<compile_context>
chip_gen: v7x
topology: tpu7x:2x2x1
jax: 0.10.0
libtpu: 0.0.40
codegen_flags: <defaults>
</compile_context>

<pallas_src>
import functools
import math

import jax
import jax.numpy as jnp
from jax.experimental import pallas as pl
from jax.experimental.pallas import tpu as pltpu


# ----------------------------------------------------------------------------
# Pallas kernel: full block forward for one (token_tile, C) slab of tokens.
# ----------------------------------------------------------------------------
def _maxvit_block_kernel(
    x_ref,        # (T, C)    token tile (original, pre-LN)
    ln1_g_ref,    # (1, C)
    ln1_b_ref,    # (1, C)
    wqkv_ref,     # (3C, C)   nn.Linear(dim, 3*dim).weight  (out, in)
    bqkv_ref,     # (3C, 1)   bias as a column (feature-major add)
    wproj_ref,    # (C, C)    nn.Linear(dim, dim).weight    (out, in)
    bproj_ref,    # (1, C)
    ln2_g_ref,    # (1, C)
    ln2_b_ref,    # (1, C)
    w1_ref,       # (C, 4C)   linear1.weight.T  (in, out)
    b1_ref,       # (1, 4C)
    w2_ref,       # (4C, C)   linear2.weight.T  (in, out)
    b2_ref,       # (1, C)
    o_ref,        # (T, C)
    *,
    dim: int,
    heads: int,
):
    hd = dim // heads
    eps = 1e-5                      # torch.nn.LayerNorm default
    scale = 1.0 / math.sqrt(hd)
    f32 = jnp.float32
    T = x_ref.shape[0]

    x = x_ref[...].astype(f32)      # (T, C); LN / softmax stats stay f32

    def layernorm(v, g_ref, b_ref):
        mu = jnp.mean(v, axis=-1, keepdims=True)
        var = jnp.mean(jnp.square(v - mu), axis=-1, keepdims=True)   # biased, like torch
        return ((v - mu) * jax.lax.rsqrt(var + eps)
                * g_ref[...].astype(f32) + b_ref[...].astype(f32))

    # ---- LayerNorm 1 ----
    h = layernorm(x, ln1_g_ref, ln1_b_ref)                           # (T, C) f32

    # ---- fused QKV projection, feature-major:  qkv_t = Wqkv @ h^T -> (3C, T) ----
    wqkv = wqkv_ref[...]
    qkv_t = jax.lax.dot_general(
        wqkv, h.astype(wqkv.dtype),
        dimension_numbers=(((1,), (1,)), ((), ())),
        preferred_element_type=f32,
    ) + bqkv_ref[...].astype(f32)                                    # (3C, T)

    # ---- per-token attention over the heads axis (literal module semantics) ----
    # Head split is a *free reshape* along an 8-aligned sublane boundary
    # (no jnp.stack copies); the token axis stays in the 128-wide lane dim so
    # everything below is lane-dense vector work next to the MXU matmuls.
    # Elementwise products run in the storage dtype (bf16 on bf16 runs: 2x
    # denser vregs on v6e/v7x; f32 otherwise / on v5e-style f32 runs).
    cdt = x_ref.dtype
    q4 = qkv_t[0 * dim:1 * dim, :].astype(cdt).reshape(heads, hd, T)  # (heads, hd, T)
    k4 = qkv_t[1 * dim:2 * dim, :].astype(cdt).reshape(heads, hd, T)
    v4 = qkv_t[2 * dim:3 * dim, :].astype(cdt).reshape(heads, hd, T)

    # scores[i, j, t] = <q_i[t], k_j[t]> / sqrt(hd)   -> (heads, heads, T)
    # Unrolled accumulation over d keeps temporaries at (heads, heads, T)
    # instead of materializing a (heads, heads, hd, T) broadcast, and replaces
    # the cross-sublane reduction with lane-wise FMAs.
    s = q4[:, None, 0, :] * k4[None, :, 0, :]
    for d in range(1, hd):
        s = s + q4[:, None, d, :] * k4[None, :, d, :]
    s = s.astype(f32) * scale

    # softmax over j (axis=1), numerically stable, f32 stats.  Exact reciprocal:
    # it acts on a (heads, 1, T) tensor (a handful of vregs), so approx=True
    # would not change wall clock while exact keeps the f32 parity check tight.
    s = s - jnp.max(s, axis=1, keepdims=True)
    p = jnp.exp(s)
    p = p * pl.reciprocal(jnp.sum(p, axis=1, keepdims=True), approx=False)

    # out[i, d, t] = sum_j p[i, j, t] * v_j[d, t]     -> (heads, hd, T)
    pc = p.astype(cdt)
    o4 = pc[:, 0, None, :] * v4[0][None, :, :]
    for j in range(1, heads):
        o4 = o4 + pc[:, j, None, :] * v4[j][None, :, :]

    # Head merge is again a free reshape; cast to the MXU input dtype *before*
    # the (C,T)->(T,C) transpose so the XLU moves half the bytes on bf16 runs.
    wproj = wproj_ref[...]
    attn_tok = o4.reshape(dim, T).astype(wproj.dtype).T              # (T, C)
    # TODO(synk): if bundle dumps show the XLU saturated by this transpose on
    # v6e/v7x, move it to the MXU via an identity matmul (MXU has slack at K=128).

    # ---- output projection (A @ B^T against the (out, in) weight) ----
    proj = jax.lax.dot_general(
        attn_tok, wproj,
        dimension_numbers=(((1,), (1,)), ((), ())),
        preferred_element_type=f32,
    ) + bproj_ref[...].astype(f32)                                   # (T, C)

    # ---- Residual 1 ----
    x1 = x + proj

    # ---- LayerNorm 2 + FFN ----
    h2 = layernorm(x1, ln2_g_ref, ln2_b_ref)
    w1 = w1_ref[...]
    f = jnp.dot(h2.astype(w1.dtype), w1,
                preferred_element_type=f32) + b1_ref[...].astype(f32)
    f = jnp.maximum(f, 0.0)
    w2 = w2_ref[...]
    f = jnp.dot(f.astype(w2.dtype), w2,
                preferred_element_type=f32) + b2_ref[...].astype(f32)

    # ---- Residual 2 ----
    o_ref[...] = (x1 + f).astype(o_ref.dtype)


# ----------------------------------------------------------------------------
# Per-generation tuning: tile cap, VMEM limit, grid-step constraints.
# ----------------------------------------------------------------------------
def _device_config():
    kind = ""
    try:
        kind = jax.devices()[0].device_kind.lower()
    except Exception:
        pass
    if "v7" in kind:
        # 64 MiB VMEM per TensorCore, 2 TCs/chip: smaller tile cap, leave DMA
        # headroom under the scoped-VMEM limit, and keep an even, >=4 step
        # grid so ("parallel",) balances both cores.
        return dict(max_tile=1024, vmem_limit=48 * 1024 * 1024,
                    min_steps=4, even_steps=True)
    # v5e / v6e: 128 MiB physical VMEM, single TensorCore per chip.
    return dict(max_tile=2048, vmem_limit=64 * 1024 * 1024,
                min_steps=2, even_steps=False)


def _choose_token_tile(num_tokens, *, max_tile, min_steps, even_steps):
    def ok(cand):
        if num_tokens % cand:
            return False
        steps = num_tokens // cand
        if steps < min_steps:
            return False
        if even_steps and steps % 2:
            return False
        return True

    start = min(max_tile, num_tokens)
    # Prefer MXU-friendly multiples of 128 for the M dimension.
    for cand in range(start - start % 128, 127, -128):
        if ok(cand):
            return cand
    for cand in range(start, 7, -8):
        if ok(cand):
            return cand
    return num_tokens


# ----------------------------------------------------------------------------
# Wrapper: free reshapes only (no host-side window transpose) + pallas_call.
# ----------------------------------------------------------------------------
def simple_maxvit_block(x, params, *, heads, ws, token_tile=None):
    B, H, W, C = x.shape
    assert C % heads == 0
    hd = C // heads
    # Free head-split/merge reshapes require sublane-aligned head_dim.
    assert hd % 8 == 0, "head_dim must be a multiple of 8 (sublane alignment)"
    assert H % ws == 0 and W % ws == 0      # required by the module's window partition
    num_tokens = B * H * W

    cfg = _device_config()
    tt = token_tile or _choose_token_tile(
        num_tokens, max_tile=cfg["max_tile"],
        min_steps=cfg["min_steps"], even_steps=cfg["even_steps"])
    assert num_tokens % tt == 0

    x2 = x.reshape(num_tokens, C)           # row-major view: free, no extra HBM pass

    weights = (
        params["ln1_g"], params["ln1_b"],
        params["wqkv"], params["bqkv"],
        params["wproj"], params["bproj"],
        params["ln2_g"], params["ln2_b"],
        params["w1"], params["b1"],
        params["w2"], params["b2"],
    )

    def full_spec(a):
        # Whole (small) parameter tensor resident in VMEM; constant block index
        # means Pallas never re-fetches it across grid steps.
        return pl.BlockSpec(a.shape, lambda i: (0, 0))

    kernel = functools.partial(_maxvit_block_kernel, dim=C, heads=heads)

    out2 = pl.pallas_call(
        kernel,
        out_shape=jax.ShapeDtypeStruct((num_tokens, C), x.dtype),
        grid_spec=pltpu.PrefetchScalarGridSpec(
            num_scalar_prefetch=0,
            grid=(num_tokens // tt,),
            in_specs=[pl.BlockSpec((tt, C), lambda i: (i, 0))]
            + [full_spec(a) for a in weights],
            out_specs=pl.BlockSpec((tt, C), lambda i: (i, 0)),
        ),
        compiler_params=pltpu.CompilerParams(
            dimension_semantics=("parallel",),
            vmem_limit_bytes=cfg["vmem_limit"],
        ),
    )(x2, *weights)

    return out2.reshape(B, H, W, C)


# ----------------------------------------------------------------------------
# Pure-JAX reference: literal transcription of the PyTorch forward, including
# the window partition round-trip and the module's attention-over-heads math.
# ----------------------------------------------------------------------------
def reference_maxvit_block(x, params, *, heads, ws):
    B, H, W, C = x.shape
    hd = C // heads
    eps = 1e-5

    x = x.astype(jnp.float32)
    p = {k: v.astype(jnp.float32) for k, v in params.items()}

    def ln(v, g, b):
        mu = jnp.mean(v, axis=-1, keepdims=True)
        var = jnp.mean(jnp.square(v - mu), axis=-1, keepdims=True)
        return (v - mu) / jnp.sqrt(var + eps) * g[0] + b[0]

    h = ln(x.reshape(B, H * W, C), p["ln1_g"], p["ln1_b"]).reshape(B, H, W, C)

    # block_attn: partition -> SimpleAttention -> unpartition (mirrors torch code)
    hw = h.reshape(B, H // ws, ws, W // ws, ws, C).transpose(0, 1, 3, 2, 4, 5)
    hw = hw.reshape(-1, ws * ws, C)                                   # (nW, N, C)
    qkv = hw @ p["wqkv"].T + p["bqkv"][:, 0]                          # nn.Linear(dim, 3*dim)
    nW, N, _ = qkv.shape
    qkv = qkv.reshape(nW, N, 3, heads, hd)
    q, k, v = qkv[:, :, 0], qkv[:, :, 1], qkv[:, :, 2]                # (nW, N, heads, hd)
    # NOTE: no head permute in the torch module -> torch.matmul batches over
    # (nW, N) and the attention is over the *heads* axis, per token.
    scores = jnp.einsum("bnid,bnjd->bnij", q, k) / math.sqrt(hd)
    attn = jax.nn.softmax(scores, axis=-1)
    out = jnp.einsum("bnij,bnjd->bnid", attn, v).reshape(nW, N, C)
    out = out @ p["wproj"].T + p["bproj"][0]
    out = out.reshape(B, H // ws, W // ws, ws, ws, C).transpose(0, 1, 3, 2, 4, 5)
    out = out.reshape(B, H, W, C)
    x = x + out

    h2 = ln(x.reshape(B, H * W, C), p["ln2_g"], p["ln2_b"])
    f = jnp.maximum(h2 @ p["w1"] + p["b1"][0], 0.0)
    f = (f @ p["w2"] + p["b2"][0]).reshape(B, H, W, C)
    return x + f


# ----------------------------------------------------------------------------
# Deterministic parameters + demo run.
# ----------------------------------------------------------------------------
def make_params(key, dim, dtype=jnp.float32):
    ks = jax.random.split(key, 12)
    s, b = 0.05, 0.01
    p = {
        "ln1_g": 1.0 + 0.1 * jax.random.normal(ks[0], (1, dim)),
        "ln1_b": 0.05 * jax.random.normal(ks[1], (1, dim)),
        "wqkv": s * jax.random.normal(ks[2], (3 * dim, dim)),    # (out, in), like nn.Linear.weight
        "bqkv": b * jax.random.normal(ks[3], (3 * dim, 1)),      # bias as a column
        "wproj": s * jax.random.normal(ks[4], (dim, dim)),       # (out, in)
        "bproj": b * jax.random.normal(ks[5], (1, dim)),
        "ln2_g": 1.0 + 0.1 * jax.random.normal(ks[6], (1, dim)),
        "ln2_b": 0.05 * jax.random.normal(ks[7], (1, dim)),
        "w1": s * jax.random.normal(ks[8], (dim, 4 * dim)),      # linear1.weight.T  (in, out)
        "b1": b * jax.random.normal(ks[9], (1, 4 * dim)),
        "w2": s * jax.random.normal(ks[10], (4 * dim, dim)),     # linear2.weight.T  (in, out)
        "b2": b * jax.random.normal(ks[11], (1, dim)),
    }
    return {k: v.astype(dtype) for k, v in p.items()}


if __name__ == "__main__":
    # Small shapes consistent with the module (defaults dim=256, heads=8, ws=8):
    # dim=128 keeps the channel dim lane-dense on TPU.
    B, H, W, C = 2, 16, 16, 128
    heads, ws = 8, 8

    key = jax.random.PRNGKey(0)
    k_x, k_p = jax.random.split(key)
    x = jax.random.normal(k_x, (B, H, W, C), jnp.float32)
    params = make_params(k_p, C)

    # --- f32 storage run + tight parity check against the literal reference ---
    out = jax.block_until_ready(simple_maxvit_block(x, params, heads=heads, ws=ws))
    ref = reference_maxvit_block(x, params, heads=heads, ws=ws)
    assert out.shape == (B, H, W, C)
    err = float(jnp.max(jnp.abs(out - ref)))
    assert jnp.allclose(out, ref, atol=1e-3, rtol=1e-3), f"f32 max|err|={err:.3e}"

    # --- bf16 storage run (halves HBM/VMEM traffic; exercises the bf16
    # elementwise attention path).  f32 accumulation inside the kernel;
    # looser tolerance for bf16 rounding. ---
    x16 = x.astype(jnp.bfloat16)
    p16 = {k: v.astype(jnp.bfloat16) for k, v in params.items()}
    out16 = jax.block_until_ready(simple_maxvit_block(x16, p16, heads=heads, ws=ws))
    ref16 = reference_maxvit_block(x16.astype(jnp.float32), p16, heads=heads, ws=ws)
    err16 = float(jnp.max(jnp.abs(out16.astype(jnp.float32) - ref16)))
    assert jnp.allclose(out16.astype(jnp.float32), ref16, atol=0.15, rtol=0.1), (
        f"bf16 max|err|={err16:.3e}"
    )

    print("KERNEL_OK")
</pallas_src>

<mosaic_0001>
module attributes {stable_mosaic.version = 11 : i64} {
  func.func @_maxvit_block_kernel(%arg0: i32, %arg1: memref<256x128xf32, #tpu.memory_space<vmem>>, %arg2: memref<1x128xf32, #tpu.memory_space<vmem>>, %arg3: memref<1x128xf32, #tpu.memory_space<vmem>>, %arg4: memref<384x128xf32, #tpu.memory_space<vmem>>, %arg5: memref<384x1xf32, #tpu.memory_space<vmem>>, %arg6: memref<128x128xf32, #tpu.memory_space<vmem>>, %arg7: memref<1x128xf32, #tpu.memory_space<vmem>>, %arg8: memref<1x128xf32, #tpu.memory_space<vmem>>, %arg9: memref<1x128xf32, #tpu.memory_space<vmem>>, %arg10: memref<128x512xf32, #tpu.memory_space<vmem>>, %arg11: memref<1x512xf32, #tpu.memory_space<vmem>>, %arg12: memref<512x128xf32, #tpu.memory_space<vmem>>, %arg13: memref<1x128xf32, #tpu.memory_space<vmem>>, %arg14: memref<256x128xf32, #tpu.memory_space<vmem>>) attributes {dimension_semantics = [#tpu.dimension_semantics<parallel>], iteration_bounds = array<i64: 2>, scalar_prefetch = 0 : i64, scratch_operands = 0 : i64, tpu.core_type = #tpu.core_type<tc>, window_params = [{transform_indices = @transform_0, window_bounds = array<i64: 256, 128>}, {pipeline_mode = #tpu.pipeline_mode<synchronous>, transform_indices = @transform_1, window_bounds = array<i64: 1, 128>}, {pipeline_mode = #tpu.pipeline_mode<synchronous>, transform_indices = @transform_2, window_bounds = array<i64: 1, 128>}, {pipeline_mode = #tpu.pipeline_mode<synchronous>, transform_indices = @transform_3, window_bounds = array<i64: 384, 128>}, {pipeline_mode = #tpu.pipeline_mode<synchronous>, transform_indices = @transform_4, window_bounds = array<i64: 384, 1>}, {pipeline_mode = #tpu.pipeline_mode<synchronous>, transform_indices = @transform_5, window_bounds = array<i64: 128, 128>}, {pipeline_mode = #tpu.pipeline_mode<synchronous>, transform_indices = @transform_6, window_bounds = array<i64: 1, 128>}, {pipeline_mode = #tpu.pipeline_mode<synchronous>, transform_indices = @transform_7, window_bounds = array<i64: 1, 128>}, {pipeline_mode = #tpu.pipeline_mode<synchronous>, transform_indices = @transform_8, window_bounds = array<i64: 1, 128>}, {pipeline_mode = #tpu.pipeline_mode<synchronous>, transform_indices = @transform_9, window_bounds = array<i64: 128, 512>}, {pipeline_mode = #tpu.pipeline_mode<synchronous>, transform_indices = @transform_10, window_bounds = array<i64: 1, 512>}, {pipeline_mode = #tpu.pipeline_mode<synchronous>, transform_indices = @transform_11, window_bounds = array<i64: 512, 128>}, {pipeline_mode = #tpu.pipeline_mode<synchronous>, transform_indices = @transform_12, window_bounds = array<i64: 1, 128>}, {transform_indices = @transform_13, window_bounds = array<i64: 256, 128>}]} {
    %c0 = arith.constant 0 : index
    %c0_0 = arith.constant 0 : index
    %0 = vector.load %arg1[%c0, %c0_0] : memref<256x128xf32, #tpu.memory_space<vmem>>, vector<256x128xf32>
    %cst = arith.constant dense<0.000000e+00> : vector<256xf32>
    %1 = vector.multi_reduction <add>, %0, %cst [1] : vector<256x128xf32> to vector<256xf32>
    %2 = vector.shape_cast %1 : vector<256xf32> to vector<256x1xf32>
    %cst_1 = arith.constant 1.280000e+02 : f32
    %3 = vector.broadcast %cst_1 : f32 to vector<256x1xf32>
    %4 = arith.divf %2, %3 : vector<256x1xf32>
    %5 = vector.broadcast %4 : vector<256x1xf32> to vector<256x128xf32>
    %6 = arith.subf %0, %5 : vector<256x128xf32>
    %7 = arith.mulf %6, %6 : vector<256x128xf32>
    %cst_2 = arith.constant dense<0.000000e+00> : vector<256xf32>
    %8 = vector.multi_reduction <add>, %7, %cst_2 [1] : vector<256x128xf32> to vector<256xf32>
    %9 = vector.shape_cast %8 : vector<256xf32> to vector<256x1xf32>
    %cst_3 = arith.constant 1.280000e+02 : f32
    %10 = vector.broadcast %cst_3 : f32 to vector<256x1xf32>
    %11 = arith.divf %9, %10 : vector<256x1xf32>
    %12 = vector.broadcast %4 : vector<256x1xf32> to vector<256x128xf32>
    %13 = arith.subf %0, %12 : vector<256x128xf32>
    %cst_4 = arith.constant 9.99999974E-6 : f32
    %14 = vector.broadcast %cst_4 : f32 to vector<256x1xf32>
    %15 = arith.addf %11, %14 : vector<256x1xf32>
    %16 = math.rsqrt %15 : vector<256x1xf32>
    %17 = vector.broadcast %16 : vector<256x1xf32> to vector<256x128xf32>
    %18 = arith.mulf %13, %17 : vector<256x128xf32>
    %c0_5 = arith.constant 0 : index
    %c0_6 = arith.constant 0 : index
    %19 = vector.load %arg2[%c0_5, %c0_6] : memref<1x128xf32, #tpu.memory_space<vmem>>, vector<1x128xf32>
    %20 = vector.broadcast %19 : vector<1x128xf32> to vector<256x128xf32>
    %21 = arith.mulf %18, %20 : vector<256x128xf32>
    %c0_7 = arith.constant 0 : index
    %c0_8 = arith.constant 0 : index
    %22 = vector.load %arg3[%c0_7, %c0_8] : memref<1x128xf32, #tpu.memory_space<vmem>>, vector<1x128xf32>
    %23 = vector.broadcast %22 : vector<1x128xf32> to vector<256x128xf32>
    %24 = arith.addf %21, %23 : vector<256x128xf32>
    %c0_9 = arith.constant 0 : index
    %c0_10 = arith.constant 0 : index
    %25 = vector.load %arg4[%c0_9, %c0_10] : memref<384x128xf32, #tpu.memory_space<vmem>>, vector<384x128xf32>
    %cst_11 = arith.constant dense<0.000000e+00> : vector<384x256xf32>
    %26 = tpu.matmul %25, %24, %cst_11 {dimension_numbers = #tpu.dot_dimension_numbers<[1], [1], [0], [0], [0, 0, 1, 0], [], []>} : vector<384x128xf32>, vector<256x128xf32>, vector<384x256xf32> -> vector<384x256xf32>
    %c0_12 = arith.constant 0 : index
    %c0_13 = arith.constant 0 : index
    %27 = vector.load %arg5[%c0_12, %c0_13] : memref<384x1xf32, #tpu.memory_space<vmem>>, vector<384x1xf32>
    %28 = vector.broadcast %27 : vector<384x1xf32> to vector<384x256xf32>
    %29 = arith.addf %26, %28 : vector<384x256xf32>
    %30 = vector.extract_strided_slice %29 {offsets = [0, 0], sizes = [128, 256], strides = [1, 1]} : vector<384x256xf32> to vector<128x256xf32>
    %31 = vector.shape_cast %30 : vector<128x256xf32> to vector<8x16x256xf32>
    %32 = vector.extract_strided_slice %29 {offsets = [128, 0], sizes = [128, 256], strides = [1, 1]} : vector<384x256xf32> to vector<128x256xf32>
    %33 = vector.shape_cast %32 : vector<128x256xf32> to vector<8x16x256xf32>
    %34 = vector.extract_strided_slice %29 {offsets = [256, 0], sizes = [128, 256], strides = [1, 1]} : vector<384x256xf32> to vector<128x256xf32>
    %35 = vector.shape_cast %34 : vector<128x256xf32> to vector<8x16x256xf32>
    %36 = vector.extract_strided_slice %31 {offsets = [0, 0, 0], sizes = [8, 1, 256], strides = [1, 1, 1]} : vector<8x16x256xf32> to vector<8x1x256xf32>
    %37 = vector.shape_cast %36 : vector<8x1x256xf32> to vector<8x256xf32>
    %38 = vector.shape_cast %37 : vector<8x256xf32> to vector<8x1x256xf32>
    %39 = vector.extract_strided_slice %33 {offsets = [0, 0, 0], sizes = [8, 1, 256], strides = [1, 1, 1]} : vector<8x16x256xf32> to vector<8x1x256xf32>
    %40 = vector.shape_cast %39 : vector<8x1x256xf32> to vector<8x256xf32>
    %41 = vector.shape_cast %40 : vector<8x256xf32> to vector<1x8x256xf32>
    %42 = vector.broadcast %38 : vector<8x1x256xf32> to vector<8x8x256xf32>
    %43 = vector.broadcast %41 : vector<1x8x256xf32> to vector<8x8x256xf32>
    %44 = arith.mulf %42, %43 : vector<8x8x256xf32>
    %45 = vector.extract_strided_slice %31 {offsets = [0, 1, 0], sizes = [8, 1, 256], strides = [1, 1, 1]} : vector<8x16x256xf32> to vector<8x1x256xf32>
    %46 = vector.shape_cast %45 : vector<8x1x256xf32> to vector<8x256xf32>
    %47 = vector.shape_cast %46 : vector<8x256xf32> to vector<8x1x256xf32>
    %48 = vector.extract_strided_slice %33 {offsets = [0, 1, 0], sizes = [8, 1, 256], strides = [1, 1, 1]} : vector<8x16x256xf32> to vector<8x1x256xf32>
    %49 = vector.shape_cast %48 : vector<8x1x256xf32> to vector<8x256xf32>
    %50 = vector.shape_cast %49 : vector<8x256xf32> to vector<1x8x256xf32>
    %51 = vector.broadcast %47 : vector<8x1x256xf32> to vector<8x8x256xf32>
    %52 = vector.broadcast %50 : vector<1x8x256xf32> to vector<8x8x256xf32>
    %53 = arith.mulf %51, %52 : vector<8x8x256xf32>
    %54 = arith.addf %44, %53 : vector<8x8x256xf32>
    %55 = vector.extract_strided_slice %31 {offsets = [0, 2, 0], sizes = [8, 1, 256], strides = [1, 1, 1]} : vector<8x16x256xf32> to vector<8x1x256xf32>
    %56 = vector.shape_cast %55 : vector<8x1x256xf32> to vector<8x256xf32>
    %57 = vector.shape_cast %56 : vector<8x256xf32> to vector<8x1x256xf32>
    %58 = vector.extract_strided_slice %33 {offsets = [0, 2, 0], sizes = [8, 1, 256], strides = [1, 1, 1]} : vector<8x16x256xf32> to vector<8x1x256xf32>
    %59 = vector.shape_cast %58 : vector<8x1x256xf32> to vector<8x256xf32>
    %60 = vector.shape_cast %59 : vector<8x256xf32> to vector<1x8x256xf32>
    %61 = vector.broadcast %57 : vector<8x1x256xf32> to vector<8x8x256xf32>
    %62 = vector.broadcast %60 : vector<1x8x256xf32> to vector<8x8x256xf32>
    %63 = arith.mulf %61, %62 : vector<8x8x256xf32>
    %64 = arith.addf %54, %63 : vector<8x8x256xf32>
    %65 = vector.extract_strided_slice %31 {offsets = [0, 3, 0], sizes = [8, 1, 256], strides = [1, 1, 1]} : vector<8x16x256xf32> to vector<8x1x256xf32>
    %66 = vector.shape_cast %65 : vector<8x1x256xf32> to vector<8x256xf32>
    %67 = vector.shape_cast %66 : vector<8x256xf32> to vector<8x1x256xf32>
    %68 = vector.extract_strided_slice %33 {offsets = [0, 3, 0], sizes = [8, 1, 256], strides = [1, 1, 1]} : vector<8x16x256xf32> to vector<8x1x256xf32>
    %69 = vector.shape_cast %68 : vector<8x1x256xf32> to vector<8x256xf32>
    %70 = vector.shape_cast %69 : vector<8x256xf32> to vector<1x8x256xf32>
    %71 = vector.broadcast %67 : vector<8x1x256xf32> to vector<8x8x256xf32>
    %72 = vector.broadcast %70 : vector<1x8x256xf32> to vector<8x8x256xf32>
    %73 = arith.mulf %71, %72 : vector<8x8x256xf32>
    %74 = arith.addf %64, %73 : vector<8x8x256xf32>
    %75 = vector.extract_strided_slice %31 {offsets = [0, 4, 0], sizes = [8, 1, 256], strides = [1, 1, 1]} : vector<8x16x256xf32> to vector<8x1x256xf32>
    %76 = vector.shape_cast %75 : vector<8x1x256xf32> to vector<8x256xf32>
    %77 = vector.shape_cast %76 : vector<8x256xf32> to vector<8x1x256xf32>
    %78 = vector.extract_strided_slice %33 {offsets = [0, 4, 0], sizes = [8, 1, 256], strides = [1, 1, 1]} : vector<8x16x256xf32> to vector<8x1x256xf32>
    %79 = vector.shape_cast %78 : vector<8x1x256xf32> to vector<8x256xf32>
    %80 = vector.shape_cast %79 : vector<8x256xf32> to vector<1x8x256xf32>
    %81 = vector.broadcast %77 : vector<8x1x256xf32> to vector<8x8x256xf32>
    %82 = vector.broadcast %80 : vector<1x8x256xf32> to vector<8x8x256xf32>
    %83 = arith.mulf %81, %82 : vector<8x8x256xf32>
    %84 = arith.addf %74, %83 : vector<8x8x256xf32>
    %85 = vector.extract_strided_slice %31 {offsets = [0, 5, 0], sizes = [8, 1, 256], strides = [1, 1, 1]} : vector<8x16x256xf32> to vector<8x1x256xf32>
    %86 = vector.shape_cast %85 : vector<8x1x256xf32> to vector<8x256xf32>
    %87 = vector.shape_cast %86 : vector<8x256xf32> to vector<8x1x256xf32>
    %88 = vector.extract_strided_slice %33 {offsets = [0, 5, 0], sizes = [8, 1, 256], strides = [1, 1, 1]} : vector<8x16x256xf32> to vector<8x1x256xf32>
    %89 = vector.shape_cast %88 : vector<8x1x256xf32> to vector<8x256xf32>
    %90 = vector.shape_cast %89 : vector<8x256xf32> to vector<1x8x256xf32>
    %91 = vector.broadcast %87 : vector<8x1x256xf32> to vector<8x8x256xf32>
    %92 = vector.broadcast %90 : vector<1x8x256xf32> to vector<8x8x256xf32>
    %93 = arith.mulf %91, %92 : vector<8x8x256xf32>
    %94 = arith.addf %84, %93 : vector<8x8x256xf32>
    %95 = vector.extract_strided_slice %31 {offsets = [0, 6, 0], sizes = [8, 1, 256], strides = [1, 1, 1]} : vector<8x16x256xf32> to vector<8x1x256xf32>
    %96 = vector.shape_cast %95 : vector<8x1x256xf32> to vector<8x256xf32>
    %97 = vector.shape_cast %96 : vector<8x256xf32> to vector<8x1x256xf32>
    %98 = vector.extract_strided_slice %33 {offsets = [0, 6, 0], sizes = [8, 1, 256], strides = [1, 1, 1]} : vector<8x16x256xf32> to vector<8x1x256xf32>
    %99 = vector.shape_cast %98 : vector<8x1x256xf32> to vector<8x256xf32>
    %100 = vector.shape_cast %99 : vector<8x256xf32> to vector<1x8x256xf32>
    %101 = vector.broadcast %97 : vector<8x1x256xf32> to vector<8x8x256xf32>
    %102 = vector.broadcast %100 : vector<1x8x256xf32> to vector<8x8x256xf32>
    %103 = arith.mulf %101, %102 : vector<8x8x256xf32>
    %104 = arith.addf %94, %103 : vector<8x8x256xf32>
    %105 = vector.extract_strided_slice %31 {offsets = [0, 7, 0], sizes = [8, 1, 256], strides = [1, 1, 1]} : vector<8x16x256xf32> to vector<8x1x256xf32>
    %106 = vector.shape_cast %105 : vector<8x1x256xf32> to vector<8x256xf32>
    %107 = vector.shape_cast %106 : vector<8x256xf32> to vector<8x1x256xf32>
    %108 = vector.extract_strided_slice %33 {offsets = [0, 7, 0], sizes = [8, 1, 256], strides = [1, 1, 1]} : vector<8x16x256xf32> to vector<8x1x256xf32>
    %109 = vector.shape_cast %108 : vector<8x1x256xf32> to vector<8x256xf32>
    %110 = vector.shape_cast %109 : vector<8x256xf32> to vector<1x8x256xf32>
    %111 = vector.broadcast %107 : vector<8x1x256xf32> to vector<8x8x256xf32>
    %112 = vector.broadcast %110 : vector<1x8x256xf32> to vector<8x8x256xf32>
    %113 = arith.mulf %111, %112 : vector<8x8x256xf32>
    %114 = arith.addf %104, %113 : vector<8x8x256xf32>
    %115 = vector.extract_strided_slice %31 {offsets = [0, 8, 0], sizes = [8, 1, 256], strides = [1, 1, 1]} : vector<8x16x256xf32> to vector<8x1x256xf32>
    %116 = vector.shape_cast %115 : vector<8x1x256xf32> to vector<8x256xf32>
    %117 = vector.shape_cast %116 : vector<8x256xf32> to vector<8x1x256xf32>
    %118 = vector.extract_strided_slice %33 {offsets = [0, 8, 0], sizes = [8, 1, 256], strides = [1, 1, 1]} : vector<8x16x256xf32> to vector<8x1x256xf32>
    %119 = vector.shape_cast %118 : vector<8x1x256xf32> to vector<8x256xf32>
    %120 = vector.shape_cast %119 : vector<8x256xf32> to vector<1x8x256xf32>
    %121 = vector.broadcast %117 : vector<8x1x256xf32> to vector<8x8x256xf32>
    %122 = vector.broadcast %120 : vector<1x8x256xf32> to vector<8x8x256xf32>
    %123 = arith.mulf %121, %122 : vector<8x8x256xf32>
    %124 = arith.addf %114, %123 : vector<8x8x256xf32>
    %125 = vector.extract_strided_slice %31 {offsets = [0, 9, 0], sizes = [8, 1, 256], strides = [1, 1, 1]} : vector<8x16x256xf32> to vector<8x1x256xf32>
    %126 = vector.shape_cast %125 : vector<8x1x256xf32> to vector<8x256xf32>
    %127 = vector.shape_cast %126 : vector<8x256xf32> to vector<8x1x256xf32>
    %128 = vector.extract_strided_slice %33 {offsets = [0, 9, 0], sizes = [8, 1, 256], strides = [1, 1, 1]} : vector<8x16x256xf32> to vector<8x1x256xf32>
    %129 = vector.shape_cast %128 : vector<8x1x256xf32> to vector<8x256xf32>
    %130 = vector.shape_cast %129 : vector<8x256xf32> to vector<1x8x256xf32>
    %131 = vector.broadcast %127 : vector<8x1x256xf32> to vector<8x8x256xf32>
    %132 = vector.broadcast %130 : vector<1x8x256xf32> to vector<8x8x256xf32>
    %133 = arith.mulf %131, %132 : vector<8x8x256xf32>
    %134 = arith.addf %124, %133 : vector<8x8x256xf32>
    %135 = vector.extract_strided_slice %31 {offsets = [0, 10, 0], sizes = [8, 1, 256], strides = [1, 1, 1]} : vector<8x16x256xf32> to vector<8x1x256xf32>
    %136 = vector.shape_cast %135 : vector<8x1x256xf32> to vector<8x256xf32>
    %137 = vector.shape_cast %136 : vector<8x256xf32> to vector<8x1x256xf32>
    %138 = vector.extract_strided_slice %33 {offsets = [0, 10, 0], sizes = [8, 1, 256], strides = [1, 1, 1]} : vector<8x16x256xf32> to vector<8x1x256xf32>
    %139 = vector.shape_cast %138 : vector<8x1x256xf32> to vector<8x256xf32>
    %140 = vector.shape_cast %139 : vector<8x256xf32> to vector<1x8x256xf32>
    %141 = vector.broadcast %137 : vector<8x1x256xf32> to vector<8x8x256xf32>
    %142 = vector.broadcast %140 : vector<1x8x256xf32> to vector<8x8x256xf32>
    %143 = arith.mulf %141, %142 : vector<8x8x256xf32>
    %144 = arith.addf %134, %143 : vector<8x8x256xf32>
    %145 = vector.extract_strided_slice %31 {offsets = [0, 11, 0], sizes = [8, 1, 256], strides = [1, 1, 1]} : vector<8x16x256xf32> to vector<8x1x256xf32>
    %146 = vector.shape_cast %145 : vector<8x1x256xf32> to vector<8x256xf32>
    %147 = vector.shape_cast %146 : vector<8x256xf32> to vector<8x1x256xf32>
    %148 = vector.extract_strided_slice %33 {offsets = [0, 11, 0], sizes = [8, 1, 256], strides = [1, 1, 1]} : vector<8x16x256xf32> to vector<8x1x256xf32>
    %149 = vector.shape_cast %148 : vector<8x1x256xf32> to vector<8x256xf32>
    %150 = vector.shape_cast %149 : vector<8x256xf32> to vector<1x8x256xf32>
    %151 = vector.broadcast %147 : vector<8x1x256xf32> to vector<8x8x256xf32>
    %152 = vector.broadcast %150 : vector<1x8x256xf32> to vector<8x8x256xf32>
    %153 = arith.mulf %151, %152 : vector<8x8x256xf32>
    %154 = arith.addf %144, %153 : vector<8x8x256xf32>
    %155 = vector.extract_strided_slice %31 {offsets = [0, 12, 0], sizes = [8, 1, 256], strides = [1, 1, 1]} : vector<8x16x256xf32> to vector<8x1x256xf32>
    %156 = vector.shape_cast %155 : vector<8x1x256xf32> to vector<8x256xf32>
    %157 = vector.shape_cast %156 : vector<8x256xf32> to vector<8x1x256xf32>
    %158 = vector.extract_strided_slice %33 {offsets = [0, 12, 0], sizes = [8, 1, 256], strides = [1, 1, 1]} : vector<8x16x256xf32> to vector<8x1x256xf32>
    %159 = vector.shape_cast %158 : vector<8x1x256xf32> to vector<8x256xf32>
    %160 = vector.shape_cast %159 : vector<8x256xf32> to vector<1x8x256xf32>
    %161 = vector.broadcast %157 : vector<8x1x256xf32> to vector<8x8x256xf32>
    %162 = vector.broadcast %160 : vector<1x8x256xf32> to vector<8x8x256xf32>
    %163 = arith.mulf %161, %162 : vector<8x8x256xf32>
    %164 = arith.addf %154, %163 : vector<8x8x256xf32>
    %165 = vector.extract_strided_slice %31 {offsets = [0, 13, 0], sizes = [8, 1, 256], strides = [1, 1, 1]} : vector<8x16x256xf32> to vector<8x1x256xf32>
    %166 = vector.shape_cast %165 : vector<8x1x256xf32> to vector<8x256xf32>
    %167 = vector.shape_cast %166 : vector<8x256xf32> to vector<8x1x256xf32>
    %168 = vector.extract_strided_slice %33 {offsets = [0, 13, 0], sizes = [8, 1, 256], strides = [1, 1, 1]} : vector<8x16x256xf32> to vector<8x1x256xf32>
    %169 = vector.shape_cast %168 : vector<8x1x256xf32> to vector<8x256xf32>
    %170 = vector.shape_cast %169 : vector<8x256xf32> to vector<1x8x256xf32>
    %171 = vector.broadcast %167 : vector<8x1x256xf32> to vector<8x8x256xf32>
    %172 = vector.broadcast %170 : vector<1x8x256xf32> to vector<8x8x256xf32>
    %173 = arith.mulf %171, %172 : vector<8x8x256xf32>
    %174 = arith.addf %164, %173 : vector<8x8x256xf32>
    %175 = vector.extract_strided_slice %31 {offsets = [0, 14, 0], sizes = [8, 1, 256], strides = [1, 1, 1]} : vector<8x16x256xf32> to vector<8x1x256xf32>
    %176 = vector.shape_cast %175 : vector<8x1x256xf32> to vector<8x256xf32>
    %177 = vector.shape_cast %176 : vector<8x256xf32> to vector<8x1x256xf32>
    %178 = vector.extract_strided_slice %33 {offsets = [0, 14, 0], sizes = [8, 1, 256], strides = [1, 1, 1]} : vector<8x16x256xf32> to vector<8x1x256xf32>
    %179 = vector.shape_cast %178 : vector<8x1x256xf32> to vector<8x256xf32>
    %180 = vector.shape_cast %179 : vector<8x256xf32> to vector<1x8x256xf32>
    %181 = vector.broadcast %177 : vector<8x1x256xf32> to vector<8x8x256xf32>
    %182 = vector.broadcast %180 : vector<1x8x256xf32> to vector<8x8x256xf32>
    %183 = arith.mulf %181, %182 : vector<8x8x256xf32>
    %184 = arith.addf %174, %183 : vector<8x8x256xf32>
    %185 = vector.extract_strided_slice %31 {offsets = [0, 15, 0], sizes = [8, 1, 256], strides = [1, 1, 1]} : vector<8x16x256xf32> to vector<8x1x256xf32>
    %186 = vector.shape_cast %185 : vector<8x1x256xf32> to vector<8x256xf32>
    %187 = vector.shape_cast %186 : vector<8x256xf32> to vector<8x1x256xf32>
    %188 = vector.extract_strided_slice %33 {offsets = [0, 15, 0], sizes = [8, 1, 256], strides = [1, 1, 1]} : vector<8x16x256xf32> to vector<8x1x256xf32>
    %189 = vector.shape_cast %188 : vector<8x1x256xf32> to vector<8x256xf32>
    %190 = vector.shape_cast %189 : vector<8x256xf32> to vector<1x8x256xf32>
    %191 = vector.broadcast %187 : vector<8x1x256xf32> to vector<8x8x256xf32>
    %192 = vector.broadcast %190 : vector<1x8x256xf32> to vector<8x8x256xf32>
    %193 = arith.mulf %191, %192 : vector<8x8x256xf32>
    %194 = arith.addf %184, %193 : vector<8x8x256xf32>
    %cst_14 = arith.constant 2.500000e-01 : f32
    %195 = vector.broadcast %cst_14 : f32 to vector<8x8x256xf32>
    %196 = arith.mulf %194, %195 : vector<8x8x256xf32>
    %cst_15 = arith.constant dense<0xFF800000> : vector<8x256xf32>
    %197 = vector.multi_reduction <maximumf>, %196, %cst_15 [1] : vector<8x8x256xf32> to vector<8x256xf32>
    %198 = vector.shape_cast %197 : vector<8x256xf32> to vector<8x1x256xf32>
    %199 = vector.broadcast %198 : vector<8x1x256xf32> to vector<8x8x256xf32>
    %200 = arith.subf %196, %199 : vector<8x8x256xf32>
    %201 = math.exp %200 : vector<8x8x256xf32>
    %cst_16 = arith.constant dense<0.000000e+00> : vector<8x256xf32>
    %202 = vector.multi_reduction <add>, %201, %cst_16 [1] : vector<8x8x256xf32> to vector<8x256xf32>
    %203 = vector.shape_cast %202 : vector<8x256xf32> to vector<8x1x256xf32>
    %204 = tpu.reciprocal %203 : vector<8x1x256xf32> -> vector<8x1x256xf32>
    %205 = vector.broadcast %204 : vector<8x1x256xf32> to vector<8x8x256xf32>
    %206 = arith.mulf %201, %205 : vector<8x8x256xf32>
    %207 = vector.extract_strided_slice %206 {offsets = [0, 0, 0], sizes = [8, 1, 256], strides = [1, 1, 1]} : vector<8x8x256xf32> to vector<8x1x256xf32>
    %208 = vector.shape_cast %207 : vector<8x1x256xf32> to vector<8x256xf32>
    %209 = vector.shape_cast %208 : vector<8x256xf32> to vector<8x1x256xf32>
    %210 = vector.extract_strided_slice %35 {offsets = [0, 0, 0], sizes = [1, 16, 256], strides = [1, 1, 1]} : vector<8x16x256xf32> to vector<1x16x256xf32>
    %211 = vector.shape_cast %210 : vector<1x16x256xf32> to vector<16x256xf32>
    %212 = vector.shape_cast %211 : vector<16x256xf32> to vector<1x16x256xf32>
    %213 = vector.broadcast %209 : vector<8x1x256xf32> to vector<8x16x256xf32>
    %214 = vector.broadcast %212 : vector<1x16x256xf32> to vector<8x16x256xf32>
    %215 = arith.mulf %213, %214 : vector<8x16x256xf32>
    %216 = vector.extract_strided_slice %206 {offsets = [0, 1, 0], sizes = [8, 1, 256], strides = [1, 1, 1]} : vector<8x8x256xf32> to vector<8x1x256xf32>
    %217 = vector.shape_cast %216 : vector<8x1x256xf32> to vector<8x256xf32>
    %218 = vector.shape_cast %217 : vector<8x256xf32> to vector<8x1x256xf32>
    %219 = vector.extract_strided_slice %35 {offsets = [1, 0, 0], sizes = [1, 16, 256], strides = [1, 1, 1]} : vector<8x16x256xf32> to vector<1x16x256xf32>
    %220 = vector.shape_cast %219 : vector<1x16x256xf32> to vector<16x256xf32>
    %221 = vector.shape_cast %220 : vector<16x256xf32> to vector<1x16x256xf32>
    %222 = vector.broadcast %218 : vector<8x1x256xf32> to vector<8x16x256xf32>
    %223 = vector.broadcast %221 : vector<1x16x256xf32> to vector<8x16x256xf32>
    %224 = arith.mulf %222, %223 : vector<8x16x256xf32>
    %225 = arith.addf %215, %224 : vector<8x16x256xf32>
    %226 = vector.extract_strided_slice %206 {offsets = [0, 2, 0], sizes = [8, 1, 256], strides = [1, 1, 1]} : vector<8x8x256xf32> to vector<8x1x256xf32>
    %227 = vector.shape_cast %226 : vector<8x1x256xf32> to vector<8x256xf32>
    %228 = vector.shape_cast %227 : vector<8x256xf32> to vector<8x1x256xf32>
    %229 = vector.extract_strided_slice %35 {offsets = [2, 0, 0], sizes = [1, 16, 256], strides = [1, 1, 1]} : vector<8x16x256xf32> to vector<1x16x256xf32>
    %230 = vector.shape_cast %229 : vector<1x16x256xf32> to vector<16x256xf32>
    %231 = vector.shape_cast %230 : vector<16x256xf32> to vector<1x16x256xf32>
    %232 = vector.broadcast %228 : vector<8x1x256xf32> to vector<8x16x256xf32>
    %233 = vector.broadcast %231 : vector<1x16x256xf32> to vector<8x16x256xf32>
    %234 = arith.mulf %232, %233 : vector<8x16x256xf32>
    %235 = arith.addf %225, %234 : vector<8x16x256xf32>
    %236 = vector.extract_strided_slice %206 {offsets = [0, 3, 0], sizes = [8, 1, 256], strides = [1, 1, 1]} : vector<8x8x256xf32> to vector<8x1x256xf32>
    %237 = vector.shape_cast %236 : vector<8x1x256xf32> to vector<8x256xf32>
    %238 = vector.shape_cast %237 : vector<8x256xf32> to vector<8x1x256xf32>
    %239 = vector.extract_strided_slice %35 {offsets = [3, 0, 0], sizes = [1, 16, 256], strides = [1, 1, 1]} : vector<8x16x256xf32> to vector<1x16x256xf32>
    %240 = vector.shape_cast %239 : vector<1x16x256xf32> to vector<16x256xf32>
    %241 = vector.shape_cast %240 : vector<16x256xf32> to vector<1x16x256xf32>
    %242 = vector.broadcast %238 : vector<8x1x256xf32> to vector<8x16x256xf32>
    %243 = vector.broadcast %241 : vector<1x16x256xf32> to vector<8x16x256xf32>
    %244 = arith.mulf %242, %243 : vector<8x16x256xf32>
    %245 = arith.addf %235, %244 : vector<8x16x256xf32>
    %246 = vector.extract_strided_slice %206 {offsets = [0, 4, 0], sizes = [8, 1, 256], strides = [1, 1, 1]} : vector<8x8x256xf32> to vector<8x1x256xf32>
    %247 = vector.shape_cast %246 : vector<8x1x256xf32> to vector<8x256xf32>
    %248 = vector.shape_cast %247 : vector<8x256xf32> to vector<8x1x256xf32>
    %249 = vector.extract_strided_slice %35 {offsets = [4, 0, 0], sizes = [1, 16, 256], strides = [1, 1, 1]} : vector<8x16x256xf32> to vector<1x16x256xf32>
    %250 = vector.shape_cast %249 : vector<1x16x256xf32> to vector<16x256xf32>
    %251 = vector.shape_cast %250 : vector<16x256xf32> to vector<1x16x256xf32>
    %252 = vector.broadcast %248 : vector<8x1x256xf32> to vector<8x16x256xf32>
    %253 = vector.broadcast %251 : vector<1x16x256xf32> to vector<8x16x256xf32>
    %254 = arith.mulf %252, %253 : vector<8x16x256xf32>
    %255 = arith.addf %245, %254 : vector<8x16x256xf32>
    %256 = vector.extract_strided_slice %206 {offsets = [0, 5, 0], sizes = [8, 1, 256], strides = [1, 1, 1]} : vector<8x8x256xf32> to vector<8x1x256xf32>
    %257 = vector.shape_cast %256 : vector<8x1x256xf32> to vector<8x256xf32>
    %258 = vector.shape_cast %257 : vector<8x256xf32> to vector<8x1x256xf32>
    %259 = vector.extract_strided_slice %35 {offsets = [5, 0, 0], sizes = [1, 16, 256], strides = [1, 1, 1]} : vector<8x16x256xf32> to vector<1x16x256xf32>
    %260 = vector.shape_cast %259 : vector<1x16x256xf32> to vector<16x256xf32>
    %261 = vector.shape_cast %260 : vector<16x256xf32> to vector<1x16x256xf32>
    %262 = vector.broadcast %258 : vector<8x1x256xf32> to vector<8x16x256xf32>
    %263 = vector.broadcast %261 : vector<1x16x256xf32> to vector<8x16x256xf32>
    %264 = arith.mulf %262, %263 : vector<8x16x256xf32>
    %265 = arith.addf %255, %264 : vector<8x16x256xf32>
    %266 = vector.extract_strided_slice %206 {offsets = [0, 6, 0], sizes = [8, 1, 256], strides = [1, 1, 1]} : vector<8x8x256xf32> to vector<8x1x256xf32>
    %267 = vector.shape_cast %266 : vector<8x1x256xf32> to vector<8x256xf32>
    %268 = vector.shape_cast %267 : vector<8x256xf32> to vector<8x1x256xf32>
    %269 = vector.extract_strided_slice %35 {offsets = [6, 0, 0], sizes = [1, 16, 256], strides = [1, 1, 1]} : vector<8x16x256xf32> to vector<1x16x256xf32>
    %270 = vector.shape_cast %269 : vector<1x16x256xf32> to vector<16x256xf32>
    %271 = vector.shape_cast %270 : vector<16x256xf32> to vector<1x16x256xf32>
    %272 = vector.broadcast %268 : vector<8x1x256xf32> to vector<8x16x256xf32>
    %273 = vector.broadcast %271 : vector<1x16x256xf32> to vector<8x16x256xf32>
    %274 = arith.mulf %272, %273 : vector<8x16x256xf32>
    %275 = arith.addf %265, %274 : vector<8x16x256xf32>
    %276 = vector.extract_strided_slice %206 {offsets = [0, 7, 0], sizes = [8, 1, 256], strides = [1, 1, 1]} : vector<8x8x256xf32> to vector<8x1x256xf32>
    %277 = vector.shape_cast %276 : vector<8x1x256xf32> to vector<8x256xf32>
    %278 = vector.shape_cast %277 : vector<8x256xf32> to vector<8x1x256xf32>
    %279 = vector.extract_strided_slice %35 {offsets = [7, 0, 0], sizes = [1, 16, 256], strides = [1, 1, 1]} : vector<8x16x256xf32> to vector<1x16x256xf32>
    %280 = vector.shape_cast %279 : vector<1x16x256xf32> to vector<16x256xf32>
    %281 = vector.shape_cast %280 : vector<16x256xf32> to vector<1x16x256xf32>
    %282 = vector.broadcast %278 : vector<8x1x256xf32> to vector<8x16x256xf32>
    %283 = vector.broadcast %281 : vector<1x16x256xf32> to vector<8x16x256xf32>
    %284 = arith.mulf %282, %283 : vector<8x16x256xf32>
    %285 = arith.addf %275, %284 : vector<8x16x256xf32>
    %c0_17 = arith.constant 0 : index
    %c0_18 = arith.constant 0 : index
    %286 = vector.load %arg6[%c0_17, %c0_18] : memref<128x128xf32, #tpu.memory_space<vmem>>, vector<128x128xf32>
    %287 = vector.shape_cast %285 : vector<8x16x256xf32> to vector<128x256xf32>
    %288 = tpu.transpose %287, [1, 0] : vector<128x256xf32> -> vector<256x128xf32>
    %cst_19 = arith.constant dense<0.000000e+00> : vector<256x128xf32>
    %289 = tpu.matmul %288, %286, %cst_19 {dimension_numbers = #tpu.dot_dimension_numbers<[1], [1], [0], [0], [0, 0, 1, 0], [], []>} : vector<256x128xf32>, vector<128x128xf32>, vector<256x128xf32> -> vector<256x128xf32>
    %c0_20 = arith.constant 0 : index
    %c0_21 = arith.constant 0 : index
    %290 = vector.load %arg7[%c0_20, %c0_21] : memref<1x128xf32, #tpu.memory_space<vmem>>, vector<1x128xf32>
    %291 = vector.broadcast %290 : vector<1x128xf32> to vector<256x128xf32>
    %292 = arith.addf %289, %291 : vector<256x128xf32>
    %293 = arith.addf %0, %292 : vector<256x128xf32>
    %cst_22 = arith.constant dense<0.000000e+00> : vector<256xf32>
    %294 = vector.multi_reduction <add>, %293, %cst_22 [1] : vector<256x128xf32> to vector<256xf32>
    %295 = vector.shape_cast %294 : vector<256xf32> to vector<256x1xf32>
    %cst_23 = arith.constant 1.280000e+02 : f32
    %296 = vector.broadcast %cst_23 : f32 to vector<256x1xf32>
    %297 = arith.divf %295, %296 : vector<256x1xf32>
    %298 = vector.broadcast %297 : vector<256x1xf32> to vector<256x128xf32>
    %299 = arith.subf %293, %298 : vector<256x128xf32>
    %300 = arith.mulf %299, %299 : vector<256x128xf32>
    %cst_24 = arith.constant dense<0.000000e+00> : vector<256xf32>
    %301 = vector.multi_reduction <add>, %300, %cst_24 [1] : vector<256x128xf32> to vector<256xf32>
    %302 = vector.shape_cast %301 : vector<256xf32> to vector<256x1xf32>
    %cst_25 = arith.constant 1.280000e+02 : f32
    %303 = vector.broadcast %cst_25 : f32 to vector<256x1xf32>
    %304 = arith.divf %302, %303 : vector<256x1xf32>
    %305 = vector.broadcast %297 : vector<256x1xf32> to vector<256x128xf32>
    %306 = arith.subf %293, %305 : vector<256x128xf32>
    %cst_26 = arith.constant 9.99999974E-6 : f32
    %307 = vector.broadcast %cst_26 : f32 to vector<256x1xf32>
    %308 = arith.addf %304, %307 : vector<256x1xf32>
    %309 = math.rsqrt %308 : vector<256x1xf32>
    %310 = vector.broadcast %309 : vector<256x1xf32> to vector<256x128xf32>
    %311 = arith.mulf %306, %310 : vector<256x128xf32>
    %c0_27 = arith.constant 0 : index
    %c0_28 = arith.constant 0 : index
    %312 = vector.load %arg8[%c0_27, %c0_28] : memref<1x128xf32, #tpu.memory_space<vmem>>, vector<1x128xf32>
    %313 = vector.broadcast %312 : vector<1x128xf32> to vector<256x128xf32>
    %314 = arith.mulf %311, %313 : vector<256x128xf32>
    %c0_29 = arith.constant 0 : index
    %c0_30 = arith.constant 0 : index
    %315 = vector.load %arg9[%c0_29, %c0_30] : memref<1x128xf32, #tpu.memory_space<vmem>>, vector<1x128xf32>
    %316 = vector.broadcast %315 : vector<1x128xf32> to vector<256x128xf32>
    %317 = arith.addf %314, %316 : vector<256x128xf32>
    %c0_31 = arith.constant 0 : index
    %c0_32 = arith.constant 0 : index
    %318 = vector.load %arg10[%c0_31, %c0_32] : memref<128x512xf32, #tpu.memory_space<vmem>>, vector<128x512xf32>
    %cst_33 = arith.constant dense<0.000000e+00> : vector<256x512xf32>
    %319 = tpu.matmul %317, %318, %cst_33 {dimension_numbers = #tpu.dot_dimension_numbers<[1], [0], [0], [1], [0, 0, 1, 1], [], []>} : vector<256x128xf32>, vector<128x512xf32>, vector<256x512xf32> -> vector<256x512xf32>
    %c0_34 = arith.constant 0 : index
    %c0_35 = arith.constant 0 : index
    %320 = vector.load %arg11[%c0_34, %c0_35] : memref<1x512xf32, #tpu.memory_space<vmem>>, vector<1x512xf32>
    %321 = vector.broadcast %320 : vector<1x512xf32> to vector<256x512xf32>
    %322 = arith.addf %319, %321 : vector<256x512xf32>
    %cst_36 = arith.constant 0.000000e+00 : f32
    %323 = vector.broadcast %cst_36 : f32 to vector<256x512xf32>
    %324 = arith.maximumf %322, %323 : vector<256x512xf32>
    %c0_37 = arith.constant 0 : index
    %c0_38 = arith.constant 0 : index
    %325 = vector.load %arg12[%c0_37, %c0_38] : memref<512x128xf32, #tpu.memory_space<vmem>>, vector<512x128xf32>
    %cst_39 = arith.constant dense<0.000000e+00> : vector<256x128xf32>
    %326 = tpu.matmul %324, %325, %cst_39 {dimension_numbers = #tpu.dot_dimension_numbers<[1], [0], [0], [1], [0, 0, 1, 1], [], []>} : vector<256x512xf32>, vector<512x128xf32>, vector<256x128xf32> -> vector<256x128xf32>
    %c0_40 = arith.constant 0 : index
    %c0_41 = arith.constant 0 : index
    %327 = vector.load %arg13[%c0_40, %c0_41] : memref<1x128xf32, #tpu.memory_space<vmem>>, vector<1x128xf32>
    %328 = vector.broadcast %327 : vector<1x128xf32> to vector<256x128xf32>
    %329 = arith.addf %326, %328 : vector<256x128xf32>
    %330 = arith.addf %293, %329 : vector<256x128xf32>
    %c0_42 = arith.constant 0 : index
    %c0_43 = arith.constant 0 : index
    %331 = vector.load %arg14[%c0_42, %c0_43] : memref<256x128xf32, #tpu.memory_space<vmem>>, vector<256x128xf32>
    tpu.vector_store %arg14[%c0_42, %c0_43], %330 {strides = array<i32>} : memref<256x128xf32, #tpu.memory_space<vmem>>, vector<256x128xf32>,
    return
  }
  func.func @transform_0(%arg0: i32) -> (i32, i32) {
    %c0_i32 = arith.constant 0 : i32
    %c0_i32_0 = arith.constant 0 : i32
    return %arg0, %c0_i32 : i32, i32
  }
  func.func @transform_1(%arg0: i32) -> (i32, i32) {
    %c0_i32 = arith.constant 0 : i32
    %c0_i32_0 = arith.constant 0 : i32
    %c0_i32_1 = arith.constant 0 : i32
    return %c0_i32, %c0_i32_0 : i32, i32
  }
  func.func @transform_2(%arg0: i32) -> (i32, i32) {
    %c0_i32 = arith.constant 0 : i32
    %c0_i32_0 = arith.constant 0 : i32
    %c0_i32_1 = arith.constant 0 : i32
    return %c0_i32, %c0_i32_0 : i32, i32
  }
  func.func @transform_3(%arg0: i32) -> (i32, i32) {
    %c0_i32 = arith.constant 0 : i32
    %c0_i32_0 = arith.constant 0 : i32
    %c0_i32_1 = arith.constant 0 : i32
    return %c0_i32, %c0_i32_0 : i32, i32
  }
  func.func @transform_4(%arg0: i32) -> (i32, i32) {
    %c0_i32 = arith.constant 0 : i32
    %c0_i32_0 = arith.constant 0 : i32
    %c0_i32_1 = arith.constant 0 : i32
    return %c0_i32, %c0_i32_0 : i32, i32
  }
  func.func @transform_5(%arg0: i32) -> (i32, i32) {
    %c0_i32 = arith.constant 0 : i32
    %c0_i32_0 = arith.constant 0 : i32
    %c0_i32_1 = arith.constant 0 : i32
    return %c0_i32, %c0_i32_0 : i32, i32
  }
  func.func @transform_6(%arg0: i32) -> (i32, i32) {
    %c0_i32 = arith.constant 0 : i32
    %c0_i32_0 = arith.constant 0 : i32
    %c0_i32_1 = arith.constant 0 : i32
    return %c0_i32, %c0_i32_0 : i32, i32
  }
  func.func @transform_7(%arg0: i32) -> (i32, i32) {
    %c0_i32 = arith.constant 0 : i32
    %c0_i32_0 = arith.constant 0 : i32
    %c0_i32_1 = arith.constant 0 : i32
    return %c0_i32, %c0_i32_0 : i32, i32
  }
  func.func @transform_8(%arg0: i32) -> (i32, i32) {
    %c0_i32 = arith.constant 0 : i32
    %c0_i32_0 = arith.constant 0 : i32
    %c0_i32_1 = arith.constant 0 : i32
    return %c0_i32, %c0_i32_0 : i32, i32
  }
  func.func @transform_9(%arg0: i32) -> (i32, i32) {
    %c0_i32 = arith.constant 0 : i32
    %c0_i32_0 = arith.constant 0 : i32
    %c0_i32_1 = arith.constant 0 : i32
    return %c0_i32, %c0_i32_0 : i32, i32
  }
  func.func @transform_10(%arg0: i32) -> (i32, i32) {
    %c0_i32 = arith.constant 0 : i32
    %c0_i32_0 = arith.constant 0 : i32
    %c0_i32_1 = arith.constant 0 : i32
    return %c0_i32, %c0_i32_0 : i32, i32
  }
  func.func @transform_11(%arg0: i32) -> (i32, i32) {
    %c0_i32 = arith.constant 0 : i32
    %c0_i32_0 = arith.constant 0 : i32
    %c0_i32_1 = arith.constant 0 : i32
    return %c0_i32, %c0_i32_0 : i32, i32
  }
  func.func @transform_12(%arg0: i32) -> (i32, i32) {
    %c0_i32 = arith.constant 0 : i32
    %c0_i32_0 = arith.constant 0 : i32
    %c0_i32_1 = arith.constant 0 : i32
    return %c0_i32, %c0_i32_0 : i32, i32
  }
  func.func @transform_13(%arg0: i32) -> (i32, i32) {
    %c0_i32 = arith.constant 0 : i32
    %c0_i32_0 = arith.constant 0 : i32
    return %arg0, %c0_i32 : i32, i32
  }
}

</mosaic_0001>

<llo_original>
// kernel: tpu_custom_call.1
$region0: #{tpu_custom_call.1}
  #allocation0 [shape = 'u32[]', space=smem, size = 0x4, offset = 0x4, fixed_abs, tag = 'smem constant byte address 0x4 - core index']
  #allocation1 [shape = 'u32[144,128]{1,0:T(1,128)}', space=vmem, size = 0x12000, scoped, tag = 'internal scratch']
  %s0 = inlined_call_operand.hbm [shape: f32[512,128], index: 0, kind: input, shape index: {}]
  %s1 = inlined_call_operand.hbm [shape: f32[1,128], index: 1, kind: input, shape index: {}]
  %s2 = inlined_call_operand.hbm [shape: f32[1,128], index: 2, kind: input, shape index: {}]
  %s3 = inlined_call_operand.hbm [shape: f32[384,128], index: 3, kind: input, shape index: {}]
  %s4 = inlined_call_operand.hbm [shape: f32[384,1], index: 4, kind: input, shape index: {}]
  %s5 = inlined_call_operand.hbm [shape: f32[128,128], index: 5, kind: input, shape index: {}]
  %s6 = inlined_call_operand.hbm [shape: f32[1,128], index: 6, kind: input, shape index: {}]
  %s7 = inlined_call_operand.hbm [shape: f32[1,128], index: 7, kind: input, shape index: {}]
  %s8 = inlined_call_operand.hbm [shape: f32[1,128], index: 8, kind: input, shape index: {}]
  %s9 = inlined_call_operand.hbm [shape: f32[128,512], index: 9, kind: input, shape index: {}]
  %s10 = inlined_call_operand.hbm [shape: f32[1,512], index: 10, kind: input, shape index: {}]
  %s11 = inlined_call_operand.hbm [shape: f32[512,128], index: 11, kind: input, shape index: {}]
  %s12 = inlined_call_operand.hbm [shape: f32[1,128], index: 12, kind: input, shape index: {}]
  %s13 = inlined_call_operand.hbm [shape: f32[512,128], index: 13, kind: output, shape index: {}]
  %s14 = sld [smem:[#allocation0]]
  $region137: #{tpu_custom_call.1} parent=0
    _
  %s16 = ssub.s32 1, %s14
  %s17 = scalar_select 0, %s16, %s14
  $region1: #{tpu_custom_call.1} parent=0
    #allocation2 [shape = 'u8[262144]{0}', space=vmem, size = 0x40000, scoped, tag = 'input window, operand 0']
    #allocation3 [shape = 's32[2]{0}', space=sflag, size = 0x8, scoped, tag = 'scoped memory for tpu_custom_call.1']
    #allocation4 [shape = 's32[2]{0}', space=sflag, size = 0x8, scoped, tag = 'scoped memory for tpu_custom_call.1']
    #allocation5 [shape = 'u8[512]{0}', space=vmem, size = 0x400, scoped, tag = 'input window, operand 1, single buffered']
    #allocation6 [shape = 's32[1]{0}', space=sflag, size = 0x4, scoped, tag = 'scoped memory for tpu_custom_call.1']
    #allocation7 [shape = 'u8[512]{0}', space=vmem, size = 0x400, scoped, tag = 'input window, operand 2, single buffered']
    #allocation8 [shape = 'u8[196608]{0}', space=vmem, size = 0x30000, scoped, tag = 'input window, operand 3, single buffered']
    #allocation9 [shape = 's32[1]{0}', space=sflag, size = 0x4, scoped, tag = 'scoped memory for tpu_custom_call.1']
    #allocation10 [shape = 'u8[196608]{0}', space=vmem, size = 0x30000, scoped, tag = 'input window, operand 4, single buffered']
    #allocation11 [shape = 'u8[65536]{0}', space=vmem, size = 0x10000, scoped, tag = 'input window, operand 5, single buffered']
    #allocation12 [shape = 's32[1]{0}', space=sflag, size = 0x4, scoped, tag = 'scoped memory for tpu_custom_call.1']
    #allocation13 [shape = 'u8[512]{0}', space=vmem, size = 0x400, scoped, tag = 'input window, operand 6, single buffered']
    #allocation14 [shape = 'u8[512]{0}', space=vmem, size = 0x400, scoped, tag = 'input window, operand 7, single buffered']
    #allocation15 [shape = 's32[1]{0}', space=sflag, size = 0x4, scoped, tag = 'scoped memory for tpu_custom_call.1']
    #allocation16 [shape = 'u8[512]{0}', space=vmem, size = 0x400, scoped, tag = 'input window, operand 8, single buffered']
    #allocation17 [shape = 'u8[262144]{0}', space=vmem, size = 0x40000, scoped, tag = 'input window, operand 9, single buffered']
    #allocation18 [shape = 's32[1]{0}', space=sflag, size = 0x4, scoped, tag = 'scoped memory for tpu_custom_call.1']
    #allocation19 [shape = 'u8[2048]{0}', space=vmem, size = 0x800, scoped, tag = 'input window, operand 10, single buffered']
    #allocation20 [shape = 'u8[262144]{0}', space=vmem, size = 0x40000, scoped, tag = 'input window, operand 11, single buffered']
    #allocation21 [shape = 's32[1]{0}', space=sflag, size = 0x4, scoped, tag = 'scoped memory for tpu_custom_call.1']
    #allocation22 [shape = 'u8[512]{0}', space=vmem, size = 0x400, scoped, tag = 'input window, operand 12, single buffered']
    #allocation23 [shape = 'u8[262144]{0}', space=vmem, size = 0x40000, scoped, tag = 'output window, operand 0']
    %18 = vsyncpa [#allocation3], 0
    %s19 = scalar_lea.sflag [#allocation3], 1
    %20 = vsyncpa %s19, 0
    %21 = vsyncpa [#allocation6], 0
    %22 = vsyncpa [#allocation9], 0
    %23 = vsyncpa [#allocation12], 0
    %24 = vsyncpa [#allocation15], 0
    %25 = vsyncpa [#allocation18], 0
    %26 = vsyncpa [#allocation21], 0
    %27 = vsyncpa [#allocation4], 0
    %s28 = scalar_lea.sflag [#allocation4], 1
    %29 = vsyncpa %s28, 0
    loop: start=0, step=1, limit=4
    $region2: #{tpu_custom_call.1} parent=1 // loop_pre_header
      _
    $region3: #{tpu_custom_call.1} parent=1 // loop_header
      %s31 = sphi 0, %s35
      %p32 = scmp.ge.s32.totalorder %s31, 4
      %s41 = sphi 0, %s43
      %s44 = sphi 0, %s41
      %s45 = sphi 0, %s44
      %s61 = sphi 0, %s45
      %s65 = sphi 0, %s65
      %s67 = sphi 0, %s65
      %s68 = sphi 0, %s67
      %s82 = sphi 0, %s68
      %s86 = sphi 0, %s86
      %s88 = sphi 0, %s86
      %s89 = sphi 0, %s88
      %s103 = sphi 0, %s89
      %s107 = sphi 0, %s107
      %s109 = sphi 0, %s107
      %s110 = sphi 0, %s109
      %s124 = sphi 0, %s110
      %s128 = sphi 0, %s128
      %s130 = sphi 0, %s128
      %s131 = sphi 0, %s130
      %s145 = sphi 0, %s131
      %s149 = sphi 0, %s149
      %s151 = sphi 0, %s149
      %s152 = sphi 0, %s151
      %s166 = sphi 0, %s152
      %s170 = sphi 0, %s170
      %s172 = sphi 0, %s170
      %s173 = sphi 0, %s172
      %s187 = sphi 0, %s173
      %s191 = sphi 0, %s191
      %s193 = sphi 0, %s191
      %s194 = sphi 0, %s193
      %s208 = sphi 0, %s194
      %s212 = sphi 0, %s212
      %s214 = sphi 0, %s212
      %s215 = sphi 0, %s214
      %s229 = sphi 0, %s215
      %s233 = sphi 0, %s233
      %s235 = sphi 0, %s233
      %s236 = sphi 0, %s235
      %s250 = sphi 0, %s236
      %s254 = sphi 0, %s254
      %s256 = sphi 0, %s254
      %s257 = sphi 0, %s256
      %s271 = sphi 0, %s257
      %s275 = sphi 0, %s275
      %s277 = sphi 0, %s275
      %s278 = sphi 0, %s277
      %s292 = sphi 0, %s278
      %s296 = sphi 0, %s296
      %s298 = sphi 0, %s296
      %s299 = sphi 0, %s298
      %s313 = sphi 0, %s299
      %s319 = sphi 0, %s321
      %s322 = sphi 0, %s319
      %s323 = sphi 0, %s322
      %s339 = sphi 0, %s323
    $region4: #{tpu_custom_call.1} parent=1 // loop_header_branch
      %34 = sbr.rel (%p32) target = $region8
    $region5: #{tpu_custom_call.1} parent=1 // loop_body
      %s36 = ssub.s32 %s31, 1
      %s37 = ssub.s32 %s31, 2
      %s38 = sadd.s32 %s31, 1
      %s39 = ssub.s32 %s31, %s38
      %p40 = scmp.eq.s32.totalorder %s39, 0
      %s42 = sadd.s32 %s41, 1
      %s43 = scalar_select %p40, %s41, %s42
      %p46 = pneg %p40
      %p47 = scmp.eq.s32.totalorder %s31, 1
      %p48 = por %p46, %p47
      %p49 = scmp.ne.s32.totalorder %s41, %s44
      %p50 = scmp.eq.s32.totalorder %s31, 0
      %p51 = por %p49, %p50
      %p52 = scmp.ne.s32.totalorder %s41, %s44
      %p53 = scmp.eq.s32.totalorder %s36, 1
      %p54 = por %p52, %p53
      %p55 = scmp.ne.s32.totalorder %s44, %s45
      %p56 = scmp.eq.s32.totalorder %s36, 0
      %p57 = por %p55, %p56
      %p58 = scmp.ne.s32.totalorder %s44, %s45
      %p59 = scmp.eq.s32.totalorder %s37, 1
      %p60 = por %p58, %p59
      %p62 = scmp.ne.s32.totalorder %s45, %s61
      %p63 = scmp.eq.s32.totalorder %s37, 0
      %p64 = por %p62, %p63
      %s66 = sadd.s32 %s65, 1
      %p69 = scmp.eq.s32.totalorder %s31, 1
      %p70 = scmp.ne.s32.totalorder %s65, %s67
      %p71 = scmp.eq.s32.totalorder %s31, 0
      %p72 = por %p70, %p71
      %p73 = scmp.ne.s32.totalorder %s65, %s67
      %p74 = scmp.eq.s32.totalorder %s36, 1
      %p75 = por %p73, %p74
      %p76 = scmp.ne.s32.totalorder %s67, %s68
      %p77 = scmp.eq.s32.totalorder %s36, 0
      %p78 = por %p76, %p77
      %p79 = scmp.ne.s32.totalorder %s67, %s68
      %p80 = scmp.eq.s32.totalorder %s37, 1
      %p81 = por %p79, %p80
      %p83 = scmp.ne.s32.totalorder %s68, %s82
      %p84 = scmp.eq.s32.totalorder %s37, 0
      %p85 = por %p83, %p84
      %s87 = sadd.s32 %s86, 1
      %p90 = scmp.eq.s32.totalorder %s31, 1
      %p91 = scmp.ne.s32.totalorder %s86, %s88
      %p92 = scmp.eq.s32.totalorder %s31, 0
      %p93 = por %p91, %p92
      %p94 = scmp.ne.s32.totalorder %s86, %s88
      %p95 = scmp.eq.s32.totalorder %s36, 1
      %p96 = por %p94, %p95
      %p97 = scmp.ne.s32.totalorder %s88, %s89
      %p98 = scmp.eq.s32.totalorder %s36, 0
      %p99 = por %p97, %p98
      %p100 = scmp.ne.s32.totalorder %s88, %s89
      %p101 = scmp.eq.s32.totalorder %s37, 1
      %p102 = por %p100, %p101
      %p104 = scmp.ne.s32.totalorder %s89, %s103
      %p105 = scmp.eq.s32.totalorder %s37, 0
      %p106 = por %p104, %p105
      %s108 = sadd.s32 %s107, 1
      %p111 = scmp.eq.s32.totalorder %s31, 1
      %p112 = scmp.ne.s32.totalorder %s107, %s109
      %p113 = scmp.eq.s32.totalorder %s31, 0
      %p114 = por %p112, %p113
      %p115 = scmp.ne.s32.totalorder %s107, %s109
      %p116 = scmp.eq.s32.totalorder %s36, 1
      %p117 = por %p115, %p116
      %p118 = scmp.ne.s32.totalorder %s109, %s110
      %p119 = scmp.eq.s32.totalorder %s36, 0
      %p120 = por %p118, %p119
      %p121 = scmp.ne.s32.totalorder %s109, %s110
      %p122 = scmp.eq.s32.totalorder %s37, 1
      %p123 = por %p121, %p122
      %p125 = scmp.ne.s32.totalorder %s110, %s124
      %p126 = scmp.eq.s32.totalorder %s37, 0
      %p127 = por %p125, %p126
      %s129 = sadd.s32 %s128, 1
      %p132 = scmp.eq.s32.totalorder %s31, 1
      %p133 = scmp.ne.s32.totalorder %s128, %s130
      %p134 = scmp.eq.s32.totalorder %s31, 0
      %p135 = por %p133, %p134
      %p136 = scmp.ne.s32.totalorder %s128, %s130
      %p137 = scmp.eq.s32.totalorder %s36, 1
      %p138 = por %p136, %p137
      %p139 = scmp.ne.s32.totalorder %s130, %s131
      %p140 = scmp.eq.s32.totalorder %s36, 0
      %p141 = por %p139, %p140
      %p142 = scmp.ne.s32.totalorder %s130, %s131
      %p143 = scmp.eq.s32.totalorder %s37, 1
      %p144 = por %p142, %p143
      %p146 = scmp.ne.s32.totalorder %s131, %s145
      %p147 = scmp.eq.s32.totalorder %s37, 0
      %p148 = por %p146, %p147
      %s150 = sadd.s32 %s149, 1
      %p153 = scmp.eq.s32.totalorder %s31, 1
      %p154 = scmp.ne.s32.totalorder %s149, %s151
      %p155 = scmp.eq.s32.totalorder %s31, 0
      %p156 = por %p154, %p155
      %p157 = scmp.ne.s32.totalorder %s149, %s151
      %p158 = scmp.eq.s32.totalorder %s36, 1
      %p159 = por %p157, %p158
      %p160 = scmp.ne.s32.totalorder %s151, %s152
      %p161 = scmp.eq.s32.totalorder %s36, 0
      %p162 = por %p160, %p161
      %p163 = scmp.ne.s32.totalorder %s151, %s152
      %p164 = scmp.eq.s32.totalorder %s37, 1
      %p165 = por %p163, %p164
      %p167 = scmp.ne.s32.totalorder %s152, %s166
      %p168 = scmp.eq.s32.totalorder %s37, 0
      %p169 = por %p167, %p168
      %s171 = sadd.s32 %s170, 1
      %p174 = scmp.eq.s32.totalorder %s31, 1
      %p175 = scmp.ne.s32.totalorder %s170, %s172
      %p176 = scmp.eq.s32.totalorder %s31, 0
      %p177 = por %p175, %p176
      %p178 = scmp.ne.s32.totalorder %s170, %s172
      %p179 = scmp.eq.s32.totalorder %s36, 1
      %p180 = por %p178, %p179
      %p181 = scmp.ne.s32.totalorder %s172, %s173
      %p182 = scmp.eq.s32.totalorder %s36, 0
      %p183 = por %p181, %p182
      %p184 = scmp.ne.s32.totalorder %s172, %s173
      %p185 = scmp.eq.s32.totalorder %s37, 1
      %p186 = por %p184, %p185
      %p188 = scmp.ne.s32.totalorder %s173, %s187
      %p189 = scmp.eq.s32.totalorder %s37, 0
      %p190 = por %p188, %p189
      %s192 = sadd.s32 %s191, 1
      %p195 = scmp.eq.s32.totalorder %s31, 1
      %p196 = scmp.ne.s32.totalorder %s191, %s193
      %p197 = scmp.eq.s32.totalorder %s31, 0
      %p198 = por %p196, %p197
      %p199 = scmp.ne.s32.totalorder %s191, %s193
      %p200 = scmp.eq.s32.totalorder %s36, 1
      %p201 = por %p199, %p200
      %p202 = scmp.ne.s32.totalorder %s193, %s194
      %p203 = scmp.eq.s32.totalorder %s36, 0
      %p204 = por %p202, %p203
      %p205 = scmp.ne.s32.totalorder %s193, %s194
      %p206 = scmp.eq.s32.totalorder %s37, 1
      %p207 = por %p205, %p206
      %p209 = scmp.ne.s32.totalorder %s194, %s208
      %p210 = scmp.eq.s32.totalorder %s37, 0
      %p211 = por %p209, %p210
      %s213 = sadd.s32 %s212, 1
      %p216 = scmp.eq.s32.totalorder %s31, 1
      %p217 = scmp.ne.s32.totalorder %s212, %s214
      %p218 = scmp.eq.s32.totalorder %s31, 0
      %p219 = por %p217, %p218
      %p220 = scmp.ne.s32.totalorder %s212, %s214
      %p221 = scmp.eq.s32.totalorder %s36, 1
      %p222 = por %p220, %p221
      %p223 = scmp.ne.s32.totalorder %s214, %s215
      %p224 = scmp.eq.s32.totalorder %s36, 0
      %p225 = por %p223, %p224
      %p226 = scmp.ne.s32.totalorder %s214, %s215
      %p227 = scmp.eq.s32.totalorder %s37, 1
      %p228 = por %p226, %p227
      %p230 = scmp.ne.s32.totalorder %s215, %s229
      %p231 = scmp.eq.s32.totalorder %s37, 0
      %p232 = por %p230, %p231
      %s234 = sadd.s32 %s233, 1
      %p237 = scmp.eq.s32.totalorder %s31, 1
      %p238 = scmp.ne.s32.totalorder %s233, %s235
      %p239 = scmp.eq.s32.totalorder %s31, 0
      %p240 = por %p238, %p239
      %p241 = scmp.ne.s32.totalorder %s233, %s235
      %p242 = scmp.eq.s32.totalorder %s36, 1
      %p243 = por %p241, %p242
      %p244 = scmp.ne.s32.totalorder %s235, %s236
      %p245 = scmp.eq.s32.totalorder %s36, 0
      %p246 = por %p244, %p245
      %p247 = scmp.ne.s32.totalorder %s235, %s236
      %p248 = scmp.eq.s32.totalorder %s37, 1
      %p249 = por %p247, %p248
      %p251 = scmp.ne.s32.totalorder %s236, %s250
      %p252 = scmp.eq.s32.totalorder %s37, 0
      %p253 = por %p251, %p252
      %s255 = sadd.s32 %s254, 1
      %p258 = scmp.eq.s32.totalorder %s31, 1
      %p259 = scmp.ne.s32.totalorder %s254, %s256
      %p260 = scmp.eq.s32.totalorder %s31, 0
      %p261 = por %p259, %p260
      %p262 = scmp.ne.s32.totalorder %s254, %s256
      %p263 = scmp.eq.s32.totalorder %s36, 1
      %p264 = por %p262, %p263
      %p265 = scmp.ne.s32.totalorder %s256, %s257
      %p266 = scmp.eq.s32.totalorder %s36, 0
      %p267 = por %p265, %p266
      %p268 = scmp.ne.s32.totalorder %s256, %s257
      %p269 = scmp.eq.s32.totalorder %s37, 1
      %p270 = por %p268, %p269
      %p272 = scmp.ne.s32.totalorder %s257, %s271
      %p273 = scmp.eq.s32.totalorder %s37, 0
      %p274 = por %p272, %p273
      %s276 = sadd.s32 %s275, 1
      %p279 = scmp.eq.s32.totalorder %s31, 1
      %p280 = scmp.ne.s32.totalorder %s275, %s277
      %p281 = scmp.eq.s32.totalorder %s31, 0
      %p282 = por %p280, %p281
      %p283 = scmp.ne.s32.totalorder %s275, %s277
      %p284 = scmp.eq.s32.totalorder %s36, 1
      %p285 = por %p283, %p284
      %p286 = scmp.ne.s32.totalorder %s277, %s278
      %p287 = scmp.eq.s32.totalorder %s36, 0
      %p288 = por %p286, %p287
      %p289 = scmp.ne.s32.totalorder %s277, %s278
      %p290 = scmp.eq.s32.totalorder %s37, 1
      %p291 = por %p289, %p290
      %p293 = scmp.ne.s32.totalorder %s278, %s292
      %p294 = scmp.eq.s32.totalorder %s37, 0
      %p295 = por %p293, %p294
      %s297 = sadd.s32 %s296, 1
      %p300 = scmp.eq.s32.totalorder %s31, 1
      %p301 = scmp.ne.s32.totalorder %s296, %s298
      %p302 = scmp.eq.s32.totalorder %s31, 0
      %p303 = por %p301, %p302
      %p304 = scmp.ne.s32.totalorder %s296, %s298
      %p305 = scmp.eq.s32.totalorder %s36, 1
      %p306 = por %p304, %p305
      %p307 = scmp.ne.s32.totalorder %s298, %s299
      %p308 = scmp.eq.s32.totalorder %s36, 0
      %p309 = por %p307, %p308
      %p310 = scmp.ne.s32.totalorder %s298, %s299
      %p311 = scmp.eq.s32.totalorder %s37, 1
      %p312 = por %p310, %p311
      %p314 = scmp.ne.s32.totalorder %s299, %s313
      %p315 = scmp.eq.s32.totalorder %s37, 0
      %p316 = por %p314, %p315
      %s317 = ssub.s32 %s31, %s38
      %p318 = scmp.eq.s32.totalorder %s317, 0
      %s320 = sadd.s32 %s319, 1
      %s321 = scalar_select %p318, %s319, %s320
      %p324 = pneg %p318
      %p325 = scmp.eq.s32.totalorder %s31, 1
      %p326 = por %p324, %p325
      %p327 = scmp.ne.s32.totalorder %s319, %s322
      %p328 = scmp.eq.s32.totalorder %s31, 0
      %p329 = por %p327, %p328
      %p330 = scmp.ne.s32.totalorder %s319, %s322
      %p331 = scmp.eq.s32.totalorder %s36, 1
      %p332 = por %p330, %p331
      %p333 = scmp.ne.s32.totalorder %s322, %s323
      %p334 = scmp.eq.s32.totalorder %s36, 0
      %p335 = por %p333, %p334
      %p336 = scmp.ne.s32.totalorder %s322, %s323
      %p337 = scmp.eq.s32.totalorder %s37, 1
      %p338 = por %p336, %p337
      %p340 = scmp.ne.s32.totalorder %s323, %s339
      %p341 = scmp.eq.s32.totalorder %s37, 0
      %p342 = por %p340, %p341
      %p343 = scmp.le.s32.totalorder 1, %s31
      %p344 = scmp.lt.s32.totalorder %s31, 3
      %p345 = pnand %p343, %p344
      %p346 = pneg %p345
      // Predicated region
      $region9: #{tpu_custom_call.1} parent=5 // pred_check
        _
      $region10: #{tpu_custom_call.1} parent=5 // pred_check_branch
        %348 = sbr.rel (%p345) target = $region12
      $region11: #{tpu_custom_call.1} parent=5 // pred_region
        %s349 = ssub.s32 %s31, 1
        // Predicated region
        $region13: #{tpu_custom_call.1} parent=11 // pred_check
          %p350 = pneg %p78
        $region14: #{tpu_custom_call.1} parent=11 // pred_check_branch
          %352 = sbr.rel (%p350) target = $region16
        $region15: #{tpu_custom_call.1} parent=11 // pred_region
          %s354 = ssub.s32 16, 16
          %355 = vsyncadd [#allocation6], %s354
          %s357 = sshll.u32 [#allocation5], 4
          %s358 = int_to_ptr.vmem [resolvable:$true] %s357
          %360 = dma.hbm_to_vmem [thread:$0]  %s1, 16, %s358, [#allocation6]
        $region16: #{tpu_custom_call.1} parent=11 // pred_fallthru
          _
        // Predicated region
        $region17: #{tpu_custom_call.1} parent=11 // pred_check
          %p361 = pneg %p99
        $region18: #{tpu_custom_call.1} parent=11 // pred_check_branch
          %363 = sbr.rel (%p361) target = $region20
        $region19: #{tpu_custom_call.1} parent=11 // pred_region
          %s365 = ssub.s32 16, 16
          %366 = vsyncadd [#allocation6], %s365
          %s368 = sshll.u32 [#allocation7], 4
          %s369 = int_to_ptr.vmem [resolvable:$true] %s368
          %371 = dma.hbm_to_vmem [thread:$0]  %s2, 16, %s369, [#allocation6]
        $region20: #{tpu_custom_call.1} parent=11 // pred_fallthru
          _
        // Predicated region
        $region21: #{tpu_custom_call.1} parent=11 // pred_check
          %p372 = pneg %p120
        $region22: #{tpu_custom_call.1} parent=11 // pred_check_branch
          %374 = sbr.rel (%p372) target = $region24
        $region23: #{tpu_custom_call.1} parent=11 // pred_region
          %s376 = ssub.s32 6144, 6144
          %377 = vsyncadd [#allocation9], %s376
          %s378 = sshll.u32 [#allocation8], 4
          %s379 = int_to_ptr.vmem [resolvable:$true] %s378
          %384 = dma.hbm_to_vmem [thread:$0]  %s3, 6144, %s379, [#allocation9], 128, 128, 8
        $region24: #{tpu_custom_call.1} parent=11 // pred_fallthru
          _
        // Predicated region
        $region25: #{tpu_custom_call.1} parent=11 // pred_check
          %p385 = pneg %p141
        $region26: #{tpu_custom_call.1} parent=11 // pred_check_branch
          %387 = sbr.rel (%p385) target = $region28
        $region27: #{tpu_custom_call.1} parent=11 // pred_region
          %s389 = ssub.s32 6144, 6144
          %390 = vsyncadd [#allocation9], %s389
          %s391 = sshll.u32 [#allocation10], 4
          %s392 = int_to_ptr.vmem [resolvable:$true] %s391
          %397 = dma.hbm_to_vmem [thread:$0]  %s4, 6144, %s392, [#allocation9], 128, 128, 8
        $region28: #{tpu_custom_call.1} parent=11 // pred_fallthru
          _
        // Predicated region
        $region29: #{tpu_custom_call.1} parent=11 // pred_check
          %p398 = pneg %p162
        $region30: #{tpu_custom_call.1} parent=11 // pred_check_branch
          %400 = sbr.rel (%p398) target = $region32
        $region31: #{tpu_custom_call.1} parent=11 // pred_region
          %s402 = ssub.s32 2048, 2048
          %403 = vsyncadd [#allocation12], %s402
          %s404 = sshll.u32 [#allocation11], 4
          %s405 = int_to_ptr.vmem [resolvable:$true] %s404
          %410 = dma.hbm_to_vmem [thread:$0]  %s5, 2048, %s405, [#allocation12], 128, 128, 8
        $region32: #{tpu_custom_call.1} parent=11 // pred_fallthru
          _
        // Predicated region
        $region33: #{tpu_custom_call.1} parent=11 // pred_check
          %p411 = pneg %p183
        $region34: #{tpu_custom_call.1} parent=11 // pred_check_branch
          %413 = sbr.rel (%p411) target = $region36
        $region35: #{tpu_custom_call.1} parent=11 // pred_region
          %s415 = ssub.s32 16, 16
          %416 = vsyncadd [#allocation12], %s415
          %s418 = sshll.u32 [#allocation13], 4
          %s419 = int_to_ptr.vmem [resolvable:$true] %s418
          %421 = dma.hbm_to_vmem [thread:$0]  %s6, 16, %s419, [#allocation12]
        $region36: #{tpu_custom_call.1} parent=11 // pred_fallthru
          _
        // Predicated region
        $region37: #{tpu_custom_call.1} parent=11 // pred_check
          %p422 = pneg %p204
        $region38: #{tpu_custom_call.1} parent=11 // pred_check_branch
          %424 = sbr.rel (%p422) target = $region40
        $region39: #{tpu_custom_call.1} parent=11 // pred_region
          %s426 = ssub.s32 16, 16
          %427 = vsyncadd [#allocation15], %s426
          %s429 = sshll.u32 [#allocation14], 4
          %s430 = int_to_ptr.vmem [resolvable:$true] %s429
          %432 = dma.hbm_to_vmem [thread:$0]  %s7, 16, %s430, [#allocation15]
        $region40: #{tpu_custom_call.1} parent=11 // pred_fallthru
          _
        // Predicated region
        $region41: #{tpu_custom_call.1} parent=11 // pred_check
          %p433 = pneg %p225
        $region42: #{tpu_custom_call.1} parent=11 // pred_check_branch
          %435 = sbr.rel (%p433) target = $region44
        $region43: #{tpu_custom_call.1} parent=11 // pred_region
          %s437 = ssub.s32 16, 16
          %438 = vsyncadd [#allocation15], %s437
          %s440 = sshll.u32 [#allocation16], 4
          %s441 = int_to_ptr.vmem [resolvable:$true] %s440
          %443 = dma.hbm_to_vmem [thread:$0]  %s8, 16, %s441, [#allocation15]
        $region44: #{tpu_custom_call.1} parent=11 // pred_fallthru
          _
        // Predicated region
        $region45: #{tpu_custom_call.1} parent=11 // pred_check
          %p444 = pneg %p246
        $region46: #{tpu_custom_call.1} parent=11 // pred_check_branch
          %446 = sbr.rel (%p444) target = $region48
        $region47: #{tpu_custom_call.1} parent=11 // pred_region
          %s448 = ssub.s32 8192, 8192
          %449 = vsyncadd [#allocation18], %s448
          %s450 = sshll.u32 [#allocation17], 4
          %s451 = int_to_ptr.vmem [resolvable:$true] %s450
          %456 = dma.hbm_to_vmem [thread:$0]  %s9, 8192, %s451, [#allocation18], 512, 512, 32
        $region48: #{tpu_custom_call.1} parent=11 // pred_fallthru
          _
        // Predicated region
        $region49: #{tpu_custom_call.1} parent=11 // pred_check
          %p457 = pneg %p267
        $region50: #{tpu_custom_call.1} parent=11 // pred_check_branch
          %459 = sbr.rel (%p457) target = $region52
        $region51: #{tpu_custom_call.1} parent=11 // pred_region
          %s461 = ssub.s32 64, 64
          %462 = vsyncadd [#allocation18], %s461
          %s464 = sshll.u32 [#allocation19], 4
          %s465 = int_to_ptr.vmem [resolvable:$true] %s464
          %467 = dma.hbm_to_vmem [thread:$0]  %s10, 64, %s465, [#allocation18]
        $region52: #{tpu_custom_call.1} parent=11 // pred_fallthru
          _
        // Predicated region
        $region53: #{tpu_custom_call.1} parent=11 // pred_check
          %p468 = pneg %p288
        $region54: #{tpu_custom_call.1} parent=11 // pred_check_branch
          %470 = sbr.rel (%p468) target = $region56
        $region55: #{tpu_custom_call.1} parent=11 // pred_region
          %s472 = ssub.s32 8192, 8192
          %473 = vsyncadd [#allocation21], %s472
          %s474 = sshll.u32 [#allocation20], 4
          %s475 = int_to_ptr.vmem [resolvable:$true] %s474
          %480 = dma.hbm_to_vmem [thread:$0]  %s11, 8192, %s475, [#allocation21], 128, 128, 8
        $region56: #{tpu_custom_call.1} parent=11 // pred_fallthru
          _
        // Predicated region
        $region57: #{tpu_custom_call.1} parent=11 // pred_check
          %p481 = pneg %p309
        $region58: #{tpu_custom_call.1} parent=11 // pred_check_branch
          %483 = sbr.rel (%p481) target = $region60
        $region59: #{tpu_custom_call.1} parent=11 // pred_region
          %s485 = ssub.s32 16, 16
          %486 = vsyncadd [#allocation21], %s485
          %s488 = sshll.u32 [#allocation22], 4
          %s489 = int_to_ptr.vmem [resolvable:$true] %s488
          %491 = dma.hbm_to_vmem [thread:$0]  %s12, 16, %s489, [#allocation21]
        $region60: #{tpu_custom_call.1} parent=11 // pred_fallthru
          _
      $region12: #{tpu_custom_call.1} parent=5 // pred_fallthru
        _
      %p492 = scmp.lt.s32.totalorder %s31, 2
      // Predicated region
      $region61: #{tpu_custom_call.1} parent=5 // pred_check
        %p493 = pneg %p492
      $region62: #{tpu_custom_call.1} parent=5 // pred_check_branch
        %495 = sbr.rel (%p493) target = $region64
      $region63: #{tpu_custom_call.1} parent=5 // pred_region
        // Predicated region
        $region65: #{tpu_custom_call.1} parent=63 // pred_check
          %p496 = pneg %p51
        $region66: #{tpu_custom_call.1} parent=63 // pred_check_branch
          %498 = sbr.rel (%p496) target = $region68
        $region67: #{tpu_custom_call.1} parent=63 // pred_region
          %s499 = sand.u32 %s41, 1
          %s500 = scalar_lea.sflag [#allocation3], %s499
          %s501 = sand.u32 %s41, 1
          %s502 = smul.addr %s501, 256
          %s503 = scalar_lea.vmem [#allocation2], %s502
          %s504 = smul.u32 32, %s31
          %s506 = ssub.s32 4096, 4096
          %507 = vsyncadd %s500, %s506
          %s508 = smul.addr %s504, 128
          %s509 = scalar_lea.hbm %s0, %s508
          %s510 = sshll.u32 %s503, 4
          %s511 = int_to_ptr.vmem [resolvable:$true] %s510
          %516 = dma.hbm_to_vmem [thread:$0]  %s509, 4096, %s511, %s500, 128, 128, 8
        $region68: #{tpu_custom_call.1} parent=63 // pred_fallthru
          _
      $region64: #{tpu_custom_call.1} parent=5 // pred_fallthru
        _
      %p517 = scmp.le.s32.totalorder 1, %s31
      %p518 = scmp.lt.s32.totalorder %s31, 3
      %p519 = pnand %p517, %p518
      %p520 = pneg %p519
      // Predicated region
      $region69: #{tpu_custom_call.1} parent=5 // pred_check
        _
      $region70: #{tpu_custom_call.1} parent=5 // pred_check_branch
        %522 = sbr.rel (%p519) target = $region72
      $region71: #{tpu_custom_call.1} parent=5 // pred_region
        %s523 = ssub.s32 %s31, 1
        %s524 = sand.u32 %s44, 1
        %s525 = scalar_lea.sflag [#allocation3], %s524
        %s526 = sand.u32 %s44, 1
        %s527 = smul.addr %s526, 256
        %s528 = scalar_lea.vmem [#allocation2], %s527
        // Predicated region
        $region73: #{tpu_custom_call.1} parent=71 // pred_check
          %p529 = pneg %p57
        $region74: #{tpu_custom_call.1} parent=71 // pred_check_branch
          %531 = sbr.rel (%p529) target = $region76
        $region75: #{tpu_custom_call.1} parent=71 // pred_region
          %532 = dma.done %s525, 4096
        $region76: #{tpu_custom_call.1} parent=71 // pred_fallthru
          _
        // Predicated region
        $region77: #{tpu_custom_call.1} parent=71 // pred_check
          %p533 = pneg %p78
        $region78: #{tpu_custom_call.1} parent=71 // pred_check_branch
          %535 = sbr.rel (%p533) target = $region80
        $region79: #{tpu_custom_call.1} parent=71 // pred_region
          %536 = dma.done [#allocation6], 16
        $region80: #{tpu_custom_call.1} parent=71 // pred_fallthru
          _
        // Predicated region
        $region81: #{tpu_custom_call.1} parent=71 // pred_check
          %p537 = pneg %p99
        $region82: #{tpu_custom_call.1} parent=71 // pred_check_branch
          %539 = sbr.rel (%p537) target = $region84
        $region83: #{tpu_custom_call.1} parent=71 // pred_region
          %540 = dma.done [#allocation6], 16
        $region84: #{tpu_custom_call.1} parent=71 // pred_fallthru
          _
        // Predicated region
        $region85: #{tpu_custom_call.1} parent=71 // pred_check
          %p541 = pneg %p120
        $region86: #{tpu_custom_call.1} parent=71 // pred_check_branch
          %543 = sbr.rel (%p541) target = $region88
        $region87: #{tpu_custom_call.1} parent=71 // pred_region
          %544 = dma.done [#allocation9], 6144
        $region88: #{tpu_custom_call.1} parent=71 // pred_fallthru
          _
        // Predicated region
        $region89: #{tpu_custom_call.1} parent=71 // pred_check
          %p545 = pneg %p141
        $region90: #{tpu_custom_call.1} parent=71 // pred_check_branch
          %547 = sbr.rel (%p545) target = $region92
        $region91: #{tpu_custom_call.1} parent=71 // pred_region
          %548 = dma.done [#allocation9], 6144
        $region92: #{tpu_custom_call.1} parent=71 // pred_fallthru
          _
        // Predicated region
        $region93: #{tpu_custom_call.1} parent=71 // pred_check
          %p549 = pneg %p162
        $region94: #{tpu_custom_call.1} parent=71 // pred_check_branch
          %551 = sbr.rel (%p549) target = $region96
        $region95: #{tpu_custom_call.1} parent=71 // pred_region
          %552 = dma.done [#allocation12], 2048
        $region96: #{tpu_custom_call.1} parent=71 // pred_fallthru
          _
        // Predicated region
        $region97: #{tpu_custom_call.1} parent=71 // pred_check
          %p553 = pneg %p183
        $region98: #{tpu_custom_call.1} parent=71 // pred_check_branch
          %555 = sbr.rel (%p553) target = $region100
        $region99: #{tpu_custom_call.1} parent=71 // pred_region
          %556 = dma.done [#allocation12], 16
        $region100: #{tpu_custom_call.1} parent=71 // pred_fallthru
          _
        // Predicated region
        $region101: #{tpu_custom_call.1} parent=71 // pred_check
          %p557 = pneg %p204
        $region102: #{tpu_custom_call.1} parent=71 // pred_check_branch
          %559 = sbr.rel (%p557) target = $region104
        $region103: #{tpu_custom_call.1} parent=71 // pred_region
          %560 = dma.done [#allocation15], 16
        $region104: #{tpu_custom_call.1} parent=71 // pred_fallthru
          _
        // Predicated region
        $region105: #{tpu_custom_call.1} parent=71 // pred_check
          %p561 = pneg %p225
        $region106: #{tpu_custom_call.1} parent=71 // pred_check_branch
          %563 = sbr.rel (%p561) target = $region108
        $region107: #{tpu_custom_call.1} parent=71 // pred_region
          %564 = dma.done [#allocation15], 16
        $region108: #{tpu_custom_call.1} parent=71 // pred_fallthru
          _
        // Predicated region
        $region109: #{tpu_custom_call.1} parent=71 // pred_check
          %p565 = pneg %p246
        $region110: #{tpu_custom_call.1} parent=71 // pred_check_branch
          %567 = sbr.rel (%p565) target = $region112
        $region111: #{tpu_custom_call.1} parent=71 // pred_region
          %568 = dma.done [#allocation18], 8192
        $region112: #{tpu_custom_call.1} parent=71 // pred_fallthru
          _
        // Predicated region
        $region113: #{tpu_custom_call.1} parent=71 // pred_check
          %p569 = pneg %p267
        $region114: #{tpu_custom_call.1} parent=71 // pred_check_branch
          %571 = sbr.rel (%p569) target = $region116
        $region115: #{tpu_custom_call.1} parent=71 // pred_region
          %572 = dma.done [#allocation18], 64
        $region116: #{tpu_custom_call.1} parent=71 // pred_fallthru
          _
        // Predicated region
        $region117: #{tpu_custom_call.1} parent=71 // pred_check
          %p573 = pneg %p288
        $region118: #{tpu_custom_call.1} parent=71 // pred_check_branch
          %575 = sbr.rel (%p573) target = $region120
        $region119: #{tpu_custom_call.1} parent=71 // pred_region
          %576 = dma.done [#allocation21], 8192
        $region120: #{tpu_custom_call.1} parent=71 // pred_fallthru
          _
        // Predicated region
        $region121: #{tpu_custom_call.1} parent=71 // pred_check
          %p577 = pneg %p309
        $region122: #{tpu_custom_call.1} parent=71 // pred_check_branch
          %579 = sbr.rel (%p577) target = $region124
        $region123: #{tpu_custom_call.1} parent=71 // pred_region
          %580 = dma.done [#allocation21], 16
        $region124: #{tpu_custom_call.1} parent=71 // pred_fallthru
          _
        %s581 = sand.u32 %s44, 1
        %s582 = scalar_lea.sflag [#allocation3], %s581
        %s583 = sand.u32 %s44, 1
        %s584 = smul.addr %s583, 256
        %s585 = scalar_lea.vmem [#allocation2], %s584
        %p586 = pneg %p57
        %p587 = pneg %p54
        %p588 = pneg %p78
        %p589 = pneg %p75
        %p590 = pneg %p99
        %p591 = pneg %p96
        %p592 = pneg %p120
        %p593 = pneg %p117
        %p594 = pneg %p141
        %p595 = pneg %p138
        %p596 = pneg %p162
        %p597 = pneg %p159
        %p598 = pneg %p183
        %p599 = pneg %p180
        %p600 = pneg %p204
        %p601 = pneg %p201
        %p602 = pneg %p225
        %p603 = pneg %p222
        %p604 = pneg %p246
        %p605 = pneg %p243
        %p606 = pneg %p267
        %p607 = pneg %p264
        %p608 = pneg %p288
        %p609 = pneg %p285
        %p610 = pneg %p309
        %p611 = pneg %p306
        %p612 = pneg %p335
        %p613 = pneg %p332
        %s614 = sand.u32 %s322, 1
        %s615 = scalar_lea.sflag [#allocation4], %s614
        %s616 = sand.u32 %s322, 1
        %s617 = smul.addr %s616, 256
        %s618 = scalar_lea.vmem [#allocation23], %s617
        %s619 = smul.u32 32, %s36
        %s620 = smul.u32 32, %s36
        %v621 = vld [vmem:[%s528] sm:$0xff]
        %v622 = vld [vmem:[%s528 + $0x8] sm:$0xff]
        %v623 = vld [vmem:[%s528 + $0x10] sm:$0xff]
        %v624 = vld [vmem:[%s528 + $0x18] sm:$0xff]
        %v625 = vld [vmem:[%s528 + $0x20] sm:$0xff]
        %v626 = vld [vmem:[%s528 + $0x28] sm:$0xff]
        %v627 = vld [vmem:[%s528 + $0x30] sm:$0xff]
        %v628 = vld [vmem:[%s528 + $0x38] sm:$0xff]
        %v629 = vld [vmem:[%s528 + $0x40] sm:$0xff]
        %v630 = vld [vmem:[%s528 + $0x48] sm:$0xff]
        %v631 = vld [vmem:[%s528 + $0x50] sm:$0xff]
        %v632 = vld [vmem:[%s528 + $0x58] sm:$0xff]
        %v633 = vld [vmem:[%s528 + $0x60] sm:$0xff]
        %v634 = vld [vmem:[%s528 + $0x68] sm:$0xff]
        %v635 = vld [vmem:[%s528 + $0x70] sm:$0xff]
        %v636 = vld [vmem:[%s528 + $0x78] sm:$0xff]
        %v637 = vld [vmem:[%s528 + $0x80] sm:$0xff]
        %v638 = vld [vmem:[%s528 + $0x88] sm:$0xff]
        %v639 = vld [vmem:[%s528 + $0x90] sm:$0xff]
        %v640 = vld [vmem:[%s528 + $0x98] sm:$0xff]
        %v641 = vld [vmem:[%s528 + $0xa0] sm:$0xff]
        %v642 = vld [vmem:[%s528 + $0xa8] sm:$0xff]
        %v643 = vld [vmem:[%s528 + $0xb0] sm:$0xff]
        %v644 = vld [vmem:[%s528 + $0xb8] sm:$0xff]
        %v645 = vld [vmem:[%s528 + $0xc0] sm:$0xff]
        %v646 = vld [vmem:[%s528 + $0xc8] sm:$0xff]
        %v647 = vld [vmem:[%s528 + $0xd0] sm:$0xff]
        %v648 = vld [vmem:[%s528 + $0xd8] sm:$0xff]
        %v649 = vld [vmem:[%s528 + $0xe0] sm:$0xff]
        %v650 = vld [vmem:[%s528 + $0xe8] sm:$0xff]
        %v651 = vld [vmem:[%s528 + $0xf0] sm:$0xff]
        %v652 = vld [vmem:[%s528 + $0xf8] sm:$0xff]
        %653 = vadd.xlane.f32.xlu0 %v621
        %v654 = vpop.xlane.xlu0 %653
        %655 = vadd.xlane.f32.xlu0 %v622
        %v656 = vpop.xlane.xlu0 %655
        %657 = vadd.xlane.f32.xlu0 %v623
        %v658 = vpop.xlane.xlu0 %657
        %659 = vadd.xlane.f32.xlu0 %v624
        %v660 = vpop.xlane.xlu0 %659
        %661 = vadd.xlane.f32.xlu0 %v625
        %v662 = vpop.xlane.xlu0 %661
        %663 = vadd.xlane.f32.xlu0 %v626
        %v664 = vpop.xlane.xlu0 %663
        %665 = vadd.xlane.f32.xlu0 %v627
        %v666 = vpop.xlane.xlu0 %665
        %667 = vadd.xlane.f32.xlu0 %v628
        %v668 = vpop.xlane.xlu0 %667
        %669 = vadd.xlane.f32.xlu0 %v629
        %v670 = vpop.xlane.xlu0 %669
        %671 = vadd.xlane.f32.xlu0 %v630
        %v672 = vpop.xlane.xlu0 %671
        %673 = vadd.xlane.f32.xlu0 %v631
        %v674 = vpop.xlane.xlu0 %673
        %675 = vadd.xlane.f32.xlu0 %v632
        %v676 = vpop.xlane.xlu0 %675
        %677 = vadd.xlane.f32.xlu0 %v633
        %v678 = vpop.xlane.xlu0 %677
        %679 = vadd.xlane.f32.xlu0 %v634
        %v680 = vpop.xlane.xlu0 %679
        %681 = vadd.xlane.f32.xlu0 %v635
        %v682 = vpop.xlane.xlu0 %681
        %683 = vadd.xlane.f32.xlu0 %v636
        %v684 = vpop.xlane.xlu0 %683
        %685 = vadd.xlane.f32.xlu0 %v637
        %v686 = vpop.xlane.xlu0 %685
        %687 = vadd.xlane.f32.xlu0 %v638
        %v688 = vpop.xlane.xlu0 %687
        %689 = vadd.xlane.f32.xlu0 %v639
        %v690 = vpop.xlane.xlu0 %689
        %691 = vadd.xlane.f32.xlu0 %v640
        %v692 = vpop.xlane.xlu0 %691
        %693 = vadd.xlane.f32.xlu0 %v641
        %v694 = vpop.xlane.xlu0 %693
        %695 = vadd.xlane.f32.xlu0 %v642
        %v696 = vpop.xlane.xlu0 %695
        %697 = vadd.xlane.f32.xlu0 %v643
        %v698 = vpop.xlane.xlu0 %697
        %699 = vadd.xlane.f32.xlu0 %v644
        %v700 = vpop.xlane.xlu0 %699
        %701 = vadd.xlane.f32.xlu0 %v645
        %v702 = vpop.xlane.xlu0 %701
        %703 = vadd.xlane.f32.xlu0 %v646
        %v704 = vpop.xlane.xlu0 %703
        %705 = vadd.xlane.f32.xlu0 %v647
        %v706 = vpop.xlane.xlu0 %705
        %707 = vadd.xlane.f32.xlu0 %v648
        %v708 = vpop.xlane.xlu0 %707
        %709 = vadd.xlane.f32.xlu0 %v649
        %v710 = vpop.xlane.xlu0 %709
        %711 = vadd.xlane.f32.xlu0 %v650
        %v712 = vpop.xlane.xlu0 %711
        %713 = vadd.xlane.f32.xlu0 %v651
        %v714 = vpop.xlane.xlu0 %713
        %715 = vadd.xlane.f32.xlu0 %v652
        %v716 = vpop.xlane.xlu0 %715
        %v717 = vrcp.pop 128.0
        %v718 = vmul.f32 %v654, %v717
        %v719 = vmul.f32 %v656, %v717
        %v720 = vmul.f32 %v658, %v717
        %v721 = vmul.f32 %v660, %v717
        %v722 = vmul.f32 %v662, %v717
        %v723 = vmul.f32 %v664, %v717
        %v724 = vmul.f32 %v666, %v717
        %v725 = vmul.f32 %v668, %v717
        %v726 = vmul.f32 %v670, %v717
        %v727 = vmul.f32 %v672, %v717
        %v728 = vmul.f32 %v674, %v717
        %v729 = vmul.f32 %v676, %v717
        %v730 = vmul.f32 %v678, %v717
        %v731 = vmul.f32 %v680, %v717
        %v732 = vmul.f32 %v682, %v717
        %v733 = vmul.f32 %v684, %v717
        %v734 = vmul.f32 %v686, %v717
        %v735 = vmul.f32 %v688, %v717
        %v736 = vmul.f32 %v690, %v717
        %v737 = vmul.f32 %v692, %v717
        %v738 = vmul.f32 %v694, %v717
        %v739 = vmul.f32 %v696, %v717
        %v740 = vmul.f32 %v698, %v717
        %v741 = vmul.f32 %v700, %v717
        %v742 = vmul.f32 %v702, %v717
        %v743 = vmul.f32 %v704, %v717
        %v744 = vmul.f32 %v706, %v717
        %v745 = vmul.f32 %v708, %v717
        %v746 = vmul.f32 %v710, %v717
        %v747 = vmul.f32 %v712, %v717
        %v748 = vmul.f32 %v714, %v717
        %v749 = vmul.f32 %v716, %v717
        %v750 = vsub.f32 %v621, %v718
        %v751 = vsub.f32 %v622, %v719
        %v752 = vsub.f32 %v623, %v720
        %v753 = vsub.f32 %v624, %v721
        %v754 = vsub.f32 %v625, %v722
        %v755 = vsub.f32 %v626, %v723
        %v756 = vsub.f32 %v627, %v724
        %v757 = vsub.f32 %v628, %v725
        %v758 = vsub.f32 %v629, %v726
        %v759 = vsub.f32 %v630, %v727
        %v760 = vsub.f32 %v631, %v728
        %v761 = vsub.f32 %v632, %v729
        %v762 = vsub.f32 %v633, %v730
        %v763 = vsub.f32 %v634, %v731
        %v764 = vsub.f32 %v635, %v732
        %v765 = vsub.f32 %v636, %v733
        %v766 = vsub.f32 %v637, %v734
        %v767 = vsub.f32 %v638, %v735
        %v768 = vsub.f32 %v639, %v736
        %v769 = vsub.f32 %v640, %v737
        %v770 = vsub.f32 %v641, %v738
        %v771 = vsub.f32 %v642, %v739
        %v772 = vsub.f32 %v643, %v740
        %v773 = vsub.f32 %v644, %v741
        %v774 = vsub.f32 %v645, %v742
        %v775 = vsub.f32 %v646, %v743
        %v776 = vsub.f32 %v647, %v744
        %v777 = vsub.f32 %v648, %v745
        %v778 = vsub.f32 %v649, %v746
        %v779 = vsub.f32 %v650, %v747
        %v780 = vsub.f32 %v651, %v748
        %v781 = vsub.f32 %v652, %v749
        %v782 = vmul.f32 %v750, %v750
        %v783 = vmul.f32 %v751, %v751
        %v784 = vmul.f32 %v752, %v752
        %v785 = vmul.f32 %v753, %v753
        %v786 = vmul.f32 %v754, %v754
        %v787 = vmul.f32 %v755, %v755
        %v788 = vmul.f32 %v756, %v756
        %v789 = vmul.f32 %v757, %v757
        %v790 = vmul.f32 %v758, %v758
        %v791 = vmul.f32 %v759, %v759
        %v792 = vmul.f32 %v760, %v760
        %v793 = vmul.f32 %v761, %v761
        %v794 = vmul.f32 %v762, %v762
        %v795 = vmul.f32 %v763, %v763
        %v796 = vmul.f32 %v764, %v764
        %v797 = vmul.f32 %v765, %v765
        %v798 = vmul.f32 %v766, %v766
        %v799 = vmul.f32 %v767, %v767
        %v800 = vmul.f32 %v768, %v768
        %v801 = vmul.f32 %v769, %v769
        %v802 = vmul.f32 %v770, %v770
        %v803 = vmul.f32 %v771, %v771
        %v804 = vmul.f32 %v772, %v772
        %v805 = vmul.f32 %v773, %v773
        %v806 = vmul.f32 %v774, %v774
        %v807 = vmul.f32 %v775, %v775
        %v808 = vmul.f32 %v776, %v776
        %v809 = vmul.f32 %v777, %v777
        %v810 = vmul.f32 %v778, %v778
        %v811 = vmul.f32 %v779, %v779
        %v812 = vmul.f32 %v780, %v780
        %v813 = vmul.f32 %v781, %v781
        %814 = vadd.xlane.f32.xlu0 %v782
        %v815 = vpop.xlane.xlu0 %814
        %816 = vadd.xlane.f32.xlu0 %v783
        %v817 = vpop.xlane.xlu0 %816
        %818 = vadd.xlane.f32.xlu0 %v784
        %v819 = vpop.xlane.xlu0 %818
        %820 = vadd.xlane.f32.xlu0 %v785
        %v821 = vpop.xlane.xlu0 %820
        %822 = vadd.xlane.f32.xlu0 %v786
        %v823 = vpop.xlane.xlu0 %822
        %824 = vadd.xlane.f32.xlu0 %v787
        %v825 = vpop.xlane.xlu0 %824
        %826 = vadd.xlane.f32.xlu0 %v788
        %v827 = vpop.xlane.xlu0 %826
        %828 = vadd.xlane.f32.xlu0 %v789
        %v829 = vpop.xlane.xlu0 %828
        %830 = vadd.xlane.f32.xlu0 %v790
        %v831 = vpop.xlane.xlu0 %830
        %832 = vadd.xlane.f32.xlu0 %v791
        %v833 = vpop.xlane.xlu0 %832
        %834 = vadd.xlane.f32.xlu0 %v792
        %v835 = vpop.xlane.xlu0 %834
        %836 = vadd.xlane.f32.xlu0 %v793
        %v837 = vpop.xlane.xlu0 %836
        %838 = vadd.xlane.f32.xlu0 %v794
        %v839 = vpop.xlane.xlu0 %838
        %840 = vadd.xlane.f32.xlu0 %v795
        %v841 = vpop.xlane.xlu0 %840
        %842 = vadd.xlane.f32.xlu0 %v796
        %v843 = vpop.xlane.xlu0 %842
        %844 = vadd.xlane.f32.xlu0 %v797
        %v845 = vpop.xlane.xlu0 %844
        %846 = vadd.xlane.f32.xlu0 %v798
        %v847 = vpop.xlane.xlu0 %846
        %848 = vadd.xlane.f32.xlu0 %v799
        %v849 = vpop.xlane.xlu0 %848
        %850 = vadd.xlane.f32.xlu0 %v800
        %v851 = vpop.xlane.xlu0 %850
        %852 = vadd.xlane.f32.xlu0 %v801
        %v853 = vpop.xlane.xlu0 %852
        %854 = vadd.xlane.f32.xlu0 %v802
        %v855 = vpop.xlane.xlu0 %854
        %856 = vadd.xlane.f32.xlu0 %v803
        %v857 = vpop.xlane.xlu0 %856
        %858 = vadd.xlane.f32.xlu0 %v804
        %v859 = vpop.xlane.xlu0 %858
        %860 = vadd.xlane.f32.xlu0 %v805
        %v861 = vpop.xlane.xlu0 %860
        %862 = vadd.xlane.f32.xlu0 %v806
        %v863 = vpop.xlane.xlu0 %862
        %864 = vadd.xlane.f32.xlu0 %v807
        %v865 = vpop.xlane.xlu0 %864
        %866 = vadd.xlane.f32.xlu0 %v808
        %v867 = vpop.xlane.xlu0 %866
        %868 = vadd.xlane.f32.xlu0 %v809
        %v869 = vpop.xlane.xlu0 %868
        %870 = vadd.xlane.f32.xlu0 %v810
        %v871 = vpop.xlane.xlu0 %870
        %872 = vadd.xlane.f32.xlu0 %v811
        %v873 = vpop.xlane.xlu0 %872
        %874 = vadd.xlane.f32.xlu0 %v812
        %v875 = vpop.xlane.xlu0 %874
        %876 = vadd.xlane.f32.xlu0 %v813
        %v877 = vpop.xlane.xlu0 %876
        %v878 = vmul.f32 %v815, %v717
        %v879 = vmul.f32 %v817, %v717
        %v880 = vmul.f32 %v819, %v717
        %v881 = vmul.f32 %v821, %v717
        %v882 = vmul.f32 %v823, %v717
        %v883 = vmul.f32 %v825, %v717
        %v884 = vmul.f32 %v827, %v717
        %v885 = vmul.f32 %v829, %v717
        %v886 = vmul.f32 %v831, %v717
        %v887 = vmul.f32 %v833, %v717
        %v888 = vmul.f32 %v835, %v717
        %v889 = vmul.f32 %v837, %v717
        %v890 = vmul.f32 %v839, %v717
        %v891 = vmul.f32 %v841, %v717
        %v892 = vmul.f32 %v843, %v717
        %v893 = vmul.f32 %v845, %v717
        %v894 = vmul.f32 %v847, %v717
        %v895 = vmul.f32 %v849, %v717
        %v896 = vmul.f32 %v851, %v717
        %v897 = vmul.f32 %v853, %v717
        %v898 = vmul.f32 %v855, %v717
        %v899 = vmul.f32 %v857, %v717
        %v900 = vmul.f32 %v859, %v717
        %v901 = vmul.f32 %v861, %v717
        %v902 = vmul.f32 %v863, %v717
        %v903 = vmul.f32 %v865, %v717
        %v904 = vmul.f32 %v867, %v717
        %v905 = vmul.f32 %v869, %v717
        %v906 = vmul.f32 %v871, %v717
        %v907 = vmul.f32 %v873, %v717
        %v908 = vmul.f32 %v875, %v717
        %v909 = vmul.f32 %v877, %v717
        %v910 = vadd.f32 %v878, 1e-05
        %v911 = vadd.f32 %v879, 1e-05
        %v912 = vadd.f32 %v880, 1e-05
        %v913 = vadd.f32 %v881, 1e-05
        %v914 = vadd.f32 %v882, 1e-05
        %v915 = vadd.f32 %v883, 1e-05
        %v916 = vadd.f32 %v884, 1e-05
        %v917 = vadd.f32 %v885, 1e-05
        %v918 = vadd.f32 %v886, 1e-05
        %v919 = vadd.f32 %v887, 1e-05
        %v920 = vadd.f32 %v888, 1e-05
        %v921 = vadd.f32 %v889, 1e-05
        %v922 = vadd.f32 %v890, 1e-05
        %v923 = vadd.f32 %v891, 1e-05
        %v924 = vadd.f32 %v892, 1e-05
        %v925 = vadd.f32 %v893, 1e-05
        %v926 = vadd.f32 %v894, 1e-05
        %v927 = vadd.f32 %v895, 1e-05
        %v928 = vadd.f32 %v896, 1e-05
        %v929 = vadd.f32 %v897, 1e-05
        %v930 = vadd.f32 %v898, 1e-05
        %v931 = vadd.f32 %v899, 1e-05
        %v932 = vadd.f32 %v900, 1e-05
        %v933 = vadd.f32 %v901, 1e-05
        %v934 = vadd.f32 %v902, 1e-05
        %v935 = vadd.f32 %v903, 1e-05
        %v936 = vadd.f32 %v904, 1e-05
        %v937 = vadd.f32 %v905, 1e-05
        %v938 = vadd.f32 %v906, 1e-05
        %v939 = vadd.f32 %v907, 1e-05
        %v940 = vadd.f32 %v908, 1e-05
        %v941 = vadd.f32 %v909, 1e-05
        %v942 = vrsqrt.pop %v910
        %v943 = vrsqrt.pop %v911
        %v944 = vrsqrt.pop %v912
        %v945 = vrsqrt.pop %v913
        %v946 = vrsqrt.pop %v914
        %v947 = vrsqrt.pop %v915
        %v948 = vrsqrt.pop %v916
        %v949 = vrsqrt.pop %v917
        %v950 = vrsqrt.pop %v918
        %v951 = vrsqrt.pop %v919
        %v952 = vrsqrt.pop %v920
        %v953 = vrsqrt.pop %v921
        %v954 = vrsqrt.pop %v922
        %v955 = vrsqrt.pop %v923
        %v956 = vrsqrt.pop %v924
        %v957 = vrsqrt.pop %v925
        %v958 = vrsqrt.pop %v926
        %v959 = vrsqrt.pop %v927
        %v960 = vrsqrt.pop %v928
        %v961 = vrsqrt.pop %v929
        %v962 = vrsqrt.pop %v930
        %v963 = vrsqrt.pop %v931
        %v964 = vrsqrt.pop %v932
        %v965 = vrsqrt.pop %v933
        %v966 = vrsqrt.pop %v934
        %v967 = vrsqrt.pop %v935
        %v968 = vrsqrt.pop %v936
        %v969 = vrsqrt.pop %v937
        %v970 = vrsqrt.pop %v938
        %v971 = vrsqrt.pop %v939
        %v972 = vrsqrt.pop %v940
        %v973 = vrsqrt.pop %v941
        %v974 = vmul.f32 %v750, %v942
        %v975 = vmul.f32 %v751, %v943
        %v976 = vmul.f32 %v752, %v944
        %v977 = vmul.f32 %v753, %v945
        %v978 = vmul.f32 %v754, %v946
        %v979 = vmul.f32 %v755, %v947
        %v980 = vmul.f32 %v756, %v948
        %v981 = vmul.f32 %v757, %v949
        %v982 = vmul.f32 %v758, %v950
        %v983 = vmul.f32 %v759, %v951
        %v984 = vmul.f32 %v760, %v952
        %v985 = vmul.f32 %v761, %v953
        %v986 = vmul.f32 %v762, %v954
        %v987 = vmul.f32 %v763, %v955
        %v988 = vmul.f32 %v764, %v956
        %v989 = vmul.f32 %v765, %v957
        %v990 = vmul.f32 %v766, %v958
        %v991 = vmul.f32 %v767, %v959
        %v992 = vmul.f32 %v768, %v960
        %v993 = vmul.f32 %v769, %v961
        %v994 = vmul.f32 %v770, %v962
        %v995 = vmul.f32 %v771, %v963
        %v996 = vmul.f32 %v772, %v964
        %v997 = vmul.f32 %v773, %v965
        %v998 = vmul.f32 %v774, %v966
        %v999 = vmul.f32 %v775, %v967
        %v1000 = vmul.f32 %v776, %v968
        %v1001 = vmul.f32 %v777, %v969
        %v1002 = vmul.f32 %v778, %v970
        %v1003 = vmul.f32 %v779, %v971
        %v1004 = vmul.f32 %v780, %v972
        %v1005 = vmul.f32 %v781, %v973
        %v1006 = vld [vmem:[#allocation5] sm:$0x1]
        %v1008 = vlaneseq
        %v1009 = vshrl.u32 %v1008, 7
        %v1010 = vsub.s32 0, %v1009
        %v1011 = vrot.slane %v1006, %v1010
        %v1013 = vmul.f32 %v974, %v1011
        %v1014 = vmul.f32 %v975, %v1011
        %v1015 = vmul.f32 %v976, %v1011
        %v1016 = vmul.f32 %v977, %v1011
        %v1017 = vmul.f32 %v978, %v1011
        %v1018 = vmul.f32 %v979, %v1011
        %v1019 = vmul.f32 %v980, %v1011
        %v1020 = vmul.f32 %v981, %v1011
        %v1021 = vmul.f32 %v982, %v1011
        %v1022 = vmul.f32 %v983, %v1011
        %v1023 = vmul.f32 %v984, %v1011
        %v1024 = vmul.f32 %v985, %v1011
        %v1025 = vmul.f32 %v986, %v1011
        %v1026 = vmul.f32 %v987, %v1011
        %v1027 = vmul.f32 %v988, %v1011
        %v1028 = vmul.f32 %v989, %v1011
        %v1029 = vmul.f32 %v990, %v1011
        %v1030 = vmul.f32 %v991, %v1011
        %v1031 = vmul.f32 %v992, %v1011
        %v1032 = vmul.f32 %v993, %v1011
        %v1033 = vmul.f32 %v994, %v1011
        %v1034 = vmul.f32 %v995, %v1011
        %v1035 = vmul.f32 %v996, %v1011
        %v1036 = vmul.f32 %v997, %v1011
        %v1037 = vmul.f32 %v998, %v1011
        %v1038 = vmul.f32 %v999, %v1011
        %v1039 = vmul.f32 %v1000, %v1011
        %v1040 = vmul.f32 %v1001, %v1011
        %v1041 = vmul.f32 %v1002, %v1011
        %v1042 = vmul.f32 %v1003, %v1011
        %v1043 = vmul.f32 %v1004, %v1011
        %v1044 = vmul.f32 %v1005, %v1011
        %v1045 = vld [vmem:[#allocation7] sm:$0x1]
        %v1047 = vlaneseq
        %v1048 = vshrl.u32 %v1047, 7
        %v1049 = vsub.s32 0, %v1048
        %v1050 = vrot.slane %v1045, %v1049
        %v1052 = vadd.f32 %v1013, %v1050
        %v1053 = vadd.f32 %v1014, %v1050
        %v1054 = vadd.f32 %v1015, %v1050
        %v1055 = vadd.f32 %v1016, %v1050
        %v1056 = vadd.f32 %v1017, %v1050
        %v1057 = vadd.f32 %v1018, %v1050
        %v1058 = vadd.f32 %v1019, %v1050
        %v1059 = vadd.f32 %v1020, %v1050
        %v1060 = vadd.f32 %v1021, %v1050
        %v1061 = vadd.f32 %v1022, %v1050
        %v1062 = vadd.f32 %v1023, %v1050
        %v1063 = vadd.f32 %v1024, %v1050
        %v1064 = vadd.f32 %v1025, %v1050
        %v1065 = vadd.f32 %v1026, %v1050
        %v1066 = vadd.f32 %v1027, %v1050
        %v1067 = vadd.f32 %v1028, %v1050
        %v1068 = vadd.f32 %v1029, %v1050
        %v1069 = vadd.f32 %v1030, %v1050
        %v1070 = vadd.f32 %v1031, %v1050
        %v1071 = vadd.f32 %v1032, %v1050
        %v1072 = vadd.f32 %v1033, %v1050
        %v1073 = vadd.f32 %v1034, %v1050
        %v1074 = vadd.f32 %v1035, %v1050
        %v1075 = vadd.f32 %v1036, %v1050
        %v1076 = vadd.f32 %v1037, %v1050
        %v1077 = vadd.f32 %v1038, %v1050
        %v1078 = vadd.f32 %v1039, %v1050
        %v1079 = vadd.f32 %v1040, %v1050
        %v1080 = vadd.f32 %v1041, %v1050
        %v1081 = vadd.f32 %v1042, %v1050
        %v1082 = vadd.f32 %v1043, %v1050
        %v1083 = vadd.f32 %v1044, %v1050
        %v1084 = vld [vmem:[#allocation8] sm:$0xff]
        %v1085 = vld [vmem:[#allocation8 + $0x8] sm:$0xff]
        %v1086 = vld [vmem:[#allocation8 + $0x10] sm:$0xff]
        %v1087 = vld [vmem:[#allocation8 + $0x18] sm:$0xff]
        %v1088 = vld [vmem:[#allocation8 + $0x20] sm:$0xff]
        %v1089 = vld [vmem:[#allocation8 + $0x28] sm:$0xff]
        %v1090 = vld [vmem:[#allocation8 + $0x30] sm:$0xff]
        %v1091 = vld [vmem:[#allocation8 + $0x38] sm:$0xff]
        %v1092 = vld [vmem:[#allocation8 + $0x40] sm:$0xff]
        %v1093 = vld [vmem:[#allocation8 + $0x48] sm:$0xff]
        %v1094 = vld [vmem:[#allocation8 + $0x50] sm:$0xff]
        %v1095 = vld [vmem:[#allocation8 + $0x58] sm:$0xff]
        %v1096 = vld [vmem:[#allocation8 + $0x60] sm:$0xff]
        %v1097 = vld [vmem:[#allocation8 + $0x68] sm:$0xff]
        %v1098 = vld [vmem:[#allocation8 + $0x70] sm:$0xff]
        %v1099 = vld [vmem:[#allocation8 + $0x78] sm:$0xff]
        %v1100 = vld [vmem:[#allocation8 + $0x80] sm:$0xff]
        %v1101 = vld [vmem:[#allocation8 + $0x88] sm:$0xff]
        %v1102 = vld [vmem:[#allocation8 + $0x90] sm:$0xff]
        %v1103 = vld [vmem:[#allocation8 + $0x98] sm:$0xff]
        %v1104 = vld [vmem:[#allocation8 + $0xa0] sm:$0xff]
        %v1105 = vld [vmem:[#allocation8 + $0xa8] sm:$0xff]
        %v1106 = vld [vmem:[#allocation8 + $0xb0] sm:$0xff]
        %v1107 = vld [vmem:[#allocation8 + $0xb8] sm:$0xff]
        %v1108 = vld [vmem:[#allocation8 + $0xc0] sm:$0xff]
        %v1109 = vld [vmem:[#allocation8 + $0xc8] sm:$0xff]
        %v1110 = vld [vmem:[#allocation8 + $0xd0] sm:$0xff]
        %v1111 = vld [vmem:[#allocation8 + $0xd8] sm:$0xff]
        %v1112 = vld [vmem:[#allocation8 + $0xe0] sm:$0xff]
        %v1113 = vld [vmem:[#allocation8 + $0xe8] sm:$0xff]
        %v1114 = vld [vmem:[#allocation8 + $0xf0] sm:$0xff]
        %v1115 = vld [vmem:[#allocation8 + $0xf8] sm:$0xff]
        %v1116 = vld [vmem:[#allocation8 + $0x100] sm:$0xff]
        %v1117 = vld [vmem:[#allocation8 + $0x108] sm:$0xff]
        %v1118 = vld [vmem:[#allocation8 + $0x110] sm:$0xff]
        %v1119 = vld [vmem:[#allocation8 + $0x118] sm:$0xff]
        %v1120 = vld [vmem:[#allocation8 + $0x120] sm:$0xff]
        %v1121 = vld [vmem:[#allocation8 + $0x128] sm:$0xff]
        %v1122 = vld [vmem:[#allocation8 + $0x130] sm:$0xff]
        %v1123 = vld [vmem:[#allocation8 + $0x138] sm:$0xff]
        %v1124 = vld [vmem:[#allocation8 + $0x140] sm:$0xff]
        %v1125 = vld [vmem:[#allocation8 + $0x148] sm:$0xff]
        %v1126 = vld [vmem:[#allocation8 + $0x150] sm:$0xff]
        %v1127 = vld [vmem:[#allocation8 + $0x158] sm:$0xff]
        %v1128 = vld [vmem:[#allocation8 + $0x160] sm:$0xff]
        %v1129 = vld [vmem:[#allocation8 + $0x168] sm:$0xff]
        %v1130 = vld [vmem:[#allocation8 + $0x170] sm:$0xff]
        %v1131 = vld [vmem:[#allocation8 + $0x178] sm:$0xff]
        %v1132 = vld [vmem:[#allocation10] sm:$0xff]
        %v1133 = vld [vmem:[#allocation10 + $0x8] sm:$0xff]
        %v1134 = vld [vmem:[#allocation10 + $0x10] sm:$0xff]
        %v1135 = vld [vmem:[#allocation10 + $0x18] sm:$0xff]
        %v1136 = vld [vmem:[#allocation10 + $0x20] sm:$0xff]
        %v1137 = vld [vmem:[#allocation10 + $0x28] sm:$0xff]
        %v1138 = vld [vmem:[#allocation10 + $0x30] sm:$0xff]
        %v1139 = vld [vmem:[#allocation10 + $0x38] sm:$0xff]
        %v1140 = vld [vmem:[#allocation10 + $0x40] sm:$0xff]
        %v1141 = vld [vmem:[#allocation10 + $0x48] sm:$0xff]
        %v1142 = vld [vmem:[#allocation10 + $0x50] sm:$0xff]
        %v1143 = vld [vmem:[#allocation10 + $0x58] sm:$0xff]
        %v1144 = vld [vmem:[#allocation10 + $0x60] sm:$0xff]
        %v1145 = vld [vmem:[#allocation10 + $0x68] sm:$0xff]
        %v1146 = vld [vmem:[#allocation10 + $0x70] sm:$0xff]
        %v1147 = vld [vmem:[#allocation10 + $0x78] sm:$0xff]
        %v1148 = vld [vmem:[#allocation10 + $0x80] sm:$0xff]
        %v1149 = vld [vmem:[#allocation10 + $0x88] sm:$0xff]
        %v1150 = vld [vmem:[#allocation10 + $0x90] sm:$0xff]
        %v1151 = vld [vmem:[#allocation10 + $0x98] sm:$0xff]
        %v1152 = vld [vmem:[#allocation10 + $0xa0] sm:$0xff]
        %v1153 = vld [vmem:[#allocation10 + $0xa8] sm:$0xff]
        %v1154 = vld [vmem:[#allocation10 + $0xb0] sm:$0xff]
        %v1155 = vld [vmem:[#allocation10 + $0xb8] sm:$0xff]
        %v1156 = vld [vmem:[#allocation10 + $0xc0] sm:$0xff]
        %v1157 = vld [vmem:[#allocation10 + $0xc8] sm:$0xff]
        %v1158 = vld [vmem:[#allocation10 + $0xd0] sm:$0xff]
        %v1159 = vld [vmem:[#allocation10 + $0xd8] sm:$0xff]
        %v1160 = vld [vmem:[#allocation10 + $0xe0] sm:$0xff]
        %v1161 = vld [vmem:[#allocation10 + $0xe8] sm:$0xff]
        %v1162 = vld [vmem:[#allocation10 + $0xf0] sm:$0xff]
        %v1163 = vld [vmem:[#allocation10 + $0xf8] sm:$0xff]
        %v1164 = vld [vmem:[#allocation10 + $0x100] sm:$0xff]
        %v1165 = vld [vmem:[#allocation10 + $0x108] sm:$0xff]
        %v1166 = vld [vmem:[#allocation10 + $0x110] sm:$0xff]
        %v1167 = vld [vmem:[#allocation10 + $0x118] sm:$0xff]
        %v1168 = vld [vmem:[#allocation10 + $0x120] sm:$0xff]
        %v1169 = vld [vmem:[#allocation10 + $0x128] sm:$0xff]
        %v1170 = vld [vmem:[#allocation10 + $0x130] sm:$0xff]
        %v1171 = vld [vmem:[#allocation10 + $0x138] sm:$0xff]
        %v1172 = vld [vmem:[#allocation10 + $0x140] sm:$0xff]
        %v1173 = vld [vmem:[#allocation10 + $0x148] sm:$0xff]
        %v1174 = vld [vmem:[#allocation10 + $0x150] sm:$0xff]
        %v1175 = vld [vmem:[#allocation10 + $0x158] sm:$0xff]
        %v1176 = vld [vmem:[#allocation10 + $0x160] sm:$0xff]
        %v1177 = vld [vmem:[#allocation10 + $0x168] sm:$0xff]
        %v1178 = vld [vmem:[#allocation10 + $0x170] sm:$0xff]
        %v1179 = vld [vmem:[#allocation10 + $0x178] sm:$0xff]
        %1181 = vset.pattern.permute.xlu0 0
        %1182 = vperm.xlu0 %1181, %v1132
        %v1183 = vpop.permute.xlu0 %1182
        %1186 = vset.pattern.permute.xlu0 0
        %1187 = vperm.xlu0 %1186, %v1133
        %v1188 = vpop.permute.xlu0 %1187
        %1191 = vset.pattern.permute.xlu0 0
        %1192 = vperm.xlu0 %1191, %v1134
        %v1193 = vpop.permute.xlu0 %1192
        %1196 = vset.pattern.permute.xlu0 0
        %1197 = vperm.xlu0 %1196, %v1135
        %v1198 = vpop.permute.xlu0 %1197
        %1201 = vset.pattern.permute.xlu0 0
        %1202 = vperm.xlu0 %1201, %v1136
        %v1203 = vpop.permute.xlu0 %1202
        %1206 = vset.pattern.permute.xlu0 0
        %1207 = vperm.xlu0 %1206, %v1137
        %v1208 = vpop.permute.xlu0 %1207
        %1211 = vset.pattern.permute.xlu0 0
        %1212 = vperm.xlu0 %1211, %v1138
        %v1213 = vpop.permute.xlu0 %1212
        %1216 = vset.pattern.permute.xlu0 0
        %1217 = vperm.xlu0 %1216, %v1139
        %v1218 = vpop.permute.xlu0 %1217
        %1221 = vset.pattern.permute.xlu0 0
        %1222 = vperm.xlu0 %1221, %v1140
        %v1223 = vpop.permute.xlu0 %1222
        %1226 = vset.pattern.permute.xlu0 0
        %1227 = vperm.xlu0 %1226, %v1141
        %v1228 = vpop.permute.xlu0 %1227
        %1231 = vset.pattern.permute.xlu0 0
        %1232 = vperm.xlu0 %1231, %v1142
        %v1233 = vpop.permute.xlu0 %1232
        %1236 = vset.pattern.permute.xlu0 0
        %1237 = vperm.xlu0 %1236, %v1143
        %v1238 = vpop.permute.xlu0 %1237
        %1241 = vset.pattern.permute.xlu0 0
        %1242 = vperm.xlu0 %1241, %v1144
        %v1243 = vpop.permute.xlu0 %1242
        %1246 = vset.pattern.permute.xlu0 0
        %1247 = vperm.xlu0 %1246, %v1145
        %v1248 = vpop.permute.xlu0 %1247
        %1251 = vset.pattern.permute.xlu0 0
        %1252 = vperm.xlu0 %1251, %v1146
        %v1253 = vpop.permute.xlu0 %1252
        %1256 = vset.pattern.permute.xlu0 0
        %1257 = vperm.xlu0 %1256, %v1147
        %v1258 = vpop.permute.xlu0 %1257
        %1261 = vset.pattern.permute.xlu0 0
        %1262 = vperm.xlu0 %1261, %v1148
        %v1263 = vpop.permute.xlu0 %1262
        %1266 = vset.pattern.permute.xlu0 0
        %1267 = vperm.xlu0 %1266, %v1149
        %v1268 = vpop.permute.xlu0 %1267
        %1271 = vset.pattern.permute.xlu0 0
        %1272 = vperm.xlu0 %1271, %v1150
        %v1273 = vpop.permute.xlu0 %1272
        %1276 = vset.pattern.permute.xlu0 0
        %1277 = vperm.xlu0 %1276, %v1151
        %v1278 = vpop.permute.xlu0 %1277
        %1281 = vset.pattern.permute.xlu0 0
        %1282 = vperm.xlu0 %1281, %v1152
        %v1283 = vpop.permute.xlu0 %1282
        %1286 = vset.pattern.permute.xlu0 0
        %1287 = vperm.xlu0 %1286, %v1153
        %v1288 = vpop.permute.xlu0 %1287
        %1291 = vset.pattern.permute.xlu0 0
        %1292 = vperm.xlu0 %1291, %v1154
        %v1293 = vpop.permute.xlu0 %1292
        %1296 = vset.pattern.permute.xlu0 0
        %1297 = vperm.xlu0 %1296, %v1155
        %v1298 = vpop.permute.xlu0 %1297
        %1301 = vset.pattern.permute.xlu0 0
        %1302 = vperm.xlu0 %1301, %v1156
        %v1303 = vpop.permute.xlu0 %1302
        %1306 = vset.pattern.permute.xlu0 0
        %1307 = vperm.xlu0 %1306, %v1157
        %v1308 = vpop.permute.xlu0 %1307
        %1311 = vset.pattern.permute.xlu0 0
        %1312 = vperm.xlu0 %1311, %v1158
        %v1313 = vpop.permute.xlu0 %1312
        %1316 = vset.pattern.permute.xlu0 0
        %1317 = vperm.xlu0 %1316, %v1159
        %v1318 = vpop.permute.xlu0 %1317
        %1321 = vset.pattern.permute.xlu0 0
        %1322 = vperm.xlu0 %1321, %v1160
        %v1323 = vpop.permute.xlu0 %1322
        %1326 = vset.pattern.permute.xlu0 0
        %1327 = vperm.xlu0 %1326, %v1161
        %v1328 = vpop.permute.xlu0 %1327
        %1331 = vset.pattern.permute.xlu0 0
        %1332 = vperm.xlu0 %1331, %v1162
        %v1333 = vpop.permute.xlu0 %1332
        %1336 = vset.pattern.permute.xlu0 0
        %1337 = vperm.xlu0 %1336, %v1163
        %v1338 = vpop.permute.xlu0 %1337
        %1341 = vset.pattern.permute.xlu0 0
        %1342 = vperm.xlu0 %1341, %v1164
        %v1343 = vpop.permute.xlu0 %1342
        %1346 = vset.pattern.permute.xlu0 0
        %1347 = vperm.xlu0 %1346, %v1165
        %v1348 = vpop.permute.xlu0 %1347
        %1351 = vset.pattern.permute.xlu0 0
        %1352 = vperm.xlu0 %1351, %v1166
        %v1353 = vpop.permute.xlu0 %1352
        %1356 = vset.pattern.permute.xlu0 0
        %1357 = vperm.xlu0 %1356, %v1167
        %v1358 = vpop.permute.xlu0 %1357
        %1361 = vset.pattern.permute.xlu0 0
        %1362 = vperm.xlu0 %1361, %v1168
        %v1363 = vpop.permute.xlu0 %1362
        %1366 = vset.pattern.permute.xlu0 0
        %1367 = vperm.xlu0 %1366, %v1169
        %v1368 = vpop.permute.xlu0 %1367
        %1371 = vset.pattern.permute.xlu0 0
        %1372 = vperm.xlu0 %1371, %v1170
        %v1373 = vpop.permute.xlu0 %1372
        %1376 = vset.pattern.permute.xlu0 0
        %1377 = vperm.xlu0 %1376, %v1171
        %v1378 = vpop.permute.xlu0 %1377
        %1381 = vset.pattern.permute.xlu0 0
        %1382 = vperm.xlu0 %1381, %v1172
        %v1383 = vpop.permute.xlu0 %1382
        %1386 = vset.pattern.permute.xlu0 0
        %1387 = vperm.xlu0 %1386, %v1173
        %v1388 = vpop.permute.xlu0 %1387
        %1391 = vset.pattern.permute.xlu0 0
        %1392 = vperm.xlu0 %1391, %v1174
        %v1393 = vpop.permute.xlu0 %1392
        %1396 = vset.pattern.permute.xlu0 0
        %1397 = vperm.xlu0 %1396, %v1175
        %v1398 = vpop.permute.xlu0 %1397
        %1401 = vset.pattern.permute.xlu0 0
        %1402 = vperm.xlu0 %1401, %v1176
        %v1403 = vpop.permute.xlu0 %1402
        %1406 = vset.pattern.permute.xlu0 0
        %1407 = vperm.xlu0 %1406, %v1177
        %v1408 = vpop.permute.xlu0 %1407
        %1411 = vset.pattern.permute.xlu0 0
        %1412 = vperm.xlu0 %1411, %v1178
        %v1413 = vpop.permute.xlu0 %1412
        %1416 = vset.pattern.permute.xlu0 0
        %1417 = vperm.xlu0 %1416, %v1179
        %v1418 = vpop.permute.xlu0 %1417
        %1420 = vmatprep.subr.mxu0 0.0
        %1421 = vmatpush1.xpose.msra.mxu0 %v1052
        %1422 = vmatprep.subr.mxu0 0.0
        %1423 = vmatpush1.xpose.msra.mxu0 %v1053
        %1424 = vmatprep.subr.mxu0 0.0
        %1425 = vmatpush1.xpose.msra.mxu0 %v1054
        %1426 = vmatprep.subr.mxu0 0.0
        %1427 = vmatpush1.xpose.msra.mxu0 %v1055
        %1428 = vmatprep.subr.mxu0 0.0
        %1429 = vmatpush1.xpose.msra.mxu0 %v1056
        %1430 = vmatprep.subr.mxu0 0.0
        %1431 = vmatpush1.xpose.msra.mxu0 %v1057
        %1432 = vmatprep.subr.mxu0 0.0
        %1433 = vmatpush1.xpose.msra.mxu0 %v1058
        %1434 = vmatprep.subr.mxu0 0.0
        %1435 = vmatpush1.xpose.msra.mxu0 %v1059
        %1436 = vmatprep.subr.mxu0 0.0
        %1437 = vmatpush1.xpose.msra.mxu0 %v1060
        %1438 = vmatprep.subr.mxu0 0.0
        %1439 = vmatpush1.xpose.msra.mxu0 %v1061
        %1440 = vmatprep.subr.mxu0 0.0
        %1441 = vmatpush1.xpose.msra.mxu0 %v1062
        %1442 = vmatprep.subr.mxu0 0.0
        %1443 = vmatpush1.xpose.msra.mxu0 %v1063
        %1444 = vmatprep.subr.mxu0 0.0
        %1445 = vmatpush1.xpose.msra.mxu0 %v1064
        %1446 = vmatprep.subr.mxu0 0.0
        %1447 = vmatpush1.xpose.msra.mxu0 %v1065
        %1448 = vmatprep.subr.mxu0 0.0
        %1449 = vmatpush1.xpose.msra.mxu0 %v1066
        %1450 = vmatprep.subr.mxu0 0.0
        %1451 = vmatpush1.xpose.msra.mxu0 %v1067
        %1452 = vmatprep.subr.mxu0 0.0
        %1453 = vmatpush1.xpose.msra.mxu0 %v1068
        %1454 = vmatprep.subr.mxu0 0.0
        %1455 = vmatpush1.xpose.msra.mxu0 %v1069
        %1456 = vmatprep.subr.mxu0 0.0
        %1457 = vmatpush1.xpose.msra.mxu0 %v1070
        %1458 = vmatprep.subr.mxu0 0.0
        %1459 = vmatpush1.xpose.msra.mxu0 %v1071
        %1460 = vmatprep.subr.mxu0 0.0
        %1461 = vmatpush1.xpose.msra.mxu0 %v1072
        %1462 = vmatprep.subr.mxu0 0.0
        %1463 = vmatpush1.xpose.msra.mxu0 %v1073
        %1464 = vmatprep.subr.mxu0 0.0
        %1465 = vmatpush1.xpose.msra.mxu0 %v1074
        %1466 = vmatprep.subr.mxu0 0.0
        %1467 = vmatpush1.xpose.msra.mxu0 %v1075
        %1468 = vmatprep.subr.mxu0 0.0
        %1469 = vmatpush1.xpose.msra.mxu0 %v1076
        %1470 = vmatprep.subr.mxu0 0.0
        %1471 = vmatpush1.xpose.msra.mxu0 %v1077
        %1472 = vmatprep.subr.mxu0 0.0
        %1473 = vmatpush1.xpose.msra.mxu0 %v1078
        %1474 = vmatprep.subr.mxu0 0.0
        %1475 = vmatpush1.xpose.msra.mxu0 %v1079
        %1476 = vmatprep.subr.mxu0 0.0
        %1477 = vmatpush1.xpose.msra.mxu0 %v1080
        %1478 = vmatprep.subr.mxu0 0.0
        %1479 = vmatpush1.xpose.msra.mxu0 %v1081
        %1480 = vmatprep.subr.mxu0 0.0
        %1481 = vmatpush1.xpose.msra.mxu0 %v1082
        %1482 = vmatprep.subr.mxu0 0.0
        %1483 = vmatpush1.xpose.msra.mxu0 %v1083
        %1484 = vmatprep.mubr.f32.mxu0 0.0
        %1485 = vmatmul.mubr.f32.gmra.mrb[0].mxu0 %v1084
        %v1486 = vpop.f32.mrb[0].mxu0
        %v1487 = vadd.f32 %v1183, %v1486
        %v1488 = vpop.f32.mrb[0].mxu0
        %v1489 = vadd.f32 %v1183, %v1488
        %1490 = vmatprep.mubr.f32.mxu0 0.0
        %1491 = vmatmul.mubr.f32.gmra.mrb[0].mxu0 %v1085
        %v1492 = vpop.f32.mrb[0].mxu0
        %v1493 = vadd.f32 %v1188, %v1492
        %v1494 = vpop.f32.mrb[0].mxu0
        %v1495 = vadd.f32 %v1188, %v1494
        %1496 = vmatprep.mubr.f32.mxu0 0.0
        %1497 = vmatmul.mubr.f32.gmra.mrb[0].mxu0 %v1086
        %v1498 = vpop.f32.mrb[0].mxu0
        %v1499 = vadd.f32 %v1193, %v1498
        %v1500 = vpop.f32.mrb[0].mxu0
        %v1501 = vadd.f32 %v1193, %v1500
        %1502 = vmatprep.mubr.f32.mxu0 0.0
        %1503 = vmatmul.mubr.f32.gmra.mrb[0].mxu0 %v1087
        %v1504 = vpop.f32.mrb[0].mxu0
        %v1505 = vadd.f32 %v1198, %v1504
        %v1506 = vpop.f32.mrb[0].mxu0
        %v1507 = vadd.f32 %v1198, %v1506
        %1508 = vmatprep.mubr.f32.mxu0 0.0
        %1509 = vmatmul.mubr.f32.gmra.mrb[0].mxu0 %v1088
        %v1510 = vpop.f32.mrb[0].mxu0
        %v1511 = vadd.f32 %v1203, %v1510
        %v1512 = vpop.f32.mrb[0].mxu0
        %v1513 = vadd.f32 %v1203, %v1512
        %1514 = vmatprep.mubr.f32.mxu0 0.0
        %1515 = vmatmul.mubr.f32.gmra.mrb[0].mxu0 %v1089
        %v1516 = vpop.f32.mrb[0].mxu0
        %v1517 = vadd.f32 %v1208, %v1516
        %v1518 = vpop.f32.mrb[0].mxu0
        %v1519 = vadd.f32 %v1208, %v1518
        %1520 = vmatprep.mubr.f32.mxu0 0.0
        %1521 = vmatmul.mubr.f32.gmra.mrb[0].mxu0 %v1090
        %v1522 = vpop.f32.mrb[0].mxu0
        %v1523 = vadd.f32 %v1213, %v1522
        %v1524 = vpop.f32.mrb[0].mxu0
        %v1525 = vadd.f32 %v1213, %v1524
        %1526 = vmatprep.mubr.f32.mxu0 0.0
        %1527 = vmatmul.mubr.f32.gmra.mrb[0].mxu0 %v1091
        %v1528 = vpop.f32.mrb[0].mxu0
        %v1529 = vadd.f32 %v1218, %v1528
        %v1530 = vpop.f32.mrb[0].mxu0
        %v1531 = vadd.f32 %v1218, %v1530
        %1532 = vmatprep.mubr.f32.mxu0 0.0
        %1533 = vmatmul.mubr.f32.gmra.mrb[0].mxu0 %v1092
        %v1534 = vpop.f32.mrb[0].mxu0
        %v1535 = vadd.f32 %v1223, %v1534
        %v1536 = vpop.f32.mrb[0].mxu0
        %v1537 = vadd.f32 %v1223, %v1536
        %1538 = vmatprep.mubr.f32.mxu0 0.0
        %1539 = vmatmul.mubr.f32.gmra.mrb[0].mxu0 %v1093
        %v1540 = vpop.f32.mrb[0].mxu0
        %v1541 = vadd.f32 %v1228, %v1540
        %v1542 = vpop.f32.mrb[0].mxu0
        %v1543 = vadd.f32 %v1228, %v1542
        %1544 = vmatprep.mubr.f32.mxu0 0.0
        %1545 = vmatmul.mubr.f32.gmra.mrb[0].mxu0 %v1094
        %v1546 = vpop.f32.mrb[0].mxu0
        %v1547 = vadd.f32 %v1233, %v1546
        %v1548 = vpop.f32.mrb[0].mxu0
        %v1549 = vadd.f32 %v1233, %v1548
        %1550 = vmatprep.mubr.f32.mxu0 0.0
        %1551 = vmatmul.mubr.f32.gmra.mrb[0].mxu0 %v1095
        %v1552 = vpop.f32.mrb[0].mxu0
        %v1553 = vadd.f32 %v1238, %v1552
        %v1554 = vpop.f32.mrb[0].mxu0
        %v1555 = vadd.f32 %v1238, %v1554
        %1556 = vmatprep.mubr.f32.mxu0 0.0
        %1557 = vmatmul.mubr.f32.gmra.mrb[0].mxu0 %v1096
        %v1558 = vpop.f32.mrb[0].mxu0
        %v1559 = vadd.f32 %v1243, %v1558
        %v1560 = vpop.f32.mrb[0].mxu0
        %v1561 = vadd.f32 %v1243, %v1560
        %1562 = vmatprep.mubr.f32.mxu0 0.0
        %1563 = vmatmul.mubr.f32.gmra.mrb[0].mxu0 %v1097
        %v1564 = vpop.f32.mrb[0].mxu0
        %v1565 = vadd.f32 %v1248, %v1564
        %v1566 = vpop.f32.mrb[0].mxu0
        %v1567 = vadd.f32 %v1248, %v1566
        %1568 = vmatprep.mubr.f32.mxu0 0.0
        %1569 = vmatmul.mubr.f32.gmra.mrb[0].mxu0 %v1098
        %v1570 = vpop.f32.mrb[0].mxu0
        %v1571 = vadd.f32 %v1253, %v1570
        %v1572 = vpop.f32.mrb[0].mxu0
        %v1573 = vadd.f32 %v1253, %v1572
        %1574 = vmatprep.mubr.f32.mxu0 0.0
        %1575 = vmatmul.mubr.f32.gmra.mrb[0].mxu0 %v1099
        %v1576 = vpop.f32.mrb[0].mxu0
        %v1577 = vadd.f32 %v1258, %v1576
        %v1578 = vpop.f32.mrb[0].mxu0
        %v1579 = vadd.f32 %v1258, %v1578
        %1580 = vmatprep.mubr.f32.mxu0 0.0
        %1581 = vmatmul.mubr.f32.gmra.mrb[0].mxu0 %v1100
        %v1582 = vpop.f32.mrb[0].mxu0
        %v1583 = vadd.f32 %v1263, %v1582
        %v1584 = vpop.f32.mrb[0].mxu0
        %v1585 = vadd.f32 %v1263, %v1584
        %1586 = vmatprep.mubr.f32.mxu0 0.0
        %1587 = vmatmul.mubr.f32.gmra.mrb[0].mxu0 %v1101
        %v1588 = vpop.f32.mrb[0].mxu0
        %v1589 = vadd.f32 %v1268, %v1588
        %v1590 = vpop.f32.mrb[0].mxu0
        %v1591 = vadd.f32 %v1268, %v1590
        %1592 = vmatprep.mubr.f32.mxu0 0.0
        %1593 = vmatmul.mubr.f32.gmra.mrb[0].mxu0 %v1102
        %v1594 = vpop.f32.mrb[0].mxu0
        %v1595 = vadd.f32 %v1273, %v1594
        %v1596 = vpop.f32.mrb[0].mxu0
        %v1597 = vadd.f32 %v1273, %v1596
        %1598 = vmatprep.mubr.f32.mxu0 0.0
        %1599 = vmatmul.mubr.f32.gmra.mrb[0].mxu0 %v1103
        %v1600 = vpop.f32.mrb[0].mxu0
        %v1601 = vadd.f32 %v1278, %v1600
        %v1602 = vpop.f32.mrb[0].mxu0
        %v1603 = vadd.f32 %v1278, %v1602
        %1604 = vmatprep.mubr.f32.mxu0 0.0
        %1605 = vmatmul.mubr.f32.gmra.mrb[0].mxu0 %v1104
        %v1606 = vpop.f32.mrb[0].mxu0
        %v1607 = vadd.f32 %v1283, %v1606
        %v1608 = vpop.f32.mrb[0].mxu0
        %v1609 = vadd.f32 %v1283, %v1608
        %1610 = vmatprep.mubr.f32.mxu0 0.0
        %1611 = vmatmul.mubr.f32.gmra.mrb[0].mxu0 %v1105
        %v1612 = vpop.f32.mrb[0].mxu0
        %v1613 = vadd.f32 %v1288, %v1612
        %v1614 = vpop.f32.mrb[0].mxu0
        %v1615 = vadd.f32 %v1288, %v1614
        %1616 = vmatprep.mubr.f32.mxu0 0.0
        %1617 = vmatmul.mubr.f32.gmra.mrb[0].mxu0 %v1106
        %v1618 = vpop.f32.mrb[0].mxu0
        %v1619 = vadd.f32 %v1293, %v1618
        %v1620 = vpop.f32.mrb[0].mxu0
        %v1621 = vadd.f32 %v1293, %v1620
        %1622 = vmatprep.mubr.f32.mxu0 0.0
        %1623 = vmatmul.mubr.f32.gmra.mrb[0].mxu0 %v1107
        %v1624 = vpop.f32.mrb[0].mxu0
        %v1625 = vadd.f32 %v1298, %v1624
        %v1626 = vpop.f32.mrb[0].mxu0
        %v1627 = vadd.f32 %v1298, %v1626
        %1628 = vmatprep.mubr.f32.mxu0 0.0
        %1629 = vmatmul.mubr.f32.gmra.mrb[0].mxu0 %v1108
        %v1630 = vpop.f32.mrb[0].mxu0
        %v1631 = vadd.f32 %v1303, %v1630
        %v1632 = vpop.f32.mrb[0].mxu0
        %v1633 = vadd.f32 %v1303, %v1632
        %1634 = vmatprep.mubr.f32.mxu0 0.0
        %1635 = vmatmul.mubr.f32.gmra.mrb[0].mxu0 %v1109
        %v1636 = vpop.f32.mrb[0].mxu0
        %v1637 = vadd.f32 %v1308, %v1636
        %v1638 = vpop.f32.mrb[0].mxu0
        %v1639 = vadd.f32 %v1308, %v1638
        %1640 = vmatprep.mubr.f32.mxu0 0.0
        %1641 = vmatmul.mubr.f32.gmra.mrb[0].mxu0 %v1110
        %v1642 = vpop.f32.mrb[0].mxu0
        %v1643 = vadd.f32 %v1313, %v1642
        %v1644 = vpop.f32.mrb[0].mxu0
        %v1645 = vadd.f32 %v1313, %v1644
        %1646 = vmatprep.mubr.f32.mxu0 0.0
        %1647 = vmatmul.mubr.f32.gmra.mrb[0].mxu0 %v1111
        %v1648 = vpop.f32.mrb[0].mxu0
        %v1649 = vadd.f32 %v1318, %v1648
        %v1650 = vpop.f32.mrb[0].mxu0
        %v1651 = vadd.f32 %v1318, %v1650
        %1652 = vmatprep.mubr.f32.mxu0 0.0
        %1653 = vmatmul.mubr.f32.gmra.mrb[0].mxu0 %v1112
        %v1654 = vpop.f32.mrb[0].mxu0
        %v1655 = vadd.f32 %v1323, %v1654
        %v1656 = vpop.f32.mrb[0].mxu0
        %v1657 = vadd.f32 %v1323, %v1656
        %1658 = vmatprep.mubr.f32.mxu0 0.0
        %1659 = vmatmul.mubr.f32.gmra.mrb[0].mxu0 %v1113
        %v1660 = vpop.f32.mrb[0].mxu0
        %v1661 = vadd.f32 %v1328, %v1660
        %v1662 = vpop.f32.mrb[0].mxu0
        %v1663 = vadd.f32 %v1328, %v1662
        %1664 = vmatprep.mubr.f32.mxu0 0.0
        %1665 = vmatmul.mubr.f32.gmra.mrb[0].mxu0 %v1114
        %v1666 = vpop.f32.mrb[0].mxu0
        %v1667 = vadd.f32 %v1333, %v1666
        %v1668 = vpop.f32.mrb[0].mxu0
        %v1669 = vadd.f32 %v1333, %v1668
        %1670 = vmatprep.mubr.f32.mxu0 0.0
        %1671 = vmatmul.mubr.f32.gmra.mrb[0].mxu0 %v1115
        %v1672 = vpop.f32.mrb[0].mxu0
        %v1673 = vadd.f32 %v1338, %v1672
        %v1674 = vpop.f32.mrb[0].mxu0
        %v1675 = vadd.f32 %v1338, %v1674
        %1676 = vmatprep.mubr.f32.mxu0 0.0
        %1677 = vmatmul.mubr.f32.gmra.mrb[0].mxu0 %v1116
        %v1678 = vpop.f32.mrb[0].mxu0
        %v1679 = vadd.f32 %v1343, %v1678
        %v1680 = vpop.f32.mrb[0].mxu0
        %v1681 = vadd.f32 %v1343, %v1680
        %1682 = vmatprep.mubr.f32.mxu0 0.0
        %1683 = vmatmul.mubr.f32.gmra.mrb[0].mxu0 %v1117
        %v1684 = vpop.f32.mrb[0].mxu0
        %v1685 = vadd.f32 %v1348, %v1684
        %v1686 = vpop.f32.mrb[0].mxu0
        %v1687 = vadd.f32 %v1348, %v1686
        %1688 = vmatprep.mubr.f32.mxu0 0.0
        %1689 = vmatmul.mubr.f32.gmra.mrb[0].mxu0 %v1118
        %v1690 = vpop.f32.mrb[0].mxu0
        %v1691 = vadd.f32 %v1353, %v1690
        %v1692 = vpop.f32.mrb[0].mxu0
        %v1693 = vadd.f32 %v1353, %v1692
        %1694 = vmatprep.mubr.f32.mxu0 0.0
        %1695 = vmatmul.mubr.f32.gmra.mrb[0].mxu0 %v1119
        %v1696 = vpop.f32.mrb[0].mxu0
        %v1697 = vadd.f32 %v1358, %v1696
        %v1698 = vpop.f32.mrb[0].mxu0
        %v1699 = vadd.f32 %v1358, %v1698
        %1700 = vmatprep.mubr.f32.mxu0 0.0
        %1701 = vmatmul.mubr.f32.gmra.mrb[0].mxu0 %v1120
        %v1702 = vpop.f32.mrb[0].mxu0
        %v1703 = vadd.f32 %v1363, %v1702
        %v1704 = vpop.f32.mrb[0].mxu0
        %v1705 = vadd.f32 %v1363, %v1704
        %1706 = vmatprep.mubr.f32.mxu0 0.0
        %1707 = vmatmul.mubr.f32.gmra.mrb[0].mxu0 %v1121
        %v1708 = vpop.f32.mrb[0].mxu0
        %v1709 = vadd.f32 %v1368, %v1708
        %v1710 = vpop.f32.mrb[0].mxu0
        %v1711 = vadd.f32 %v1368, %v1710
        %1712 = vmatprep.mubr.f32.mxu0 0.0
        %1713 = vmatmul.mubr.f32.gmra.mrb[0].mxu0 %v1122
        %v1714 = vpop.f32.mrb[0].mxu0
        %v1715 = vadd.f32 %v1373, %v1714
        %v1716 = vpop.f32.mrb[0].mxu0
        %v1717 = vadd.f32 %v1373, %v1716
        %1718 = vmatprep.mubr.f32.mxu0 0.0
        %1719 = vmatmul.mubr.f32.gmra.mrb[0].mxu0 %v1123
        %v1720 = vpop.f32.mrb[0].mxu0
        %v1721 = vadd.f32 %v1378, %v1720
        %v1722 = vpop.f32.mrb[0].mxu0
        %v1723 = vadd.f32 %v1378, %v1722
        %1724 = vmatprep.mubr.f32.mxu0 0.0
        %1725 = vmatmul.mubr.f32.gmra.mrb[0].mxu0 %v1124
        %v1726 = vpop.f32.mrb[0].mxu0
        %v1727 = vadd.f32 %v1383, %v1726
        %v1728 = vpop.f32.mrb[0].mxu0
        %v1729 = vadd.f32 %v1383, %v1728
        %1730 = vmatprep.mubr.f32.mxu0 0.0
        %1731 = vmatmul.mubr.f32.gmra.mrb[0].mxu0 %v1125
        %v1732 = vpop.f32.mrb[0].mxu0
        %v1733 = vadd.f32 %v1388, %v1732
        %v1734 = vpop.f32.mrb[0].mxu0
        %v1735 = vadd.f32 %v1388, %v1734
        %1736 = vmatprep.mubr.f32.mxu0 0.0
        %1737 = vmatmul.mubr.f32.gmra.mrb[0].mxu0 %v1126
        %v1738 = vpop.f32.mrb[0].mxu0
        %v1739 = vadd.f32 %v1393, %v1738
        %v1740 = vpop.f32.mrb[0].mxu0
        %v1741 = vadd.f32 %v1393, %v1740
        %1742 = vmatprep.mubr.f32.mxu0 0.0
        %1743 = vmatmul.mubr.f32.gmra.mrb[0].mxu0 %v1127
        %v1744 = vpop.f32.mrb[0].mxu0
        %v1745 = vadd.f32 %v1398, %v1744
        %v1746 = vpop.f32.mrb[0].mxu0
        %v1747 = vadd.f32 %v1398, %v1746
        %1748 = vmatprep.mubr.f32.mxu0 0.0
        %1749 = vmatmul.mubr.f32.gmra.mrb[0].mxu0 %v1128
        %v1750 = vpop.f32.mrb[0].mxu0
        %v1751 = vadd.f32 %v1403, %v1750
        %v1752 = vpop.f32.mrb[0].mxu0
        %v1753 = vadd.f32 %v1403, %v1752
        %1754 = vmatprep.mubr.f32.mxu0 0.0
        %1755 = vmatmul.mubr.f32.gmra.mrb[0].mxu0 %v1129
        %v1756 = vpop.f32.mrb[0].mxu0
        %v1757 = vadd.f32 %v1408, %v1756
        %v1758 = vpop.f32.mrb[0].mxu0
        %v1759 = vadd.f32 %v1408, %v1758
        %1760 = vmatprep.mubr.f32.mxu0 0.0
        %1761 = vmatmul.mubr.f32.gmra.mrb[0].mxu0 %v1130
        %v1762 = vpop.f32.mrb[0].mxu0
        %v1763 = vadd.f32 %v1413, %v1762
        %v1764 = vpop.f32.mrb[0].mxu0
        %v1765 = vadd.f32 %v1413, %v1764
        %1766 = vmatprep.mubr.f32.mxu0 0.0
        %1767 = vmatmul.mubr.f32.gmra.mrb[0].mxu0 %v1131
        %v1768 = vpop.f32.mrb[0].mxu0
        %v1769 = vadd.f32 %v1418, %v1768
        %v1770 = vpop.f32.mrb[0].mxu0
        %v1771 = vadd.f32 %v1418, %v1770
        %1772 = vdwg.mxu0
        %v1773 = vlaneseq
        %v1774 = vshrl.u32 %v1773, 7
        %v1775 = vsub.s32 0, %v1774
        %v1776 = vrot.slane %v1487, %v1775
        %v1777 = vlaneseq
        %v1778 = vshrl.u32 %v1777, 7
        %v1779 = vsub.s32 0, %v1778
        %v1780 = vrot.slane %v1489, %v1779
        %v1781 = vlaneseq
        %v1782 = vshrl.u32 %v1781, 7
        %v1783 = vsub.s32 0, %v1782
        %v1784 = vrot.slane %v1499, %v1783
        %v1785 = vlaneseq
        %v1786 = vshrl.u32 %v1785, 7
        %v1787 = vsub.s32 0, %v1786
        %v1788 = vrot.slane %v1501, %v1787
        %v1789 = vlaneseq
        %v1790 = vshrl.u32 %v1789, 7
        %v1791 = vsub.s32 0, %v1790
        %v1792 = vrot.slane %v1511, %v1791
        %v1793 = vlaneseq
        %v1794 = vshrl.u32 %v1793, 7
        %v1795 = vsub.s32 0, %v1794
        %v1796 = vrot.slane %v1513, %v1795
        %v1797 = vlaneseq
        %v1798 = vshrl.u32 %v1797, 7
        %v1799 = vsub.s32 0, %v1798
        %v1800 = vrot.slane %v1523, %v1799
        %v1801 = vlaneseq
        %v1802 = vshrl.u32 %v1801, 7
        %v1803 = vsub.s32 0, %v1802
        %v1804 = vrot.slane %v1525, %v1803
        %v1805 = vlaneseq
        %v1806 = vshrl.u32 %v1805, 7
        %v1807 = vsub.s32 0, %v1806
        %v1808 = vrot.slane %v1535, %v1807
        %v1809 = vlaneseq
        %v1810 = vshrl.u32 %v1809, 7
        %v1811 = vsub.s32 0, %v1810
        %v1812 = vrot.slane %v1537, %v1811
        %v1813 = vlaneseq
        %v1814 = vshrl.u32 %v1813, 7
        %v1815 = vsub.s32 0, %v1814
        %v1816 = vrot.slane %v1547, %v1815
        %v1817 = vlaneseq
        %v1818 = vshrl.u32 %v1817, 7
        %v1819 = vsub.s32 0, %v1818
        %v1820 = vrot.slane %v1549, %v1819
        %v1821 = vlaneseq
        %v1822 = vshrl.u32 %v1821, 7
        %v1823 = vsub.s32 0, %v1822
        %v1824 = vrot.slane %v1559, %v1823
        %v1825 = vlaneseq
        %v1826 = vshrl.u32 %v1825, 7
        %v1827 = vsub.s32 0, %v1826
        %v1828 = vrot.slane %v1561, %v1827
        %v1829 = vlaneseq
        %v1830 = vshrl.u32 %v1829, 7
        %v1831 = vsub.s32 0, %v1830
        %v1832 = vrot.slane %v1571, %v1831
        %v1833 = vlaneseq
        %v1834 = vshrl.u32 %v1833, 7
        %v1835 = vsub.s32 0, %v1834
        %v1836 = vrot.slane %v1573, %v1835
        %v1853 = vrot.slane %v1595, 7
        %vm1854 = vcmask 1041409
        %v1855 = vsel %vm1854, %v1853, %v1583
        %v1856 = vrot.slane %v1607, 6
        %vm1857 = vcmask 1042434
        %v1858 = vsel %vm1857, %v1856, %v1855
        %v1859 = vrot.slane %v1619, 5
        %vm1860 = vcmask 1043459
        %v1861 = vsel %vm1860, %v1859, %v1858
        %v1862 = vrot.slane %v1631, 4
        %vm1863 = vcmask 1044484
        %v1864 = vsel %vm1863, %v1862, %v1861
        %v1865 = vrot.slane %v1643, 3
        %vm1866 = vcmask 1045509
        %v1867 = vsel %vm1866, %v1865, %v1864
        %v1868 = vrot.slane %v1655, 2
        %vm1869 = vcmask 1046534
        %v1870 = vsel %vm1869, %v1868, %v1867
        %v1871 = vrot.slane %v1667, 1
        %vm1872 = vcmask 1047559
        %v1873 = vsel %vm1872, %v1871, %v1870
        %v1874 = vrot.slane %v1597, 7
        %v1875 = vsel %vm1854, %v1874, %v1585
        %v1876 = vrot.slane %v1609, 6
        %v1877 = vsel %vm1857, %v1876, %v1875
        %v1878 = vrot.slane %v1621, 5
        %v1879 = vsel %vm1860, %v1878, %v1877
        %v1880 = vrot.slane %v1633, 4
        %v1881 = vsel %vm1863, %v1880, %v1879
        %v1882 = vrot.slane %v1645, 3
        %v1883 = vsel %vm1866, %v1882, %v1881
        %v1884 = vrot.slane %v1657, 2
        %v1885 = vsel %vm1869, %v1884, %v1883
        %v1886 = vrot.slane %v1669, 1
        %v1887 = vsel %vm1872, %v1886, %v1885
        %v1890 = vmul.f32 %v1776, %v1873
        %v1891 = vmul.f32 %v1780, %v1887
        %v1892 = vmul.f32 %v1784, %v1873
        %v1893 = vmul.f32 %v1788, %v1887
        %v1894 = vmul.f32 %v1792, %v1873
        %v1895 = vmul.f32 %v1796, %v1887
        %v1896 = vmul.f32 %v1800, %v1873
        %v1897 = vmul.f32 %v1804, %v1887
        %v1898 = vmul.f32 %v1808, %v1873
        %v1899 = vmul.f32 %v1812, %v1887
        %v1900 = vmul.f32 %v1816, %v1873
        %v1901 = vmul.f32 %v1820, %v1887
        %v1902 = vmul.f32 %v1824, %v1873
        %v1903 = vmul.f32 %v1828, %v1887
        %v1904 = vmul.f32 %v1832, %v1873
        %v1905 = vmul.f32 %v1836, %v1887
        %v1906 = vlaneseq
        %v1907 = vshrl.u32 %v1906, 7
        %v1908 = vsub.s32 1, %v1907
        %v1909 = vrot.slane %v1487, %v1908
        %v1910 = vlaneseq
        %v1911 = vshrl.u32 %v1910, 7
        %v1912 = vsub.s32 1, %v1911
        %v1913 = vrot.slane %v1489, %v1912
        %v1914 = vlaneseq
        %v1915 = vshrl.u32 %v1914, 7
        %v1916 = vsub.s32 1, %v1915
        %v1917 = vrot.slane %v1499, %v1916
        %v1918 = vlaneseq
        %v1919 = vshrl.u32 %v1918, 7
        %v1920 = vsub.s32 1, %v1919
        %v1921 = vrot.slane %v1501, %v1920
        %v1922 = vlaneseq
        %v1923 = vshrl.u32 %v1922, 7
        %v1924 = vsub.s32 1, %v1923
        %v1925 = vrot.slane %v1511, %v1924
        %v1926 = vlaneseq
        %v1927 = vshrl.u32 %v1926, 7
        %v1928 = vsub.s32 1, %v1927
        %v1929 = vrot.slane %v1513, %v1928
        %v1930 = vlaneseq
        %v1931 = vshrl.u32 %v1930, 7
        %v1932 = vsub.s32 1, %v1931
        %v1933 = vrot.slane %v1523, %v1932
        %v1934 = vlaneseq
        %v1935 = vshrl.u32 %v1934, 7
        %v1936 = vsub.s32 1, %v1935
        %v1937 = vrot.slane %v1525, %v1936
        %v1938 = vlaneseq
        %v1939 = vshrl.u32 %v1938, 7
        %v1940 = vsub.s32 1, %v1939
        %v1941 = vrot.slane %v1535, %v1940
        %v1942 = vlaneseq
        %v1943 = vshrl.u32 %v1942, 7
        %v1944 = vsub.s32 1, %v1943
        %v1945 = vrot.slane %v1537, %v1944
        %v1946 = vlaneseq
        %v1947 = vshrl.u32 %v1946, 7
        %v1948 = vsub.s32 1, %v1947
        %v1949 = vrot.slane %v1547, %v1948
        %v1950 = vlaneseq
        %v1951 = vshrl.u32 %v1950, 7
        %v1952 = vsub.s32 1, %v1951
        %v1953 = vrot.slane %v1549, %v1952
        %v1954 = vlaneseq
        %v1955 = vshrl.u32 %v1954, 7
        %v1956 = vsub.s32 1, %v1955
        %v1957 = vrot.slane %v1559, %v1956
        %v1958 = vlaneseq
        %v1959 = vshrl.u32 %v1958, 7
        %v1960 = vsub.s32 1, %v1959
        %v1961 = vrot.slane %v1561, %v1960
        %v1962 = vlaneseq
        %v1963 = vshrl.u32 %v1962, 7
        %v1964 = vsub.s32 1, %v1963
        %v1965 = vrot.slane %v1571, %v1964
        %v1966 = vlaneseq
        %v1967 = vshrl.u32 %v1966, 7
        %v1968 = vsub.s32 1, %v1967
        %v1969 = vrot.slane %v1573, %v1968
        %v1970 = vrot.slane %v1583, 1
        %v1971 = vsel %vm1854, %v1595, %v1970
        %v1972 = vrot.slane %v1607, 7
        %v1973 = vsel %vm1857, %v1972, %v1971
        %v1974 = vrot.slane %v1619, 6
        %v1975 = vsel %vm1860, %v1974, %v1973
        %v1976 = vrot.slane %v1631, 5
        %v1977 = vsel %vm1863, %v1976, %v1975
        %v1978 = vrot.slane %v1643, 4
        %v1979 = vsel %vm1866, %v1978, %v1977
        %v1980 = vrot.slane %v1655, 3
        %v1981 = vsel %vm1869, %v1980, %v1979
        %v1982 = vrot.slane %v1667, 2
        %v1983 = vsel %vm1872, %v1982, %v1981
        %v1984 = vrot.slane %v1585, 1
        %v1985 = vsel %vm1854, %v1597, %v1984
        %v1986 = vrot.slane %v1609, 7
        %v1987 = vsel %vm1857, %v1986, %v1985
        %v1988 = vrot.slane %v1621, 6
        %v1989 = vsel %vm1860, %v1988, %v1987
        %v1990 = vrot.slane %v1633, 5
        %v1991 = vsel %vm1863, %v1990, %v1989
        %v1992 = vrot.slane %v1645, 4
        %v1993 = vsel %vm1866, %v1992, %v1991
        %v1994 = vrot.slane %v1657, 3
        %v1995 = vsel %vm1869, %v1994, %v1993
        %v1996 = vrot.slane %v1669, 2
        %v1997 = vsel %vm1872, %v1996, %v1995
        %v2000 = vmul.f32 %v1909, %v1983
        %v2001 = vmul.f32 %v1913, %v1997
        %v2002 = vmul.f32 %v1917, %v1983
        %v2003 = vmul.f32 %v1921, %v1997
        %v2004 = vmul.f32 %v1925, %v1983
        %v2005 = vmul.f32 %v1929, %v1997
        %v2006 = vmul.f32 %v1933, %v1983
        %v2007 = vmul.f32 %v1937, %v1997
        %v2008 = vmul.f32 %v1941, %v1983
        %v2009 = vmul.f32 %v1945, %v1997
        %v2010 = vmul.f32 %v1949, %v1983
        %v2011 = vmul.f32 %v1953, %v1997
        %v2012 = vmul.f32 %v1957, %v1983
        %v2013 = vmul.f32 %v1961, %v1997
        %v2014 = vmul.f32 %v1965, %v1983
        %v2015 = vmul.f32 %v1969, %v1997
        %v2016 = vadd.f32 %v1890, %v2000
        %v2017 = vadd.f32 %v1891, %v2001
        %v2018 = vadd.f32 %v1892, %v2002
        %v2019 = vadd.f32 %v1893, %v2003
        %v2020 = vadd.f32 %v1894, %v2004
        %v2021 = vadd.f32 %v1895, %v2005
        %v2022 = vadd.f32 %v1896, %v2006
        %v2023 = vadd.f32 %v1897, %v2007
        %v2024 = vadd.f32 %v1898, %v2008
        %v2025 = vadd.f32 %v1899, %v2009
        %v2026 = vadd.f32 %v1900, %v2010
        %v2027 = vadd.f32 %v1901, %v2011
        %v2028 = vadd.f32 %v1902, %v2012
        %v2029 = vadd.f32 %v1903, %v2013
        %v2030 = vadd.f32 %v1904, %v2014
        %v2031 = vadd.f32 %v1905, %v2015
        %v2032 = vlaneseq
        %v2033 = vshrl.u32 %v2032, 7
        %v2034 = vsub.s32 2, %v2033
        %v2035 = vrot.slane %v1487, %v2034
        %v2036 = vlaneseq
        %v2037 = vshrl.u32 %v2036, 7
        %v2038 = vsub.s32 2, %v2037
        %v2039 = vrot.slane %v1489, %v2038
        %v2040 = vlaneseq
        %v2041 = vshrl.u32 %v2040, 7
        %v2042 = vsub.s32 2, %v2041
        %v2043 = vrot.slane %v1499, %v2042
        %v2044 = vlaneseq
        %v2045 = vshrl.u32 %v2044, 7
        %v2046 = vsub.s32 2, %v2045
        %v2047 = vrot.slane %v1501, %v2046
        %v2048 = vlaneseq
        %v2049 = vshrl.u32 %v2048, 7
        %v2050 = vsub.s32 2, %v2049
        %v2051 = vrot.slane %v1511, %v2050
        %v2052 = vlaneseq
        %v2053 = vshrl.u32 %v2052, 7
        %v2054 = vsub.s32 2, %v2053
        %v2055 = vrot.slane %v1513, %v2054
        %v2056 = vlaneseq
        %v2057 = vshrl.u32 %v2056, 7
        %v2058 = vsub.s32 2, %v2057
        %v2059 = vrot.slane %v1523, %v2058
        %v2060 = vlaneseq
        %v2061 = vshrl.u32 %v2060, 7
        %v2062 = vsub.s32 2, %v2061
        %v2063 = vrot.slane %v1525, %v2062
        %v2064 = vlaneseq
        %v2065 = vshrl.u32 %v2064, 7
        %v2066 = vsub.s32 2, %v2065
        %v2067 = vrot.slane %v1535, %v2066
        %v2068 = vlaneseq
        %v2069 = vshrl.u32 %v2068, 7
        %v2070 = vsub.s32 2, %v2069
        %v2071 = vrot.slane %v1537, %v2070
        %v2072 = vlaneseq
        %v2073 = vshrl.u32 %v2072, 7
        %v2074 = vsub.s32 2, %v2073
        %v2075 = vrot.slane %v1547, %v2074
        %v2076 = vlaneseq
        %v2077 = vshrl.u32 %v2076, 7
        %v2078 = vsub.s32 2, %v2077
        %v2079 = vrot.slane %v1549, %v2078
        %v2080 = vlaneseq
        %v2081 = vshrl.u32 %v2080, 7
        %v2082 = vsub.s32 2, %v2081
        %v2083 = vrot.slane %v1559, %v2082
        %v2084 = vlaneseq
        %v2085 = vshrl.u32 %v2084, 7
        %v2086 = vsub.s32 2, %v2085
        %v2087 = vrot.slane %v1561, %v2086
        %v2088 = vlaneseq
        %v2089 = vshrl.u32 %v2088, 7
        %v2090 = vsub.s32 2, %v2089
        %v2091 = vrot.slane %v1571, %v2090
        %v2092 = vlaneseq
        %v2093 = vshrl.u32 %v2092, 7
        %v2094 = vsub.s32 2, %v2093
        %v2095 = vrot.slane %v1573, %v2094
        %v2096 = vrot.slane %v1583, 2
        %v2097 = vrot.slane %v1595, 1
        %v2098 = vsel %vm1854, %v2097, %v2096
        %v2099 = vsel %vm1857, %v1607, %v2098
        %v2100 = vrot.slane %v1619, 7
        %v2101 = vsel %vm1860, %v2100, %v2099
        %v2102 = vrot.slane %v1631, 6
        %v2103 = vsel %vm1863, %v2102, %v2101
        %v2104 = vrot.slane %v1643, 5
        %v2105 = vsel %vm1866, %v2104, %v2103
        %v2106 = vrot.slane %v1655, 4
        %v2107 = vsel %vm1869, %v2106, %v2105
        %v2108 = vrot.slane %v1667, 3
        %v2109 = vsel %vm1872, %v2108, %v2107
        %v2110 = vrot.slane %v1585, 2
        %v2111 = vrot.slane %v1597, 1
        %v2112 = vsel %vm1854, %v2111, %v2110
        %v2113 = vsel %vm1857, %v1609, %v2112
        %v2114 = vrot.slane %v1621, 7
        %v2115 = vsel %vm1860, %v2114, %v2113
        %v2116 = vrot.slane %v1633, 6
        %v2117 = vsel %vm1863, %v2116, %v2115
        %v2118 = vrot.slane %v1645, 5
        %v2119 = vsel %vm1866, %v2118, %v2117
        %v2120 = vrot.slane %v1657, 4
        %v2121 = vsel %vm1869, %v2120, %v2119
        %v2122 = vrot.slane %v1669, 3
        %v2123 = vsel %vm1872, %v2122, %v2121
        %v2126 = vmul.f32 %v2035, %v2109
        %v2127 = vmul.f32 %v2039, %v2123
        %v2128 = vmul.f32 %v2043, %v2109
        %v2129 = vmul.f32 %v2047, %v2123
        %v2130 = vmul.f32 %v2051, %v2109
        %v2131 = vmul.f32 %v2055, %v2123
        %v2132 = vmul.f32 %v2059, %v2109
        %v2133 = vmul.f32 %v2063, %v2123
        %v2134 = vmul.f32 %v2067, %v2109
        %v2135 = vmul.f32 %v2071, %v2123
        %v2136 = vmul.f32 %v2075, %v2109
        %v2137 = vmul.f32 %v2079, %v2123
        %v2138 = vmul.f32 %v2083, %v2109
        %v2139 = vmul.f32 %v2087, %v2123
        %v2140 = vmul.f32 %v2091, %v2109
        %v2141 = vmul.f32 %v2095, %v2123
        %v2142 = vadd.f32 %v2016, %v2126
        %v2143 = vadd.f32 %v2017, %v2127
        %v2144 = vadd.f32 %v2018, %v2128
        %v2145 = vadd.f32 %v2019, %v2129
        %v2146 = vadd.f32 %v2020, %v2130
        %v2147 = vadd.f32 %v2021, %v2131
        %v2148 = vadd.f32 %v2022, %v2132
        %v2149 = vadd.f32 %v2023, %v2133
        %v2150 = vadd.f32 %v2024, %v2134
        %v2151 = vadd.f32 %v2025, %v2135
        %v2152 = vadd.f32 %v2026, %v2136
        %v2153 = vadd.f32 %v2027, %v2137
        %v2154 = vadd.f32 %v2028, %v2138
        %v2155 = vadd.f32 %v2029, %v2139
        %v2156 = vadd.f32 %v2030, %v2140
        %v2157 = vadd.f32 %v2031, %v2141
        %v2158 = vlaneseq
        %v2159 = vshrl.u32 %v2158, 7
        %v2160 = vsub.s32 3, %v2159
        %v2161 = vrot.slane %v1487, %v2160
        %v2162 = vlaneseq
        %v2163 = vshrl.u32 %v2162, 7
        %v2164 = vsub.s32 3, %v2163
        %v2165 = vrot.slane %v1489, %v2164
        %v2166 = vlaneseq
        %v2167 = vshrl.u32 %v2166, 7
        %v2168 = vsub.s32 3, %v2167
        %v2169 = vrot.slane %v1499, %v2168
        %v2170 = vlaneseq
        %v2171 = vshrl.u32 %v2170, 7
        %v2172 = vsub.s32 3, %v2171
        %v2173 = vrot.slane %v1501, %v2172
        %v2174 = vlaneseq
        %v2175 = vshrl.u32 %v2174, 7
        %v2176 = vsub.s32 3, %v2175
        %v2177 = vrot.slane %v1511, %v2176
        %v2178 = vlaneseq
        %v2179 = vshrl.u32 %v2178, 7
        %v2180 = vsub.s32 3, %v2179
        %v2181 = vrot.slane %v1513, %v2180
        %v2182 = vlaneseq
        %v2183 = vshrl.u32 %v2182, 7
        %v2184 = vsub.s32 3, %v2183
        %v2185 = vrot.slane %v1523, %v2184
        %v2186 = vlaneseq
        %v2187 = vshrl.u32 %v2186, 7
        %v2188 = vsub.s32 3, %v2187
        %v2189 = vrot.slane %v1525, %v2188
        %v2190 = vlaneseq
        %v2191 = vshrl.u32 %v2190, 7
        %v2192 = vsub.s32 3, %v2191
        %v2193 = vrot.slane %v1535, %v2192
        %v2194 = vlaneseq
        %v2195 = vshrl.u32 %v2194, 7
        %v2196 = vsub.s32 3, %v2195
        %v2197 = vrot.slane %v1537, %v2196
        %v2198 = vlaneseq
        %v2199 = vshrl.u32 %v2198, 7
        %v2200 = vsub.s32 3, %v2199
        %v2201 = vrot.slane %v1547, %v2200
        %v2202 = vlaneseq
        %v2203 = vshrl.u32 %v2202, 7
        %v2204 = vsub.s32 3, %v2203
        %v2205 = vrot.slane %v1549, %v2204
        %v2206 = vlaneseq
        %v2207 = vshrl.u32 %v2206, 7
        %v2208 = vsub.s32 3, %v2207
        %v2209 = vrot.slane %v1559, %v2208
        %v2210 = vlaneseq
        %v2211 = vshrl.u32 %v2210, 7
        %v2212 = vsub.s32 3, %v2211
        %v2213 = vrot.slane %v1561, %v2212
        %v2214 = vlaneseq
        %v2215 = vshrl.u32 %v2214, 7
        %v2216 = vsub.s32 3, %v2215
        %v2217 = vrot.slane %v1571, %v2216
        %v2218 = vlaneseq
        %v2219 = vshrl.u32 %v2218, 7
        %v2220 = vsub.s32 3, %v2219
        %v2221 = vrot.slane %v1573, %v2220
        %v2222 = vrot.slane %v1583, 3
        %v2223 = vrot.slane %v1595, 2
        %v2224 = vsel %vm1854, %v2223, %v2222
        %v2225 = vrot.slane %v1607, 1
        %v2226 = vsel %vm1857, %v2225, %v2224
        %v2227 = vsel %vm1860, %v1619, %v2226
        %v2228 = vrot.slane %v1631, 7
        %v2229 = vsel %vm1863, %v2228, %v2227
        %v2230 = vrot.slane %v1643, 6
        %v2231 = vsel %vm1866, %v2230, %v2229
        %v2232 = vrot.slane %v1655, 5
        %v2233 = vsel %vm1869, %v2232, %v2231
        %v2234 = vrot.slane %v1667, 4
        %v2235 = vsel %vm1872, %v2234, %v2233
        %v2236 = vrot.slane %v1585, 3
        %v2237 = vrot.slane %v1597, 2
        %v2238 = vsel %vm1854, %v2237, %v2236
        %v2239 = vrot.slane %v1609, 1
        %v2240 = vsel %vm1857, %v2239, %v2238
        %v2241 = vsel %vm1860, %v1621, %v2240
        %v2242 = vrot.slane %v1633, 7
        %v2243 = vsel %vm1863, %v2242, %v2241
        %v2244 = vrot.slane %v1645, 6
        %v2245 = vsel %vm1866, %v2244, %v2243
        %v2246 = vrot.slane %v1657, 5
        %v2247 = vsel %vm1869, %v2246, %v2245
        %v2248 = vrot.slane %v1669, 4
        %v2249 = vsel %vm1872, %v2248, %v2247
        %v2252 = vmul.f32 %v2161, %v2235
        %v2253 = vmul.f32 %v2165, %v2249
        %v2254 = vmul.f32 %v2169, %v2235
        %v2255 = vmul.f32 %v2173, %v2249
        %v2256 = vmul.f32 %v2177, %v2235
        %v2257 = vmul.f32 %v2181, %v2249
        %v2258 = vmul.f32 %v2185, %v2235
        %v2259 = vmul.f32 %v2189, %v2249
        %v2260 = vmul.f32 %v2193, %v2235
        %v2261 = vmul.f32 %v2197, %v2249
        %v2262 = vmul.f32 %v2201, %v2235
        %v2263 = vmul.f32 %v2205, %v2249
        %v2264 = vmul.f32 %v2209, %v2235
        %v2265 = vmul.f32 %v2213, %v2249
        %v2266 = vmul.f32 %v2217, %v2235
        %v2267 = vmul.f32 %v2221, %v2249
        %v2268 = vadd.f32 %v2142, %v2252
        %v2269 = vadd.f32 %v2143, %v2253
        %v2270 = vadd.f32 %v2144, %v2254
        %v2271 = vadd.f32 %v2145, %v2255
        %v2272 = vadd.f32 %v2146, %v2256
        %v2273 = vadd.f32 %v2147, %v2257
        %v2274 = vadd.f32 %v2148, %v2258
        %v2275 = vadd.f32 %v2149, %v2259
        %v2276 = vadd.f32 %v2150, %v2260
        %v2277 = vadd.f32 %v2151, %v2261
        %v2278 = vadd.f32 %v2152, %v2262
        %v2279 = vadd.f32 %v2153, %v2263
        %v2280 = vadd.f32 %v2154, %v2264
        %v2281 = vadd.f32 %v2155, %v2265
        %v2282 = vadd.f32 %v2156, %v2266
        %v2283 = vadd.f32 %v2157, %v2267
        %v2284 = vlaneseq
        %v2285 = vshrl.u32 %v2284, 7
        %v2286 = vsub.s32 4, %v2285
        %v2287 = vrot.slane %v1487, %v2286
        %v2288 = vlaneseq
        %v2289 = vshrl.u32 %v2288, 7
        %v2290 = vsub.s32 4, %v2289
        %v2291 = vrot.slane %v1489, %v2290
        %v2292 = vlaneseq
        %v2293 = vshrl.u32 %v2292, 7
        %v2294 = vsub.s32 4, %v2293
        %v2295 = vrot.slane %v1499, %v2294
        %v2296 = vlaneseq
        %v2297 = vshrl.u32 %v2296, 7
        %v2298 = vsub.s32 4, %v2297
        %v2299 = vrot.slane %v1501, %v2298
        %v2300 = vlaneseq
        %v2301 = vshrl.u32 %v2300, 7
        %v2302 = vsub.s32 4, %v2301
        %v2303 = vrot.slane %v1511, %v2302
        %v2304 = vlaneseq
        %v2305 = vshrl.u32 %v2304, 7
        %v2306 = vsub.s32 4, %v2305
        %v2307 = vrot.slane %v1513, %v2306
        %v2308 = vlaneseq
        %v2309 = vshrl.u32 %v2308, 7
        %v2310 = vsub.s32 4, %v2309
        %v2311 = vrot.slane %v1523, %v2310
        %v2312 = vlaneseq
        %v2313 = vshrl.u32 %v2312, 7
        %v2314 = vsub.s32 4, %v2313
        %v2315 = vrot.slane %v1525, %v2314
        %v2316 = vlaneseq
        %v2317 = vshrl.u32 %v2316, 7
        %v2318 = vsub.s32 4, %v2317
        %v2319 = vrot.slane %v1535, %v2318
        %v2320 = vlaneseq
        %v2321 = vshrl.u32 %v2320, 7
        %v2322 = vsub.s32 4, %v2321
        %v2323 = vrot.slane %v1537, %v2322
        %v2324 = vlaneseq
        %v2325 = vshrl.u32 %v2324, 7
        %v2326 = vsub.s32 4, %v2325
        %v2327 = vrot.slane %v1547, %v2326
        %v2328 = vlaneseq
        %v2329 = vshrl.u32 %v2328, 7
        %v2330 = vsub.s32 4, %v2329
        %v2331 = vrot.slane %v1549, %v2330
        %v2332 = vlaneseq
        %v2333 = vshrl.u32 %v2332, 7
        %v2334 = vsub.s32 4, %v2333
        %v2335 = vrot.slane %v1559, %v2334
        %v2336 = vlaneseq
        %v2337 = vshrl.u32 %v2336, 7
        %v2338 = vsub.s32 4, %v2337
        %v2339 = vrot.slane %v1561, %v2338
        %v2340 = vlaneseq
        %v2341 = vshrl.u32 %v2340, 7
        %v2342 = vsub.s32 4, %v2341
        %v2343 = vrot.slane %v1571, %v2342
        %v2344 = vlaneseq
        %v2345 = vshrl.u32 %v2344, 7
        %v2346 = vsub.s32 4, %v2345
        %v2347 = vrot.slane %v1573, %v2346
        %v2348 = vrot.slane %v1583, 4
        %v2349 = vrot.slane %v1595, 3
        %v2350 = vsel %vm1854, %v2349, %v2348
        %v2351 = vrot.slane %v1607, 2
        %v2352 = vsel %vm1857, %v2351, %v2350
        %v2353 = vrot.slane %v1619, 1
        %v2354 = vsel %vm1860, %v2353, %v2352
        %v2355 = vsel %vm1863, %v1631, %v2354
        %v2356 = vrot.slane %v1643, 7
        %v2357 = vsel %vm1866, %v2356, %v2355
        %v2358 = vrot.slane %v1655, 6
        %v2359 = vsel %vm1869, %v2358, %v2357
        %v2360 = vrot.slane %v1667, 5
        %v2361 = vsel %vm1872, %v2360, %v2359
        %v2362 = vrot.slane %v1585, 4
        %v2363 = vrot.slane %v1597, 3
        %v2364 = vsel %vm1854, %v2363, %v2362
        %v2365 = vrot.slane %v1609, 2
        %v2366 = vsel %vm1857, %v2365, %v2364
        %v2367 = vrot.slane %v1621, 1
        %v2368 = vsel %vm1860, %v2367, %v2366
        %v2369 = vsel %vm1863, %v1633, %v2368
        %v2370 = vrot.slane %v1645, 7
        %v2371 = vsel %vm1866, %v2370, %v2369
        %v2372 = vrot.slane %v1657, 6
        %v2373 = vsel %vm1869, %v2372, %v2371
        %v2374 = vrot.slane %v1669, 5
        %v2375 = vsel %vm1872, %v2374, %v2373
        %v2378 = vmul.f32 %v2287, %v2361
        %v2379 = vmul.f32 %v2291, %v2375
        %v2380 = vmul.f32 %v2295, %v2361
        %v2381 = vmul.f32 %v2299, %v2375
        %v2382 = vmul.f32 %v2303, %v2361
        %v2383 = vmul.f32 %v2307, %v2375
        %v2384 = vmul.f32 %v2311, %v2361
        %v2385 = vmul.f32 %v2315, %v2375
        %v2386 = vmul.f32 %v2319, %v2361
        %v2387 = vmul.f32 %v2323, %v2375
        %v2388 = vmul.f32 %v2327, %v2361
        %v2389 = vmul.f32 %v2331, %v2375
        %v2390 = vmul.f32 %v2335, %v2361
        %v2391 = vmul.f32 %v2339, %v2375
        %v2392 = vmul.f32 %v2343, %v2361
        %v2393 = vmul.f32 %v2347, %v2375
        %v2394 = vadd.f32 %v2268, %v2378
        %v2395 = vadd.f32 %v2269, %v2379
        %v2396 = vadd.f32 %v2270, %v2380
        %v2397 = vadd.f32 %v2271, %v2381
        %v2398 = vadd.f32 %v2272, %v2382
        %v2399 = vadd.f32 %v2273, %v2383
        %v2400 = vadd.f32 %v2274, %v2384
        %v2401 = vadd.f32 %v2275, %v2385
        %v2402 = vadd.f32 %v2276, %v2386
        %v2403 = vadd.f32 %v2277, %v2387
        %v2404 = vadd.f32 %v2278, %v2388
        %v2405 = vadd.f32 %v2279, %v2389
        %v2406 = vadd.f32 %v2280, %v2390
        %v2407 = vadd.f32 %v2281, %v2391
        %v2408 = vadd.f32 %v2282, %v2392
        %v2409 = vadd.f32 %v2283, %v2393
        %v2410 = vlaneseq
        %v2411 = vshrl.u32 %v2410, 7
        %v2412 = vsub.s32 5, %v2411
        %v2413 = vrot.slane %v1487, %v2412
        %v2414 = vlaneseq
        %v2415 = vshrl.u32 %v2414, 7
        %v2416 = vsub.s32 5, %v2415
        %v2417 = vrot.slane %v1489, %v2416
        %v2418 = vlaneseq
        %v2419 = vshrl.u32 %v2418, 7
        %v2420 = vsub.s32 5, %v2419
        %v2421 = vrot.slane %v1499, %v2420
        %v2422 = vlaneseq
        %v2423 = vshrl.u32 %v2422, 7
        %v2424 = vsub.s32 5, %v2423
        %v2425 = vrot.slane %v1501, %v2424
        %v2426 = vlaneseq
        %v2427 = vshrl.u32 %v2426, 7
        %v2428 = vsub.s32 5, %v2427
        %v2429 = vrot.slane %v1511, %v2428
        %v2430 = vlaneseq
        %v2431 = vshrl.u32 %v2430, 7
        %v2432 = vsub.s32 5, %v2431
        %v2433 = vrot.slane %v1513, %v2432
        %v2434 = vlaneseq
        %v2435 = vshrl.u32 %v2434, 7
        %v2436 = vsub.s32 5, %v2435
        %v2437 = vrot.slane %v1523, %v2436
        %v2438 = vlaneseq
        %v2439 = vshrl.u32 %v2438, 7
        %v2440 = vsub.s32 5, %v2439
        %v2441 = vrot.slane %v1525, %v2440
        %v2442 = vlaneseq
        %v2443 = vshrl.u32 %v2442, 7
        %v2444 = vsub.s32 5, %v2443
        %v2445 = vrot.slane %v1535, %v2444
        %v2446 = vlaneseq
        %v2447 = vshrl.u32 %v2446, 7
        %v2448 = vsub.s32 5, %v2447
        %v2449 = vrot.slane %v1537, %v2448
        %v2450 = vlaneseq
        %v2451 = vshrl.u32 %v2450, 7
        %v2452 = vsub.s32 5, %v2451
        %v2453 = vrot.slane %v1547, %v2452
        %v2454 = vlaneseq
        %v2455 = vshrl.u32 %v2454, 7
        %v2456 = vsub.s32 5, %v2455
        %v2457 = vrot.slane %v1549, %v2456
        %v2458 = vlaneseq
        %v2459 = vshrl.u32 %v2458, 7
        %v2460 = vsub.s32 5, %v2459
        %v2461 = vrot.slane %v1559, %v2460
        %v2462 = vlaneseq
        %v2463 = vshrl.u32 %v2462, 7
        %v2464 = vsub.s32 5, %v2463
        %v2465 = vrot.slane %v1561, %v2464
        %v2466 = vlaneseq
        %v2467 = vshrl.u32 %v2466, 7
        %v2468 = vsub.s32 5, %v2467
        %v2469 = vrot.slane %v1571, %v2468
        %v2470 = vlaneseq
        %v2471 = vshrl.u32 %v2470, 7
        %v2472 = vsub.s32 5, %v2471
        %v2473 = vrot.slane %v1573, %v2472
        %v2474 = vrot.slane %v1583, 5
        %v2475 = vrot.slane %v1595, 4
        %v2476 = vsel %vm1854, %v2475, %v2474
        %v2477 = vrot.slane %v1607, 3
        %v2478 = vsel %vm1857, %v2477, %v2476
        %v2479 = vrot.slane %v1619, 2
        %v2480 = vsel %vm1860, %v2479, %v2478
        %v2481 = vrot.slane %v1631, 1
        %v2482 = vsel %vm1863, %v2481, %v2480
        %v2483 = vsel %vm1866, %v1643, %v2482
        %v2484 = vrot.slane %v1655, 7
        %v2485 = vsel %vm1869, %v2484, %v2483
        %v2486 = vrot.slane %v1667, 6
        %v2487 = vsel %vm1872, %v2486, %v2485
        %v2488 = vrot.slane %v1585, 5
        %v2489 = vrot.slane %v1597, 4
        %v2490 = vsel %vm1854, %v2489, %v2488
        %v2491 = vrot.slane %v1609, 3
        %v2492 = vsel %vm1857, %v2491, %v2490
        %v2493 = vrot.slane %v1621, 2
        %v2494 = vsel %vm1860, %v2493, %v2492
        %v2495 = vrot.slane %v1633, 1
        %v2496 = vsel %vm1863, %v2495, %v2494
        %v2497 = vsel %vm1866, %v1645, %v2496
        %v2498 = vrot.slane %v1657, 7
        %v2499 = vsel %vm1869, %v2498, %v2497
        %v2500 = vrot.slane %v1669, 6
        %v2501 = vsel %vm1872, %v2500, %v2499
        %v2504 = vmul.f32 %v2413, %v2487
        %v2505 = vmul.f32 %v2417, %v2501
        %v2506 = vmul.f32 %v2421, %v2487
        %v2507 = vmul.f32 %v2425, %v2501
        %v2508 = vmul.f32 %v2429, %v2487
        %v2509 = vmul.f32 %v2433, %v2501
        %v2510 = vmul.f32 %v2437, %v2487
        %v2511 = vmul.f32 %v2441, %v2501
        %v2512 = vmul.f32 %v2445, %v2487
        %v2513 = vmul.f32 %v2449, %v2501
        %v2514 = vmul.f32 %v2453, %v2487
        %v2515 = vmul.f32 %v2457, %v2501
        %v2516 = vmul.f32 %v2461, %v2487
        %v2517 = vmul.f32 %v2465, %v2501
        %v2518 = vmul.f32 %v2469, %v2487
        %v2519 = vmul.f32 %v2473, %v2501
        %v2520 = vadd.f32 %v2394, %v2504
        %v2521 = vadd.f32 %v2395, %v2505
        %v2522 = vadd.f32 %v2396, %v2506
        %v2523 = vadd.f32 %v2397, %v2507
        %v2524 = vadd.f32 %v2398, %v2508
        %v2525 = vadd.f32 %v2399, %v2509
        %v2526 = vadd.f32 %v2400, %v2510
        %v2527 = vadd.f32 %v2401, %v2511
        %v2528 = vadd.f32 %v2402, %v2512
        %v2529 = vadd.f32 %v2403, %v2513
        %v2530 = vadd.f32 %v2404, %v2514
        %v2531 = vadd.f32 %v2405, %v2515
        %v2532 = vadd.f32 %v2406, %v2516
        %v2533 = vadd.f32 %v2407, %v2517
        %v2534 = vadd.f32 %v2408, %v2518
        %v2535 = vadd.f32 %v2409, %v2519
        %v2536 = vlaneseq
        %v2537 = vshrl.u32 %v2536, 7
        %v2538 = vsub.s32 6, %v2537
        %v2539 = vrot.slane %v1487, %v2538
        %v2540 = vlaneseq
        %v2541 = vshrl.u32 %v2540, 7
        %v2542 = vsub.s32 6, %v2541
        %v2543 = vrot.slane %v1489, %v2542
        %v2544 = vlaneseq
        %v2545 = vshrl.u32 %v2544, 7
        %v2546 = vsub.s32 6, %v2545
        %v2547 = vrot.slane %v1499, %v2546
        %v2548 = vlaneseq
        %v2549 = vshrl.u32 %v2548, 7
        %v2550 = vsub.s32 6, %v2549
        %v2551 = vrot.slane %v1501, %v2550
        %v2552 = vlaneseq
        %v2553 = vshrl.u32 %v2552, 7
        %v2554 = vsub.s32 6, %v2553
        %v2555 = vrot.slane %v1511, %v2554
        %v2556 = vlaneseq
        %v2557 = vshrl.u32 %v2556, 7
        %v2558 = vsub.s32 6, %v2557
        %v2559 = vrot.slane %v1513, %v2558
        %v2560 = vlaneseq
        %v2561 = vshrl.u32 %v2560, 7
        %v2562 = vsub.s32 6, %v2561
        %v2563 = vrot.slane %v1523, %v2562
        %v2564 = vlaneseq
        %v2565 = vshrl.u32 %v2564, 7
        %v2566 = vsub.s32 6, %v2565
        %v2567 = vrot.slane %v1525, %v2566
        %v2568 = vlaneseq
        %v2569 = vshrl.u32 %v2568, 7
        %v2570 = vsub.s32 6, %v2569
        %v2571 = vrot.slane %v1535, %v2570
        %v2572 = vlaneseq
        %v2573 = vshrl.u32 %v2572, 7
        %v2574 = vsub.s32 6, %v2573
        %v2575 = vrot.slane %v1537, %v2574
        %v2576 = vlaneseq
        %v2577 = vshrl.u32 %v2576, 7
        %v2578 = vsub.s32 6, %v2577
        %v2579 = vrot.slane %v1547, %v2578
        %v2580 = vlaneseq
        %v2581 = vshrl.u32 %v2580, 7
        %v2582 = vsub.s32 6, %v2581
        %v2583 = vrot.slane %v1549, %v2582
        %v2584 = vlaneseq
        %v2585 = vshrl.u32 %v2584, 7
        %v2586 = vsub.s32 6, %v2585
        %v2587 = vrot.slane %v1559, %v2586
        %v2588 = vlaneseq
        %v2589 = vshrl.u32 %v2588, 7
        %v2590 = vsub.s32 6, %v2589
        %v2591 = vrot.slane %v1561, %v2590
        %v2592 = vlaneseq
        %v2593 = vshrl.u32 %v2592, 7
        %v2594 = vsub.s32 6, %v2593
        %v2595 = vrot.slane %v1571, %v2594
        %v2596 = vlaneseq
        %v2597 = vshrl.u32 %v2596, 7
        %v2598 = vsub.s32 6, %v2597
        %v2599 = vrot.slane %v1573, %v2598
        %v2600 = vrot.slane %v1583, 6
        %v2601 = vrot.slane %v1595, 5
        %v2602 = vsel %vm1854, %v2601, %v2600
        %v2603 = vrot.slane %v1607, 4
        %v2604 = vsel %vm1857, %v2603, %v2602
        %v2605 = vrot.slane %v1619, 3
        %v2606 = vsel %vm1860, %v2605, %v2604
        %v2607 = vrot.slane %v1631, 2
        %v2608 = vsel %vm1863, %v2607, %v2606
        %v2609 = vrot.slane %v1643, 1
        %v2610 = vsel %vm1866, %v2609, %v2608
        %v2611 = vsel %vm1869, %v1655, %v2610
        %v2612 = vrot.slane %v1667, 7
        %v2613 = vsel %vm1872, %v2612, %v2611
        %v2614 = vrot.slane %v1585, 6
        %v2615 = vrot.slane %v1597, 5
        %v2616 = vsel %vm1854, %v2615, %v2614
        %v2617 = vrot.slane %v1609, 4
        %v2618 = vsel %vm1857, %v2617, %v2616
        %v2619 = vrot.slane %v1621, 3
        %v2620 = vsel %vm1860, %v2619, %v2618
        %v2621 = vrot.slane %v1633, 2
        %v2622 = vsel %vm1863, %v2621, %v2620
        %v2623 = vrot.slane %v1645, 1
        %v2624 = vsel %vm1866, %v2623, %v2622
        %v2625 = vsel %vm1869, %v1657, %v2624
        %v2626 = vrot.slane %v1669, 7
        %v2627 = vsel %vm1872, %v2626, %v2625
        %v2630 = vmul.f32 %v2539, %v2613
        %v2631 = vmul.f32 %v2543, %v2627
        %v2632 = vmul.f32 %v2547, %v2613
        %v2633 = vmul.f32 %v2551, %v2627
        %v2634 = vmul.f32 %v2555, %v2613
        %v2635 = vmul.f32 %v2559, %v2627
        %v2636 = vmul.f32 %v2563, %v2613
        %v2637 = vmul.f32 %v2567, %v2627
        %v2638 = vmul.f32 %v2571, %v2613
        %v2639 = vmul.f32 %v2575, %v2627
        %v2640 = vmul.f32 %v2579, %v2613
        %v2641 = vmul.f32 %v2583, %v2627
        %v2642 = vmul.f32 %v2587, %v2613
        %v2643 = vmul.f32 %v2591, %v2627
        %v2644 = vmul.f32 %v2595, %v2613
        %v2645 = vmul.f32 %v2599, %v2627
        %v2646 = vadd.f32 %v2520, %v2630
        %v2647 = vadd.f32 %v2521, %v2631
        %v2648 = vadd.f32 %v2522, %v2632
        %v2649 = vadd.f32 %v2523, %v2633
        %v2650 = vadd.f32 %v2524, %v2634
        %v2651 = vadd.f32 %v2525, %v2635
        %v2652 = vadd.f32 %v2526, %v2636
        %v2653 = vadd.f32 %v2527, %v2637
        %v2654 = vadd.f32 %v2528, %v2638
        %v2655 = vadd.f32 %v2529, %v2639
        %v2656 = vadd.f32 %v2530, %v2640
        %v2657 = vadd.f32 %v2531, %v2641
        %v2658 = vadd.f32 %v2532, %v2642
        %v2659 = vadd.f32 %v2533, %v2643
        %v2660 = vadd.f32 %v2534, %v2644
        %v2661 = vadd.f32 %v2535, %v2645
        %v2662 = vlaneseq
        %v2663 = vshrl.u32 %v2662, 7
        %v2664 = vsub.s32 7, %v2663
        %v2665 = vrot.slane %v1487, %v2664
        %v2666 = vlaneseq
        %v2667 = vshrl.u32 %v2666, 7
        %v2668 = vsub.s32 7, %v2667
        %v2669 = vrot.slane %v1489, %v2668
        %v2670 = vlaneseq
        %v2671 = vshrl.u32 %v2670, 7
        %v2672 = vsub.s32 7, %v2671
        %v2673 = vrot.slane %v1499, %v2672
        %v2674 = vlaneseq
        %v2675 = vshrl.u32 %v2674, 7
        %v2676 = vsub.s32 7, %v2675
        %v2677 = vrot.slane %v1501, %v2676
        %v2678 = vlaneseq
        %v2679 = vshrl.u32 %v2678, 7
        %v2680 = vsub.s32 7, %v2679
        %v2681 = vrot.slane %v1511, %v2680
        %v2682 = vlaneseq
        %v2683 = vshrl.u32 %v2682, 7
        %v2684 = vsub.s32 7, %v2683
        %v2685 = vrot.slane %v1513, %v2684
        %v2686 = vlaneseq
        %v2687 = vshrl.u32 %v2686, 7
        %v2688 = vsub.s32 7, %v2687
        %v2689 = vrot.slane %v1523, %v2688
        %v2690 = vlaneseq
        %v2691 = vshrl.u32 %v2690, 7
        %v2692 = vsub.s32 7, %v2691
        %v2693 = vrot.slane %v1525, %v2692
        %v2694 = vlaneseq
        %v2695 = vshrl.u32 %v2694, 7
        %v2696 = vsub.s32 7, %v2695
        %v2697 = vrot.slane %v1535, %v2696
        %v2698 = vlaneseq
        %v2699 = vshrl.u32 %v2698, 7
        %v2700 = vsub.s32 7, %v2699
        %v2701 = vrot.slane %v1537, %v2700
        %v2702 = vlaneseq
        %v2703 = vshrl.u32 %v2702, 7
        %v2704 = vsub.s32 7, %v2703
        %v2705 = vrot.slane %v1547, %v2704
        %v2706 = vlaneseq
        %v2707 = vshrl.u32 %v2706, 7
        %v2708 = vsub.s32 7, %v2707
        %v2709 = vrot.slane %v1549, %v2708
        %v2710 = vlaneseq
        %v2711 = vshrl.u32 %v2710, 7
        %v2712 = vsub.s32 7, %v2711
        %v2713 = vrot.slane %v1559, %v2712
        %v2714 = vlaneseq
        %v2715 = vshrl.u32 %v2714, 7
        %v2716 = vsub.s32 7, %v2715
        %v2717 = vrot.slane %v1561, %v2716
        %v2718 = vlaneseq
        %v2719 = vshrl.u32 %v2718, 7
        %v2720 = vsub.s32 7, %v2719
        %v2721 = vrot.slane %v1571, %v2720
        %v2722 = vlaneseq
        %v2723 = vshrl.u32 %v2722, 7
        %v2724 = vsub.s32 7, %v2723
        %v2725 = vrot.slane %v1573, %v2724
        %v2726 = vrot.slane %v1583, 7
        %v2727 = vrot.slane %v1595, 6
        %v2728 = vsel %vm1854, %v2727, %v2726
        %v2729 = vrot.slane %v1607, 5
        %v2730 = vsel %vm1857, %v2729, %v2728
        %v2731 = vrot.slane %v1619, 4
        %v2732 = vsel %vm1860, %v2731, %v2730
        %v2733 = vrot.slane %v1631, 3
        %v2734 = vsel %vm1863, %v2733, %v2732
        %v2735 = vrot.slane %v1643, 2
        %v2736 = vsel %vm1866, %v2735, %v2734
        %v2737 = vrot.slane %v1655, 1
        %v2738 = vsel %vm1869, %v2737, %v2736
        %v2739 = vsel %vm1872, %v1667, %v2738
        %v2740 = vrot.slane %v1585, 7
        %v2741 = vrot.slane %v1597, 6
        %v2742 = vsel %vm1854, %v2741, %v2740
        %v2743 = vrot.slane %v1609, 5
        %v2744 = vsel %vm1857, %v2743, %v2742
        %v2745 = vrot.slane %v1621, 4
        %v2746 = vsel %vm1860, %v2745, %v2744
        %v2747 = vrot.slane %v1633, 3
        %v2748 = vsel %vm1863, %v2747, %v2746
        %v2749 = vrot.slane %v1645, 2
        %v2750 = vsel %vm1866, %v2749, %v2748
        %v2751 = vrot.slane %v1657, 1
        %v2752 = vsel %vm1869, %v2751, %v2750
        %v2753 = vsel %vm1872, %v1669, %v2752
        %v2756 = vmul.f32 %v2665, %v2739
        %v2757 = vmul.f32 %v2669, %v2753
        %v2758 = vmul.f32 %v2673, %v2739
        %v2759 = vmul.f32 %v2677, %v2753
        %v2760 = vmul.f32 %v2681, %v2739
        %v2761 = vmul.f32 %v2685, %v2753
        %v2762 = vmul.f32 %v2689, %v2739
        %v2763 = vmul.f32 %v2693, %v2753
        %v2764 = vmul.f32 %v2697, %v2739
        %v2765 = vmul.f32 %v2701, %v2753
        %v2766 = vmul.f32 %v2705, %v2739
        %v2767 = vmul.f32 %v2709, %v2753
        %v2768 = vmul.f32 %v2713, %v2739
        %v2769 = vmul.f32 %v2717, %v2753
        %v2770 = vmul.f32 %v2721, %v2739
        %v2771 = vmul.f32 %v2725, %v2753
        %v2772 = vadd.f32 %v2646, %v2756
        %v2773 = vadd.f32 %v2647, %v2757
        %v2774 = vadd.f32 %v2648, %v2758
        %v2775 = vadd.f32 %v2649, %v2759
        %v2776 = vadd.f32 %v2650, %v2760
        %v2777 = vadd.f32 %v2651, %v2761
        %v2778 = vadd.f32 %v2652, %v2762
        %v2779 = vadd.f32 %v2653, %v2763
        %v2780 = vadd.f32 %v2654, %v2764
        %v2781 = vadd.f32 %v2655, %v2765
        %v2782 = vadd.f32 %v2656, %v2766
        %v2783 = vadd.f32 %v2657, %v2767
        %v2784 = vadd.f32 %v2658, %v2768
        %v2785 = vadd.f32 %v2659, %v2769
        %v2786 = vadd.f32 %v2660, %v2770
        %v2787 = vadd.f32 %v2661, %v2771
        %v2788 = vlaneseq
        %v2789 = vshrl.u32 %v2788, 7
        %v2790 = vsub.s32 0, %v2789
        %v2791 = vrot.slane %v1493, %v2790
        %v2792 = vlaneseq
        %v2793 = vshrl.u32 %v2792, 7
        %v2794 = vsub.s32 0, %v2793
        %v2795 = vrot.slane %v1495, %v2794
        %v2796 = vlaneseq
        %v2797 = vshrl.u32 %v2796, 7
        %v2798 = vsub.s32 0, %v2797
        %v2799 = vrot.slane %v1505, %v2798
        %v2800 = vlaneseq
        %v2801 = vshrl.u32 %v2800, 7
        %v2802 = vsub.s32 0, %v2801
        %v2803 = vrot.slane %v1507, %v2802
        %v2804 = vlaneseq
        %v2805 = vshrl.u32 %v2804, 7
        %v2806 = vsub.s32 0, %v2805
        %v2807 = vrot.slane %v1517, %v2806
        %v2808 = vlaneseq
        %v2809 = vshrl.u32 %v2808, 7
        %v2810 = vsub.s32 0, %v2809
        %v2811 = vrot.slane %v1519, %v2810
        %v2812 = vlaneseq
        %v2813 = vshrl.u32 %v2812, 7
        %v2814 = vsub.s32 0, %v2813
        %v2815 = vrot.slane %v1529, %v2814
        %v2816 = vlaneseq
        %v2817 = vshrl.u32 %v2816, 7
        %v2818 = vsub.s32 0, %v2817
        %v2819 = vrot.slane %v1531, %v2818
        %v2820 = vlaneseq
        %v2821 = vshrl.u32 %v2820, 7
        %v2822 = vsub.s32 0, %v2821
        %v2823 = vrot.slane %v1541, %v2822
        %v2824 = vlaneseq
        %v2825 = vshrl.u32 %v2824, 7
        %v2826 = vsub.s32 0, %v2825
        %v2827 = vrot.slane %v1543, %v2826
        %v2828 = vlaneseq
        %v2829 = vshrl.u32 %v2828, 7
        %v2830 = vsub.s32 0, %v2829
        %v2831 = vrot.slane %v1553, %v2830
        %v2832 = vlaneseq
        %v2833 = vshrl.u32 %v2832, 7
        %v2834 = vsub.s32 0, %v2833
        %v2835 = vrot.slane %v1555, %v2834
        %v2836 = vlaneseq
        %v2837 = vshrl.u32 %v2836, 7
        %v2838 = vsub.s32 0, %v2837
        %v2839 = vrot.slane %v1565, %v2838
        %v2840 = vlaneseq
        %v2841 = vshrl.u32 %v2840, 7
        %v2842 = vsub.s32 0, %v2841
        %v2843 = vrot.slane %v1567, %v2842
        %v2844 = vlaneseq
        %v2845 = vshrl.u32 %v2844, 7
        %v2846 = vsub.s32 0, %v2845
        %v2847 = vrot.slane %v1577, %v2846
        %v2848 = vlaneseq
        %v2849 = vshrl.u32 %v2848, 7
        %v2850 = vsub.s32 0, %v2849
        %v2851 = vrot.slane %v1579, %v2850
        %v2868 = vrot.slane %v1601, 7
        %v2869 = vsel %vm1854, %v2868, %v1589
        %v2870 = vrot.slane %v1613, 6
        %v2871 = vsel %vm1857, %v2870, %v2869
        %v2872 = vrot.slane %v1625, 5
        %v2873 = vsel %vm1860, %v2872, %v2871
        %v2874 = vrot.slane %v1637, 4
        %v2875 = vsel %vm1863, %v2874, %v2873
        %v2876 = vrot.slane %v1649, 3
        %v2877 = vsel %vm1866, %v2876, %v2875
        %v2878 = vrot.slane %v1661, 2
        %v2879 = vsel %vm1869, %v2878, %v2877
        %v2880 = vrot.slane %v1673, 1
        %v2881 = vsel %vm1872, %v2880, %v2879
        %v2882 = vrot.slane %v1603, 7
        %v2883 = vsel %vm1854, %v2882, %v1591
        %v2884 = vrot.slane %v1615, 6
        %v2885 = vsel %vm1857, %v2884, %v2883
        %v2886 = vrot.slane %v1627, 5
        %v2887 = vsel %vm1860, %v2886, %v2885
        %v2888 = vrot.slane %v1639, 4
        %v2889 = vsel %vm1863, %v2888, %v2887
        %v2890 = vrot.slane %v1651, 3
        %v2891 = vsel %vm1866, %v2890, %v2889
        %v2892 = vrot.slane %v1663, 2
        %v2893 = vsel %vm1869, %v2892, %v2891
        %v2894 = vrot.slane %v1675, 1
        %v2895 = vsel %vm1872, %v2894, %v2893
        %v2898 = vmul.f32 %v2791, %v2881
        %v2899 = vmul.f32 %v2795, %v2895
        %v2900 = vmul.f32 %v2799, %v2881
        %v2901 = vmul.f32 %v2803, %v2895
        %v2902 = vmul.f32 %v2807, %v2881
        %v2903 = vmul.f32 %v2811, %v2895
        %v2904 = vmul.f32 %v2815, %v2881
        %v2905 = vmul.f32 %v2819, %v2895
        %v2906 = vmul.f32 %v2823, %v2881
        %v2907 = vmul.f32 %v2827, %v2895
        %v2908 = vmul.f32 %v2831, %v2881
        %v2909 = vmul.f32 %v2835, %v2895
        %v2910 = vmul.f32 %v2839, %v2881
        %v2911 = vmul.f32 %v2843, %v2895
        %v2912 = vmul.f32 %v2847, %v2881
        %v2913 = vmul.f32 %v2851, %v2895
        %v2914 = vadd.f32 %v2772, %v2898
        %v2915 = vadd.f32 %v2773, %v2899
        %v2916 = vadd.f32 %v2774, %v2900
        %v2917 = vadd.f32 %v2775, %v2901
        %v2918 = vadd.f32 %v2776, %v2902
        %v2919 = vadd.f32 %v2777, %v2903
        %v2920 = vadd.f32 %v2778, %v2904
        %v2921 = vadd.f32 %v2779, %v2905
        %v2922 = vadd.f32 %v2780, %v2906
        %v2923 = vadd.f32 %v2781, %v2907
        %v2924 = vadd.f32 %v2782, %v2908
        %v2925 = vadd.f32 %v2783, %v2909
        %v2926 = vadd.f32 %v2784, %v2910
        %v2927 = vadd.f32 %v2785, %v2911
        %v2928 = vadd.f32 %v2786, %v2912
        %v2929 = vadd.f32 %v2787, %v2913
        %v2930 = vlaneseq
        %v2931 = vshrl.u32 %v2930, 7
        %v2932 = vsub.s32 1, %v2931
        %v2933 = vrot.slane %v1493, %v2932
        %v2934 = vlaneseq
        %v2935 = vshrl.u32 %v2934, 7
        %v2936 = vsub.s32 1, %v2935
        %v2937 = vrot.slane %v1495, %v2936
        %v2938 = vlaneseq
        %v2939 = vshrl.u32 %v2938, 7
        %v2940 = vsub.s32 1, %v2939
        %v2941 = vrot.slane %v1505, %v2940
        %v2942 = vlaneseq
        %v2943 = vshrl.u32 %v2942, 7
        %v2944 = vsub.s32 1, %v2943
        %v2945 = vrot.slane %v1507, %v2944
        %v2946 = vlaneseq
        %v2947 = vshrl.u32 %v2946, 7
        %v2948 = vsub.s32 1, %v2947
        %v2949 = vrot.slane %v1517, %v2948
        %v2950 = vlaneseq
        %v2951 = vshrl.u32 %v2950, 7
        %v2952 = vsub.s32 1, %v2951
        %v2953 = vrot.slane %v1519, %v2952
        %v2954 = vlaneseq
        %v2955 = vshrl.u32 %v2954, 7
        %v2956 = vsub.s32 1, %v2955
        %v2957 = vrot.slane %v1529, %v2956
        %v2958 = vlaneseq
        %v2959 = vshrl.u32 %v2958, 7
        %v2960 = vsub.s32 1, %v2959
        %v2961 = vrot.slane %v1531, %v2960
        %v2962 = vlaneseq
        %v2963 = vshrl.u32 %v2962, 7
        %v2964 = vsub.s32 1, %v2963
        %v2965 = vrot.slane %v1541, %v2964
        %v2966 = vlaneseq
        %v2967 = vshrl.u32 %v2966, 7
        %v2968 = vsub.s32 1, %v2967
        %v2969 = vrot.slane %v1543, %v2968
        %v2970 = vlaneseq
        %v2971 = vshrl.u32 %v2970, 7
        %v2972 = vsub.s32 1, %v2971
        %v2973 = vrot.slane %v1553, %v2972
        %v2974 = vlaneseq
        %v2975 = vshrl.u32 %v2974, 7
        %v2976 = vsub.s32 1, %v2975
        %v2977 = vrot.slane %v1555, %v2976
        %v2978 = vlaneseq
        %v2979 = vshrl.u32 %v2978, 7
        %v2980 = vsub.s32 1, %v2979
        %v2981 = vrot.slane %v1565, %v2980
        %v2982 = vlaneseq
        %v2983 = vshrl.u32 %v2982, 7
        %v2984 = vsub.s32 1, %v2983
        %v2985 = vrot.slane %v1567, %v2984
        %v2986 = vlaneseq
        %v2987 = vshrl.u32 %v2986, 7
        %v2988 = vsub.s32 1, %v2987
        %v2989 = vrot.slane %v1577, %v2988
        %v2990 = vlaneseq
        %v2991 = vshrl.u32 %v2990, 7
        %v2992 = vsub.s32 1, %v2991
        %v2993 = vrot.slane %v1579, %v2992
        %v2994 = vrot.slane %v1589, 1
        %v2995 = vsel %vm1854, %v1601, %v2994
        %v2996 = vrot.slane %v1613, 7
        %v2997 = vsel %vm1857, %v2996, %v2995
        %v2998 = vrot.slane %v1625, 6
        %v2999 = vsel %vm1860, %v2998, %v2997
        %v3000 = vrot.slane %v1637, 5
        %v3001 = vsel %vm1863, %v3000, %v2999
        %v3002 = vrot.slane %v1649, 4
        %v3003 = vsel %vm1866, %v3002, %v3001
        %v3004 = vrot.slane %v1661, 3
        %v3005 = vsel %vm1869, %v3004, %v3003
        %v3006 = vrot.slane %v1673, 2
        %v3007 = vsel %vm1872, %v3006, %v3005
        %v3008 = vrot.slane %v1591, 1
        %v3009 = vsel %vm1854, %v1603, %v3008
        %v3010 = vrot.slane %v1615, 7
        %v3011 = vsel %vm1857, %v3010, %v3009
        %v3012 = vrot.slane %v1627, 6
        %v3013 = vsel %vm1860, %v3012, %v3011
        %v3014 = vrot.slane %v1639, 5
        %v3015 = vsel %vm1863, %v3014, %v3013
        %v3016 = vrot.slane %v1651, 4
        %v3017 = vsel %vm1866, %v3016, %v3015
        %v3018 = vrot.slane %v1663, 3
        %v3019 = vsel %vm1869, %v3018, %v3017
        %v3020 = vrot.slane %v1675, 2
        %v3021 = vsel %vm1872, %v3020, %v3019
        %v3024 = vmul.f32 %v2933, %v3007
        %v3025 = vmul.f32 %v2937, %v3021
        %v3026 = vmul.f32 %v2941, %v3007
        %v3027 = vmul.f32 %v2945, %v3021
        %v3028 = vmul.f32 %v2949, %v3007
        %v3029 = vmul.f32 %v2953, %v3021
        %v3030 = vmul.f32 %v2957, %v3007
        %v3031 = vmul.f32 %v2961, %v3021
        %v3032 = vmul.f32 %v2965, %v3007
        %v3033 = vmul.f32 %v2969, %v3021
        %v3034 = vmul.f32 %v2973, %v3007
        %v3035 = vmul.f32 %v2977, %v3021
        %v3036 = vmul.f32 %v2981, %v3007
        %v3037 = vmul.f32 %v2985, %v3021
        %v3038 = vmul.f32 %v2989, %v3007
        %v3039 = vmul.f32 %v2993, %v3021
        %v3040 = vadd.f32 %v2914, %v3024
        %v3041 = vadd.f32 %v2915, %v3025
        %v3042 = vadd.f32 %v2916, %v3026
        %v3043 = vadd.f32 %v2917, %v3027
        %v3044 = vadd.f32 %v2918, %v3028
        %v3045 = vadd.f32 %v2919, %v3029
        %v3046 = vadd.f32 %v2920, %v3030
        %v3047 = vadd.f32 %v2921, %v3031
        %v3048 = vadd.f32 %v2922, %v3032
        %v3049 = vadd.f32 %v2923, %v3033
        %v3050 = vadd.f32 %v2924, %v3034
        %v3051 = vadd.f32 %v2925, %v3035
        %v3052 = vadd.f32 %v2926, %v3036
        %v3053 = vadd.f32 %v2927, %v3037
        %v3054 = vadd.f32 %v2928, %v3038
        %v3055 = vadd.f32 %v2929, %v3039
        %v3056 = vlaneseq
        %v3057 = vshrl.u32 %v3056, 7
        %v3058 = vsub.s32 2, %v3057
        %v3059 = vrot.slane %v1493, %v3058
        %v3060 = vlaneseq
        %v3061 = vshrl.u32 %v3060, 7
        %v3062 = vsub.s32 2, %v3061
        %v3063 = vrot.slane %v1495, %v3062
        %v3064 = vlaneseq
        %v3065 = vshrl.u32 %v3064, 7
        %v3066 = vsub.s32 2, %v3065
        %v3067 = vrot.slane %v1505, %v3066
        %v3068 = vlaneseq
        %v3069 = vshrl.u32 %v3068, 7
        %v3070 = vsub.s32 2, %v3069
        %v3071 = vrot.slane %v1507, %v3070
        %v3072 = vlaneseq
        %v3073 = vshrl.u32 %v3072, 7
        %v3074 = vsub.s32 2, %v3073
        %v3075 = vrot.slane %v1517, %v3074
        %v3076 = vlaneseq
        %v3077 = vshrl.u32 %v3076, 7
        %v3078 = vsub.s32 2, %v3077
        %v3079 = vrot.slane %v1519, %v3078
        %v3080 = vlaneseq
        %v3081 = vshrl.u32 %v3080, 7
        %v3082 = vsub.s32 2, %v3081
        %v3083 = vrot.slane %v1529, %v3082
        %v3084 = vlaneseq
        %v3085 = vshrl.u32 %v3084, 7
        %v3086 = vsub.s32 2, %v3085
        %v3087 = vrot.slane %v1531, %v3086
        %v3088 = vlaneseq
        %v3089 = vshrl.u32 %v3088, 7
        %v3090 = vsub.s32 2, %v3089
        %v3091 = vrot.slane %v1541, %v3090
        %v3092 = vlaneseq
        %v3093 = vshrl.u32 %v3092, 7
        %v3094 = vsub.s32 2, %v3093
        %v3095 = vrot.slane %v1543, %v3094
        %v3096 = vlaneseq
        %v3097 = vshrl.u32 %v3096, 7
        %v3098 = vsub.s32 2, %v3097
        %v3099 = vrot.slane %v1553, %v3098
        %v3100 = vlaneseq
        %v3101 = vshrl.u32 %v3100, 7
        %v3102 = vsub.s32 2, %v3101
        %v3103 = vrot.slane %v1555, %v3102
        %v3104 = vlaneseq
        %v3105 = vshrl.u32 %v3104, 7
        %v3106 = vsub.s32 2, %v3105
        %v3107 = vrot.slane %v1565, %v3106
        %v3108 = vlaneseq
        %v3109 = vshrl.u32 %v3108, 7
        %v3110 = vsub.s32 2, %v3109
        %v3111 = vrot.slane %v1567, %v3110
        %v3112 = vlaneseq
        %v3113 = vshrl.u32 %v3112, 7
        %v3114 = vsub.s32 2, %v3113
        %v3115 = vrot.slane %v1577, %v3114
        %v3116 = vlaneseq
        %v3117 = vshrl.u32 %v3116, 7
        %v3118 = vsub.s32 2, %v3117
        %v3119 = vrot.slane %v1579, %v3118
        %v3120 = vrot.slane %v1589, 2
        %v3121 = vrot.slane %v1601, 1
        %v3122 = vsel %vm1854, %v3121, %v3120
        %v3123 = vsel %vm1857, %v1613, %v3122
        %v3124 = vrot.slane %v1625, 7
        %v3125 = vsel %vm1860, %v3124, %v3123
        %v3126 = vrot.slane %v1637, 6
        %v3127 = vsel %vm1863, %v3126, %v3125
        %v3128 = vrot.slane %v1649, 5
        %v3129 = vsel %vm1866, %v3128, %v3127
        %v3130 = vrot.slane %v1661, 4
        %v3131 = vsel %vm1869, %v3130, %v3129
        %v3132 = vrot.slane %v1673, 3
        %v3133 = vsel %vm1872, %v3132, %v3131
        %v3134 = vrot.slane %v1591, 2
        %v3135 = vrot.slane %v1603, 1
        %v3136 = vsel %vm1854, %v3135, %v3134
        %v3137 = vsel %vm1857, %v1615, %v3136
        %v3138 = vrot.slane %v1627, 7
        %v3139 = vsel %vm1860, %v3138, %v3137
        %v3140 = vrot.slane %v1639, 6
        %v3141 = vsel %vm1863, %v3140, %v3139
        %v3142 = vrot.slane %v1651, 5
        %v3143 = vsel %vm1866, %v3142, %v3141
        %v3144 = vrot.slane %v1663, 4
        %v3145 = vsel %vm1869, %v3144, %v3143
        %v3146 = vrot.slane %v1675, 3
        %v3147 = vsel %vm1872, %v3146, %v3145
        %v3150 = vmul.f32 %v3059, %v3133
        %v3151 = vmul.f32 %v3063, %v3147
        %v3152 = vmul.f32 %v3067, %v3133
        %v3153 = vmul.f32 %v3071, %v3147
        %v3154 = vmul.f32 %v3075, %v3133
        %v3155 = vmul.f32 %v3079, %v3147
        %v3156 = vmul.f32 %v3083, %v3133
        %v3157 = vmul.f32 %v3087, %v3147
        %v3158 = vmul.f32 %v3091, %v3133
        %v3159 = vmul.f32 %v3095, %v3147
        %v3160 = vmul.f32 %v3099, %v3133
        %v3161 = vmul.f32 %v3103, %v3147
        %v3162 = vmul.f32 %v3107, %v3133
        %v3163 = vmul.f32 %v3111, %v3147
        %v3164 = vmul.f32 %v3115, %v3133
        %v3165 = vmul.f32 %v3119, %v3147
        %v3166 = vadd.f32 %v3040, %v3150
        %v3167 = vadd.f32 %v3041, %v3151
        %v3168 = vadd.f32 %v3042, %v3152
        %v3169 = vadd.f32 %v3043, %v3153
        %v3170 = vadd.f32 %v3044, %v3154
        %v3171 = vadd.f32 %v3045, %v3155
        %v3172 = vadd.f32 %v3046, %v3156
        %v3173 = vadd.f32 %v3047, %v3157
        %v3174 = vadd.f32 %v3048, %v3158
        %v3175 = vadd.f32 %v3049, %v3159
        %v3176 = vadd.f32 %v3050, %v3160
        %v3177 = vadd.f32 %v3051, %v3161
        %v3178 = vadd.f32 %v3052, %v3162
        %v3179 = vadd.f32 %v3053, %v3163
        %v3180 = vadd.f32 %v3054, %v3164
        %v3181 = vadd.f32 %v3055, %v3165
        %v3182 = vlaneseq
        %v3183 = vshrl.u32 %v3182, 7
        %v3184 = vsub.s32 3, %v3183
        %v3185 = vrot.slane %v1493, %v3184
        %v3186 = vlaneseq
        %v3187 = vshrl.u32 %v3186, 7
        %v3188 = vsub.s32 3, %v3187
        %v3189 = vrot.slane %v1495, %v3188
        %v3190 = vlaneseq
        %v3191 = vshrl.u32 %v3190, 7
        %v3192 = vsub.s32 3, %v3191
        %v3193 = vrot.slane %v1505, %v3192
        %v3194 = vlaneseq
        %v3195 = vshrl.u32 %v3194, 7
        %v3196 = vsub.s32 3, %v3195
        %v3197 = vrot.slane %v1507, %v3196
        %v3198 = vlaneseq
        %v3199 = vshrl.u32 %v3198, 7
        %v3200 = vsub.s32 3, %v3199
        %v3201 = vrot.slane %v1517, %v3200
        %v3202 = vlaneseq
        %v3203 = vshrl.u32 %v3202, 7
        %v3204 = vsub.s32 3, %v3203
        %v3205 = vrot.slane %v1519, %v3204
        %v3206 = vlaneseq
        %v3207 = vshrl.u32 %v3206, 7
        %v3208 = vsub.s32 3, %v3207
        %v3209 = vrot.slane %v1529, %v3208
        %v3210 = vlaneseq
        %v3211 = vshrl.u32 %v3210, 7
        %v3212 = vsub.s32 3, %v3211
        %v3213 = vrot.slane %v1531, %v3212
        %v3214 = vlaneseq
        %v3215 = vshrl.u32 %v3214, 7
        %v3216 = vsub.s32 3, %v3215
        %v3217 = vrot.slane %v1541, %v3216
        %v3218 = vlaneseq
        %v3219 = vshrl.u32 %v3218, 7
        %v3220 = vsub.s32 3, %v3219
        %v3221 = vrot.slane %v1543, %v3220
        %v3222 = vlaneseq
        %v3223 = vshrl.u32 %v3222, 7
        %v3224 = vsub.s32 3, %v3223
        %v3225 = vrot.slane %v1553, %v3224
        %v3226 = vlaneseq
        %v3227 = vshrl.u32 %v3226, 7
        %v3228 = vsub.s32 3, %v3227
        %v3229 = vrot.slane %v1555, %v3228
        %v3230 = vlaneseq
        %v3231 = vshrl.u32 %v3230, 7
        %v3232 = vsub.s32 3, %v3231
        %v3233 = vrot.slane %v1565, %v3232
        %v3234 = vlaneseq
        %v3235 = vshrl.u32 %v3234, 7
        %v3236 = vsub.s32 3, %v3235
        %v3237 = vrot.slane %v1567, %v3236
        %v3238 = vlaneseq
        %v3239 = vshrl.u32 %v3238, 7
        %v3240 = vsub.s32 3, %v3239
        %v3241 = vrot.slane %v1577, %v3240
        %v3242 = vlaneseq
        %v3243 = vshrl.u32 %v3242, 7
        %v3244 = vsub.s32 3, %v3243
        %v3245 = vrot.slane %v1579, %v3244
        %v3246 = vrot.slane %v1589, 3
        %v3247 = vrot.slane %v1601, 2
        %v3248 = vsel %vm1854, %v3247, %v3246
        %v3249 = vrot.slane %v1613, 1
        %v3250 = vsel %vm1857, %v3249, %v3248
        %v3251 = vsel %vm1860, %v1625, %v3250
        %v3252 = vrot.slane %v1637, 7
        %v3253 = vsel %vm1863, %v3252, %v3251
        %v3254 = vrot.slane %v1649, 6
        %v3255 = vsel %vm1866, %v3254, %v3253
        %v3256 = vrot.slane %v1661, 5
        %v3257 = vsel %vm1869, %v3256, %v3255
        %v3258 = vrot.slane %v1673, 4
        %v3259 = vsel %vm1872, %v3258, %v3257
        %v3260 = vrot.slane %v1591, 3
        %v3261 = vrot.slane %v1603, 2
        %v3262 = vsel %vm1854, %v3261, %v3260
        %v3263 = vrot.slane %v1615, 1
        %v3264 = vsel %vm1857, %v3263, %v3262
        %v3265 = vsel %vm1860, %v1627, %v3264
        %v3266 = vrot.slane %v1639, 7
        %v3267 = vsel %vm1863, %v3266, %v3265
        %v3268 = vrot.slane %v1651, 6
        %v3269 = vsel %vm1866, %v3268, %v3267
        %v3270 = vrot.slane %v1663, 5
        %v3271 = vsel %vm1869, %v3270, %v3269
        %v3272 = vrot.slane %v1675, 4
        %v3273 = vsel %vm1872, %v3272, %v3271
        %v3276 = vmul.f32 %v3185, %v3259
        %v3277 = vmul.f32 %v3189, %v3273
        %v3278 = vmul.f32 %v3193, %v3259
        %v3279 = vmul.f32 %v3197, %v3273
        %v3280 = vmul.f32 %v3201, %v3259
        %v3281 = vmul.f32 %v3205, %v3273
        %v3282 = vmul.f32 %v3209, %v3259
        %v3283 = vmul.f32 %v3213, %v3273
        %v3284 = vmul.f32 %v3217, %v3259
        %v3285 = vmul.f32 %v3221, %v3273
        %v3286 = vmul.f32 %v3225, %v3259
        %v3287 = vmul.f32 %v3229, %v3273
        %v3288 = vmul.f32 %v3233, %v3259
        %v3289 = vmul.f32 %v3237, %v3273
        %v3290 = vmul.f32 %v3241, %v3259
        %v3291 = vmul.f32 %v3245, %v3273
        %v3292 = vadd.f32 %v3166, %v3276
        %v3293 = vadd.f32 %v3167, %v3277
        %v3294 = vadd.f32 %v3168, %v3278
        %v3295 = vadd.f32 %v3169, %v3279
        %v3296 = vadd.f32 %v3170, %v3280
        %v3297 = vadd.f32 %v3171, %v3281
        %v3298 = vadd.f32 %v3172, %v3282
        %v3299 = vadd.f32 %v3173, %v3283
        %v3300 = vadd.f32 %v3174, %v3284
        %v3301 = vadd.f32 %v3175, %v3285
        %v3302 = vadd.f32 %v3176, %v3286
        %v3303 = vadd.f32 %v3177, %v3287
        %v3304 = vadd.f32 %v3178, %v3288
        %v3305 = vadd.f32 %v3179, %v3289
        %v3306 = vadd.f32 %v3180, %v3290
        %v3307 = vadd.f32 %v3181, %v3291
        %v3308 = vlaneseq
        %v3309 = vshrl.u32 %v3308, 7
        %v3310 = vsub.s32 4, %v3309
        %v3311 = vrot.slane %v1493, %v3310
        %v3312 = vlaneseq
        %v3313 = vshrl.u32 %v3312, 7
        %v3314 = vsub.s32 4, %v3313
        %v3315 = vrot.slane %v1495, %v3314
        %v3316 = vlaneseq
        %v3317 = vshrl.u32 %v3316, 7
        %v3318 = vsub.s32 4, %v3317
        %v3319 = vrot.slane %v1505, %v3318
        %v3320 = vlaneseq
        %v3321 = vshrl.u32 %v3320, 7
        %v3322 = vsub.s32 4, %v3321
        %v3323 = vrot.slane %v1507, %v3322
        %v3324 = vlaneseq
        %v3325 = vshrl.u32 %v3324, 7
        %v3326 = vsub.s32 4, %v3325
        %v3327 = vrot.slane %v1517, %v3326
        %v3328 = vlaneseq
        %v3329 = vshrl.u32 %v3328, 7
        %v3330 = vsub.s32 4, %v3329
        %v3331 = vrot.slane %v1519, %v3330
        %v3332 = vlaneseq
        %v3333 = vshrl.u32 %v3332, 7
        %v3334 = vsub.s32 4, %v3333
        %v3335 = vrot.slane %v1529, %v3334
        %v3336 = vlaneseq
        %v3337 = vshrl.u32 %v3336, 7
        %v3338 = vsub.s32 4, %v3337
        %v3339 = vrot.slane %v1531, %v3338
        %v3340 = vlaneseq
        %v3341 = vshrl.u32 %v3340, 7
        %v3342 = vsub.s32 4, %v3341
        %v3343 = vrot.slane %v1541, %v3342
        %v3344 = vlaneseq
        %v3345 = vshrl.u32 %v3344, 7
        %v3346 = vsub.s32 4, %v3345
        %v3347 = vrot.slane %v1543, %v3346
        %v3348 = vlaneseq
        %v3349 = vshrl.u32 %v3348, 7
        %v3350 = vsub.s32 4, %v3349
        %v3351 = vrot.slane %v1553, %v3350
        %v3352 = vlaneseq
        %v3353 = vshrl.u32 %v3352, 7
        %v3354 = vsub.s32 4, %v3353
        %v3355 = vrot.slane %v1555, %v3354
        %v3356 = vlaneseq
        %v3357 = vshrl.u32 %v3356, 7
        %v3358 = vsub.s32 4, %v3357
        %v3359 = vrot.slane %v1565, %v3358
        %v3360 = vlaneseq
        %v3361 = vshrl.u32 %v3360, 7
        %v3362 = vsub.s32 4, %v3361
        %v3363 = vrot.slane %v1567, %v3362
        %v3364 = vlaneseq
        %v3365 = vshrl.u32 %v3364, 7
        %v3366 = vsub.s32 4, %v3365
        %v3367 = vrot.slane %v1577, %v3366
        %v3368 = vlaneseq
        %v3369 = vshrl.u32 %v3368, 7
        %v3370 = vsub.s32 4, %v3369
        %v3371 = vrot.slane %v1579, %v3370
        %v3372 = vrot.slane %v1589, 4
        %v3373 = vrot.slane %v1601, 3
        %v3374 = vsel %vm1854, %v3373, %v3372
        %v3375 = vrot.slane %v1613, 2
        %v3376 = vsel %vm1857, %v3375, %v3374
        %v3377 = vrot.slane %v1625, 1
        %v3378 = vsel %vm1860, %v3377, %v3376
        %v3379 = vsel %vm1863, %v1637, %v3378
        %v3380 = vrot.slane %v1649, 7
        %v3381 = vsel %vm1866, %v3380, %v3379
        %v3382 = vrot.slane %v1661, 6
        %v3383 = vsel %vm1869, %v3382, %v3381
        %v3384 = vrot.slane %v1673, 5
        %v3385 = vsel %vm1872, %v3384, %v3383
        %v3386 = vrot.slane %v1591, 4
        %v3387 = vrot.slane %v1603, 3
        %v3388 = vsel %vm1854, %v3387, %v3386
        %v3389 = vrot.slane %v1615, 2
        %v3390 = vsel %vm1857, %v3389, %v3388
        %v3391 = vrot.slane %v1627, 1
        %v3392 = vsel %vm1860, %v3391, %v3390
        %v3393 = vsel %vm1863, %v1639, %v3392
        %v3394 = vrot.slane %v1651, 7
        %v3395 = vsel %vm1866, %v3394, %v3393
        %v3396 = vrot.slane %v1663, 6
        %v3397 = vsel %vm1869, %v3396, %v3395
        %v3398 = vrot.slane %v1675, 5
        %v3399 = vsel %vm1872, %v3398, %v3397
        %v3402 = vmul.f32 %v3311, %v3385
        %v3403 = vmul.f32 %v3315, %v3399
        %v3404 = vmul.f32 %v3319, %v3385
        %v3405 = vmul.f32 %v3323, %v3399
        %v3406 = vmul.f32 %v3327, %v3385
        %v3407 = vmul.f32 %v3331, %v3399
        %v3408 = vmul.f32 %v3335, %v3385
        %v3409 = vmul.f32 %v3339, %v3399
        %v3410 = vmul.f32 %v3343, %v3385
        %v3411 = vmul.f32 %v3347, %v3399
        %v3412 = vmul.f32 %v3351, %v3385
        %v3413 = vmul.f32 %v3355, %v3399
        %v3414 = vmul.f32 %v3359, %v3385
        %v3415 = vmul.f32 %v3363, %v3399
        %v3416 = vmul.f32 %v3367, %v3385
        %v3417 = vmul.f32 %v3371, %v3399
        %v3418 = vadd.f32 %v3292, %v3402
        %v3419 = vadd.f32 %v3293, %v3403
        %v3420 = vadd.f32 %v3294, %v3404
        %v3421 = vadd.f32 %v3295, %v3405
        %v3422 = vadd.f32 %v3296, %v3406
        %v3423 = vadd.f32 %v3297, %v3407
        %v3424 = vadd.f32 %v3298, %v3408
        %v3425 = vadd.f32 %v3299, %v3409
        %v3426 = vadd.f32 %v3300, %v3410
        %v3427 = vadd.f32 %v3301, %v3411
        %v3428 = vadd.f32 %v3302, %v3412
        %v3429 = vadd.f32 %v3303, %v3413
        %v3430 = vadd.f32 %v3304, %v3414
        %v3431 = vadd.f32 %v3305, %v3415
        %v3432 = vadd.f32 %v3306, %v3416
        %v3433 = vadd.f32 %v3307, %v3417
        %v3434 = vlaneseq
        %v3435 = vshrl.u32 %v3434, 7
        %v3436 = vsub.s32 5, %v3435
        %v3437 = vrot.slane %v1493, %v3436
        %v3438 = vlaneseq
        %v3439 = vshrl.u32 %v3438, 7
        %v3440 = vsub.s32 5, %v3439
        %v3441 = vrot.slane %v1495, %v3440
        %v3442 = vlaneseq
        %v3443 = vshrl.u32 %v3442, 7
        %v3444 = vsub.s32 5, %v3443
        %v3445 = vrot.slane %v1505, %v3444
        %v3446 = vlaneseq
        %v3447 = vshrl.u32 %v3446, 7
        %v3448 = vsub.s32 5, %v3447
        %v3449 = vrot.slane %v1507, %v3448
        %v3450 = vlaneseq
        %v3451 = vshrl.u32 %v3450, 7
        %v3452 = vsub.s32 5, %v3451
        %v3453 = vrot.slane %v1517, %v3452
        %v3454 = vlaneseq
        %v3455 = vshrl.u32 %v3454, 7
        %v3456 = vsub.s32 5, %v3455
        %v3457 = vrot.slane %v1519, %v3456
        %v3458 = vlaneseq
        %v3459 = vshrl.u32 %v3458, 7
        %v3460 = vsub.s32 5, %v3459
        %v3461 = vrot.slane %v1529, %v3460
        %v3462 = vlaneseq
        %v3463 = vshrl.u32 %v3462, 7
        %v3464 = vsub.s32 5, %v3463
        %v3465 = vrot.slane %v1531, %v3464
        %v3466 = vlaneseq
        %v3467 = vshrl.u32 %v3466, 7
        %v3468 = vsub.s32 5, %v3467
        %v3469 = vrot.slane %v1541, %v3468
        %v3470 = vlaneseq
        %v3471 = vshrl.u32 %v3470, 7
        %v3472 = vsub.s32 5, %v3471
        %v3473 = vrot.slane %v1543, %v3472
        %v3474 = vlaneseq
        %v3475 = vshrl.u32 %v3474, 7
        %v3476 = vsub.s32 5, %v3475
        %v3477 = vrot.slane %v1553, %v3476
        %v3478 = vlaneseq
        %v3479 = vshrl.u32 %v3478, 7
        %v3480 = vsub.s32 5, %v3479
        %v3481 = vrot.slane %v1555, %v3480
        %v3482 = vlaneseq
        %v3483 = vshrl.u32 %v3482, 7
        %v3484 = vsub.s32 5, %v3483
        %v3485 = vrot.slane %v1565, %v3484
        %v3486 = vlaneseq
        %v3487 = vshrl.u32 %v3486, 7
        %v3488 = vsub.s32 5, %v3487
        %v3489 = vrot.slane %v1567, %v3488
        %v3490 = vlaneseq
        %v3491 = vshrl.u32 %v3490, 7
        %v3492 = vsub.s32 5, %v3491
        %v3493 = vrot.slane %v1577, %v3492
        %v3494 = vlaneseq
        %v3495 = vshrl.u32 %v3494, 7
        %v3496 = vsub.s32 5, %v3495
        %v3497 = vrot.slane %v1579, %v3496
        %v3498 = vrot.slane %v1589, 5
        %v3499 = vrot.slane %v1601, 4
        %v3500 = vsel %vm1854, %v3499, %v3498
        %v3501 = vrot.slane %v1613, 3
        %v3502 = vsel %vm1857, %v3501, %v3500
        %v3503 = vrot.slane %v1625, 2
        %v3504 = vsel %vm1860, %v3503, %v3502
        %v3505 = vrot.slane %v1637, 1
        %v3506 = vsel %vm1863, %v3505, %v3504
        %v3507 = vsel %vm1866, %v1649, %v3506
        %v3508 = vrot.slane %v1661, 7
        %v3509 = vsel %vm1869, %v3508, %v3507
        %v3510 = vrot.slane %v1673, 6
        %v3511 = vsel %vm1872, %v3510, %v3509
        %v3512 = vrot.slane %v1591, 5
        %v3513 = vrot.slane %v1603, 4
        %v3514 = vsel %vm1854, %v3513, %v3512
        %v3515 = vrot.slane %v1615, 3
        %v3516 = vsel %vm1857, %v3515, %v3514
        %v3517 = vrot.slane %v1627, 2
        %v3518 = vsel %vm1860, %v3517, %v3516
        %v3519 = vrot.slane %v1639, 1
        %v3520 = vsel %vm1863, %v3519, %v3518
        %v3521 = vsel %vm1866, %v1651, %v3520
        %v3522 = vrot.slane %v1663, 7
        %v3523 = vsel %vm1869, %v3522, %v3521
        %v3524 = vrot.slane %v1675, 6
        %v3525 = vsel %vm1872, %v3524, %v3523
        %v3528 = vmul.f32 %v3437, %v3511
        %v3529 = vmul.f32 %v3441, %v3525
        %v3530 = vmul.f32 %v3445, %v3511
        %v3531 = vmul.f32 %v3449, %v3525
        %v3532 = vmul.f32 %v3453, %v3511
        %v3533 = vmul.f32 %v3457, %v3525
        %v3534 = vmul.f32 %v3461, %v3511
        %v3535 = vmul.f32 %v3465, %v3525
        %v3536 = vmul.f32 %v3469, %v3511
        %v3537 = vmul.f32 %v3473, %v3525
        %v3538 = vmul.f32 %v3477, %v3511
        %v3539 = vmul.f32 %v3481, %v3525
        %v3540 = vmul.f32 %v3485, %v3511
        %v3541 = vmul.f32 %v3489, %v3525
        %v3542 = vmul.f32 %v3493, %v3511
        %v3543 = vmul.f32 %v3497, %v3525
        %v3544 = vadd.f32 %v3418, %v3528
        %v3545 = vadd.f32 %v3419, %v3529
        %v3546 = vadd.f32 %v3420, %v3530
        %v3547 = vadd.f32 %v3421, %v3531
        %v3548 = vadd.f32 %v3422, %v3532
        %v3549 = vadd.f32 %v3423, %v3533
        %v3550 = vadd.f32 %v3424, %v3534
        %v3551 = vadd.f32 %v3425, %v3535
        %v3552 = vadd.f32 %v3426, %v3536
        %v3553 = vadd.f32 %v3427, %v3537
        %v3554 = vadd.f32 %v3428, %v3538
        %v3555 = vadd.f32 %v3429, %v3539
        %v3556 = vadd.f32 %v3430, %v3540
        %v3557 = vadd.f32 %v3431, %v3541
        %v3558 = vadd.f32 %v3432, %v3542
        %v3559 = vadd.f32 %v3433, %v3543
        %v3560 = vlaneseq
        %v3561 = vshrl.u32 %v3560, 7
        %v3562 = vsub.s32 6, %v3561
        %v3563 = vrot.slane %v1493, %v3562
        %v3564 = vlaneseq
        %v3565 = vshrl.u32 %v3564, 7
        %v3566 = vsub.s32 6, %v3565
        %v3567 = vrot.slane %v1495, %v3566
        %v3568 = vlaneseq
        %v3569 = vshrl.u32 %v3568, 7
        %v3570 = vsub.s32 6, %v3569
        %v3571 = vrot.slane %v1505, %v3570
        %v3572 = vlaneseq
        %v3573 = vshrl.u32 %v3572, 7
        %v3574 = vsub.s32 6, %v3573
        %v3575 = vrot.slane %v1507, %v3574
        %v3576 = vlaneseq
        %v3577 = vshrl.u32 %v3576, 7
        %v3578 = vsub.s32 6, %v3577
        %v3579 = vrot.slane %v1517, %v3578
        %v3580 = vlaneseq
        %v3581 = vshrl.u32 %v3580, 7
        %v3582 = vsub.s32 6, %v3581
        %v3583 = vrot.slane %v1519, %v3582
        %v3584 = vlaneseq
        %v3585 = vshrl.u32 %v3584, 7
        %v3586 = vsub.s32 6, %v3585
        %v3587 = vrot.slane %v1529, %v3586
        %v3588 = vlaneseq
        %v3589 = vshrl.u32 %v3588, 7
        %v3590 = vsub.s32 6, %v3589
        %v3591 = vrot.slane %v1531, %v3590
        %v3592 = vlaneseq
        %v3593 = vshrl.u32 %v3592, 7
        %v3594 = vsub.s32 6, %v3593
        %v3595 = vrot.slane %v1541, %v3594
        %v3596 = vlaneseq
        %v3597 = vshrl.u32 %v3596, 7
        %v3598 = vsub.s32 6, %v3597
        %v3599 = vrot.slane %v1543, %v3598
        %v3600 = vlaneseq
        %v3601 = vshrl.u32 %v3600, 7
        %v3602 = vsub.s32 6, %v3601
        %v3603 = vrot.slane %v1553, %v3602
        %v3604 = vlaneseq
        %v3605 = vshrl.u32 %v3604, 7
        %v3606 = vsub.s32 6, %v3605
        %v3607 = vrot.slane %v1555, %v3606
        %v3608 = vlaneseq
        %v3609 = vshrl.u32 %v3608, 7
        %v3610 = vsub.s32 6, %v3609
        %v3611 = vrot.slane %v1565, %v3610
        %v3612 = vlaneseq
        %v3613 = vshrl.u32 %v3612, 7
        %v3614 = vsub.s32 6, %v3613
        %v3615 = vrot.slane %v1567, %v3614
        %v3616 = vlaneseq
        %v3617 = vshrl.u32 %v3616, 7
        %v3618 = vsub.s32 6, %v3617
        %v3619 = vrot.slane %v1577, %v3618
        %v3620 = vlaneseq
        %v3621 = vshrl.u32 %v3620, 7
        %v3622 = vsub.s32 6, %v3621
        %v3623 = vrot.slane %v1579, %v3622
        %v3624 = vrot.slane %v1589, 6
        %v3625 = vrot.slane %v1601, 5
        %v3626 = vsel %vm1854, %v3625, %v3624
        %v3627 = vrot.slane %v1613, 4
        %v3628 = vsel %vm1857, %v3627, %v3626
        %v3629 = vrot.slane %v1625, 3
        %v3630 = vsel %vm1860, %v3629, %v3628
        %v3631 = vrot.slane %v1637, 2
        %v3632 = vsel %vm1863, %v3631, %v3630
        %v3633 = vrot.slane %v1649, 1
        %v3634 = vsel %vm1866, %v3633, %v3632
        %v3635 = vsel %vm1869, %v1661, %v3634
        %v3636 = vrot.slane %v1673, 7
        %v3637 = vsel %vm1872, %v3636, %v3635
        %v3638 = vrot.slane %v1591, 6
        %v3639 = vrot.slane %v1603, 5
        %v3640 = vsel %vm1854, %v3639, %v3638
        %v3641 = vrot.slane %v1615, 4
        %v3642 = vsel %vm1857, %v3641, %v3640
        %v3643 = vrot.slane %v1627, 3
        %v3644 = vsel %vm1860, %v3643, %v3642
        %v3645 = vrot.slane %v1639, 2
        %v3646 = vsel %vm1863, %v3645, %v3644
        %v3647 = vrot.slane %v1651, 1
        %v3648 = vsel %vm1866, %v3647, %v3646
        %v3649 = vsel %vm1869, %v1663, %v3648
        %v3650 = vrot.slane %v1675, 7
        %v3651 = vsel %vm1872, %v3650, %v3649
        %v3654 = vmul.f32 %v3563, %v3637
        %v3655 = vmul.f32 %v3567, %v3651
        %v3656 = vmul.f32 %v3571, %v3637
        %v3657 = vmul.f32 %v3575, %v3651
        %v3658 = vmul.f32 %v3579, %v3637
        %v3659 = vmul.f32 %v3583, %v3651
        %v3660 = vmul.f32 %v3587, %v3637
        %v3661 = vmul.f32 %v3591, %v3651
        %v3662 = vmul.f32 %v3595, %v3637
        %v3663 = vmul.f32 %v3599, %v3651
        %v3664 = vmul.f32 %v3603, %v3637
        %v3665 = vmul.f32 %v3607, %v3651
        %v3666 = vmul.f32 %v3611, %v3637
        %v3667 = vmul.f32 %v3615, %v3651
        %v3668 = vmul.f32 %v3619, %v3637
        %v3669 = vmul.f32 %v3623, %v3651
        %v3670 = vadd.f32 %v3544, %v3654
        %v3671 = vadd.f32 %v3545, %v3655
        %v3672 = vadd.f32 %v3546, %v3656
        %v3673 = vadd.f32 %v3547, %v3657
        %v3674 = vadd.f32 %v3548, %v3658
        %v3675 = vadd.f32 %v3549, %v3659
        %v3676 = vadd.f32 %v3550, %v3660
        %v3677 = vadd.f32 %v3551, %v3661
        %v3678 = vadd.f32 %v3552, %v3662
        %v3679 = vadd.f32 %v3553, %v3663
        %v3680 = vadd.f32 %v3554, %v3664
        %v3681 = vadd.f32 %v3555, %v3665
        %v3682 = vadd.f32 %v3556, %v3666
        %v3683 = vadd.f32 %v3557, %v3667
        %v3684 = vadd.f32 %v3558, %v3668
        %v3685 = vadd.f32 %v3559, %v3669
        %v3686 = vlaneseq
        %v3687 = vshrl.u32 %v3686, 7
        %v3688 = vsub.s32 7, %v3687
        %v3689 = vrot.slane %v1493, %v3688
        %v3690 = vlaneseq
        %v3691 = vshrl.u32 %v3690, 7
        %v3692 = vsub.s32 7, %v3691
        %v3693 = vrot.slane %v1495, %v3692
        %v3694 = vlaneseq
        %v3695 = vshrl.u32 %v3694, 7
        %v3696 = vsub.s32 7, %v3695
        %v3697 = vrot.slane %v1505, %v3696
        %v3698 = vlaneseq
        %v3699 = vshrl.u32 %v3698, 7
        %v3700 = vsub.s32 7, %v3699
        %v3701 = vrot.slane %v1507, %v3700
        %v3702 = vlaneseq
        %v3703 = vshrl.u32 %v3702, 7
        %v3704 = vsub.s32 7, %v3703
        %v3705 = vrot.slane %v1517, %v3704
        %v3706 = vlaneseq
        %v3707 = vshrl.u32 %v3706, 7
        %v3708 = vsub.s32 7, %v3707
        %v3709 = vrot.slane %v1519, %v3708
        %v3710 = vlaneseq
        %v3711 = vshrl.u32 %v3710, 7
        %v3712 = vsub.s32 7, %v3711
        %v3713 = vrot.slane %v1529, %v3712
        %v3714 = vlaneseq
        %v3715 = vshrl.u32 %v3714, 7
        %v3716 = vsub.s32 7, %v3715
        %v3717 = vrot.slane %v1531, %v3716
        %v3718 = vlaneseq
        %v3719 = vshrl.u32 %v3718, 7
        %v3720 = vsub.s32 7, %v3719
        %v3721 = vrot.slane %v1541, %v3720
        %v3722 = vlaneseq
        %v3723 = vshrl.u32 %v3722, 7
        %v3724 = vsub.s32 7, %v3723
        %v3725 = vrot.slane %v1543, %v3724
        %v3726 = vlaneseq
        %v3727 = vshrl.u32 %v3726, 7
        %v3728 = vsub.s32 7, %v3727
        %v3729 = vrot.slane %v1553, %v3728
        %v3730 = vlaneseq
        %v3731 = vshrl.u32 %v3730, 7
        %v3732 = vsub.s32 7, %v3731
        %v3733 = vrot.slane %v1555, %v3732
        %v3734 = vlaneseq
        %v3735 = vshrl.u32 %v3734, 7
        %v3736 = vsub.s32 7, %v3735
        %v3737 = vrot.slane %v1565, %v3736
        %v3738 = vlaneseq
        %v3739 = vshrl.u32 %v3738, 7
        %v3740 = vsub.s32 7, %v3739
        %v3741 = vrot.slane %v1567, %v3740
        %v3742 = vlaneseq
        %v3743 = vshrl.u32 %v3742, 7
        %v3744 = vsub.s32 7, %v3743
        %v3745 = vrot.slane %v1577, %v3744
        %v3746 = vlaneseq
        %v3747 = vshrl.u32 %v3746, 7
        %v3748 = vsub.s32 7, %v3747
        %v3749 = vrot.slane %v1579, %v3748
        %v3750 = vrot.slane %v1589, 7
        %v3751 = vrot.slane %v1601, 6
        %v3752 = vsel %vm1854, %v3751, %v3750
        %v3753 = vrot.slane %v1613, 5
        %v3754 = vsel %vm1857, %v3753, %v3752
        %v3755 = vrot.slane %v1625, 4
        %v3756 = vsel %vm1860, %v3755, %v3754
        %v3757 = vrot.slane %v1637, 3
        %v3758 = vsel %vm1863, %v3757, %v3756
        %v3759 = vrot.slane %v1649, 2
        %v3760 = vsel %vm1866, %v3759, %v3758
        %v3761 = vrot.slane %v1661, 1
        %v3762 = vsel %vm1869, %v3761, %v3760
        %v3763 = vsel %vm1872, %v1673, %v3762
        %v3764 = vrot.slane %v1591, 7
        %v3765 = vrot.slane %v1603, 6
        %v3766 = vsel %vm1854, %v3765, %v3764
        %v3767 = vrot.slane %v1615, 5
        %v3768 = vsel %vm1857, %v3767, %v3766
        %v3769 = vrot.slane %v1627, 4
        %v3770 = vsel %vm1860, %v3769, %v3768
        %v3771 = vrot.slane %v1639, 3
        %v3772 = vsel %vm1863, %v3771, %v3770
        %v3773 = vrot.slane %v1651, 2
        %v3774 = vsel %vm1866, %v3773, %v3772
        %v3775 = vrot.slane %v1663, 1
        %v3776 = vsel %vm1869, %v3775, %v3774
        %v3777 = vsel %vm1872, %v1675, %v3776
        %v3780 = vmul.f32 %v3689, %v3763
        %v3781 = vmul.f32 %v3693, %v3777
        %v3782 = vmul.f32 %v3697, %v3763
        %v3783 = vmul.f32 %v3701, %v3777
        %v3784 = vmul.f32 %v3705, %v3763
        %v3785 = vmul.f32 %v3709, %v3777
        %v3786 = vmul.f32 %v3713, %v3763
        %v3787 = vmul.f32 %v3717, %v3777
        %v3788 = vmul.f32 %v3721, %v3763
        %v3789 = vmul.f32 %v3725, %v3777
        %v3790 = vmul.f32 %v3729, %v3763
        %v3791 = vmul.f32 %v3733, %v3777
        %v3792 = vmul.f32 %v3737, %v3763
        %v3793 = vmul.f32 %v3741, %v3777
        %v3794 = vmul.f32 %v3745, %v3763
        %v3795 = vmul.f32 %v3749, %v3777
        %v3796 = vadd.f32 %v3670, %v3780
        %v3797 = vadd.f32 %v3671, %v3781
        %v3798 = vadd.f32 %v3672, %v3782
        %v3799 = vadd.f32 %v3673, %v3783
        %v3800 = vadd.f32 %v3674, %v3784
        %v3801 = vadd.f32 %v3675, %v3785
        %v3802 = vadd.f32 %v3676, %v3786
        %v3803 = vadd.f32 %v3677, %v3787
        %v3804 = vadd.f32 %v3678, %v3788
        %v3805 = vadd.f32 %v3679, %v3789
        %v3806 = vadd.f32 %v3680, %v3790
        %v3807 = vadd.f32 %v3681, %v3791
        %v3808 = vadd.f32 %v3682, %v3792
        %v3809 = vadd.f32 %v3683, %v3793
        %v3810 = vadd.f32 %v3684, %v3794
        %v3811 = vadd.f32 %v3685, %v3795
        %v3812 = vmul.f32 %v3796, 0.25
        %v3813 = vmul.f32 %v3797, 0.25
        %v3814 = vmul.f32 %v3798, 0.25
        %v3815 = vmul.f32 %v3799, 0.25
        %v3816 = vmul.f32 %v3800, 0.25
        %v3817 = vmul.f32 %v3801, 0.25
        %v3818 = vmul.f32 %v3802, 0.25
        %v3819 = vmul.f32 %v3803, 0.25
        %v3820 = vmul.f32 %v3804, 0.25
        %v3821 = vmul.f32 %v3805, 0.25
        %v3822 = vmul.f32 %v3806, 0.25
        %v3823 = vmul.f32 %v3807, 0.25
        %v3824 = vmul.f32 %v3808, 0.25
        %v3825 = vmul.f32 %v3809, 0.25
        %v3826 = vmul.f32 %v3810, 0.25
        %v3827 = vmul.f32 %v3811, 0.25
        %v3828 = vrot.slane %v3812, 4
        %v3829 = vmax.f32 %v3812, %v3828
        %v3830 = vrot.slane %v3829, 2
        %v3831 = vmax.f32 %v3829, %v3830
        %v3832 = vrot.slane %v3831, 1
        %v3833 = vmax.f32 %v3831, %v3832
        %v3834 = vrot.slane %v3813, 4
        %v3835 = vmax.f32 %v3813, %v3834
        %v3836 = vrot.slane %v3835, 2
        %v3837 = vmax.f32 %v3835, %v3836
        %v3838 = vrot.slane %v3837, 1
        %v3839 = vmax.f32 %v3837, %v3838
        %v3840 = vrot.slane %v3814, 4
        %v3841 = vmax.f32 %v3814, %v3840
        %v3842 = vrot.slane %v3841, 2
        %v3843 = vmax.f32 %v3841, %v3842
        %v3844 = vrot.slane %v3843, 1
        %v3845 = vmax.f32 %v3843, %v3844
        %v3846 = vrot.slane %v3815, 4
        %v3847 = vmax.f32 %v3815, %v3846
        %v3848 = vrot.slane %v3847, 2
        %v3849 = vmax.f32 %v3847, %v3848
        %v3850 = vrot.slane %v3849, 1
        %v3851 = vmax.f32 %v3849, %v3850
        %v3852 = vrot.slane %v3816, 4
        %v3853 = vmax.f32 %v3816, %v3852
        %v3854 = vrot.slane %v3853, 2
        %v3855 = vmax.f32 %v3853, %v3854
        %v3856 = vrot.slane %v3855, 1
        %v3857 = vmax.f32 %v3855, %v3856
        %v3858 = vrot.slane %v3817, 4
        %v3859 = vmax.f32 %v3817, %v3858
        %v3860 = vrot.slane %v3859, 2
        %v3861 = vmax.f32 %v3859, %v3860
        %v3862 = vrot.slane %v3861, 1
        %v3863 = vmax.f32 %v3861, %v3862
        %v3864 = vrot.slane %v3818, 4
        %v3865 = vmax.f32 %v3818, %v3864
        %v3866 = vrot.slane %v3865, 2
        %v3867 = vmax.f32 %v3865, %v3866
        %v3868 = vrot.slane %v3867, 1
        %v3869 = vmax.f32 %v3867, %v3868
        %v3870 = vrot.slane %v3819, 4
        %v3871 = vmax.f32 %v3819, %v3870
        %v3872 = vrot.slane %v3871, 2
        %v3873 = vmax.f32 %v3871, %v3872
        %v3874 = vrot.slane %v3873, 1
        %v3875 = vmax.f32 %v3873, %v3874
        %v3876 = vrot.slane %v3820, 4
        %v3877 = vmax.f32 %v3820, %v3876
        %v3878 = vrot.slane %v3877, 2
        %v3879 = vmax.f32 %v3877, %v3878
        %v3880 = vrot.slane %v3879, 1
        %v3881 = vmax.f32 %v3879, %v3880
        %v3882 = vrot.slane %v3821, 4
        %v3883 = vmax.f32 %v3821, %v3882
        %v3884 = vrot.slane %v3883, 2
        %v3885 = vmax.f32 %v3883, %v3884
        %v3886 = vrot.slane %v3885, 1
        %v3887 = vmax.f32 %v3885, %v3886
        %v3888 = vrot.slane %v3822, 4
        %v3889 = vmax.f32 %v3822, %v3888
        %v3890 = vrot.slane %v3889, 2
        %v3891 = vmax.f32 %v3889, %v3890
        %v3892 = vrot.slane %v3891, 1
        %v3893 = vmax.f32 %v3891, %v3892
        %v3894 = vrot.slane %v3823, 4
        %v3895 = vmax.f32 %v3823, %v3894
        %v3896 = vrot.slane %v3895, 2
        %v3897 = vmax.f32 %v3895, %v3896
        %v3898 = vrot.slane %v3897, 1
        %v3899 = vmax.f32 %v3897, %v3898
        %v3900 = vrot.slane %v3824, 4
        %v3901 = vmax.f32 %v3824, %v3900
        %v3902 = vrot.slane %v3901, 2
        %v3903 = vmax.f32 %v3901, %v3902
        %v3904 = vrot.slane %v3903, 1
        %v3905 = vmax.f32 %v3903, %v3904
        %v3906 = vrot.slane %v3825, 4
        %v3907 = vmax.f32 %v3825, %v3906
        %v3908 = vrot.slane %v3907, 2
        %v3909 = vmax.f32 %v3907, %v3908
        %v3910 = vrot.slane %v3909, 1
        %v3911 = vmax.f32 %v3909, %v3910
        %v3912 = vrot.slane %v3826, 4
        %v3913 = vmax.f32 %v3826, %v3912
        %v3914 = vrot.slane %v3913, 2
        %v3915 = vmax.f32 %v3913, %v3914
        %v3916 = vrot.slane %v3915, 1
        %v3917 = vmax.f32 %v3915, %v3916
        %v3918 = vrot.slane %v3827, 4
        %v3919 = vmax.f32 %v3827, %v3918
        %v3920 = vrot.slane %v3919, 2
        %v3921 = vmax.f32 %v3919, %v3920
        %v3922 = vrot.slane %v3921, 1
        %v3923 = vmax.f32 %v3921, %v3922
        %v3924 = vsub.f32 %v3812, %v3833
        %v3925 = vsub.f32 %v3813, %v3839
        %v3926 = vsub.f32 %v3814, %v3845
        %v3927 = vsub.f32 %v3815, %v3851
        %v3928 = vsub.f32 %v3816, %v3857
        %v3929 = vsub.f32 %v3817, %v3863
        %v3930 = vsub.f32 %v3818, %v3869
        %v3931 = vsub.f32 %v3819, %v3875
        %v3932 = vsub.f32 %v3820, %v3881
        %v3933 = vsub.f32 %v3821, %v3887
        %v3934 = vsub.f32 %v3822, %v3893
        %v3935 = vsub.f32 %v3823, %v3899
        %v3936 = vsub.f32 %v3824, %v3905
        %v3937 = vsub.f32 %v3825, %v3911
        %v3938 = vsub.f32 %v3826, %v3917
        %v3939 = vsub.f32 %v3827, %v3923
        %v3940 = vmul.f32 %v3924, 1.442695
        %v3941 = vpow.pop %v3940
        %v3942 = vmul.f32 %v3925, 1.442695
        %v3943 = vpow.pop %v3942
        %v3944 = vmul.f32 %v3926, 1.442695
        %v3945 = vpow.pop %v3944
        %v3946 = vmul.f32 %v3927, 1.442695
        %v3947 = vpow.pop %v3946
        %v3948 = vmul.f32 %v3928, 1.442695
        %v3949 = vpow.pop %v3948
        %v3950 = vmul.f32 %v3929, 1.442695
        %v3951 = vpow.pop %v3950
        %v3952 = vmul.f32 %v3930, 1.442695
        %v3953 = vpow.pop %v3952
        %v3954 = vmul.f32 %v3931, 1.442695
        %v3955 = vpow.pop %v3954
        %v3956 = vmul.f32 %v3932, 1.442695
        %v3957 = vpow.pop %v3956
        %v3958 = vmul.f32 %v3933, 1.442695
        %v3959 = vpow.pop %v3958
        %v3960 = vmul.f32 %v3934, 1.442695
        %v3961 = vpow.pop %v3960
        %v3962 = vmul.f32 %v3935, 1.442695
        %v3963 = vpow.pop %v3962
        %v3964 = vmul.f32 %v3936, 1.442695
        %v3965 = vpow.pop %v3964
        %v3966 = vmul.f32 %v3937, 1.442695
        %v3967 = vpow.pop %v3966
        %v3968 = vmul.f32 %v3938, 1.442695
        %v3969 = vpow.pop %v3968
        %v3970 = vmul.f32 %v3939, 1.442695
        %v3971 = vpow.pop %v3970
        %v3972 = vrot.slane %v3941, 4
        %v3973 = vadd.f32 %v3941, %v3972
        %v3974 = vrot.slane %v3973, 2
        %v3975 = vadd.f32 %v3973, %v3974
        %v3976 = vrot.slane %v3975, 1
        %v3977 = vadd.f32 %v3975, %v3976
        %v3978 = vrot.slane %v3943, 4
        %v3979 = vadd.f32 %v3943, %v3978
        %v3980 = vrot.slane %v3979, 2
        %v3981 = vadd.f32 %v3979, %v3980
        %v3982 = vrot.slane %v3981, 1
        %v3983 = vadd.f32 %v3981, %v3982
        %v3984 = vrot.slane %v3945, 4
        %v3985 = vadd.f32 %v3945, %v3984
        %v3986 = vrot.slane %v3985, 2
        %v3987 = vadd.f32 %v3985, %v3986
        %v3988 = vrot.slane %v3987, 1
        %v3989 = vadd.f32 %v3987, %v3988
        %v3990 = vrot.slane %v3947, 4
        %v3991 = vadd.f32 %v3947, %v3990
        %v3992 = vrot.slane %v3991, 2
        %v3993 = vadd.f32 %v3991, %v3992
        %v3994 = vrot.slane %v3993, 1
        %v3995 = vadd.f32 %v3993, %v3994
        %v3996 = vrot.slane %v3949, 4
        %v3997 = vadd.f32 %v3949, %v3996
        %v3998 = vrot.slane %v3997, 2
        %v3999 = vadd.f32 %v3997, %v3998
        %v4000 = vrot.slane %v3999, 1
        %v4001 = vadd.f32 %v3999, %v4000
        %v4002 = vrot.slane %v3951, 4
        %v4003 = vadd.f32 %v3951, %v4002
        %v4004 = vrot.slane %v4003, 2
        %v4005 = vadd.f32 %v4003, %v4004
        %v4006 = vrot.slane %v4005, 1
        %v4007 = vadd.f32 %v4005, %v4006
        %v4008 = vrot.slane %v3953, 4
        %v4009 = vadd.f32 %v3953, %v4008
        %v4010 = vrot.slane %v4009, 2
        %v4011 = vadd.f32 %v4009, %v4010
        %v4012 = vrot.slane %v4011, 1
        %v4013 = vadd.f32 %v4011, %v4012
        %v4014 = vrot.slane %v3955, 4
        %v4015 = vadd.f32 %v3955, %v4014
        %v4016 = vrot.slane %v4015, 2
        %v4017 = vadd.f32 %v4015, %v4016
        %v4018 = vrot.slane %v4017, 1
        %v4019 = vadd.f32 %v4017, %v4018
        %v4020 = vrot.slane %v3957, 4
        %v4021 = vadd.f32 %v3957, %v4020
        %v4022 = vrot.slane %v4021, 2
        %v4023 = vadd.f32 %v4021, %v4022
        %v4024 = vrot.slane %v4023, 1
        %v4025 = vadd.f32 %v4023, %v4024
        %v4026 = vrot.slane %v3959, 4
        %v4027 = vadd.f32 %v3959, %v4026
        %v4028 = vrot.slane %v4027, 2
        %v4029 = vadd.f32 %v4027, %v4028
        %v4030 = vrot.slane %v4029, 1
        %v4031 = vadd.f32 %v4029, %v4030
        %v4032 = vrot.slane %v3961, 4
        %v4033 = vadd.f32 %v3961, %v4032
        %v4034 = vrot.slane %v4033, 2
        %v4035 = vadd.f32 %v4033, %v4034
        %v4036 = vrot.slane %v4035, 1
        %v4037 = vadd.f32 %v4035, %v4036
        %v4038 = vrot.slane %v3963, 4
        %v4039 = vadd.f32 %v3963, %v4038
        %v4040 = vrot.slane %v4039, 2
        %v4041 = vadd.f32 %v4039, %v4040
        %v4042 = vrot.slane %v4041, 1
        %v4043 = vadd.f32 %v4041, %v4042
        %v4044 = vrot.slane %v3965, 4
        %v4045 = vadd.f32 %v3965, %v4044
        %v4046 = vrot.slane %v4045, 2
        %v4047 = vadd.f32 %v4045, %v4046
        %v4048 = vrot.slane %v4047, 1
        %v4049 = vadd.f32 %v4047, %v4048
        %v4050 = vrot.slane %v3967, 4
        %v4051 = vadd.f32 %v3967, %v4050
        %v4052 = vrot.slane %v4051, 2
        %v4053 = vadd.f32 %v4051, %v4052
        %v4054 = vrot.slane %v4053, 1
        %v4055 = vadd.f32 %v4053, %v4054
        %v4056 = vrot.slane %v3969, 4
        %v4057 = vadd.f32 %v3969, %v4056
        %v4058 = vrot.slane %v4057, 2
        %v4059 = vadd.f32 %v4057, %v4058
        %v4060 = vrot.slane %v4059, 1
        %v4061 = vadd.f32 %v4059, %v4060
        %v4062 = vrot.slane %v3971, 4
        %v4063 = vadd.f32 %v3971, %v4062
        %v4064 = vrot.slane %v4063, 2
        %v4065 = vadd.f32 %v4063, %v4064
        %v4066 = vrot.slane %v4065, 1
        %v4067 = vadd.f32 %v4065, %v4066
        %v4068 = vrcp.pop %v3977
        %v4069 = vrcp.pop %v3983
        %v4070 = vrcp.pop %v3989
        %v4071 = vrcp.pop %v3995
        %v4072 = vrcp.pop %v4001
        %v4073 = vrcp.pop %v4007
        %v4074 = vrcp.pop %v4013
        %v4075 = vrcp.pop %v4019
        %v4076 = vrcp.pop %v4025
        %v4077 = vrcp.pop %v4031
        %v4078 = vrcp.pop %v4037
        %v4079 = vrcp.pop %v4043
        %v4080 = vrcp.pop %v4049
        %v4081 = vrcp.pop %v4055
        %v4082 = vrcp.pop %v4061
        %v4083 = vrcp.pop %v4067
        %v4084 = vmul.f32 %v3941, %v4068
        %v4085 = vmul.f32 %v3943, %v4069
        %v4086 = vmul.f32 %v3945, %v4070
        %v4087 = vmul.f32 %v3947, %v4071
        %v4088 = vmul.f32 %v3949, %v4072
        %v4089 = vmul.f32 %v3951, %v4073
        %v4090 = vmul.f32 %v3953, %v4074
        %v4091 = vmul.f32 %v3955, %v4075
        %v4092 = vmul.f32 %v3957, %v4076
        %v4093 = vmul.f32 %v3959, %v4077
        %v4094 = vmul.f32 %v3961, %v4078
        %v4095 = vmul.f32 %v3963, %v4079
        %v4096 = vmul.f32 %v3965, %v4080
        %v4097 = vmul.f32 %v3967, %v4081
        %v4098 = vmul.f32 %v3969, %v4082
        %v4099 = vmul.f32 %v3971, %v4083
        %v4100 = vlaneseq
        %v4101 = vshrl.u32 %v4100, 7
        %v4102 = vsub.s32 0, %v4101
        %v4103 = vrot.slane %v4084, %v4102
        %v4104 = vlaneseq
        %v4105 = vshrl.u32 %v4104, 7
        %v4106 = vsub.s32 0, %v4105
        %v4107 = vrot.slane %v4085, %v4106
        %v4108 = vlaneseq
        %v4109 = vshrl.u32 %v4108, 7
        %v4110 = vsub.s32 0, %v4109
        %v4111 = vrot.slane %v4086, %v4110
        %v4112 = vlaneseq
        %v4113 = vshrl.u32 %v4112, 7
        %v4114 = vsub.s32 0, %v4113
        %v4115 = vrot.slane %v4087, %v4114
        %v4116 = vlaneseq
        %v4117 = vshrl.u32 %v4116, 7
        %v4118 = vsub.s32 0, %v4117
        %v4119 = vrot.slane %v4088, %v4118
        %v4120 = vlaneseq
        %v4121 = vshrl.u32 %v4120, 7
        %v4122 = vsub.s32 0, %v4121
        %v4123 = vrot.slane %v4089, %v4122
        %v4124 = vlaneseq
        %v4125 = vshrl.u32 %v4124, 7
        %v4126 = vsub.s32 0, %v4125
        %v4127 = vrot.slane %v4090, %v4126
        %v4128 = vlaneseq
        %v4129 = vshrl.u32 %v4128, 7
        %v4130 = vsub.s32 0, %v4129
        %v4131 = vrot.slane %v4091, %v4130
        %v4132 = vlaneseq
        %v4133 = vshrl.u32 %v4132, 7
        %v4134 = vsub.s32 0, %v4133
        %v4135 = vrot.slane %v4092, %v4134
        %v4136 = vlaneseq
        %v4137 = vshrl.u32 %v4136, 7
        %v4138 = vsub.s32 0, %v4137
        %v4139 = vrot.slane %v4093, %v4138
        %v4140 = vlaneseq
        %v4141 = vshrl.u32 %v4140, 7
        %v4142 = vsub.s32 0, %v4141
        %v4143 = vrot.slane %v4094, %v4142
        %v4144 = vlaneseq
        %v4145 = vshrl.u32 %v4144, 7
        %v4146 = vsub.s32 0, %v4145
        %v4147 = vrot.slane %v4095, %v4146
        %v4148 = vlaneseq
        %v4149 = vshrl.u32 %v4148, 7
        %v4150 = vsub.s32 0, %v4149
        %v4151 = vrot.slane %v4096, %v4150
        %v4152 = vlaneseq
        %v4153 = vshrl.u32 %v4152, 7
        %v4154 = vsub.s32 0, %v4153
        %v4155 = vrot.slane %v4097, %v4154
        %v4156 = vlaneseq
        %v4157 = vshrl.u32 %v4156, 7
        %v4158 = vsub.s32 0, %v4157
        %v4159 = vrot.slane %v4098, %v4158
        %v4160 = vlaneseq
        %v4161 = vshrl.u32 %v4160, 7
        %v4162 = vsub.s32 0, %v4161
        %v4163 = vrot.slane %v4099, %v4162
        %v4164 = vmul.f32 %v4103, %v1679
        %v4165 = vmul.f32 %v4107, %v1681
        %v4166 = vmul.f32 %v4103, %v1685
        %v4167 = vmul.f32 %v4107, %v1687
        %v4168 = vmul.f32 %v4111, %v1679
        %v4169 = vmul.f32 %v4115, %v1681
        %v4170 = vmul.f32 %v4111, %v1685
        %v4171 = vmul.f32 %v4115, %v1687
        %v4172 = vmul.f32 %v4119, %v1679
        %v4173 = vmul.f32 %v4123, %v1681
        %v4174 = vmul.f32 %v4119, %v1685
        %v4175 = vmul.f32 %v4123, %v1687
        %v4176 = vmul.f32 %v4127, %v1679
        %v4177 = vmul.f32 %v4131, %v1681
        %v4178 = vmul.f32 %v4127, %v1685
        %v4179 = vmul.f32 %v4131, %v1687
        %v4180 = vmul.f32 %v4135, %v1679
        %v4181 = vmul.f32 %v4139, %v1681
        %v4182 = vmul.f32 %v4135, %v1685
        %v4183 = vmul.f32 %v4139, %v1687
        %v4184 = vmul.f32 %v4143, %v1679
        %v4185 = vmul.f32 %v4147, %v1681
        %v4186 = vmul.f32 %v4143, %v1685
        %v4187 = vmul.f32 %v4147, %v1687
        %v4188 = vmul.f32 %v4151, %v1679
        %v4189 = vmul.f32 %v4155, %v1681
        %v4190 = vmul.f32 %v4151, %v1685
        %v4191 = vmul.f32 %v4155, %v1687
        %v4192 = vmul.f32 %v4159, %v1679
        %v4193 = vmul.f32 %v4163, %v1681
        %v4194 = vmul.f32 %v4159, %v1685
        %v4195 = vmul.f32 %v4163, %v1687
        %v4196 = vlaneseq
        %v4197 = vshrl.u32 %v4196, 7
        %v4198 = vsub.s32 1, %v4197
        %v4199 = vrot.slane %v4084, %v4198
        %v4200 = vlaneseq
        %v4201 = vshrl.u32 %v4200, 7
        %v4202 = vsub.s32 1, %v4201
        %v4203 = vrot.slane %v4085, %v4202
        %v4204 = vlaneseq
        %v4205 = vshrl.u32 %v4204, 7
        %v4206 = vsub.s32 1, %v4205
        %v4207 = vrot.slane %v4086, %v4206
        %v4208 = vlaneseq
        %v4209 = vshrl.u32 %v4208, 7
        %v4210 = vsub.s32 1, %v4209
        %v4211 = vrot.slane %v4087, %v4210
        %v4212 = vlaneseq
        %v4213 = vshrl.u32 %v4212, 7
        %v4214 = vsub.s32 1, %v4213
        %v4215 = vrot.slane %v4088, %v4214
        %v4216 = vlaneseq
        %v4217 = vshrl.u32 %v4216, 7
        %v4218 = vsub.s32 1, %v4217
        %v4219 = vrot.slane %v4089, %v4218
        %v4220 = vlaneseq
        %v4221 = vshrl.u32 %v4220, 7
        %v4222 = vsub.s32 1, %v4221
        %v4223 = vrot.slane %v4090, %v4222
        %v4224 = vlaneseq
        %v4225 = vshrl.u32 %v4224, 7
        %v4226 = vsub.s32 1, %v4225
        %v4227 = vrot.slane %v4091, %v4226
        %v4228 = vlaneseq
        %v4229 = vshrl.u32 %v4228, 7
        %v4230 = vsub.s32 1, %v4229
        %v4231 = vrot.slane %v4092, %v4230
        %v4232 = vlaneseq
        %v4233 = vshrl.u32 %v4232, 7
        %v4234 = vsub.s32 1, %v4233
        %v4235 = vrot.slane %v4093, %v4234
        %v4236 = vlaneseq
        %v4237 = vshrl.u32 %v4236, 7
        %v4238 = vsub.s32 1, %v4237
        %v4239 = vrot.slane %v4094, %v4238
        %v4240 = vlaneseq
        %v4241 = vshrl.u32 %v4240, 7
        %v4242 = vsub.s32 1, %v4241
        %v4243 = vrot.slane %v4095, %v4242
        %v4244 = vlaneseq
        %v4245 = vshrl.u32 %v4244, 7
        %v4246 = vsub.s32 1, %v4245
        %v4247 = vrot.slane %v4096, %v4246
        %v4248 = vlaneseq
        %v4249 = vshrl.u32 %v4248, 7
        %v4250 = vsub.s32 1, %v4249
        %v4251 = vrot.slane %v4097, %v4250
        %v4252 = vlaneseq
        %v4253 = vshrl.u32 %v4252, 7
        %v4254 = vsub.s32 1, %v4253
        %v4255 = vrot.slane %v4098, %v4254
        %v4256 = vlaneseq
        %v4257 = vshrl.u32 %v4256, 7
        %v4258 = vsub.s32 1, %v4257
        %v4259 = vrot.slane %v4099, %v4258
        %v4260 = vmul.f32 %v4199, %v1691
        %v4261 = vmul.f32 %v4203, %v1693
        %v4262 = vmul.f32 %v4199, %v1697
        %v4263 = vmul.f32 %v4203, %v1699
        %v4264 = vmul.f32 %v4207, %v1691
        %v4265 = vmul.f32 %v4211, %v1693
        %v4266 = vmul.f32 %v4207, %v1697
        %v4267 = vmul.f32 %v4211, %v1699
        %v4268 = vmul.f32 %v4215, %v1691
        %v4269 = vmul.f32 %v4219, %v1693
        %v4270 = vmul.f32 %v4215, %v1697
        %v4271 = vmul.f32 %v4219, %v1699
        %v4272 = vmul.f32 %v4223, %v1691
        %v4273 = vmul.f32 %v4227, %v1693
        %v4274 = vmul.f32 %v4223, %v1697
        %v4275 = vmul.f32 %v4227, %v1699
        %v4276 = vmul.f32 %v4231, %v1691
        %v4277 = vmul.f32 %v4235, %v1693
        %v4278 = vmul.f32 %v4231, %v1697
        %v4279 = vmul.f32 %v4235, %v1699
        %v4280 = vmul.f32 %v4239, %v1691
        %v4281 = vmul.f32 %v4243, %v1693
        %v4282 = vmul.f32 %v4239, %v1697
        %v4283 = vmul.f32 %v4243, %v1699
        %v4284 = vmul.f32 %v4247, %v1691
        %v4285 = vmul.f32 %v4251, %v1693
        %v4286 = vmul.f32 %v4247, %v1697
        %v4287 = vmul.f32 %v4251, %v1699
        %v4288 = vmul.f32 %v4255, %v1691
        %v4289 = vmul.f32 %v4259, %v1693
        %v4290 = vmul.f32 %v4255, %v1697
        %v4291 = vmul.f32 %v4259, %v1699
        %v4292 = vadd.f32 %v4164, %v4260
        %v4293 = vadd.f32 %v4165, %v4261
        %v4294 = vadd.f32 %v4166, %v4262
        %v4295 = vadd.f32 %v4167, %v4263
        %v4296 = vadd.f32 %v4168, %v4264
        %v4297 = vadd.f32 %v4169, %v4265
        %v4298 = vadd.f32 %v4170, %v4266
        %v4299 = vadd.f32 %v4171, %v4267
        %v4300 = vadd.f32 %v4172, %v4268
        %v4301 = vadd.f32 %v4173, %v4269
        %v4302 = vadd.f32 %v4174, %v4270
        %v4303 = vadd.f32 %v4175, %v4271
        %v4304 = vadd.f32 %v4176, %v4272
        %v4305 = vadd.f32 %v4177, %v4273
        %v4306 = vadd.f32 %v4178, %v4274
        %v4307 = vadd.f32 %v4179, %v4275
        %v4308 = vadd.f32 %v4180, %v4276
        %v4309 = vadd.f32 %v4181, %v4277
        %v4310 = vadd.f32 %v4182, %v4278
        %v4311 = vadd.f32 %v4183, %v4279
        %v4312 = vadd.f32 %v4184, %v4280
        %v4313 = vadd.f32 %v4185, %v4281
        %v4314 = vadd.f32 %v4186, %v4282
        %v4315 = vadd.f32 %v4187, %v4283
        %v4316 = vadd.f32 %v4188, %v4284
        %v4317 = vadd.f32 %v4189, %v4285
        %v4318 = vadd.f32 %v4190, %v4286
        %v4319 = vadd.f32 %v4191, %v4287
        %v4320 = vadd.f32 %v4192, %v4288
        %v4321 = vadd.f32 %v4193, %v4289
        %v4322 = vadd.f32 %v4194, %v4290
        %v4323 = vadd.f32 %v4195, %v4291
        %v4324 = vlaneseq
        %v4325 = vshrl.u32 %v4324, 7
        %v4326 = vsub.s32 2, %v4325
        %v4327 = vrot.slane %v4084, %v4326
        %v4328 = vlaneseq
        %v4329 = vshrl.u32 %v4328, 7
        %v4330 = vsub.s32 2, %v4329
        %v4331 = vrot.slane %v4085, %v4330
        %v4332 = vlaneseq
        %v4333 = vshrl.u32 %v4332, 7
        %v4334 = vsub.s32 2, %v4333
        %v4335 = vrot.slane %v4086, %v4334
        %v4336 = vlaneseq
        %v4337 = vshrl.u32 %v4336, 7
        %v4338 = vsub.s32 2, %v4337
        %v4339 = vrot.slane %v4087, %v4338
        %v4340 = vlaneseq
        %v4341 = vshrl.u32 %v4340, 7
        %v4342 = vsub.s32 2, %v4341
        %v4343 = vrot.slane %v4088, %v4342
        %v4344 = vlaneseq
        %v4345 = vshrl.u32 %v4344, 7
        %v4346 = vsub.s32 2, %v4345
        %v4347 = vrot.slane %v4089, %v4346
        %v4348 = vlaneseq
        %v4349 = vshrl.u32 %v4348, 7
        %v4350 = vsub.s32 2, %v4349
        %v4351 = vrot.slane %v4090, %v4350
        %v4352 = vlaneseq
        %v4353 = vshrl.u32 %v4352, 7
        %v4354 = vsub.s32 2, %v4353
        %v4355 = vrot.slane %v4091, %v4354
        %v4356 = vlaneseq
        %v4357 = vshrl.u32 %v4356, 7
        %v4358 = vsub.s32 2, %v4357
        %v4359 = vrot.slane %v4092, %v4358
        %v4360 = vlaneseq
        %v4361 = vshrl.u32 %v4360, 7
        %v4362 = vsub.s32 2, %v4361
        %v4363 = vrot.slane %v4093, %v4362
        %v4364 = vlaneseq
        %v4365 = vshrl.u32 %v4364, 7
        %v4366 = vsub.s32 2, %v4365
        %v4367 = vrot.slane %v4094, %v4366
        %v4368 = vlaneseq
        %v4369 = vshrl.u32 %v4368, 7
        %v4370 = vsub.s32 2, %v4369
        %v4371 = vrot.slane %v4095, %v4370
        %v4372 = vlaneseq
        %v4373 = vshrl.u32 %v4372, 7
        %v4374 = vsub.s32 2, %v4373
        %v4375 = vrot.slane %v4096, %v4374
        %v4376 = vlaneseq
        %v4377 = vshrl.u32 %v4376, 7
        %v4378 = vsub.s32 2, %v4377
        %v4379 = vrot.slane %v4097, %v4378
        %v4380 = vlaneseq
        %v4381 = vshrl.u32 %v4380, 7
        %v4382 = vsub.s32 2, %v4381
        %v4383 = vrot.slane %v4098, %v4382
        %v4384 = vlaneseq
        %v4385 = vshrl.u32 %v4384, 7
        %v4386 = vsub.s32 2, %v4385
        %v4387 = vrot.slane %v4099, %v4386
        %v4388 = vmul.f32 %v4327, %v1703
        %v4389 = vmul.f32 %v4331, %v1705
        %v4390 = vmul.f32 %v4327, %v1709
        %v4391 = vmul.f32 %v4331, %v1711
        %v4392 = vmul.f32 %v4335, %v1703
        %v4393 = vmul.f32 %v4339, %v1705
        %v4394 = vmul.f32 %v4335, %v1709
        %v4395 = vmul.f32 %v4339, %v1711
        %v4396 = vmul.f32 %v4343, %v1703
        %v4397 = vmul.f32 %v4347, %v1705
        %v4398 = vmul.f32 %v4343, %v1709
        %v4399 = vmul.f32 %v4347, %v1711
        %v4400 = vmul.f32 %v4351, %v1703
        %v4401 = vmul.f32 %v4355, %v1705
        %v4402 = vmul.f32 %v4351, %v1709
        %v4403 = vmul.f32 %v4355, %v1711
        %v4404 = vmul.f32 %v4359, %v1703
        %v4405 = vmul.f32 %v4363, %v1705
        %v4406 = vmul.f32 %v4359, %v1709
        %v4407 = vmul.f32 %v4363, %v1711
        %v4408 = vmul.f32 %v4367, %v1703
        %v4409 = vmul.f32 %v4371, %v1705
        %v4410 = vmul.f32 %v4367, %v1709
        %v4411 = vmul.f32 %v4371, %v1711
        %v4412 = vmul.f32 %v4375, %v1703
        %v4413 = vmul.f32 %v4379, %v1705
        %v4414 = vmul.f32 %v4375, %v1709
        %v4415 = vmul.f32 %v4379, %v1711
        %v4416 = vmul.f32 %v4383, %v1703
        %v4417 = vmul.f32 %v4387, %v1705
        %v4418 = vmul.f32 %v4383, %v1709
        %v4419 = vmul.f32 %v4387, %v1711
        %v4420 = vadd.f32 %v4292, %v4388
        %v4421 = vadd.f32 %v4293, %v4389
        %v4422 = vadd.f32 %v4294, %v4390
        %v4423 = vadd.f32 %v4295, %v4391
        %v4424 = vadd.f32 %v4296, %v4392
        %v4425 = vadd.f32 %v4297, %v4393
        %v4426 = vadd.f32 %v4298, %v4394
        %v4427 = vadd.f32 %v4299, %v4395
        %v4428 = vadd.f32 %v4300, %v4396
        %v4429 = vadd.f32 %v4301, %v4397
        %v4430 = vadd.f32 %v4302, %v4398
        %v4431 = vadd.f32 %v4303, %v4399
        %v4432 = vadd.f32 %v4304, %v4400
        %v4433 = vadd.f32 %v4305, %v4401
        %v4434 = vadd.f32 %v4306, %v4402
        %v4435 = vadd.f32 %v4307, %v4403
        %v4436 = vadd.f32 %v4308, %v4404
        %v4437 = vadd.f32 %v4309, %v4405
        %v4438 = vadd.f32 %v4310, %v4406
        %v4439 = vadd.f32 %v4311, %v4407
        %v4440 = vadd.f32 %v4312, %v4408
        %v4441 = vadd.f32 %v4313, %v4409
        %v4442 = vadd.f32 %v4314, %v4410
        %v4443 = vadd.f32 %v4315, %v4411
        %v4444 = vadd.f32 %v4316, %v4412
        %v4445 = vadd.f32 %v4317, %v4413
        %v4446 = vadd.f32 %v4318, %v4414
        %v4447 = vadd.f32 %v4319, %v4415
        %v4448 = vadd.f32 %v4320, %v4416
        %v4449 = vadd.f32 %v4321, %v4417
        %v4450 = vadd.f32 %v4322, %v4418
        %v4451 = vadd.f32 %v4323, %v4419
        %v4452 = vlaneseq
        %v4453 = vshrl.u32 %v4452, 7
        %v4454 = vsub.s32 3, %v4453
        %v4455 = vrot.slane %v4084, %v4454
        %v4456 = vlaneseq
        %v4457 = vshrl.u32 %v4456, 7
        %v4458 = vsub.s32 3, %v4457
        %v4459 = vrot.slane %v4085, %v4458
        %v4460 = vlaneseq
        %v4461 = vshrl.u32 %v4460, 7
        %v4462 = vsub.s32 3, %v4461
        %v4463 = vrot.slane %v4086, %v4462
        %v4464 = vlaneseq
        %v4465 = vshrl.u32 %v4464, 7
        %v4466 = vsub.s32 3, %v4465
        %v4467 = vrot.slane %v4087, %v4466
        %v4468 = vlaneseq
        %v4469 = vshrl.u32 %v4468, 7
        %v4470 = vsub.s32 3, %v4469
        %v4471 = vrot.slane %v4088, %v4470
        %v4472 = vlaneseq
        %v4473 = vshrl.u32 %v4472, 7
        %v4474 = vsub.s32 3, %v4473
        %v4475 = vrot.slane %v4089, %v4474
        %v4476 = vlaneseq
        %v4477 = vshrl.u32 %v4476, 7
        %v4478 = vsub.s32 3, %v4477
        %v4479 = vrot.slane %v4090, %v4478
        %v4480 = vlaneseq
        %v4481 = vshrl.u32 %v4480, 7
        %v4482 = vsub.s32 3, %v4481
        %v4483 = vrot.slane %v4091, %v4482
        %v4484 = vlaneseq
        %v4485 = vshrl.u32 %v4484, 7
        %v4486 = vsub.s32 3, %v4485
        %v4487 = vrot.slane %v4092, %v4486
        %v4488 = vlaneseq
        %v4489 = vshrl.u32 %v4488, 7
        %v4490 = vsub.s32 3, %v4489
        %v4491 = vrot.slane %v4093, %v4490
        %v4492 = vlaneseq
        %v4493 = vshrl.u32 %v4492, 7
        %v4494 = vsub.s32 3, %v4493
        %v4495 = vrot.slane %v4094, %v4494
        %v4496 = vlaneseq
        %v4497 = vshrl.u32 %v4496, 7
        %v4498 = vsub.s32 3, %v4497
        %v4499 = vrot.slane %v4095, %v4498
        %v4500 = vlaneseq
        %v4501 = vshrl.u32 %v4500, 7
        %v4502 = vsub.s32 3, %v4501
        %v4503 = vrot.slane %v4096, %v4502
        %v4504 = vlaneseq
        %v4505 = vshrl.u32 %v4504, 7
        %v4506 = vsub.s32 3, %v4505
        %v4507 = vrot.slane %v4097, %v4506
        %v4508 = vlaneseq
        %v4509 = vshrl.u32 %v4508, 7
        %v4510 = vsub.s32 3, %v4509
        %v4511 = vrot.slane %v4098, %v4510
        %v4512 = vlaneseq
        %v4513 = vshrl.u32 %v4512, 7
        %v4514 = vsub.s32 3, %v4513
        %v4515 = vrot.slane %v4099, %v4514
        %v4516 = vmul.f32 %v4455, %v1715
        %v4517 = vmul.f32 %v4459, %v1717
        %v4518 = vmul.f32 %v4455, %v1721
        %v4519 = vmul.f32 %v4459, %v1723
        %v4520 = vmul.f32 %v4463, %v1715
        %v4521 = vmul.f32 %v4467, %v1717
        %v4522 = vmul.f32 %v4463, %v1721
        %v4523 = vmul.f32 %v4467, %v1723
        %v4524 = vmul.f32 %v4471, %v1715
        %v4525 = vmul.f32 %v4475, %v1717
        %v4526 = vmul.f32 %v4471, %v1721
        %v4527 = vmul.f32 %v4475, %v1723
        %v4528 = vmul.f32 %v4479, %v1715
        %v4529 = vmul.f32 %v4483, %v1717
        %v4530 = vmul.f32 %v4479, %v1721
        %v4531 = vmul.f32 %v4483, %v1723
        %v4532 = vmul.f32 %v4487, %v1715
        %v4533 = vmul.f32 %v4491, %v1717
        %v4534 = vmul.f32 %v4487, %v1721
        %v4535 = vmul.f32 %v4491, %v1723
        %v4536 = vmul.f32 %v4495, %v1715
        %v4537 = vmul.f32 %v4499, %v1717
        %v4538 = vmul.f32 %v4495, %v1721
        %v4539 = vmul.f32 %v4499, %v1723
        %v4540 = vmul.f32 %v4503, %v1715
        %v4541 = vmul.f32 %v4507, %v1717
        %v4542 = vmul.f32 %v4503, %v1721
        %v4543 = vmul.f32 %v4507, %v1723
        %v4544 = vmul.f32 %v4511, %v1715
        %v4545 = vmul.f32 %v4515, %v1717
        %v4546 = vmul.f32 %v4511, %v1721
        %v4547 = vmul.f32 %v4515, %v1723
        %v4548 = vadd.f32 %v4420, %v4516
        %v4549 = vadd.f32 %v4421, %v4517
        %v4550 = vadd.f32 %v4422, %v4518
        %v4551 = vadd.f32 %v4423, %v4519
        %v4552 = vadd.f32 %v4424, %v4520
        %v4553 = vadd.f32 %v4425, %v4521
        %v4554 = vadd.f32 %v4426, %v4522
        %v4555 = vadd.f32 %v4427, %v4523
        %v4556 = vadd.f32 %v4428, %v4524
        %v4557 = vadd.f32 %v4429, %v4525
        %v4558 = vadd.f32 %v4430, %v4526
        %v4559 = vadd.f32 %v4431, %v4527
        %v4560 = vadd.f32 %v4432, %v4528
        %v4561 = vadd.f32 %v4433, %v4529
        %v4562 = vadd.f32 %v4434, %v4530
        %v4563 = vadd.f32 %v4435, %v4531
        %v4564 = vadd.f32 %v4436, %v4532
        %v4565 = vadd.f32 %v4437, %v4533
        %v4566 = vadd.f32 %v4438, %v4534
        %v4567 = vadd.f32 %v4439, %v4535
        %v4568 = vadd.f32 %v4440, %v4536
        %v4569 = vadd.f32 %v4441, %v4537
        %v4570 = vadd.f32 %v4442, %v4538
        %v4571 = vadd.f32 %v4443, %v4539
        %v4572 = vadd.f32 %v4444, %v4540
        %v4573 = vadd.f32 %v4445, %v4541
        %v4574 = vadd.f32 %v4446, %v4542
        %v4575 = vadd.f32 %v4447, %v4543
        %v4576 = vadd.f32 %v4448, %v4544
        %v4577 = vadd.f32 %v4449, %v4545
        %v4578 = vadd.f32 %v4450, %v4546
        %v4579 = vadd.f32 %v4451, %v4547
        %v4580 = vlaneseq
        %v4581 = vshrl.u32 %v4580, 7
        %v4582 = vsub.s32 4, %v4581
        %v4583 = vrot.slane %v4084, %v4582
        %v4584 = vlaneseq
        %v4585 = vshrl.u32 %v4584, 7
        %v4586 = vsub.s32 4, %v4585
        %v4587 = vrot.slane %v4085, %v4586
        %v4588 = vlaneseq
        %v4589 = vshrl.u32 %v4588, 7
        %v4590 = vsub.s32 4, %v4589
        %v4591 = vrot.slane %v4086, %v4590
        %v4592 = vlaneseq
        %v4593 = vshrl.u32 %v4592, 7
        %v4594 = vsub.s32 4, %v4593
        %v4595 = vrot.slane %v4087, %v4594
        %v4596 = vlaneseq
        %v4597 = vshrl.u32 %v4596, 7
        %v4598 = vsub.s32 4, %v4597
        %v4599 = vrot.slane %v4088, %v4598
        %v4600 = vlaneseq
        %v4601 = vshrl.u32 %v4600, 7
        %v4602 = vsub.s32 4, %v4601
        %v4603 = vrot.slane %v4089, %v4602
        %v4604 = vlaneseq
        %v4605 = vshrl.u32 %v4604, 7
        %v4606 = vsub.s32 4, %v4605
        %v4607 = vrot.slane %v4090, %v4606
        %v4608 = vlaneseq
        %v4609 = vshrl.u32 %v4608, 7
        %v4610 = vsub.s32 4, %v4609
        %v4611 = vrot.slane %v4091, %v4610
        %v4612 = vlaneseq
        %v4613 = vshrl.u32 %v4612, 7
        %v4614 = vsub.s32 4, %v4613
        %v4615 = vrot.slane %v4092, %v4614
        %v4616 = vlaneseq
        %v4617 = vshrl.u32 %v4616, 7
        %v4618 = vsub.s32 4, %v4617
        %v4619 = vrot.slane %v4093, %v4618
        %v4620 = vlaneseq
        %v4621 = vshrl.u32 %v4620, 7
        %v4622 = vsub.s32 4, %v4621
        %v4623 = vrot.slane %v4094, %v4622
        %v4624 = vlaneseq
        %v4625 = vshrl.u32 %v4624, 7
        %v4626 = vsub.s32 4, %v4625
        %v4627 = vrot.slane %v4095, %v4626
        %v4628 = vlaneseq
        %v4629 = vshrl.u32 %v4628, 7
        %v4630 = vsub.s32 4, %v4629
        %v4631 = vrot.slane %v4096, %v4630
        %v4632 = vlaneseq
        %v4633 = vshrl.u32 %v4632, 7
        %v4634 = vsub.s32 4, %v4633
        %v4635 = vrot.slane %v4097, %v4634
        %v4636 = vlaneseq
        %v4637 = vshrl.u32 %v4636, 7
        %v4638 = vsub.s32 4, %v4637
        %v4639 = vrot.slane %v4098, %v4638
        %v4640 = vlaneseq
        %v4641 = vshrl.u32 %v4640, 7
        %v4642 = vsub.s32 4, %v4641
        %v4643 = vrot.slane %v4099, %v4642
        %v4644 = vmul.f32 %v4583, %v1727
        %v4645 = vmul.f32 %v4587, %v1729
        %v4646 = vmul.f32 %v4583, %v1733
        %v4647 = vmul.f32 %v4587, %v1735
        %v4648 = vmul.f32 %v4591, %v1727
        %v4649 = vmul.f32 %v4595, %v1729
        %v4650 = vmul.f32 %v4591, %v1733
        %v4651 = vmul.f32 %v4595, %v1735
        %v4652 = vmul.f32 %v4599, %v1727
        %v4653 = vmul.f32 %v4603, %v1729
        %v4654 = vmul.f32 %v4599, %v1733
        %v4655 = vmul.f32 %v4603, %v1735
        %v4656 = vmul.f32 %v4607, %v1727
        %v4657 = vmul.f32 %v4611, %v1729
        %v4658 = vmul.f32 %v4607, %v1733
        %v4659 = vmul.f32 %v4611, %v1735
        %v4660 = vmul.f32 %v4615, %v1727
        %v4661 = vmul.f32 %v4619, %v1729
        %v4662 = vmul.f32 %v4615, %v1733
        %v4663 = vmul.f32 %v4619, %v1735
        %v4664 = vmul.f32 %v4623, %v1727
        %v4665 = vmul.f32 %v4627, %v1729
        %v4666 = vmul.f32 %v4623, %v1733
        %v4667 = vmul.f32 %v4627, %v1735
        %v4668 = vmul.f32 %v4631, %v1727
        %v4669 = vmul.f32 %v4635, %v1729
        %v4670 = vmul.f32 %v4631, %v1733
        %v4671 = vmul.f32 %v4635, %v1735
        %v4672 = vmul.f32 %v4639, %v1727
        %v4673 = vmul.f32 %v4643, %v1729
        %v4674 = vmul.f32 %v4639, %v1733
        %v4675 = vmul.f32 %v4643, %v1735
        %v4676 = vadd.f32 %v4548, %v4644
        %v4677 = vadd.f32 %v4549, %v4645
        %v4678 = vadd.f32 %v4550, %v4646
        %v4679 = vadd.f32 %v4551, %v4647
        %v4680 = vadd.f32 %v4552, %v4648
        %v4681 = vadd.f32 %v4553, %v4649
        %v4682 = vadd.f32 %v4554, %v4650
        %v4683 = vadd.f32 %v4555, %v4651
        %v4684 = vadd.f32 %v4556, %v4652
        %v4685 = vadd.f32 %v4557, %v4653
        %v4686 = vadd.f32 %v4558, %v4654
        %v4687 = vadd.f32 %v4559, %v4655
        %v4688 = vadd.f32 %v4560, %v4656
        %v4689 = vadd.f32 %v4561, %v4657
        %v4690 = vadd.f32 %v4562, %v4658
        %v4691 = vadd.f32 %v4563, %v4659
        %v4692 = vadd.f32 %v4564, %v4660
        %v4693 = vadd.f32 %v4565, %v4661
        %v4694 = vadd.f32 %v4566, %v4662
        %v4695 = vadd.f32 %v4567, %v4663
        %v4696 = vadd.f32 %v4568, %v4664
        %v4697 = vadd.f32 %v4569, %v4665
        %v4698 = vadd.f32 %v4570, %v4666
        %v4699 = vadd.f32 %v4571, %v4667
        %v4700 = vadd.f32 %v4572, %v4668
        %v4701 = vadd.f32 %v4573, %v4669
        %v4702 = vadd.f32 %v4574, %v4670
        %v4703 = vadd.f32 %v4575, %v4671
        %v4704 = vadd.f32 %v4576, %v4672
        %v4705 = vadd.f32 %v4577, %v4673
        %v4706 = vadd.f32 %v4578, %v4674
        %v4707 = vadd.f32 %v4579, %v4675
        %v4708 = vlaneseq
        %v4709 = vshrl.u32 %v4708, 7
        %v4710 = vsub.s32 5, %v4709
        %v4711 = vrot.slane %v4084, %v4710
        %v4712 = vlaneseq
        %v4713 = vshrl.u32 %v4712, 7
        %v4714 = vsub.s32 5, %v4713
        %v4715 = vrot.slane %v4085, %v4714
        %v4716 = vlaneseq
        %v4717 = vshrl.u32 %v4716, 7
        %v4718 = vsub.s32 5, %v4717
        %v4719 = vrot.slane %v4086, %v4718
        %v4720 = vlaneseq
        %v4721 = vshrl.u32 %v4720, 7
        %v4722 = vsub.s32 5, %v4721
        %v4723 = vrot.slane %v4087, %v4722
        %v4724 = vlaneseq
        %v4725 = vshrl.u32 %v4724, 7
        %v4726 = vsub.s32 5, %v4725
        %v4727 = vrot.slane %v4088, %v4726
        %v4728 = vlaneseq
        %v4729 = vshrl.u32 %v4728, 7
        %v4730 = vsub.s32 5, %v4729
        %v4731 = vrot.slane %v4089, %v4730
        %v4732 = vlaneseq
        %v4733 = vshrl.u32 %v4732, 7
        %v4734 = vsub.s32 5, %v4733
        %v4735 = vrot.slane %v4090, %v4734
        %v4736 = vlaneseq
        %v4737 = vshrl.u32 %v4736, 7
        %v4738 = vsub.s32 5, %v4737
        %v4739 = vrot.slane %v4091, %v4738
        %v4740 = vlaneseq
        %v4741 = vshrl.u32 %v4740, 7
        %v4742 = vsub.s32 5, %v4741
        %v4743 = vrot.slane %v4092, %v4742
        %v4744 = vlaneseq
        %v4745 = vshrl.u32 %v4744, 7
        %v4746 = vsub.s32 5, %v4745
        %v4747 = vrot.slane %v4093, %v4746
        %v4748 = vlaneseq
        %v4749 = vshrl.u32 %v4748, 7
        %v4750 = vsub.s32 5, %v4749
        %v4751 = vrot.slane %v4094, %v4750
        %v4752 = vlaneseq
        %v4753 = vshrl.u32 %v4752, 7
        %v4754 = vsub.s32 5, %v4753
        %v4755 = vrot.slane %v4095, %v4754
        %v4756 = vlaneseq
        %v4757 = vshrl.u32 %v4756, 7
        %v4758 = vsub.s32 5, %v4757
        %v4759 = vrot.slane %v4096, %v4758
        %v4760 = vlaneseq
        %v4761 = vshrl.u32 %v4760, 7
        %v4762 = vsub.s32 5, %v4761
        %v4763 = vrot.slane %v4097, %v4762
        %v4764 = vlaneseq
        %v4765 = vshrl.u32 %v4764, 7
        %v4766 = vsub.s32 5, %v4765
        %v4767 = vrot.slane %v4098, %v4766
        %v4768 = vlaneseq
        %v4769 = vshrl.u32 %v4768, 7
        %v4770 = vsub.s32 5, %v4769
        %v4771 = vrot.slane %v4099, %v4770
        %v4772 = vmul.f32 %v4711, %v1739
        %v4773 = vmul.f32 %v4715, %v1741
        %v4774 = vmul.f32 %v4711, %v1745
        %v4775 = vmul.f32 %v4715, %v1747
        %v4776 = vmul.f32 %v4719, %v1739
        %v4777 = vmul.f32 %v4723, %v1741
        %v4778 = vmul.f32 %v4719, %v1745
        %v4779 = vmul.f32 %v4723, %v1747
        %v4780 = vmul.f32 %v4727, %v1739
        %v4781 = vmul.f32 %v4731, %v1741
        %v4782 = vmul.f32 %v4727, %v1745
        %v4783 = vmul.f32 %v4731, %v1747
        %v4784 = vmul.f32 %v4735, %v1739
        %v4785 = vmul.f32 %v4739, %v1741
        %v4786 = vmul.f32 %v4735, %v1745
        %v4787 = vmul.f32 %v4739, %v1747
        %v4788 = vmul.f32 %v4743, %v1739
        %v4789 = vmul.f32 %v4747, %v1741
        %v4790 = vmul.f32 %v4743, %v1745
        %v4791 = vmul.f32 %v4747, %v1747
        %v4792 = vmul.f32 %v4751, %v1739
        %v4793 = vmul.f32 %v4755, %v1741
        %v4794 = vmul.f32 %v4751, %v1745
        %v4795 = vmul.f32 %v4755, %v1747
        %v4796 = vmul.f32 %v4759, %v1739
        %v4797 = vmul.f32 %v4763, %v1741
        %v4798 = vmul.f32 %v4759, %v1745
        %v4799 = vmul.f32 %v4763, %v1747
        %v4800 = vmul.f32 %v4767, %v1739
        %v4801 = vmul.f32 %v4771, %v1741
        %v4802 = vmul.f32 %v4767, %v1745
        %v4803 = vmul.f32 %v4771, %v1747
        %v4804 = vadd.f32 %v4676, %v4772
        %v4805 = vadd.f32 %v4677, %v4773
        %v4806 = vadd.f32 %v4678, %v4774
        %v4807 = vadd.f32 %v4679, %v4775
        %v4808 = vadd.f32 %v4680, %v4776
        %v4809 = vadd.f32 %v4681, %v4777
        %v4810 = vadd.f32 %v4682, %v4778
        %v4811 = vadd.f32 %v4683, %v4779
        %v4812 = vadd.f32 %v4684, %v4780
        %v4813 = vadd.f32 %v4685, %v4781
        %v4814 = vadd.f32 %v4686, %v4782
        %v4815 = vadd.f32 %v4687, %v4783
        %v4816 = vadd.f32 %v4688, %v4784
        %v4817 = vadd.f32 %v4689, %v4785
        %v4818 = vadd.f32 %v4690, %v4786
        %v4819 = vadd.f32 %v4691, %v4787
        %v4820 = vadd.f32 %v4692, %v4788
        %v4821 = vadd.f32 %v4693, %v4789
        %v4822 = vadd.f32 %v4694, %v4790
        %v4823 = vadd.f32 %v4695, %v4791
        %v4824 = vadd.f32 %v4696, %v4792
        %v4825 = vadd.f32 %v4697, %v4793
        %v4826 = vadd.f32 %v4698, %v4794
        %v4827 = vadd.f32 %v4699, %v4795
        %v4828 = vadd.f32 %v4700, %v4796
        %v4829 = vadd.f32 %v4701, %v4797
        %v4830 = vadd.f32 %v4702, %v4798
        %v4831 = vadd.f32 %v4703, %v4799
        %v4832 = vadd.f32 %v4704, %v4800
        %v4833 = vadd.f32 %v4705, %v4801
        %v4834 = vadd.f32 %v4706, %v4802
        %v4835 = vadd.f32 %v4707, %v4803
        %v4836 = vlaneseq
        %v4837 = vshrl.u32 %v4836, 7
        %v4838 = vsub.s32 6, %v4837
        %v4839 = vrot.slane %v4084, %v4838
        %v4840 = vlaneseq
        %v4841 = vshrl.u32 %v4840, 7
        %v4842 = vsub.s32 6, %v4841
        %v4843 = vrot.slane %v4085, %v4842
        %v4844 = vlaneseq
        %v4845 = vshrl.u32 %v4844, 7
        %v4846 = vsub.s32 6, %v4845
        %v4847 = vrot.slane %v4086, %v4846
        %v4848 = vlaneseq
        %v4849 = vshrl.u32 %v4848, 7
        %v4850 = vsub.s32 6, %v4849
        %v4851 = vrot.slane %v4087, %v4850
        %v4852 = vlaneseq
        %v4853 = vshrl.u32 %v4852, 7
        %v4854 = vsub.s32 6, %v4853
        %v4855 = vrot.slane %v4088, %v4854
        %v4856 = vlaneseq
        %v4857 = vshrl.u32 %v4856, 7
        %v4858 = vsub.s32 6, %v4857
        %v4859 = vrot.slane %v4089, %v4858
        %v4860 = vlaneseq
        %v4861 = vshrl.u32 %v4860, 7
        %v4862 = vsub.s32 6, %v4861
        %v4863 = vrot.slane %v4090, %v4862
        %v4864 = vlaneseq
        %v4865 = vshrl.u32 %v4864, 7
        %v4866 = vsub.s32 6, %v4865
        %v4867 = vrot.slane %v4091, %v4866
        %v4868 = vlaneseq
        %v4869 = vshrl.u32 %v4868, 7
        %v4870 = vsub.s32 6, %v4869
        %v4871 = vrot.slane %v4092, %v4870
        %v4872 = vlaneseq
        %v4873 = vshrl.u32 %v4872, 7
        %v4874 = vsub.s32 6, %v4873
        %v4875 = vrot.slane %v4093, %v4874
        %v4876 = vlaneseq
        %v4877 = vshrl.u32 %v4876, 7
        %v4878 = vsub.s32 6, %v4877
        %v4879 = vrot.slane %v4094, %v4878
        %v4880 = vlaneseq
        %v4881 = vshrl.u32 %v4880, 7
        %v4882 = vsub.s32 6, %v4881
        %v4883 = vrot.slane %v4095, %v4882
        %v4884 = vlaneseq
        %v4885 = vshrl.u32 %v4884, 7
        %v4886 = vsub.s32 6, %v4885
        %v4887 = vrot.slane %v4096, %v4886
        %v4888 = vlaneseq
        %v4889 = vshrl.u32 %v4888, 7
        %v4890 = vsub.s32 6, %v4889
        %v4891 = vrot.slane %v4097, %v4890
        %v4892 = vlaneseq
        %v4893 = vshrl.u32 %v4892, 7
        %v4894 = vsub.s32 6, %v4893
        %v4895 = vrot.slane %v4098, %v4894
        %v4896 = vlaneseq
        %v4897 = vshrl.u32 %v4896, 7
        %v4898 = vsub.s32 6, %v4897
        %v4899 = vrot.slane %v4099, %v4898
        %v4900 = vmul.f32 %v4839, %v1751
        %v4901 = vmul.f32 %v4843, %v1753
        %v4902 = vmul.f32 %v4839, %v1757
        %v4903 = vmul.f32 %v4843, %v1759
        %v4904 = vmul.f32 %v4847, %v1751
        %v4905 = vmul.f32 %v4851, %v1753
        %v4906 = vmul.f32 %v4847, %v1757
        %v4907 = vmul.f32 %v4851, %v1759
        %v4908 = vmul.f32 %v4855, %v1751
        %v4909 = vmul.f32 %v4859, %v1753
        %v4910 = vmul.f32 %v4855, %v1757
        %v4911 = vmul.f32 %v4859, %v1759
        %v4912 = vmul.f32 %v4863, %v1751
        %v4913 = vmul.f32 %v4867, %v1753
        %v4914 = vmul.f32 %v4863, %v1757
        %v4915 = vmul.f32 %v4867, %v1759
        %v4916 = vmul.f32 %v4871, %v1751
        %v4917 = vmul.f32 %v4875, %v1753
        %v4918 = vmul.f32 %v4871, %v1757
        %v4919 = vmul.f32 %v4875, %v1759
        %v4920 = vmul.f32 %v4879, %v1751
        %v4921 = vmul.f32 %v4883, %v1753
        %v4922 = vmul.f32 %v4879, %v1757
        %v4923 = vmul.f32 %v4883, %v1759
        %v4924 = vmul.f32 %v4887, %v1751
        %v4925 = vmul.f32 %v4891, %v1753
        %v4926 = vmul.f32 %v4887, %v1757
        %v4927 = vmul.f32 %v4891, %v1759
        %v4928 = vmul.f32 %v4895, %v1751
        %v4929 = vmul.f32 %v4899, %v1753
        %v4930 = vmul.f32 %v4895, %v1757
        %v4931 = vmul.f32 %v4899, %v1759
        %v4932 = vadd.f32 %v4804, %v4900
        %v4933 = vadd.f32 %v4805, %v4901
        %v4934 = vadd.f32 %v4806, %v4902
        %v4935 = vadd.f32 %v4807, %v4903
        %v4936 = vadd.f32 %v4808, %v4904
        %v4937 = vadd.f32 %v4809, %v4905
        %v4938 = vadd.f32 %v4810, %v4906
        %v4939 = vadd.f32 %v4811, %v4907
        %v4940 = vadd.f32 %v4812, %v4908
        %v4941 = vadd.f32 %v4813, %v4909
        %v4942 = vadd.f32 %v4814, %v4910
        %v4943 = vadd.f32 %v4815, %v4911
        %v4944 = vadd.f32 %v4816, %v4912
        %v4945 = vadd.f32 %v4817, %v4913
        %v4946 = vadd.f32 %v4818, %v4914
        %v4947 = vadd.f32 %v4819, %v4915
        %v4948 = vadd.f32 %v4820, %v4916
        %v4949 = vadd.f32 %v4821, %v4917
        %v4950 = vadd.f32 %v4822, %v4918
        %v4951 = vadd.f32 %v4823, %v4919
        %v4952 = vadd.f32 %v4824, %v4920
        %v4953 = vadd.f32 %v4825, %v4921
        %v4954 = vadd.f32 %v4826, %v4922
        %v4955 = vadd.f32 %v4827, %v4923
        %v4956 = vadd.f32 %v4828, %v4924
        %v4957 = vadd.f32 %v4829, %v4925
        %v4958 = vadd.f32 %v4830, %v4926
        %v4959 = vadd.f32 %v4831, %v4927
        %v4960 = vadd.f32 %v4832, %v4928
        %v4961 = vadd.f32 %v4833, %v4929
        %v4962 = vadd.f32 %v4834, %v4930
        %v4963 = vadd.f32 %v4835, %v4931
        %v4964 = vlaneseq
        %v4965 = vshrl.u32 %v4964, 7
        %v4966 = vsub.s32 7, %v4965
        %v4967 = vrot.slane %v4084, %v4966
        %v4968 = vlaneseq
        %v4969 = vshrl.u32 %v4968, 7
        %v4970 = vsub.s32 7, %v4969
        %v4971 = vrot.slane %v4085, %v4970
        %v4972 = vlaneseq
        %v4973 = vshrl.u32 %v4972, 7
        %v4974 = vsub.s32 7, %v4973
        %v4975 = vrot.slane %v4086, %v4974
        %v4976 = vlaneseq
        %v4977 = vshrl.u32 %v4976, 7
        %v4978 = vsub.s32 7, %v4977
        %v4979 = vrot.slane %v4087, %v4978
        %v4980 = vlaneseq
        %v4981 = vshrl.u32 %v4980, 7
        %v4982 = vsub.s32 7, %v4981
        %v4983 = vrot.slane %v4088, %v4982
        %v4984 = vlaneseq
        %v4985 = vshrl.u32 %v4984, 7
        %v4986 = vsub.s32 7, %v4985
        %v4987 = vrot.slane %v4089, %v4986
        %v4988 = vlaneseq
        %v4989 = vshrl.u32 %v4988, 7
        %v4990 = vsub.s32 7, %v4989
        %v4991 = vrot.slane %v4090, %v4990
        %v4992 = vlaneseq
        %v4993 = vshrl.u32 %v4992, 7
        %v4994 = vsub.s32 7, %v4993
        %v4995 = vrot.slane %v4091, %v4994
        %v4996 = vlaneseq
        %v4997 = vshrl.u32 %v4996, 7
        %v4998 = vsub.s32 7, %v4997
        %v4999 = vrot.slane %v4092, %v4998
        %v5000 = vlaneseq
        %v5001 = vshrl.u32 %v5000, 7
        %v5002 = vsub.s32 7, %v5001
        %v5003 = vrot.slane %v4093, %v5002
        %v5004 = vlaneseq
        %v5005 = vshrl.u32 %v5004, 7
        %v5006 = vsub.s32 7, %v5005
        %v5007 = vrot.slane %v4094, %v5006
        %v5008 = vlaneseq
        %v5009 = vshrl.u32 %v5008, 7
        %v5010 = vsub.s32 7, %v5009
        %v5011 = vrot.slane %v4095, %v5010
        %v5012 = vlaneseq
        %v5013 = vshrl.u32 %v5012, 7
        %v5014 = vsub.s32 7, %v5013
        %v5015 = vrot.slane %v4096, %v5014
        %v5016 = vlaneseq
        %v5017 = vshrl.u32 %v5016, 7
        %v5018 = vsub.s32 7, %v5017
        %v5019 = vrot.slane %v4097, %v5018
        %v5020 = vlaneseq
        %v5021 = vshrl.u32 %v5020, 7
        %v5022 = vsub.s32 7, %v5021
        %v5023 = vrot.slane %v4098, %v5022
        %v5024 = vlaneseq
        %v5025 = vshrl.u32 %v5024, 7
        %v5026 = vsub.s32 7, %v5025
        %v5027 = vrot.slane %v4099, %v5026
        %v5028 = vmul.f32 %v4967, %v1763
        %v5029 = vmul.f32 %v4971, %v1765
        %v5030 = vmul.f32 %v4967, %v1769
        %v5031 = vmul.f32 %v4971, %v1771
        %v5032 = vmul.f32 %v4975, %v1763
        %v5033 = vmul.f32 %v4979, %v1765
        %v5034 = vmul.f32 %v4975, %v1769
        %v5035 = vmul.f32 %v4979, %v1771
        %v5036 = vmul.f32 %v4983, %v1763
        %v5037 = vmul.f32 %v4987, %v1765
        %v5038 = vmul.f32 %v4983, %v1769
        %v5039 = vmul.f32 %v4987, %v1771
        %v5040 = vmul.f32 %v4991, %v1763
        %v5041 = vmul.f32 %v4995, %v1765
        %v5042 = vmul.f32 %v4991, %v1769
        %v5043 = vmul.f32 %v4995, %v1771
        %v5044 = vmul.f32 %v4999, %v1763
        %v5045 = vmul.f32 %v5003, %v1765
        %v5046 = vmul.f32 %v4999, %v1769
        %v5047 = vmul.f32 %v5003, %v1771
        %v5048 = vmul.f32 %v5007, %v1763
        %v5049 = vmul.f32 %v5011, %v1765
        %v5050 = vmul.f32 %v5007, %v1769
        %v5051 = vmul.f32 %v5011, %v1771
        %v5052 = vmul.f32 %v5015, %v1763
        %v5053 = vmul.f32 %v5019, %v1765
        %v5054 = vmul.f32 %v5015, %v1769
        %v5055 = vmul.f32 %v5019, %v1771
        %v5056 = vmul.f32 %v5023, %v1763
        %v5057 = vmul.f32 %v5027, %v1765
        %v5058 = vmul.f32 %v5023, %v1769
        %v5059 = vmul.f32 %v5027, %v1771
        %v5060 = vadd.f32 %v4932, %v5028
        %v5061 = vadd.f32 %v4933, %v5029
        %v5062 = vadd.f32 %v4934, %v5030
        %v5063 = vadd.f32 %v4935, %v5031
        %v5064 = vadd.f32 %v4936, %v5032
        %v5065 = vadd.f32 %v4937, %v5033
        %v5066 = vadd.f32 %v4938, %v5034
        %v5067 = vadd.f32 %v4939, %v5035
        %v5068 = vadd.f32 %v4940, %v5036
        %v5069 = vadd.f32 %v4941, %v5037
        %v5070 = vadd.f32 %v4942, %v5038
        %v5071 = vadd.f32 %v4943, %v5039
        %v5072 = vadd.f32 %v4944, %v5040
        %v5073 = vadd.f32 %v4945, %v5041
        %v5074 = vadd.f32 %v4946, %v5042
        %v5075 = vadd.f32 %v4947, %v5043
        %v5076 = vadd.f32 %v4948, %v5044
        %v5077 = vadd.f32 %v4949, %v5045
        %v5078 = vadd.f32 %v4950, %v5046
        %v5079 = vadd.f32 %v4951, %v5047
        %v5080 = vadd.f32 %v4952, %v5048
        %v5081 = vadd.f32 %v4953, %v5049
        %v5082 = vadd.f32 %v4954, %v5050
        %v5083 = vadd.f32 %v4955, %v5051
        %v5084 = vadd.f32 %v4956, %v5052
        %v5085 = vadd.f32 %v4957, %v5053
        %v5086 = vadd.f32 %v4958, %v5054
        %v5087 = vadd.f32 %v4959, %v5055
        %v5088 = vadd.f32 %v4960, %v5056
        %v5089 = vadd.f32 %v4961, %v5057
        %v5090 = vadd.f32 %v4962, %v5058
        %v5091 = vadd.f32 %v4963, %v5059
        %v5092 = vld [vmem:[#allocation11] sm:$0xff]
        %v5093 = vld [vmem:[#allocation11 + $0x8] sm:$0xff]
        %v5094 = vld [vmem:[#allocation11 + $0x10] sm:$0xff]
        %v5095 = vld [vmem:[#allocation11 + $0x18] sm:$0xff]
        %v5096 = vld [vmem:[#allocation11 + $0x20] sm:$0xff]
        %v5097 = vld [vmem:[#allocation11 + $0x28] sm:$0xff]
        %v5098 = vld [vmem:[#allocation11 + $0x30] sm:$0xff]
        %v5099 = vld [vmem:[#allocation11 + $0x38] sm:$0xff]
        %v5100 = vld [vmem:[#allocation11 + $0x40] sm:$0xff]
        %v5101 = vld [vmem:[#allocation11 + $0x48] sm:$0xff]
        %v5102 = vld [vmem:[#allocation11 + $0x50] sm:$0xff]
        %v5103 = vld [vmem:[#allocation11 + $0x58] sm:$0xff]
        %v5104 = vld [vmem:[#allocation11 + $0x60] sm:$0xff]
        %v5105 = vld [vmem:[#allocation11 + $0x68] sm:$0xff]
        %v5106 = vld [vmem:[#allocation11 + $0x70] sm:$0xff]
        %v5107 = vld [vmem:[#allocation11 + $0x78] sm:$0xff]
        %5108 = vxpose.xlu0.b32.start [1/16] %v5060, 128
        %5109 = vxpose.xlu0.b32.cont [2/16] %v5062, 128
        %5110 = vxpose.xlu0.b32.cont [3/16] %v5064, 128
        %5111 = vxpose.xlu0.b32.cont [4/16] %v5066, 128
        %5112 = vxpose.xlu0.b32.cont [5/16] %v5068, 128
        %5113 = vxpose.xlu0.b32.cont [6/16] %v5070, 128
        %5114 = vxpose.xlu0.b32.cont [7/16] %v5072, 128
        %5115 = vxpose.xlu0.b32.cont [8/16] %v5074, 128
        %5116 = vxpose.xlu0.b32.cont [9/16] %v5076, 128
        %5117 = vxpose.xlu0.b32.cont [10/16] %v5078, 128
        %5118 = vxpose.xlu0.b32.cont [11/16] %v5080, 128
        %5119 = vxpose.xlu0.b32.cont [12/16] %v5082, 128
        %5120 = vxpose.xlu0.b32.cont [13/16] %v5084, 128
        %5121 = vxpose.xlu0.b32.cont [14/16] %v5086, 128
        %5122 = vxpose.xlu0.b32.cont [15/16] %v5088, 128
        %5123 = vxpose.xlu0.b32.end [16/16] %v5090, 128
        %v5124 = vpop.trf.xlu0
        %v5125 = vpop.trf.xlu0
        %v5126 = vpop.trf.xlu0
        %v5127 = vpop.trf.xlu0
        %v5128 = vpop.trf.xlu0
        %v5129 = vpop.trf.xlu0
        %v5130 = vpop.trf.xlu0
        %v5131 = vpop.trf.xlu0
        %v5132 = vpop.trf.xlu0
        %v5133 = vpop.trf.xlu0
        %v5134 = vpop.trf.xlu0
        %v5135 = vpop.trf.xlu0
        %v5136 = vpop.trf.xlu0
        %v5137 = vpop.trf.xlu0
        %v5138 = vpop.trf.xlu0
        %v5139 = vpop.trf.xlu0
        %5140 = vxpose.xlu0.b32.start [1/16] %v5061, 128
        %5141 = vxpose.xlu0.b32.cont [2/16] %v5063, 128
        %5142 = vxpose.xlu0.b32.cont [3/16] %v5065, 128
        %5143 = vxpose.xlu0.b32.cont [4/16] %v5067, 128
        %5144 = vxpose.xlu0.b32.cont [5/16] %v5069, 128
        %5145 = vxpose.xlu0.b32.cont [6/16] %v5071, 128
        %5146 = vxpose.xlu0.b32.cont [7/16] %v5073, 128
        %5147 = vxpose.xlu0.b32.cont [8/16] %v5075, 128
        %5148 = vxpose.xlu0.b32.cont [9/16] %v5077, 128
        %5149 = vxpose.xlu0.b32.cont [10/16] %v5079, 128
        %5150 = vxpose.xlu0.b32.cont [11/16] %v5081, 128
        %5151 = vxpose.xlu0.b32.cont [12/16] %v5083, 128
        %5152 = vxpose.xlu0.b32.cont [13/16] %v5085, 128
        %5153 = vxpose.xlu0.b32.cont [14/16] %v5087, 128
        %5154 = vxpose.xlu0.b32.cont [15/16] %v5089, 128
        %5155 = vxpose.xlu0.b32.end [16/16] %v5091, 128
        %v5156 = vpop.trf.xlu0
        %v5157 = vpop.trf.xlu0
        %v5158 = vpop.trf.xlu0
        %v5159 = vpop.trf.xlu0
        %v5160 = vpop.trf.xlu0
        %v5161 = vpop.trf.xlu0
        %v5162 = vpop.trf.xlu0
        %v5163 = vpop.trf.xlu0
        %v5164 = vpop.trf.xlu0
        %v5165 = vpop.trf.xlu0
        %v5166 = vpop.trf.xlu0
        %v5167 = vpop.trf.xlu0
        %v5168 = vpop.trf.xlu0
        %v5169 = vpop.trf.xlu0
        %v5170 = vpop.trf.xlu0
        %v5171 = vpop.trf.xlu0
        %v5172 = vld [vmem:[#allocation13] sm:$0x1]
        %v5174 = vlaneseq
        %v5175 = vshrl.u32 %v5174, 7
        %v5176 = vsub.s32 0, %v5175
        %v5177 = vrot.slane %v5172, %v5176
        %5179 = vmatprep.subr.mxu0 0.0
        %5180 = vmatpush1.xpose.msra.mxu0 %v5092
        %5181 = vmatprep.subr.mxu0 0.0
        %5182 = vmatpush1.xpose.msra.mxu0 %v5093
        %5183 = vmatprep.subr.mxu0 0.0
        %5184 = vmatpush1.xpose.msra.mxu0 %v5094
        %5185 = vmatprep.subr.mxu0 0.0
        %5186 = vmatpush1.xpose.msra.mxu0 %v5095
        %5187 = vmatprep.subr.mxu0 0.0
        %5188 = vmatpush1.xpose.msra.mxu0 %v5096
        %5189 = vmatprep.subr.mxu0 0.0
        %5190 = vmatpush1.xpose.msra.mxu0 %v5097
        %5191 = vmatprep.subr.mxu0 0.0
        %5192 = vmatpush1.xpose.msra.mxu0 %v5098
        %5193 = vmatprep.subr.mxu0 0.0
        %5194 = vmatpush1.xpose.msra.mxu0 %v5099
        %5195 = vmatprep.subr.mxu0 0.0
        %5196 = vmatpush1.xpose.msra.mxu0 %v5100
        %5197 = vmatprep.subr.mxu0 0.0
        %5198 = vmatpush1.xpose.msra.mxu0 %v5101
        %5199 = vmatprep.subr.mxu0 0.0
        %5200 = vmatpush1.xpose.msra.mxu0 %v5102
        %5201 = vmatprep.subr.mxu0 0.0
        %5202 = vmatpush1.xpose.msra.mxu0 %v5103
        %5203 = vmatprep.subr.mxu0 0.0
        %5204 = vmatpush1.xpose.msra.mxu0 %v5104
        %5205 = vmatprep.subr.mxu0 0.0
        %5206 = vmatpush1.xpose.msra.mxu0 %v5105
        %5207 = vmatprep.subr.mxu0 0.0
        %5208 = vmatpush1.xpose.msra.mxu0 %v5106
        %5209 = vmatprep.subr.mxu0 0.0
        %5210 = vmatpush1.xpose.msra.mxu0 %v5107
        %5211 = vmatprep.subr.mxu0 0.0
        %5212 = vmatpush1.xpose.msra.mxu0 0.0
        %5213 = vmatprep.subr.mxu0 0.0
        %5214 = vmatpush1.xpose.msra.mxu0 0.0
        %5215 = vmatprep.subr.mxu0 0.0
        %5216 = vmatpush1.xpose.msra.mxu0 0.0
        %5217 = vmatprep.subr.mxu0 0.0
        %5218 = vmatpush1.xpose.msra.mxu0 0.0
        %5219 = vmatprep.subr.mxu0 0.0
        %5220 = vmatpush1.xpose.msra.mxu0 0.0
        %5221 = vmatprep.subr.mxu0 0.0
        %5222 = vmatpush1.xpose.msra.mxu0 0.0
        %5223 = vmatprep.subr.mxu0 0.0
        %5224 = vmatpush1.xpose.msra.mxu0 0.0
        %5225 = vmatprep.subr.mxu0 0.0
        %5226 = vmatpush1.xpose.msra.mxu0 0.0
        %5227 = vmatprep.subr.mxu0 0.0
        %5228 = vmatpush1.xpose.msra.mxu0 0.0
        %5229 = vmatprep.subr.mxu0 0.0
        %5230 = vmatpush1.xpose.msra.mxu0 0.0
        %5231 = vmatprep.subr.mxu0 0.0
        %5232 = vmatpush1.xpose.msra.mxu0 0.0
        %5233 = vmatprep.subr.mxu0 0.0
        %5234 = vmatpush1.xpose.msra.mxu0 0.0
        %5235 = vmatprep.subr.mxu0 0.0
        %5236 = vmatpush1.xpose.msra.mxu0 0.0
        %5237 = vmatprep.subr.mxu0 0.0
        %5238 = vmatpush1.xpose.msra.mxu0 0.0
        %5239 = vmatprep.subr.mxu0 0.0
        %5240 = vmatpush1.xpose.msra.mxu0 0.0
        %5241 = vmatprep.subr.mxu0 0.0
        %5242 = vmatpush1.xpose.msra.mxu0 0.0
        %5243 = vmatprep.mubr.f32.mxu0 0.0
        %5244 = vmatmul.mubr.f32.gmra.mrb[0].mxu0 %v5124
        %v5245 = vpop.f32.mrb[0].mxu0
        %v5246 = vadd.f32 %v5177, %v5245
        %v5247 = vpop.f32.mrb[0].mxu0
        %5248 = vmatprep.mubr.f32.mxu0 0.0
        %5249 = vmatmul.mubr.f32.gmra.mrb[0].mxu0 %v5125
        %v5250 = vpop.f32.mrb[0].mxu0
        %v5251 = vadd.f32 %v5177, %v5250
        %v5252 = vpop.f32.mrb[0].mxu0
        %5253 = vmatprep.mubr.f32.mxu0 0.0
        %5254 = vmatmul.mubr.f32.gmra.mrb[0].mxu0 %v5126
        %v5255 = vpop.f32.mrb[0].mxu0
        %v5256 = vadd.f32 %v5177, %v5255
        %v5257 = vpop.f32.mrb[0].mxu0
        %5258 = vmatprep.mubr.f32.mxu0 0.0
        %5259 = vmatmul.mubr.f32.gmra.mrb[0].mxu0 %v5127
        %v5260 = vpop.f32.mrb[0].mxu0
        %v5261 = vadd.f32 %v5177, %v5260
        %v5262 = vpop.f32.mrb[0].mxu0
        %5263 = vmatprep.mubr.f32.mxu0 0.0
        %5264 = vmatmul.mubr.f32.gmra.mrb[0].mxu0 %v5128
        %v5265 = vpop.f32.mrb[0].mxu0
        %v5266 = vadd.f32 %v5177, %v5265
        %v5267 = vpop.f32.mrb[0].mxu0
        %5268 = vmatprep.mubr.f32.mxu0 0.0
        %5269 = vmatmul.mubr.f32.gmra.mrb[0].mxu0 %v5129
        %v5270 = vpop.f32.mrb[0].mxu0
        %v5271 = vadd.f32 %v5177, %v5270
        %v5272 = vpop.f32.mrb[0].mxu0
        %5273 = vmatprep.mubr.f32.mxu0 0.0
        %5274 = vmatmul.mubr.f32.gmra.mrb[0].mxu0 %v5130
        %v5275 = vpop.f32.mrb[0].mxu0
        %v5276 = vadd.f32 %v5177, %v5275
        %v5277 = vpop.f32.mrb[0].mxu0
        %5278 = vmatprep.mubr.f32.mxu0 0.0
        %5279 = vmatmul.mubr.f32.gmra.mrb[0].mxu0 %v5131
        %v5280 = vpop.f32.mrb[0].mxu0
        %v5281 = vadd.f32 %v5177, %v5280
        %v5282 = vpop.f32.mrb[0].mxu0
        %5283 = vmatprep.mubr.f32.mxu0 0.0
        %5284 = vmatmul.mubr.f32.gmra.mrb[0].mxu0 %v5132
        %v5285 = vpop.f32.mrb[0].mxu0
        %v5286 = vadd.f32 %v5177, %v5285
        %v5287 = vpop.f32.mrb[0].mxu0
        %5288 = vmatprep.mubr.f32.mxu0 0.0
        %5289 = vmatmul.mubr.f32.gmra.mrb[0].mxu0 %v5133
        %v5290 = vpop.f32.mrb[0].mxu0
        %v5291 = vadd.f32 %v5177, %v5290
        %v5292 = vpop.f32.mrb[0].mxu0
        %5293 = vmatprep.mubr.f32.mxu0 0.0
        %5294 = vmatmul.mubr.f32.gmra.mrb[0].mxu0 %v5134
        %v5295 = vpop.f32.mrb[0].mxu0
        %v5296 = vadd.f32 %v5177, %v5295
        %v5297 = vpop.f32.mrb[0].mxu0
        %5298 = vmatprep.mubr.f32.mxu0 0.0
        %5299 = vmatmul.mubr.f32.gmra.mrb[0].mxu0 %v5135
        %v5300 = vpop.f32.mrb[0].mxu0
        %v5301 = vadd.f32 %v5177, %v5300
        %v5302 = vpop.f32.mrb[0].mxu0
        %5303 = vmatprep.mubr.f32.mxu0 0.0
        %5304 = vmatmul.mubr.f32.gmra.mrb[0].mxu0 %v5136
        %v5305 = vpop.f32.mrb[0].mxu0
        %v5306 = vadd.f32 %v5177, %v5305
        %v5307 = vpop.f32.mrb[0].mxu0
        %5308 = vmatprep.mubr.f32.mxu0 0.0
        %5309 = vmatmul.mubr.f32.gmra.mrb[0].mxu0 %v5137
        %v5310 = vpop.f32.mrb[0].mxu0
        %v5311 = vadd.f32 %v5177, %v5310
        %v5312 = vpop.f32.mrb[0].mxu0
        %5313 = vmatprep.mubr.f32.mxu0 0.0
        %5314 = vmatmul.mubr.f32.gmra.mrb[0].mxu0 %v5138
        %v5315 = vpop.f32.mrb[0].mxu0
        %v5316 = vadd.f32 %v5177, %v5315
        %v5317 = vpop.f32.mrb[0].mxu0
        %5318 = vmatprep.mubr.f32.mxu0 0.0
        %5319 = vmatmul.mubr.f32.gmra.mrb[0].mxu0 %v5139
        %v5320 = vpop.f32.mrb[0].mxu0
        %v5321 = vadd.f32 %v5177, %v5320
        %v5322 = vpop.f32.mrb[0].mxu0
        %5323 = vmatprep.mubr.f32.mxu0 0.0
        %5324 = vmatmul.mubr.f32.gmra.mrb[0].mxu0 %v5156
        %v5325 = vpop.f32.mrb[0].mxu0
        %v5326 = vadd.f32 %v5177, %v5325
        %v5327 = vpop.f32.mrb[0].mxu0
        %5328 = vmatprep.mubr.f32.mxu0 0.0
        %5329 = vmatmul.mubr.f32.gmra.mrb[0].mxu0 %v5157
        %v5330 = vpop.f32.mrb[0].mxu0
        %v5331 = vadd.f32 %v5177, %v5330
        %v5332 = vpop.f32.mrb[0].mxu0
        %5333 = vmatprep.mubr.f32.mxu0 0.0
        %5334 = vmatmul.mubr.f32.gmra.mrb[0].mxu0 %v5158
        %v5335 = vpop.f32.mrb[0].mxu0
        %v5336 = vadd.f32 %v5177, %v5335
        %v5337 = vpop.f32.mrb[0].mxu0
        %5338 = vmatprep.mubr.f32.mxu0 0.0
        %5339 = vmatmul.mubr.f32.gmra.mrb[0].mxu0 %v5159
        %v5340 = vpop.f32.mrb[0].mxu0
        %v5341 = vadd.f32 %v5177, %v5340
        %v5342 = vpop.f32.mrb[0].mxu0
        %5343 = vmatprep.mubr.f32.mxu0 0.0
        %5344 = vmatmul.mubr.f32.gmra.mrb[0].mxu0 %v5160
        %v5345 = vpop.f32.mrb[0].mxu0
        %v5346 = vadd.f32 %v5177, %v5345
        %v5347 = vpop.f32.mrb[0].mxu0
        %5348 = vmatprep.mubr.f32.mxu0 0.0
        %5349 = vmatmul.mubr.f32.gmra.mrb[0].mxu0 %v5161
        %v5350 = vpop.f32.mrb[0].mxu0
        %v5351 = vadd.f32 %v5177, %v5350
        %v5352 = vpop.f32.mrb[0].mxu0
        %5353 = vmatprep.mubr.f32.mxu0 0.0
        %5354 = vmatmul.mubr.f32.gmra.mrb[0].mxu0 %v5162
        %v5355 = vpop.f32.mrb[0].mxu0
        %v5356 = vadd.f32 %v5177, %v5355
        %v5357 = vpop.f32.mrb[0].mxu0
        %5358 = vmatprep.mubr.f32.mxu0 0.0
        %5359 = vmatmul.mubr.f32.gmra.mrb[0].mxu0 %v5163
        %v5360 = vpop.f32.mrb[0].mxu0
        %v5361 = vadd.f32 %v5177, %v5360
        %v5362 = vpop.f32.mrb[0].mxu0
        %5363 = vmatprep.mubr.f32.mxu0 0.0
        %5364 = vmatmul.mubr.f32.gmra.mrb[0].mxu0 %v5164
        %v5365 = vpop.f32.mrb[0].mxu0
        %v5366 = vadd.f32 %v5177, %v5365
        %v5367 = vpop.f32.mrb[0].mxu0
        %5368 = vmatprep.mubr.f32.mxu0 0.0
        %5369 = vmatmul.mubr.f32.gmra.mrb[0].mxu0 %v5165
        %v5370 = vpop.f32.mrb[0].mxu0
        %v5371 = vadd.f32 %v5177, %v5370
        %v5372 = vpop.f32.mrb[0].mxu0
        %5373 = vmatprep.mubr.f32.mxu0 0.0
        %5374 = vmatmul.mubr.f32.gmra.mrb[0].mxu0 %v5166
        %v5375 = vpop.f32.mrb[0].mxu0
        %v5376 = vadd.f32 %v5177, %v5375
        %v5377 = vpop.f32.mrb[0].mxu0
        %5378 = vmatprep.mubr.f32.mxu0 0.0
        %5379 = vmatmul.mubr.f32.gmra.mrb[0].mxu0 %v5167
        %v5380 = vpop.f32.mrb[0].mxu0
        %v5381 = vadd.f32 %v5177, %v5380
        %v5382 = vpop.f32.mrb[0].mxu0
        %5383 = vmatprep.mubr.f32.mxu0 0.0
        %5384 = vmatmul.mubr.f32.gmra.mrb[0].mxu0 %v5168
        %v5385 = vpop.f32.mrb[0].mxu0
        %v5386 = vadd.f32 %v5177, %v5385
        %v5387 = vpop.f32.mrb[0].mxu0
        %5388 = vmatprep.mubr.f32.mxu0 0.0
        %5389 = vmatmul.mubr.f32.gmra.mrb[0].mxu0 %v5169
        %v5390 = vpop.f32.mrb[0].mxu0
        %v5391 = vadd.f32 %v5177, %v5390
        %v5392 = vpop.f32.mrb[0].mxu0
        %5393 = vmatprep.mubr.f32.mxu0 0.0
        %5394 = vmatmul.mubr.f32.gmra.mrb[0].mxu0 %v5170
        %v5395 = vpop.f32.mrb[0].mxu0
        %v5396 = vadd.f32 %v5177, %v5395
        %v5397 = vpop.f32.mrb[0].mxu0
        %5398 = vmatprep.mubr.f32.mxu0 0.0
        %5399 = vmatmul.mubr.f32.gmra.mrb[0].mxu0 %v5171
        %v5400 = vpop.f32.mrb[0].mxu0
        %v5401 = vadd.f32 %v5177, %v5400
        %v5402 = vpop.f32.mrb[0].mxu0
        %5403 = vdwg.mxu0
        %v5404 = vadd.f32 %v621, %v5246
        %v5405 = vadd.f32 %v622, %v5251
        %v5406 = vadd.f32 %v623, %v5256
        %v5407 = vadd.f32 %v624, %v5261
        %v5408 = vadd.f32 %v625, %v5266
        %v5409 = vadd.f32 %v626, %v5271
        %v5410 = vadd.f32 %v627, %v5276
        %v5411 = vadd.f32 %v628, %v5281
        %v5412 = vadd.f32 %v629, %v5286
        %v5413 = vadd.f32 %v630, %v5291
        %v5414 = vadd.f32 %v631, %v5296
        %v5415 = vadd.f32 %v632, %v5301
        %v5416 = vadd.f32 %v633, %v5306
        %v5417 = vadd.f32 %v634, %v5311
        %v5418 = vadd.f32 %v635, %v5316
        %v5419 = vadd.f32 %v636, %v5321
        %v5420 = vadd.f32 %v637, %v5326
        %v5421 = vadd.f32 %v638, %v5331
        %v5422 = vadd.f32 %v639, %v5336
        %v5423 = vadd.f32 %v640, %v5341
        %v5424 = vadd.f32 %v641, %v5346
        %v5425 = vadd.f32 %v642, %v5351
        %v5426 = vadd.f32 %v643, %v5356
        %v5427 = vadd.f32 %v644, %v5361
        %v5428 = vadd.f32 %v645, %v5366
        %v5429 = vadd.f32 %v646, %v5371
        %v5430 = vadd.f32 %v647, %v5376
        %v5431 = vadd.f32 %v648, %v5381
        %v5432 = vadd.f32 %v649, %v5386
        %v5433 = vadd.f32 %v650, %v5391
        %v5434 = vadd.f32 %v651, %v5396
        %v5435 = vadd.f32 %v652, %v5401
        %5436 = vadd.xlane.f32.xlu0 %v5404
        %v5437 = vpop.xlane.xlu0 %5436
        %5438 = vadd.xlane.f32.xlu0 %v5405
        %v5439 = vpop.xlane.xlu0 %5438
        %5440 = vadd.xlane.f32.xlu0 %v5406
        %v5441 = vpop.xlane.xlu0 %5440
        %5442 = vadd.xlane.f32.xlu0 %v5407
        %v5443 = vpop.xlane.xlu0 %5442
        %5444 = vadd.xlane.f32.xlu0 %v5408
        %v5445 = vpop.xlane.xlu0 %5444
        %5446 = vadd.xlane.f32.xlu0 %v5409
        %v5447 = vpop.xlane.xlu0 %5446
        %5448 = vadd.xlane.f32.xlu0 %v5410
        %v5449 = vpop.xlane.xlu0 %5448
        %5450 = vadd.xlane.f32.xlu0 %v5411
        %v5451 = vpop.xlane.xlu0 %5450
        %5452 = vadd.xlane.f32.xlu0 %v5412
        %v5453 = vpop.xlane.xlu0 %5452
        %5454 = vadd.xlane.f32.xlu0 %v5413
        %v5455 = vpop.xlane.xlu0 %5454
        %5456 = vadd.xlane.f32.xlu0 %v5414
        %v5457 = vpop.xlane.xlu0 %5456
        %5458 = vadd.xlane.f32.xlu0 %v5415
        %v5459 = vpop.xlane.xlu0 %5458
        %5460 = vadd.xlane.f32.xlu0 %v5416
        %v5461 = vpop.xlane.xlu0 %5460
        %5462 = vadd.xlane.f32.xlu0 %v5417
        %v5463 = vpop.xlane.xlu0 %5462
        %5464 = vadd.xlane.f32.xlu0 %v5418
        %v5465 = vpop.xlane.xlu0 %5464
        %5466 = vadd.xlane.f32.xlu0 %v5419
        %v5467 = vpop.xlane.xlu0 %5466
        %5468 = vadd.xlane.f32.xlu0 %v5420
        %v5469 = vpop.xlane.xlu0 %5468
        %5470 = vadd.xlane.f32.xlu0 %v5421
        %v5471 = vpop.xlane.xlu0 %5470
        %5472 = vadd.xlane.f32.xlu0 %v5422
        %v5473 = vpop.xlane.xlu0 %5472
        %5474 = vadd.xlane.f32.xlu0 %v5423
        %v5475 = vpop.xlane.xlu0 %5474
        %5476 = vadd.xlane.f32.xlu0 %v5424
        %v5477 = vpop.xlane.xlu0 %5476
        %5478 = vadd.xlane.f32.xlu0 %v5425
        %v5479 = vpop.xlane.xlu0 %5478
        %5480 = vadd.xlane.f32.xlu0 %v5426
        %v5481 = vpop.xlane.xlu0 %5480
        %5482 = vadd.xlane.f32.xlu0 %v5427
        %v5483 = vpop.xlane.xlu0 %5482
        %5484 = vadd.xlane.f32.xlu0 %v5428
        %v5485 = vpop.xlane.xlu0 %5484
        %5486 = vadd.xlane.f32.xlu0 %v5429
        %v5487 = vpop.xlane.xlu0 %5486
        %5488 = vadd.xlane.f32.xlu0 %v5430
        %v5489 = vpop.xlane.xlu0 %5488
        %5490 = vadd.xlane.f32.xlu0 %v5431
        %v5491 = vpop.xlane.xlu0 %5490
        %5492 = vadd.xlane.f32.xlu0 %v5432
        %v5493 = vpop.xlane.xlu0 %5492
        %5494 = vadd.xlane.f32.xlu0 %v5433
        %v5495 = vpop.xlane.xlu0 %5494
        %5496 = vadd.xlane.f32.xlu0 %v5434
        %v5497 = vpop.xlane.xlu0 %5496
        %5498 = vadd.xlane.f32.xlu0 %v5435
        %v5499 = vpop.xlane.xlu0 %5498
        %v5500 = vmul.f32 %v5437, %v717
        %v5501 = vmul.f32 %v5439, %v717
        %v5502 = vmul.f32 %v5441, %v717
        %v5503 = vmul.f32 %v5443, %v717
        %v5504 = vmul.f32 %v5445, %v717
        %v5505 = vmul.f32 %v5447, %v717
        %v5506 = vmul.f32 %v5449, %v717
        %v5507 = vmul.f32 %v5451, %v717
        %v5508 = vmul.f32 %v5453, %v717
        %v5509 = vmul.f32 %v5455, %v717
        %v5510 = vmul.f32 %v5457, %v717
        %v5511 = vmul.f32 %v5459, %v717
        %v5512 = vmul.f32 %v5461, %v717
        %v5513 = vmul.f32 %v5463, %v717
        %v5514 = vmul.f32 %v5465, %v717
        %v5515 = vmul.f32 %v5467, %v717
        %v5516 = vmul.f32 %v5469, %v717
        %v5517 = vmul.f32 %v5471, %v717
        %v5518 = vmul.f32 %v5473, %v717
        %v5519 = vmul.f32 %v5475, %v717
        %v5520 = vmul.f32 %v5477, %v717
        %v5521 = vmul.f32 %v5479, %v717
        %v5522 = vmul.f32 %v5481, %v717
        %v5523 = vmul.f32 %v5483, %v717
        %v5524 = vmul.f32 %v5485, %v717
        %v5525 = vmul.f32 %v5487, %v717
        %v5526 = vmul.f32 %v5489, %v717
        %v5527 = vmul.f32 %v5491, %v717
        %v5528 = vmul.f32 %v5493, %v717
        %v5529 = vmul.f32 %v5495, %v717
        %v5530 = vmul.f32 %v5497, %v717
        %v5531 = vmul.f32 %v5499, %v717
        %v5532 = vsub.f32 %v5404, %v5500
        %v5533 = vsub.f32 %v5405, %v5501
        %v5534 = vsub.f32 %v5406, %v5502
        %v5535 = vsub.f32 %v5407, %v5503
        %v5536 = vsub.f32 %v5408, %v5504
        %v5537 = vsub.f32 %v5409, %v5505
        %v5538 = vsub.f32 %v5410, %v5506
        %v5539 = vsub.f32 %v5411, %v5507
        %v5540 = vsub.f32 %v5412, %v5508
        %v5541 = vsub.f32 %v5413, %v5509
        %v5542 = vsub.f32 %v5414, %v5510
        %v5543 = vsub.f32 %v5415, %v5511
        %v5544 = vsub.f32 %v5416, %v5512
        %v5545 = vsub.f32 %v5417, %v5513
        %v5546 = vsub.f32 %v5418, %v5514
        %v5547 = vsub.f32 %v5419, %v5515
        %v5548 = vsub.f32 %v5420, %v5516
        %v5549 = vsub.f32 %v5421, %v5517
        %v5550 = vsub.f32 %v5422, %v5518
        %v5551 = vsub.f32 %v5423, %v5519
        %v5552 = vsub.f32 %v5424, %v5520
        %v5553 = vsub.f32 %v5425, %v5521
        %v5554 = vsub.f32 %v5426, %v5522
        %v5555 = vsub.f32 %v5427, %v5523
        %v5556 = vsub.f32 %v5428, %v5524
        %v5557 = vsub.f32 %v5429, %v5525
        %v5558 = vsub.f32 %v5430, %v5526
        %v5559 = vsub.f32 %v5431, %v5527
        %v5560 = vsub.f32 %v5432, %v5528
        %v5561 = vsub.f32 %v5433, %v5529
        %v5562 = vsub.f32 %v5434, %v5530
        %v5563 = vsub.f32 %v5435, %v5531
        %v5564 = vmul.f32 %v5532, %v5532
        %v5565 = vmul.f32 %v5533, %v5533
        %v5566 = vmul.f32 %v5534, %v5534
        %v5567 = vmul.f32 %v5535, %v5535
        %v5568 = vmul.f32 %v5536, %v5536
        %v5569 = vmul.f32 %v5537, %v5537
        %v5570 = vmul.f32 %v5538, %v5538
        %v5571 = vmul.f32 %v5539, %v5539
        %v5572 = vmul.f32 %v5540, %v5540
        %v5573 = vmul.f32 %v5541, %v5541
        %v5574 = vmul.f32 %v5542, %v5542
        %v5575 = vmul.f32 %v5543, %v5543
        %v5576 = vmul.f32 %v5544, %v5544
        %v5577 = vmul.f32 %v5545, %v5545
        %v5578 = vmul.f32 %v5546, %v5546
        %v5579 = vmul.f32 %v5547, %v5547
        %v5580 = vmul.f32 %v5548, %v5548
        %v5581 = vmul.f32 %v5549, %v5549
        %v5582 = vmul.f32 %v5550, %v5550
        %v5583 = vmul.f32 %v5551, %v5551
        %v5584 = vmul.f32 %v5552, %v5552
        %v5585 = vmul.f32 %v5553, %v5553
        %v5586 = vmul.f32 %v5554, %v5554
        %v5587 = vmul.f32 %v5555, %v5555
        %v5588 = vmul.f32 %v5556, %v5556
        %v5589 = vmul.f32 %v5557, %v5557
        %v5590 = vmul.f32 %v5558, %v5558
        %v5591 = vmul.f32 %v5559, %v5559
        %v5592 = vmul.f32 %v5560, %v5560
        %v5593 = vmul.f32 %v5561, %v5561
        %v5594 = vmul.f32 %v5562, %v5562
        %v5595 = vmul.f32 %v5563, %v5563
        %5596 = vadd.xlane.f32.xlu0 %v5564
        %v5597 = vpop.xlane.xlu0 %5596
        %5598 = vadd.xlane.f32.xlu0 %v5565
        %v5599 = vpop.xlane.xlu0 %5598
        %5600 = vadd.xlane.f32.xlu0 %v5566
        %v5601 = vpop.xlane.xlu0 %5600
        %5602 = vadd.xlane.f32.xlu0 %v5567
        %v5603 = vpop.xlane.xlu0 %5602
        %5604 = vadd.xlane.f32.xlu0 %v5568
        %v5605 = vpop.xlane.xlu0 %5604
        %5606 = vadd.xlane.f32.xlu0 %v5569
        %v5607 = vpop.xlane.xlu0 %5606
        %5608 = vadd.xlane.f32.xlu0 %v5570
        %v5609 = vpop.xlane.xlu0 %5608
        %5610 = vadd.xlane.f32.xlu0 %v5571
        %v5611 = vpop.xlane.xlu0 %5610
        %5612 = vadd.xlane.f32.xlu0 %v5572
        %v5613 = vpop.xlane.xlu0 %5612
        %5614 = vadd.xlane.f32.xlu0 %v5573
        %v5615 = vpop.xlane.xlu0 %5614
        %5616 = vadd.xlane.f32.xlu0 %v5574
        %v5617 = vpop.xlane.xlu0 %5616
        %5618 = vadd.xlane.f32.xlu0 %v5575
        %v5619 = vpop.xlane.xlu0 %5618
        %5620 = vadd.xlane.f32.xlu0 %v5576
        %v5621 = vpop.xlane.xlu0 %5620
        %5622 = vadd.xlane.f32.xlu0 %v5577
        %v5623 = vpop.xlane.xlu0 %5622
        %5624 = vadd.xlane.f32.xlu0 %v5578
        %v5625 = vpop.xlane.xlu0 %5624
        %5626 = vadd.xlane.f32.xlu0 %v5579
        %v5627 = vpop.xlane.xlu0 %5626
        %5628 = vadd.xlane.f32.xlu0 %v5580
        %v5629 = vpop.xlane.xlu0 %5628
        %5630 = vadd.xlane.f32.xlu0 %v5581
        %v5631 = vpop.xlane.xlu0 %5630
        %5632 = vadd.xlane.f32.xlu0 %v5582
        %v5633 = vpop.xlane.xlu0 %5632
        %5634 = vadd.xlane.f32.xlu0 %v5583
        %v5635 = vpop.xlane.xlu0 %5634
        %5636 = vadd.xlane.f32.xlu0 %v5584
        %v5637 = vpop.xlane.xlu0 %5636
        %5638 = vadd.xlane.f32.xlu0 %v5585
        %v5639 = vpop.xlane.xlu0 %5638
        %5640 = vadd.xlane.f32.xlu0 %v5586
        %v5641 = vpop.xlane.xlu0 %5640
        %5642 = vadd.xlane.f32.xlu0 %v5587
        %v5643 = vpop.xlane.xlu0 %5642
        %5644 = vadd.xlane.f32.xlu0 %v5588
        %v5645 = vpop.xlane.xlu0 %5644
        %5646 = vadd.xlane.f32.xlu0 %v5589
        %v5647 = vpop.xlane.xlu0 %5646
        %5648 = vadd.xlane.f32.xlu0 %v5590
        %v5649 = vpop.xlane.xlu0 %5648
        %5650 = vadd.xlane.f32.xlu0 %v5591
        %v5651 = vpop.xlane.xlu0 %5650
        %5652 = vadd.xlane.f32.xlu0 %v5592
        %v5653 = vpop.xlane.xlu0 %5652
        %5654 = vadd.xlane.f32.xlu0 %v5593
        %v5655 = vpop.xlane.xlu0 %5654
        %5656 = vadd.xlane.f32.xlu0 %v5594
        %v5657 = vpop.xlane.xlu0 %5656
        %5658 = vadd.xlane.f32.xlu0 %v5595
        %v5659 = vpop.xlane.xlu0 %5658
        %v5660 = vmul.f32 %v5597, %v717
        %v5661 = vmul.f32 %v5599, %v717
        %v5662 = vmul.f32 %v5601, %v717
        %v5663 = vmul.f32 %v5603, %v717
        %v5664 = vmul.f32 %v5605, %v717
        %v5665 = vmul.f32 %v5607, %v717
        %v5666 = vmul.f32 %v5609, %v717
        %v5667 = vmul.f32 %v5611, %v717
        %v5668 = vmul.f32 %v5613, %v717
        %v5669 = vmul.f32 %v5615, %v717
        %v5670 = vmul.f32 %v5617, %v717
        %v5671 = vmul.f32 %v5619, %v717
        %v5672 = vmul.f32 %v5621, %v717
        %v5673 = vmul.f32 %v5623, %v717
        %v5674 = vmul.f32 %v5625, %v717
        %v5675 = vmul.f32 %v5627, %v717
        %v5676 = vmul.f32 %v5629, %v717
        %v5677 = vmul.f32 %v5631, %v717
        %v5678 = vmul.f32 %v5633, %v717
        %v5679 = vmul.f32 %v5635, %v717
        %v5680 = vmul.f32 %v5637, %v717
        %v5681 = vmul.f32 %v5639, %v717
        %v5682 = vmul.f32 %v5641, %v717
        %v5683 = vmul.f32 %v5643, %v717
        %v5684 = vmul.f32 %v5645, %v717
        %v5685 = vmul.f32 %v5647, %v717
        %v5686 = vmul.f32 %v5649, %v717
        %v5687 = vmul.f32 %v5651, %v717
        %v5688 = vmul.f32 %v5653, %v717
        %v5689 = vmul.f32 %v5655, %v717
        %v5690 = vmul.f32 %v5657, %v717
        %v5691 = vmul.f32 %v5659, %v717
        %v5692 = vadd.f32 %v5660, 1e-05
        %v5693 = vadd.f32 %v5661, 1e-05
        %v5694 = vadd.f32 %v5662, 1e-05
        %v5695 = vadd.f32 %v5663, 1e-05
        %v5696 = vadd.f32 %v5664, 1e-05
        %v5697 = vadd.f32 %v5665, 1e-05
        %v5698 = vadd.f32 %v5666, 1e-05
        %v5699 = vadd.f32 %v5667, 1e-05
        %v5700 = vadd.f32 %v5668, 1e-05
        %v5701 = vadd.f32 %v5669, 1e-05
        %v5702 = vadd.f32 %v5670, 1e-05
        %v5703 = vadd.f32 %v5671, 1e-05
        %v5704 = vadd.f32 %v5672, 1e-05
        %v5705 = vadd.f32 %v5673, 1e-05
        %v5706 = vadd.f32 %v5674, 1e-05
        %v5707 = vadd.f32 %v5675, 1e-05
        %v5708 = vadd.f32 %v5676, 1e-05
        %v5709 = vadd.f32 %v5677, 1e-05
        %v5710 = vadd.f32 %v5678, 1e-05
        %v5711 = vadd.f32 %v5679, 1e-05
        %v5712 = vadd.f32 %v5680, 1e-05
        %v5713 = vadd.f32 %v5681, 1e-05
        %v5714 = vadd.f32 %v5682, 1e-05
        %v5715 = vadd.f32 %v5683, 1e-05
        %v5716 = vadd.f32 %v5684, 1e-05
        %v5717 = vadd.f32 %v5685, 1e-05
        %v5718 = vadd.f32 %v5686, 1e-05
        %v5719 = vadd.f32 %v5687, 1e-05
        %v5720 = vadd.f32 %v5688, 1e-05
        %v5721 = vadd.f32 %v5689, 1e-05
        %v5722 = vadd.f32 %v5690, 1e-05
        %v5723 = vadd.f32 %v5691, 1e-05
        %v5724 = vrsqrt.pop %v5692
        %v5725 = vrsqrt.pop %v5693
        %v5726 = vrsqrt.pop %v5694
        %v5727 = vrsqrt.pop %v5695
        %v5728 = vrsqrt.pop %v5696
        %v5729 = vrsqrt.pop %v5697
        %v5730 = vrsqrt.pop %v5698
        %v5731 = vrsqrt.pop %v5699
        %v5732 = vrsqrt.pop %v5700
        %v5733 = vrsqrt.pop %v5701
        %v5734 = vrsqrt.pop %v5702
        %v5735 = vrsqrt.pop %v5703
        %v5736 = vrsqrt.pop %v5704
        %v5737 = vrsqrt.pop %v5705
        %v5738 = vrsqrt.pop %v5706
        %v5739 = vrsqrt.pop %v5707
        %v5740 = vrsqrt.pop %v5708
        %v5741 = vrsqrt.pop %v5709
        %v5742 = vrsqrt.pop %v5710
        %v5743 = vrsqrt.pop %v5711
        %v5744 = vrsqrt.pop %v5712
        %v5745 = vrsqrt.pop %v5713
        %v5746 = vrsqrt.pop %v5714
        %v5747 = vrsqrt.pop %v5715
        %v5748 = vrsqrt.pop %v5716
        %v5749 = vrsqrt.pop %v5717
        %v5750 = vrsqrt.pop %v5718
        %v5751 = vrsqrt.pop %v5719
        %v5752 = vrsqrt.pop %v5720
        %v5753 = vrsqrt.pop %v5721
        %v5754 = vrsqrt.pop %v5722
        %v5755 = vrsqrt.pop %v5723
        %v5756 = vmul.f32 %v5532, %v5724
        %v5757 = vmul.f32 %v5533, %v5725
        %v5758 = vmul.f32 %v5534, %v5726
        %v5759 = vmul.f32 %v5535, %v5727
        %v5760 = vmul.f32 %v5536, %v5728
        %v5761 = vmul.f32 %v5537, %v5729
        %v5762 = vmul.f32 %v5538, %v5730
        %v5763 = vmul.f32 %v5539, %v5731
        %v5764 = vmul.f32 %v5540, %v5732
        %v5765 = vmul.f32 %v5541, %v5733
        %v5766 = vmul.f32 %v5542, %v5734
        %v5767 = vmul.f32 %v5543, %v5735
        %v5768 = vmul.f32 %v5544, %v5736
        %v5769 = vmul.f32 %v5545, %v5737
        %v5770 = vmul.f32 %v5546, %v5738
        %v5771 = vmul.f32 %v5547, %v5739
        %v5772 = vmul.f32 %v5548, %v5740
        %v5773 = vmul.f32 %v5549, %v5741
        %v5774 = vmul.f32 %v5550, %v5742
        %v5775 = vmul.f32 %v5551, %v5743
        %v5776 = vmul.f32 %v5552, %v5744
        %v5777 = vmul.f32 %v5553, %v5745
        %v5778 = vmul.f32 %v5554, %v5746
        %v5779 = vmul.f32 %v5555, %v5747
        %v5780 = vmul.f32 %v5556, %v5748
        %v5781 = vmul.f32 %v5557, %v5749
        %v5782 = vmul.f32 %v5558, %v5750
        %v5783 = vmul.f32 %v5559, %v5751
        %v5784 = vmul.f32 %v5560, %v5752
        %v5785 = vmul.f32 %v5561, %v5753
        %v5786 = vmul.f32 %v5562, %v5754
        %v5787 = vmul.f32 %v5563, %v5755
        %v5788 = vld [vmem:[#allocation14] sm:$0x1]
        %v5790 = vlaneseq
        %v5791 = vshrl.u32 %v5790, 7
        %v5792 = vsub.s32 0, %v5791
        %v5793 = vrot.slane %v5788, %v5792
        %v5795 = vmul.f32 %v5756, %v5793
        %v5796 = vmul.f32 %v5757, %v5793
        %v5797 = vmul.f32 %v5758, %v5793
        %v5798 = vmul.f32 %v5759, %v5793
        %v5799 = vmul.f32 %v5760, %v5793
        %v5800 = vmul.f32 %v5761, %v5793
        %v5801 = vmul.f32 %v5762, %v5793
        %v5802 = vmul.f32 %v5763, %v5793
        %v5803 = vmul.f32 %v5764, %v5793
        %v5804 = vmul.f32 %v5765, %v5793
        %v5805 = vmul.f32 %v5766, %v5793
        %v5806 = vmul.f32 %v5767, %v5793
        %v5807 = vmul.f32 %v5768, %v5793
        %v5808 = vmul.f32 %v5769, %v5793
        %v5809 = vmul.f32 %v5770, %v5793
        %v5810 = vmul.f32 %v5771, %v5793
        %v5811 = vmul.f32 %v5772, %v5793
        %v5812 = vmul.f32 %v5773, %v5793
        %v5813 = vmul.f32 %v5774, %v5793
        %v5814 = vmul.f32 %v5775, %v5793
        %v5815 = vmul.f32 %v5776, %v5793
        %v5816 = vmul.f32 %v5777, %v5793
        %v5817 = vmul.f32 %v5778, %v5793
        %v5818 = vmul.f32 %v5779, %v5793
        %v5819 = vmul.f32 %v5780, %v5793
        %v5820 = vmul.f32 %v5781, %v5793
        %v5821 = vmul.f32 %v5782, %v5793
        %v5822 = vmul.f32 %v5783, %v5793
        %v5823 = vmul.f32 %v5784, %v5793
        %v5824 = vmul.f32 %v5785, %v5793
        %v5825 = vmul.f32 %v5786, %v5793
        %v5826 = vmul.f32 %v5787, %v5793
        %v5827 = vld [vmem:[#allocation16] sm:$0x1]
        %v5829 = vlaneseq
        %v5830 = vshrl.u32 %v5829, 7
        %v5831 = vsub.s32 0, %v5830
        %v5832 = vrot.slane %v5827, %v5831
        %v5834 = vadd.f32 %v5795, %v5832
        %v5835 = vadd.f32 %v5796, %v5832
        %v5836 = vadd.f32 %v5797, %v5832
        %v5837 = vadd.f32 %v5798, %v5832
        %v5838 = vadd.f32 %v5799, %v5832
        %v5839 = vadd.f32 %v5800, %v5832
        %v5840 = vadd.f32 %v5801, %v5832
        %v5841 = vadd.f32 %v5802, %v5832
        %v5842 = vadd.f32 %v5803, %v5832
        %v5843 = vadd.f32 %v5804, %v5832
        %v5844 = vadd.f32 %v5805, %v5832
        %v5845 = vadd.f32 %v5806, %v5832
        %v5846 = vadd.f32 %v5807, %v5832
        %v5847 = vadd.f32 %v5808, %v5832
        %v5848 = vadd.f32 %v5809, %v5832
        %v5849 = vadd.f32 %v5810, %v5832
        %v5850 = vadd.f32 %v5811, %v5832
        %v5851 = vadd.f32 %v5812, %v5832
        %v5852 = vadd.f32 %v5813, %v5832
        %v5853 = vadd.f32 %v5814, %v5832
        %v5854 = vadd.f32 %v5815, %v5832
        %v5855 = vadd.f32 %v5816, %v5832
        %v5856 = vadd.f32 %v5817, %v5832
        %v5857 = vadd.f32 %v5818, %v5832
        %v5858 = vadd.f32 %v5819, %v5832
        %v5859 = vadd.f32 %v5820, %v5832
        %v5860 = vadd.f32 %v5821, %v5832
        %v5861 = vadd.f32 %v5822, %v5832
        %v5862 = vadd.f32 %v5823, %v5832
        %v5863 = vadd.f32 %v5824, %v5832
        %v5864 = vadd.f32 %v5825, %v5832
        %v5865 = vadd.f32 %v5826, %v5832
        %v5866 = vld [vmem:[#allocation17] sm:$0xff]
        %v5867 = vld [vmem:[#allocation17 + $0x8] sm:$0xff]
        %v5868 = vld [vmem:[#allocation17 + $0x10] sm:$0xff]
        %v5869 = vld [vmem:[#allocation17 + $0x18] sm:$0xff]
        %v5870 = vld [vmem:[#allocation17 + $0x20] sm:$0xff]
        %v5871 = vld [vmem:[#allocation17 + $0x28] sm:$0xff]
        %v5872 = vld [vmem:[#allocation17 + $0x30] sm:$0xff]
        %v5873 = vld [vmem:[#allocation17 + $0x38] sm:$0xff]
        %v5874 = vld [vmem:[#allocation17 + $0x40] sm:$0xff]
        %v5875 = vld [vmem:[#allocation17 + $0x48] sm:$0xff]
        %v5876 = vld [vmem:[#allocation17 + $0x50] sm:$0xff]
        %v5877 = vld [vmem:[#allocation17 + $0x58] sm:$0xff]
        %v5878 = vld [vmem:[#allocation17 + $0x60] sm:$0xff]
        %v5879 = vld [vmem:[#allocation17 + $0x68] sm:$0xff]
        %v5880 = vld [vmem:[#allocation17 + $0x70] sm:$0xff]
        %v5881 = vld [vmem:[#allocation17 + $0x78] sm:$0xff]
        %v5882 = vld [vmem:[#allocation17 + $0x80] sm:$0xff]
        %v5883 = vld [vmem:[#allocation17 + $0x88] sm:$0xff]
        %v5884 = vld [vmem:[#allocation17 + $0x90] sm:$0xff]
        %v5885 = vld [vmem:[#allocation17 + $0x98] sm:$0xff]
        %v5886 = vld [vmem:[#allocation17 + $0xa0] sm:$0xff]
        %v5887 = vld [vmem:[#allocation17 + $0xa8] sm:$0xff]
        %v5888 = vld [vmem:[#allocation17 + $0xb0] sm:$0xff]
        %v5889 = vld [vmem:[#allocation17 + $0xb8] sm:$0xff]
        %v5890 = vld [vmem:[#allocation17 + $0xc0] sm:$0xff]
        %v5891 = vld [vmem:[#allocation17 + $0xc8] sm:$0xff]
        %v5892 = vld [vmem:[#allocation17 + $0xd0] sm:$0xff]
        %v5893 = vld [vmem:[#allocation17 + $0xd8] sm:$0xff]
        %v5894 = vld [vmem:[#allocation17 + $0xe0] sm:$0xff]
        %v5895 = vld [vmem:[#allocation17 + $0xe8] sm:$0xff]
        %v5896 = vld [vmem:[#allocation17 + $0xf0] sm:$0xff]
        %v5897 = vld [vmem:[#allocation17 + $0xf8] sm:$0xff]
        %v5898 = vld [vmem:[#allocation17 + $0x100] sm:$0xff]
        %v5899 = vld [vmem:[#allocation17 + $0x108] sm:$0xff]
        %v5900 = vld [vmem:[#allocation17 + $0x110] sm:$0xff]
        %v5901 = vld [vmem:[#allocation17 + $0x118] sm:$0xff]
        %v5902 = vld [vmem:[#allocation17 + $0x120] sm:$0xff]
        %v5903 = vld [vmem:[#allocation17 + $0x128] sm:$0xff]
        %v5904 = vld [vmem:[#allocation17 + $0x130] sm:$0xff]
        %v5905 = vld [vmem:[#allocation17 + $0x138] sm:$0xff]
        %v5906 = vld [vmem:[#allocation17 + $0x140] sm:$0xff]
        %v5907 = vld [vmem:[#allocation17 + $0x148] sm:$0xff]
        %v5908 = vld [vmem:[#allocation17 + $0x150] sm:$0xff]
        %v5909 = vld [vmem:[#allocation17 + $0x158] sm:$0xff]
        %v5910 = vld [vmem:[#allocation17 + $0x160] sm:$0xff]
        %v5911 = vld [vmem:[#allocation17 + $0x168] sm:$0xff]
        %v5912 = vld [vmem:[#allocation17 + $0x170] sm:$0xff]
        %v5913 = vld [vmem:[#allocation17 + $0x178] sm:$0xff]
        %v5914 = vld [vmem:[#allocation17 + $0x180] sm:$0xff]
        %v5915 = vld [vmem:[#allocation17 + $0x188] sm:$0xff]
        %v5916 = vld [vmem:[#allocation17 + $0x190] sm:$0xff]
        %v5917 = vld [vmem:[#allocation17 + $0x198] sm:$0xff]
        %v5918 = vld [vmem:[#allocation17 + $0x1a0] sm:$0xff]
        %v5919 = vld [vmem:[#allocation17 + $0x1a8] sm:$0xff]
        %v5920 = vld [vmem:[#allocation17 + $0x1b0] sm:$0xff]
        %v5921 = vld [vmem:[#allocation17 + $0x1b8] sm:$0xff]
        %v5922 = vld [vmem:[#allocation17 + $0x1c0] sm:$0xff]
        %v5923 = vld [vmem:[#allocation17 + $0x1c8] sm:$0xff]
        %v5924 = vld [vmem:[#allocation17 + $0x1d0] sm:$0xff]
        %v5925 = vld [vmem:[#allocation17 + $0x1d8] sm:$0xff]
        %v5926 = vld [vmem:[#allocation17 + $0x1e0] sm:$0xff]
        %v5927 = vld [vmem:[#allocation17 + $0x1e8] sm:$0xff]
        %v5928 = vld [vmem:[#allocation17 + $0x1f0] sm:$0xff]
        %v5929 = vld [vmem:[#allocation17 + $0x1f8] sm:$0xff]
        %v5930 = vld [vmem:[#allocation19] sm:$0xf]
        %v5932 = vlaneseq
        %v5933 = vshrl.u32 %v5932, 7
        %v5934 = vsub.s32 0, %v5933
        %v5935 = vrot.slane %v5930, %v5934
        %v5936 = vlaneseq
        %v5937 = vshrl.u32 %v5936, 7
        %v5938 = vsub.s32 1, %v5937
        %v5939 = vrot.slane %v5930, %v5938
        %v5940 = vlaneseq
        %v5941 = vshrl.u32 %v5940, 7
        %v5942 = vsub.s32 2, %v5941
        %v5943 = vrot.slane %v5930, %v5942
        %v5944 = vlaneseq
        %v5945 = vshrl.u32 %v5944, 7
        %v5946 = vsub.s32 3, %v5945
        %v5947 = vrot.slane %v5930, %v5946
        %5952 = vmatprep.subr.mxu0 %v5867
        %5953 = vmatpush1.msra.mxu0 %v5866
        %5954 = vmatprep.subr.mxu0 %v5871
        %5955 = vmatpush1.msra.mxu0 %v5870
        %5956 = vmatprep.subr.mxu0 %v5875
        %5957 = vmatpush1.msra.mxu0 %v5874
        %5958 = vmatprep.subr.mxu0 %v5879
        %5959 = vmatpush1.msra.mxu0 %v5878
        %5960 = vmatprep.subr.mxu0 %v5883
        %5961 = vmatpush1.msra.mxu0 %v5882
        %5962 = vmatprep.subr.mxu0 %v5887
        %5963 = vmatpush1.msra.mxu0 %v5886
        %5964 = vmatprep.subr.mxu0 %v5891
        %5965 = vmatpush1.msra.mxu0 %v5890
        %5966 = vmatprep.subr.mxu0 %v5895
        %5967 = vmatpush1.msra.mxu0 %v5894
        %5968 = vmatprep.subr.mxu0 %v5899
        %5969 = vmatpush1.msra.mxu0 %v5898
        %5970 = vmatprep.subr.mxu0 %v5903
        %5971 = vmatpush1.msra.mxu0 %v5902
        %5972 = vmatprep.subr.mxu0 %v5907
        %5973 = vmatpush1.msra.mxu0 %v5906
        %5974 = vmatprep.subr.mxu0 %v5911
        %5975 = vmatpush1.msra.mxu0 %v5910
        %5976 = vmatprep.subr.mxu0 %v5915
        %5977 = vmatpush1.msra.mxu0 %v5914
        %5978 = vmatprep.subr.mxu0 %v5919
        %5979 = vmatpush1.msra.mxu0 %v5918
        %5980 = vmatprep.subr.mxu0 %v5923
        %5981 = vmatpush1.msra.mxu0 %v5922
        %5982 = vmatprep.subr.mxu0 %v5927
        %5983 = vmatpush1.msra.mxu0 %v5926
        %5984 = vmatprep.subr.mxu0 0.0
        %5985 = vmatpush1.msra.mxu0 0.0
        %5986 = vmatprep.subr.mxu0 0.0
        %5987 = vmatpush1.msra.mxu0 0.0
        %5988 = vmatprep.subr.mxu0 0.0
        %5989 = vmatpush1.msra.mxu0 0.0
        %5990 = vmatprep.subr.mxu0 0.0
        %5991 = vmatpush1.msra.mxu0 0.0
        %5992 = vmatprep.subr.mxu0 0.0
        %5993 = vmatpush1.msra.mxu0 0.0
        %5994 = vmatprep.subr.mxu0 0.0
        %5995 = vmatpush1.msra.mxu0 0.0
        %5996 = vmatprep.subr.mxu0 0.0
        %5997 = vmatpush1.msra.mxu0 0.0
        %5998 = vmatprep.subr.mxu0 0.0
        %5999 = vmatpush1.msra.mxu0 0.0
        %6000 = vmatprep.subr.mxu0 0.0
        %6001 = vmatpush1.msra.mxu0 0.0
        %6002 = vmatprep.subr.mxu0 0.0
        %6003 = vmatpush1.msra.mxu0 0.0
        %6004 = vmatprep.subr.mxu0 0.0
        %6005 = vmatpush1.msra.mxu0 0.0
        %6006 = vmatprep.subr.mxu0 0.0
        %6007 = vmatpush1.msra.mxu0 0.0
        %6008 = vmatprep.subr.mxu0 0.0
        %6009 = vmatpush1.msra.mxu0 0.0
        %6010 = vmatprep.subr.mxu0 0.0
        %6011 = vmatpush1.msra.mxu0 0.0
        %6012 = vmatprep.subr.mxu0 0.0
        %6013 = vmatpush1.msra.mxu0 0.0
        %6014 = vmatprep.subr.mxu0 0.0
        %6015 = vmatpush1.msra.mxu0 0.0
        %6016 = vmatprep.mubr.f32.mxu0 0.0
        %6017 = vmatmul.mubr.f32.gmra.mrb[0].mxu0 %v5834
        %v6018 = vpop.f32.mrb[0].mxu0
        %v6019 = vadd.f32 %v5935, %v6018
        %v6020 = vpop.f32.mrb[0].mxu0
        %v6021 = vadd.f32 %v5939, %v6020
        %6022 = vmatprep.mubr.f32.mxu0 0.0
        %6023 = vmatmul.mubr.f32.gmra.mrb[0].mxu0 %v5835
        %v6024 = vpop.f32.mrb[0].mxu0
        %v6025 = vadd.f32 %v5935, %v6024
        %v6026 = vpop.f32.mrb[0].mxu0
        %v6027 = vadd.f32 %v5939, %v6026
        %6028 = vmatprep.mubr.f32.mxu0 0.0
        %6029 = vmatmul.mubr.f32.gmra.mrb[0].mxu0 %v5836
        %v6030 = vpop.f32.mrb[0].mxu0
        %v6031 = vadd.f32 %v5935, %v6030
        %v6032 = vpop.f32.mrb[0].mxu0
        %v6033 = vadd.f32 %v5939, %v6032
        %6034 = vmatprep.mubr.f32.mxu0 0.0
        %6035 = vmatmul.mubr.f32.gmra.mrb[0].mxu0 %v5837
        %v6036 = vpop.f32.mrb[0].mxu0
        %v6037 = vadd.f32 %v5935, %v6036
        %v6038 = vpop.f32.mrb[0].mxu0
        %v6039 = vadd.f32 %v5939, %v6038
        %6040 = vmatprep.mubr.f32.mxu0 0.0
        %6041 = vmatmul.mubr.f32.gmra.mrb[0].mxu0 %v5838
        %v6042 = vpop.f32.mrb[0].mxu0
        %v6043 = vadd.f32 %v5935, %v6042
        %v6044 = vpop.f32.mrb[0].mxu0
        %v6045 = vadd.f32 %v5939, %v6044
        %6046 = vmatprep.mubr.f32.mxu0 0.0
        %6047 = vmatmul.mubr.f32.gmra.mrb[0].mxu0 %v5839
        %v6048 = vpop.f32.mrb[0].mxu0
        %v6049 = vadd.f32 %v5935, %v6048
        %v6050 = vpop.f32.mrb[0].mxu0
        %v6051 = vadd.f32 %v5939, %v6050
        %6052 = vmatprep.mubr.f32.mxu0 0.0
        %6053 = vmatmul.mubr.f32.gmra.mrb[0].mxu0 %v5840
        %v6054 = vpop.f32.mrb[0].mxu0
        %v6055 = vadd.f32 %v5935, %v6054
        %v6056 = vpop.f32.mrb[0].mxu0
        %v6057 = vadd.f32 %v5939, %v6056
        %6058 = vmatprep.mubr.f32.mxu0 0.0
        %6059 = vmatmul.mubr.f32.gmra.mrb[0].mxu0 %v5841
        %v6060 = vpop.f32.mrb[0].mxu0
        %v6061 = vadd.f32 %v5935, %v6060
        %v6062 = vpop.f32.mrb[0].mxu0
        %v6063 = vadd.f32 %v5939, %v6062
        %6064 = vmatprep.mubr.f32.mxu0 0.0
        %6065 = vmatmul.mubr.f32.gmra.mrb[0].mxu0 %v5842
        %v6066 = vpop.f32.mrb[0].mxu0
        %v6067 = vadd.f32 %v5935, %v6066
        %v6068 = vpop.f32.mrb[0].mxu0
        %v6069 = vadd.f32 %v5939, %v6068
        %6070 = vmatprep.mubr.f32.mxu0 0.0
        %6071 = vmatmul.mubr.f32.gmra.mrb[0].mxu0 %v5843
        %v6072 = vpop.f32.mrb[0].mxu0
        %v6073 = vadd.f32 %v5935, %v6072
        %v6074 = vpop.f32.mrb[0].mxu0
        %v6075 = vadd.f32 %v5939, %v6074
        %6076 = vmatprep.mubr.f32.mxu0 0.0
        %6077 = vmatmul.mubr.f32.gmra.mrb[0].mxu0 %v5844
        %v6078 = vpop.f32.mrb[0].mxu0
        %v6079 = vadd.f32 %v5935, %v6078
        %v6080 = vpop.f32.mrb[0].mxu0
        %v6081 = vadd.f32 %v5939, %v6080
        %6082 = vmatprep.mubr.f32.mxu0 0.0
        %6083 = vmatmul.mubr.f32.gmra.mrb[0].mxu0 %v5845
        %v6084 = vpop.f32.mrb[0].mxu0
        %v6085 = vadd.f32 %v5935, %v6084
        %v6086 = vpop.f32.mrb[0].mxu0
        %v6087 = vadd.f32 %v5939, %v6086
        %6088 = vmatprep.mubr.f32.mxu0 0.0
        %6089 = vmatmul.mubr.f32.gmra.mrb[0].mxu0 %v5846
        %v6090 = vpop.f32.mrb[0].mxu0
        %v6091 = vadd.f32 %v5935, %v6090
        %v6092 = vpop.f32.mrb[0].mxu0
        %v6093 = vadd.f32 %v5939, %v6092
        %6094 = vmatprep.mubr.f32.mxu0 0.0
        %6095 = vmatmul.mubr.f32.gmra.mrb[0].mxu0 %v5847
        %v6096 = vpop.f32.mrb[0].mxu0
        %v6097 = vadd.f32 %v5935, %v6096
        %v6098 = vpop.f32.mrb[0].mxu0
        %v6099 = vadd.f32 %v5939, %v6098
        %6100 = vmatprep.mubr.f32.mxu0 0.0
        %6101 = vmatmul.mubr.f32.gmra.mrb[0].mxu0 %v5848
        %v6102 = vpop.f32.mrb[0].mxu0
        %v6103 = vadd.f32 %v5935, %v6102
        %v6104 = vpop.f32.mrb[0].mxu0
        %v6105 = vadd.f32 %v5939, %v6104
        %6106 = vmatprep.mubr.f32.mxu0 0.0
        %6107 = vmatmul.mubr.f32.gmra.mrb[0].mxu0 %v5849
        %v6108 = vpop.f32.mrb[0].mxu0
        %v6109 = vadd.f32 %v5935, %v6108
        %v6110 = vpop.f32.mrb[0].mxu0
        %v6111 = vadd.f32 %v5939, %v6110
        %6112 = vmatprep.mubr.f32.mxu0 0.0
        %6113 = vmatmul.mubr.f32.gmra.mrb[0].mxu0 %v5850
        %v6114 = vpop.f32.mrb[0].mxu0
        %v6115 = vadd.f32 %v5935, %v6114
        %v6116 = vpop.f32.mrb[0].mxu0
        %v6117 = vadd.f32 %v5939, %v6116
        %6118 = vmatprep.mubr.f32.mxu0 0.0
        %6119 = vmatmul.mubr.f32.gmra.mrb[0].mxu0 %v5851
        %v6120 = vpop.f32.mrb[0].mxu0
        %v6121 = vadd.f32 %v5935, %v6120
        %v6122 = vpop.f32.mrb[0].mxu0
        %v6123 = vadd.f32 %v5939, %v6122
        %6124 = vmatprep.mubr.f32.mxu0 0.0
        %6125 = vmatmul.mubr.f32.gmra.mrb[0].mxu0 %v5852
        %v6126 = vpop.f32.mrb[0].mxu0
        %v6127 = vadd.f32 %v5935, %v6126
        %v6128 = vpop.f32.mrb[0].mxu0
        %v6129 = vadd.f32 %v5939, %v6128
        %6130 = vmatprep.mubr.f32.mxu0 0.0
        %6131 = vmatmul.mubr.f32.gmra.mrb[0].mxu0 %v5853
        %v6132 = vpop.f32.mrb[0].mxu0
        %v6133 = vadd.f32 %v5935, %v6132
        %v6134 = vpop.f32.mrb[0].mxu0
        %v6135 = vadd.f32 %v5939, %v6134
        %6136 = vmatprep.mubr.f32.mxu0 0.0
        %6137 = vmatmul.mubr.f32.gmra.mrb[0].mxu0 %v5854
        %v6138 = vpop.f32.mrb[0].mxu0
        %v6139 = vadd.f32 %v5935, %v6138
        %v6140 = vpop.f32.mrb[0].mxu0
        %v6141 = vadd.f32 %v5939, %v6140
        %6142 = vmatprep.mubr.f32.mxu0 0.0
        %6143 = vmatmul.mubr.f32.gmra.mrb[0].mxu0 %v5855
        %v6144 = vpop.f32.mrb[0].mxu0
        %v6145 = vadd.f32 %v5935, %v6144
        %v6146 = vpop.f32.mrb[0].mxu0
        %v6147 = vadd.f32 %v5939, %v6146
        %6148 = vmatprep.mubr.f32.mxu0 0.0
        %6149 = vmatmul.mubr.f32.gmra.mrb[0].mxu0 %v5856
        %v6150 = vpop.f32.mrb[0].mxu0
        %v6151 = vadd.f32 %v5935, %v6150
        %v6152 = vpop.f32.mrb[0].mxu0
        %v6153 = vadd.f32 %v5939, %v6152
        %6154 = vmatprep.mubr.f32.mxu0 0.0
        %6155 = vmatmul.mubr.f32.gmra.mrb[0].mxu0 %v5857
        %v6156 = vpop.f32.mrb[0].mxu0
        %v6157 = vadd.f32 %v5935, %v6156
        %v6158 = vpop.f32.mrb[0].mxu0
        %v6159 = vadd.f32 %v5939, %v6158
        %6160 = vmatprep.mubr.f32.mxu0 0.0
        %6161 = vmatmul.mubr.f32.gmra.mrb[0].mxu0 %v5858
        %v6162 = vpop.f32.mrb[0].mxu0
        %v6163 = vadd.f32 %v5935, %v6162
        %v6164 = vpop.f32.mrb[0].mxu0
        %v6165 = vadd.f32 %v5939, %v6164
        %6166 = vmatprep.mubr.f32.mxu0 0.0
        %6167 = vmatmul.mubr.f32.gmra.mrb[0].mxu0 %v5859
        %v6168 = vpop.f32.mrb[0].mxu0
        %v6169 = vadd.f32 %v5935, %v6168
        %v6170 = vpop.f32.mrb[0].mxu0
        %v6171 = vadd.f32 %v5939, %v6170
        %6172 = vmatprep.mubr.f32.mxu0 0.0
        %6173 = vmatmul.mubr.f32.gmra.mrb[0].mxu0 %v5860
        %v6174 = vpop.f32.mrb[0].mxu0
        %v6175 = vadd.f32 %v5935, %v6174
        %v6176 = vpop.f32.mrb[0].mxu0
        %v6177 = vadd.f32 %v5939, %v6176
        %6178 = vmatprep.mubr.f32.mxu0 0.0
        %6179 = vmatmul.mubr.f32.gmra.mrb[0].mxu0 %v5861
        %v6180 = vpop.f32.mrb[0].mxu0
        %v6181 = vadd.f32 %v5935, %v6180
        %v6182 = vpop.f32.mrb[0].mxu0
        %v6183 = vadd.f32 %v5939, %v6182
        %6184 = vmatprep.mubr.f32.mxu0 0.0
        %6185 = vmatmul.mubr.f32.gmra.mrb[0].mxu0 %v5862
        %v6186 = vpop.f32.mrb[0].mxu0
        %v6187 = vadd.f32 %v5935, %v6186
        %v6188 = vpop.f32.mrb[0].mxu0
        %v6189 = vadd.f32 %v5939, %v6188
        %6190 = vmatprep.mubr.f32.mxu0 0.0
        %6191 = vmatmul.mubr.f32.gmra.mrb[0].mxu0 %v5863
        %v6192 = vpop.f32.mrb[0].mxu0
        %v6193 = vadd.f32 %v5935, %v6192
        %v6194 = vpop.f32.mrb[0].mxu0
        %v6195 = vadd.f32 %v5939, %v6194
        %6196 = vmatprep.mubr.f32.mxu0 0.0
        %6197 = vmatmul.mubr.f32.gmra.mrb[0].mxu0 %v5864
        %v6198 = vpop.f32.mrb[0].mxu0
        %v6199 = vadd.f32 %v5935, %v6198
        %v6200 = vpop.f32.mrb[0].mxu0
        %v6201 = vadd.f32 %v5939, %v6200
        %6202 = vmatprep.mubr.f32.mxu0 0.0
        %6203 = vmatmul.mubr.f32.gmra.mrb[0].mxu0 %v5865
        %v6204 = vpop.f32.mrb[0].mxu0
        %v6205 = vadd.f32 %v5935, %v6204
        %v6206 = vpop.f32.mrb[0].mxu0
        %v6207 = vadd.f32 %v5939, %v6206
        %6208 = vdwg.mxu0
        %6209 = vmatprep.subr.mxu0 %v5869
        %6210 = vmatpush1.msra.mxu0 %v5868
        %6211 = vmatprep.subr.mxu0 %v5873
        %6212 = vmatpush1.msra.mxu0 %v5872
        %6213 = vmatprep.subr.mxu0 %v5877
        %6214 = vmatpush1.msra.mxu0 %v5876
        %6215 = vmatprep.subr.mxu0 %v5881
        %6216 = vmatpush1.msra.mxu0 %v5880
        %6217 = vmatprep.subr.mxu0 %v5885
        %6218 = vmatpush1.msra.mxu0 %v5884
        %6219 = vmatprep.subr.mxu0 %v5889
        %6220 = vmatpush1.msra.mxu0 %v5888
        %6221 = vmatprep.subr.mxu0 %v5893
        %6222 = vmatpush1.msra.mxu0 %v5892
        %6223 = vmatprep.subr.mxu0 %v5897
        %6224 = vmatpush1.msra.mxu0 %v5896
        %6225 = vmatprep.subr.mxu0 %v5901
        %6226 = vmatpush1.msra.mxu0 %v5900
        %6227 = vmatprep.subr.mxu0 %v5905
        %6228 = vmatpush1.msra.mxu0 %v5904
        %6229 = vmatprep.subr.mxu0 %v5909
        %6230 = vmatpush1.msra.mxu0 %v5908
        %6231 = vmatprep.subr.mxu0 %v5913
        %6232 = vmatpush1.msra.mxu0 %v5912
        %6233 = vmatprep.subr.mxu0 %v5917
        %6234 = vmatpush1.msra.mxu0 %v5916
        %6235 = vmatprep.subr.mxu0 %v5921
        %6236 = vmatpush1.msra.mxu0 %v5920
        %6237 = vmatprep.subr.mxu0 %v5925
        %6238 = vmatpush1.msra.mxu0 %v5924
        %6239 = vmatprep.subr.mxu0 %v5929
        %6240 = vmatpush1.msra.mxu0 %v5928
        %6241 = vmatprep.subr.mxu0 0.0
        %6242 = vmatpush1.msra.mxu0 0.0
        %6243 = vmatprep.subr.mxu0 0.0
        %6244 = vmatpush1.msra.mxu0 0.0
        %6245 = vmatprep.subr.mxu0 0.0
        %6246 = vmatpush1.msra.mxu0 0.0
        %6247 = vmatprep.subr.mxu0 0.0
        %6248 = vmatpush1.msra.mxu0 0.0
        %6249 = vmatprep.subr.mxu0 0.0
        %6250 = vmatpush1.msra.mxu0 0.0
        %6251 = vmatprep.subr.mxu0 0.0
        %6252 = vmatpush1.msra.mxu0 0.0
        %6253 = vmatprep.subr.mxu0 0.0
        %6254 = vmatpush1.msra.mxu0 0.0
        %6255 = vmatprep.subr.mxu0 0.0
        %6256 = vmatpush1.msra.mxu0 0.0
        %6257 = vmatprep.subr.mxu0 0.0
        %6258 = vmatpush1.msra.mxu0 0.0
        %6259 = vmatprep.subr.mxu0 0.0
        %6260 = vmatpush1.msra.mxu0 0.0
        %6261 = vmatprep.subr.mxu0 0.0
        %6262 = vmatpush1.msra.mxu0 0.0
        %6263 = vmatprep.subr.mxu0 0.0
        %6264 = vmatpush1.msra.mxu0 0.0
        %6265 = vmatprep.subr.mxu0 0.0
        %6266 = vmatpush1.msra.mxu0 0.0
        %6267 = vmatprep.subr.mxu0 0.0
        %6268 = vmatpush1.msra.mxu0 0.0
        %6269 = vmatprep.subr.mxu0 0.0
        %6270 = vmatpush1.msra.mxu0 0.0
        %6271 = vmatprep.subr.mxu0 0.0
        %6272 = vmatpush1.msra.mxu0 0.0
        %6273 = vmatprep.mubr.f32.mxu0 0.0
        %6274 = vmatmul.mubr.f32.gmra.mrb[0].mxu0 %v5834
        %v6275 = vpop.f32.mrb[0].mxu0
        %v6276 = vadd.f32 %v5943, %v6275
        %v6277 = vpop.f32.mrb[0].mxu0
        %v6278 = vadd.f32 %v5947, %v6277
        %6279 = vmatprep.mubr.f32.mxu0 0.0
        %6280 = vmatmul.mubr.f32.gmra.mrb[0].mxu0 %v5835
        %v6281 = vpop.f32.mrb[0].mxu0
        %v6282 = vadd.f32 %v5943, %v6281
        %v6283 = vpop.f32.mrb[0].mxu0
        %v6284 = vadd.f32 %v5947, %v6283
        %6285 = vmatprep.mubr.f32.mxu0 0.0
        %6286 = vmatmul.mubr.f32.gmra.mrb[0].mxu0 %v5836
        %v6287 = vpop.f32.mrb[0].mxu0
        %v6288 = vadd.f32 %v5943, %v6287
        %v6289 = vpop.f32.mrb[0].mxu0
        %v6290 = vadd.f32 %v5947, %v6289
        %6291 = vmatprep.mubr.f32.mxu0 0.0
        %6292 = vmatmul.mubr.f32.gmra.mrb[0].mxu0 %v5837
        %v6293 = vpop.f32.mrb[0].mxu0
        %v6294 = vadd.f32 %v5943, %v6293
        %v6295 = vpop.f32.mrb[0].mxu0
        %v6296 = vadd.f32 %v5947, %v6295
        %6297 = vmatprep.mubr.f32.mxu0 0.0
        %6298 = vmatmul.mubr.f32.gmra.mrb[0].mxu0 %v5838
        %v6299 = vpop.f32.mrb[0].mxu0
        %v6300 = vadd.f32 %v5943, %v6299
        %v6301 = vpop.f32.mrb[0].mxu0
        %v6302 = vadd.f32 %v5947, %v6301
        %6303 = vmatprep.mubr.f32.mxu0 0.0
        %6304 = vmatmul.mubr.f32.gmra.mrb[0].mxu0 %v5839
        %v6305 = vpop.f32.mrb[0].mxu0
        %v6306 = vadd.f32 %v5943, %v6305
        %v6307 = vpop.f32.mrb[0].mxu0
        %v6308 = vadd.f32 %v5947, %v6307
        %6309 = vmatprep.mubr.f32.mxu0 0.0
        %6310 = vmatmul.mubr.f32.gmra.mrb[0].mxu0 %v5840
        %v6311 = vpop.f32.mrb[0].mxu0
        %v6312 = vadd.f32 %v5943, %v6311
        %v6313 = vpop.f32.mrb[0].mxu0
        %v6314 = vadd.f32 %v5947, %v6313
        %6315 = vmatprep.mubr.f32.mxu0 0.0
        %6316 = vmatmul.mubr.f32.gmra.mrb[0].mxu0 %v5841
        %v6317 = vpop.f32.mrb[0].mxu0
        %v6318 = vadd.f32 %v5943, %v6317
        %v6319 = vpop.f32.mrb[0].mxu0
        %v6320 = vadd.f32 %v5947, %v6319
        %6321 = vmatprep.mubr.f32.mxu0 0.0
        %6322 = vmatmul.mubr.f32.gmra.mrb[0].mxu0 %v5842
        %v6323 = vpop.f32.mrb[0].mxu0
        %v6324 = vadd.f32 %v5943, %v6323
        %v6325 = vpop.f32.mrb[0].mxu0
        %v6326 = vadd.f32 %v5947, %v6325
        %6327 = vmatprep.mubr.f32.mxu0 0.0
        %6328 = vmatmul.mubr.f32.gmra.mrb[0].mxu0 %v5843
        %v6329 = vpop.f32.mrb[0].mxu0
        %v6330 = vadd.f32 %v5943, %v6329
        %v6331 = vpop.f32.mrb[0].mxu0
        %v6332 = vadd.f32 %v5947, %v6331
        %6333 = vmatprep.mubr.f32.mxu0 0.0
        %6334 = vmatmul.mubr.f32.gmra.mrb[0].mxu0 %v5844
        %v6335 = vpop.f32.mrb[0].mxu0
        %v6336 = vadd.f32 %v5943, %v6335
        %v6337 = vpop.f32.mrb[0].mxu0
        %v6338 = vadd.f32 %v5947, %v6337
        %6339 = vmatprep.mubr.f32.mxu0 0.0
        %6340 = vmatmul.mubr.f32.gmra.mrb[0].mxu0 %v5845
        %v6341 = vpop.f32.mrb[0].mxu0
        %v6342 = vadd.f32 %v5943, %v6341
        %v6343 = vpop.f32.mrb[0].mxu0
        %v6344 = vadd.f32 %v5947, %v6343
        %6345 = vmatprep.mubr.f32.mxu0 0.0
        %6346 = vmatmul.mubr.f32.gmra.mrb[0].mxu0 %v5846
        %v6347 = vpop.f32.mrb[0].mxu0
        %v6348 = vadd.f32 %v5943, %v6347
        %v6349 = vpop.f32.mrb[0].mxu0
        %v6350 = vadd.f32 %v5947, %v6349
        %6351 = vmatprep.mubr.f32.mxu0 0.0
        %6352 = vmatmul.mubr.f32.gmra.mrb[0].mxu0 %v5847
        %v6353 = vpop.f32.mrb[0].mxu0
        %v6354 = vadd.f32 %v5943, %v6353
        %v6355 = vpop.f32.mrb[0].mxu0
        %v6356 = vadd.f32 %v5947, %v6355
        %6357 = vmatprep.mubr.f32.mxu0 0.0
        %6358 = vmatmul.mubr.f32.gmra.mrb[0].mxu0 %v5848
        %v6359 = vpop.f32.mrb[0].mxu0
        %v6360 = vadd.f32 %v5943, %v6359
        %v6361 = vpop.f32.mrb[0].mxu0
        %v6362 = vadd.f32 %v5947, %v6361
        %6363 = vmatprep.mubr.f32.mxu0 0.0
        %6364 = vmatmul.mubr.f32.gmra.mrb[0].mxu0 %v5849
        %v6365 = vpop.f32.mrb[0].mxu0
        %v6366 = vadd.f32 %v5943, %v6365
        %v6367 = vpop.f32.mrb[0].mxu0
        %v6368 = vadd.f32 %v5947, %v6367
        %6369 = vmatprep.mubr.f32.mxu0 0.0
        %6370 = vmatmul.mubr.f32.gmra.mrb[0].mxu0 %v5850
        %v6371 = vpop.f32.mrb[0].mxu0
        %v6372 = vadd.f32 %v5943, %v6371
        %v6373 = vpop.f32.mrb[0].mxu0
        %v6374 = vadd.f32 %v5947, %v6373
        %6375 = vmatprep.mubr.f32.mxu0 0.0
        %6376 = vmatmul.mubr.f32.gmra.mrb[0].mxu0 %v5851
        %v6377 = vpop.f32.mrb[0].mxu0
        %v6378 = vadd.f32 %v5943, %v6377
        %v6379 = vpop.f32.mrb[0].mxu0
        %v6380 = vadd.f32 %v5947, %v6379
        %6381 = vmatprep.mubr.f32.mxu0 0.0
        %6382 = vmatmul.mubr.f32.gmra.mrb[0].mxu0 %v5852
        %v6383 = vpop.f32.mrb[0].mxu0
        %v6384 = vadd.f32 %v5943, %v6383
        %v6385 = vpop.f32.mrb[0].mxu0
        %v6386 = vadd.f32 %v5947, %v6385
        %6387 = vmatprep.mubr.f32.mxu0 0.0
        %6388 = vmatmul.mubr.f32.gmra.mrb[0].mxu0 %v5853
        %v6389 = vpop.f32.mrb[0].mxu0
        %v6390 = vadd.f32 %v5943, %v6389
        %v6391 = vpop.f32.mrb[0].mxu0
        %v6392 = vadd.f32 %v5947, %v6391
        %6393 = vmatprep.mubr.f32.mxu0 0.0
        %6394 = vmatmul.mubr.f32.gmra.mrb[0].mxu0 %v5854
        %v6395 = vpop.f32.mrb[0].mxu0
        %v6396 = vadd.f32 %v5943, %v6395
        %v6397 = vpop.f32.mrb[0].mxu0
        %v6398 = vadd.f32 %v5947, %v6397
        %6399 = vmatprep.mubr.f32.mxu0 0.0
        %6400 = vmatmul.mubr.f32.gmra.mrb[0].mxu0 %v5855
        %v6401 = vpop.f32.mrb[0].mxu0
        %v6402 = vadd.f32 %v5943, %v6401
        %v6403 = vpop.f32.mrb[0].mxu0
        %v6404 = vadd.f32 %v5947, %v6403
        %6405 = vmatprep.mubr.f32.mxu0 0.0
        %6406 = vmatmul.mubr.f32.gmra.mrb[0].mxu0 %v5856
        %v6407 = vpop.f32.mrb[0].mxu0
        %v6408 = vadd.f32 %v5943, %v6407
        %v6409 = vpop.f32.mrb[0].mxu0
        %v6410 = vadd.f32 %v5947, %v6409
        %6411 = vmatprep.mubr.f32.mxu0 0.0
        %6412 = vmatmul.mubr.f32.gmra.mrb[0].mxu0 %v5857
        %v6413 = vpop.f32.mrb[0].mxu0
        %v6414 = vadd.f32 %v5943, %v6413
        %v6415 = vpop.f32.mrb[0].mxu0
        %v6416 = vadd.f32 %v5947, %v6415
        %6417 = vmatprep.mubr.f32.mxu0 0.0
        %6418 = vmatmul.mubr.f32.gmra.mrb[0].mxu0 %v5858
        %v6419 = vpop.f32.mrb[0].mxu0
        %v6420 = vadd.f32 %v5943, %v6419
        %v6421 = vpop.f32.mrb[0].mxu0
        %v6422 = vadd.f32 %v5947, %v6421
        %6423 = vmatprep.mubr.f32.mxu0 0.0
        %6424 = vmatmul.mubr.f32.gmra.mrb[0].mxu0 %v5859
        %v6425 = vpop.f32.mrb[0].mxu0
        %v6426 = vadd.f32 %v5943, %v6425
        %v6427 = vpop.f32.mrb[0].mxu0
        %v6428 = vadd.f32 %v5947, %v6427
        %6429 = vmatprep.mubr.f32.mxu0 0.0
        %6430 = vmatmul.mubr.f32.gmra.mrb[0].mxu0 %v5860
        %v6431 = vpop.f32.mrb[0].mxu0
        %v6432 = vadd.f32 %v5943, %v6431
        %v6433 = vpop.f32.mrb[0].mxu0
        %v6434 = vadd.f32 %v5947, %v6433
        %6435 = vmatprep.mubr.f32.mxu0 0.0
        %6436 = vmatmul.mubr.f32.gmra.mrb[0].mxu0 %v5861
        %v6437 = vpop.f32.mrb[0].mxu0
        %v6438 = vadd.f32 %v5943, %v6437
        %v6439 = vpop.f32.mrb[0].mxu0
        %v6440 = vadd.f32 %v5947, %v6439
        %6441 = vmatprep.mubr.f32.mxu0 0.0
        %6442 = vmatmul.mubr.f32.gmra.mrb[0].mxu0 %v5862
        %v6443 = vpop.f32.mrb[0].mxu0
        %v6444 = vadd.f32 %v5943, %v6443
        %v6445 = vpop.f32.mrb[0].mxu0
        %v6446 = vadd.f32 %v5947, %v6445
        %6447 = vmatprep.mubr.f32.mxu0 0.0
        %6448 = vmatmul.mubr.f32.gmra.mrb[0].mxu0 %v5863
        %v6449 = vpop.f32.mrb[0].mxu0
        %v6450 = vadd.f32 %v5943, %v6449
        %v6451 = vpop.f32.mrb[0].mxu0
        %v6452 = vadd.f32 %v5947, %v6451
        %6453 = vmatprep.mubr.f32.mxu0 0.0
        %6454 = vmatmul.mubr.f32.gmra.mrb[0].mxu0 %v5864
        %v6455 = vpop.f32.mrb[0].mxu0
        %v6456 = vadd.f32 %v5943, %v6455
        %v6457 = vpop.f32.mrb[0].mxu0
        %v6458 = vadd.f32 %v5947, %v6457
        %6459 = vmatprep.mubr.f32.mxu0 0.0
        %6460 = vmatmul.mubr.f32.gmra.mrb[0].mxu0 %v5865
        %v6461 = vpop.f32.mrb[0].mxu0
        %v6462 = vadd.f32 %v5943, %v6461
        %v6463 = vpop.f32.mrb[0].mxu0
        %v6464 = vadd.f32 %v5947, %v6463
        %6465 = vdwg.mxu0
        %v6466 = vmax.f32 %v6019, 0.0
        %v6467 = vmax.f32 %v6021, 0.0
        %v6468 = vmax.f32 %v6276, 0.0
        %v6469 = vmax.f32 %v6278, 0.0
        %v6470 = vmax.f32 %v6025, 0.0
        %v6471 = vmax.f32 %v6027, 0.0
        %v6472 = vmax.f32 %v6282, 0.0
        %v6473 = vmax.f32 %v6284, 0.0
        %v6474 = vmax.f32 %v6031, 0.0
        %v6475 = vmax.f32 %v6033, 0.0
        %v6476 = vmax.f32 %v6288, 0.0
        %v6477 = vmax.f32 %v6290, 0.0
        %v6478 = vmax.f32 %v6037, 0.0
        %v6479 = vmax.f32 %v6039, 0.0
        %v6480 = vmax.f32 %v6294, 0.0
        %v6481 = vmax.f32 %v6296, 0.0
        %v6482 = vmax.f32 %v6043, 0.0
        %v6483 = vmax.f32 %v6045, 0.0
        %v6484 = vmax.f32 %v6300, 0.0
        %v6485 = vmax.f32 %v6302, 0.0
        %v6486 = vmax.f32 %v6049, 0.0
        %v6487 = vmax.f32 %v6051, 0.0
        %v6488 = vmax.f32 %v6306, 0.0
        %v6489 = vmax.f32 %v6308, 0.0
        %v6490 = vmax.f32 %v6055, 0.0
        %v6491 = vmax.f32 %v6057, 0.0
        %v6492 = vmax.f32 %v6312, 0.0
        %v6493 = vmax.f32 %v6314, 0.0
        %v6494 = vmax.f32 %v6061, 0.0
        %v6495 = vmax.f32 %v6063, 0.0
        %v6496 = vmax.f32 %v6318, 0.0
        %v6497 = vmax.f32 %v6320, 0.0
        %v6498 = vmax.f32 %v6067, 0.0
        %v6499 = vmax.f32 %v6069, 0.0
        %v6500 = vmax.f32 %v6324, 0.0
        %v6501 = vmax.f32 %v6326, 0.0
        %v6502 = vmax.f32 %v6073, 0.0
        %v6503 = vmax.f32 %v6075, 0.0
        %v6504 = vmax.f32 %v6330, 0.0
        %v6505 = vmax.f32 %v6332, 0.0
        %v6506 = vmax.f32 %v6079, 0.0
        %v6507 = vmax.f32 %v6081, 0.0
        %v6508 = vmax.f32 %v6336, 0.0
        %v6509 = vmax.f32 %v6338, 0.0
        %v6510 = vmax.f32 %v6085, 0.0
        %v6511 = vmax.f32 %v6087, 0.0
        %v6512 = vmax.f32 %v6342, 0.0
        %v6513 = vmax.f32 %v6344, 0.0
        %v6514 = vmax.f32 %v6091, 0.0
        %v6515 = vmax.f32 %v6093, 0.0
        %v6516 = vmax.f32 %v6348, 0.0
        %v6517 = vmax.f32 %v6350, 0.0
        %v6518 = vmax.f32 %v6097, 0.0
        %v6519 = vmax.f32 %v6099, 0.0
        %v6520 = vmax.f32 %v6354, 0.0
        %v6521 = vmax.f32 %v6356, 0.0
        %v6522 = vmax.f32 %v6103, 0.0
        %v6523 = vmax.f32 %v6105, 0.0
        %v6524 = vmax.f32 %v6360, 0.0
        %v6525 = vmax.f32 %v6362, 0.0
        %v6526 = vmax.f32 %v6109, 0.0
        %v6527 = vmax.f32 %v6111, 0.0
        %v6528 = vmax.f32 %v6366, 0.0
        %v6529 = vmax.f32 %v6368, 0.0
        %v6530 = vmax.f32 %v6115, 0.0
        %v6531 = vmax.f32 %v6117, 0.0
        %v6532 = vmax.f32 %v6372, 0.0
        %v6533 = vmax.f32 %v6374, 0.0
        %v6534 = vmax.f32 %v6121, 0.0
        %v6535 = vmax.f32 %v6123, 0.0
        %v6536 = vmax.f32 %v6378, 0.0
        %v6537 = vmax.f32 %v6380, 0.0
        %v6538 = vmax.f32 %v6127, 0.0
        %v6539 = vmax.f32 %v6129, 0.0
        %v6540 = vmax.f32 %v6384, 0.0
        %v6541 = vmax.f32 %v6386, 0.0
        %v6542 = vmax.f32 %v6133, 0.0
        %v6543 = vmax.f32 %v6135, 0.0
        %v6544 = vmax.f32 %v6390, 0.0
        %v6545 = vmax.f32 %v6392, 0.0
        %v6546 = vmax.f32 %v6139, 0.0
        %v6547 = vmax.f32 %v6141, 0.0
        %v6548 = vmax.f32 %v6396, 0.0
        %v6549 = vmax.f32 %v6398, 0.0
        %v6550 = vmax.f32 %v6145, 0.0
        %v6551 = vmax.f32 %v6147, 0.0
        %v6552 = vmax.f32 %v6402, 0.0
        %v6553 = vmax.f32 %v6404, 0.0
        %v6554 = vmax.f32 %v6151, 0.0
        %v6555 = vmax.f32 %v6153, 0.0
        %v6556 = vmax.f32 %v6408, 0.0
        %v6557 = vmax.f32 %v6410, 0.0
        %v6558 = vmax.f32 %v6157, 0.0
        %v6559 = vmax.f32 %v6159, 0.0
        %v6560 = vmax.f32 %v6414, 0.0
        %v6561 = vmax.f32 %v6416, 0.0
        %v6562 = vmax.f32 %v6163, 0.0
        %v6563 = vmax.f32 %v6165, 0.0
        %v6564 = vmax.f32 %v6420, 0.0
        %v6565 = vmax.f32 %v6422, 0.0
        %v6566 = vmax.f32 %v6169, 0.0
        %v6567 = vmax.f32 %v6171, 0.0
        %v6568 = vmax.f32 %v6426, 0.0
        %v6569 = vmax.f32 %v6428, 0.0
        %v6570 = vmax.f32 %v6175, 0.0
        %v6571 = vmax.f32 %v6177, 0.0
        %v6572 = vmax.f32 %v6432, 0.0
        %v6573 = vmax.f32 %v6434, 0.0
        %v6574 = vmax.f32 %v6181, 0.0
        %v6575 = vmax.f32 %v6183, 0.0
        %v6576 = vmax.f32 %v6438, 0.0
        %v6577 = vmax.f32 %v6440, 0.0
        %v6578 = vmax.f32 %v6187, 0.0
        %v6579 = vmax.f32 %v6189, 0.0
        %v6580 = vmax.f32 %v6444, 0.0
        %v6581 = vmax.f32 %v6446, 0.0
        %v6582 = vmax.f32 %v6193, 0.0
        %v6583 = vmax.f32 %v6195, 0.0
        %v6584 = vmax.f32 %v6450, 0.0
        %v6585 = vmax.f32 %v6452, 0.0
        %v6586 = vmax.f32 %v6199, 0.0
        %v6587 = vmax.f32 %v6201, 0.0
        %v6588 = vmax.f32 %v6456, 0.0
        %v6589 = vmax.f32 %v6458, 0.0
        %v6590 = vmax.f32 %v6205, 0.0
        %v6591 = vmax.f32 %v6207, 0.0
        %v6592 = vmax.f32 %v6462, 0.0
        %v6593 = vmax.f32 %v6464, 0.0
        %v6594 = vld [vmem:[#allocation20] sm:$0xff]
        %v6595 = vld [vmem:[#allocation20 + $0x8] sm:$0xff]
        %v6596 = vld [vmem:[#allocation20 + $0x10] sm:$0xff]
        %v6597 = vld [vmem:[#allocation20 + $0x18] sm:$0xff]
        %v6598 = vld [vmem:[#allocation20 + $0x20] sm:$0xff]
        %v6599 = vld [vmem:[#allocation20 + $0x28] sm:$0xff]
        %v6600 = vld [vmem:[#allocation20 + $0x30] sm:$0xff]
        %v6601 = vld [vmem:[#allocation20 + $0x38] sm:$0xff]
        %v6602 = vld [vmem:[#allocation20 + $0x40] sm:$0xff]
        %v6603 = vld [vmem:[#allocation20 + $0x48] sm:$0xff]
        %v6604 = vld [vmem:[#allocation20 + $0x50] sm:$0xff]
        %v6605 = vld [vmem:[#allocation20 + $0x58] sm:$0xff]
        %v6606 = vld [vmem:[#allocation20 + $0x60] sm:$0xff]
        %v6607 = vld [vmem:[#allocation20 + $0x68] sm:$0xff]
        %v6608 = vld [vmem:[#allocation20 + $0x70] sm:$0xff]
        %v6609 = vld [vmem:[#allocation20 + $0x78] sm:$0xff]
        %v6610 = vld [vmem:[#allocation20 + $0x80] sm:$0xff]
        %v6611 = vld [vmem:[#allocation20 + $0x88] sm:$0xff]
        %v6612 = vld [vmem:[#allocation20 + $0x90] sm:$0xff]
        %v6613 = vld [vmem:[#allocation20 + $0x98] sm:$0xff]
        %v6614 = vld [vmem:[#allocation20 + $0xa0] sm:$0xff]
        %v6615 = vld [vmem:[#allocation20 + $0xa8] sm:$0xff]
        %v6616 = vld [vmem:[#allocation20 + $0xb0] sm:$0xff]
        %v6617 = vld [vmem:[#allocation20 + $0xb8] sm:$0xff]
        %v6618 = vld [vmem:[#allocation20 + $0xc0] sm:$0xff]
        %v6619 = vld [vmem:[#allocation20 + $0xc8] sm:$0xff]
        %v6620 = vld [vmem:[#allocation20 + $0xd0] sm:$0xff]
        %v6621 = vld [vmem:[#allocation20 + $0xd8] sm:$0xff]
        %v6622 = vld [vmem:[#allocation20 + $0xe0] sm:$0xff]
        %v6623 = vld [vmem:[#allocation20 + $0xe8] sm:$0xff]
        %v6624 = vld [vmem:[#allocation20 + $0xf0] sm:$0xff]
        %v6625 = vld [vmem:[#allocation20 + $0xf8] sm:$0xff]
        %v6626 = vld [vmem:[#allocation20 + $0x100] sm:$0xff]
        %v6627 = vld [vmem:[#allocation20 + $0x108] sm:$0xff]
        %v6628 = vld [vmem:[#allocation20 + $0x110] sm:$0xff]
        %v6629 = vld [vmem:[#allocation20 + $0x118] sm:$0xff]
        %v6630 = vld [vmem:[#allocation20 + $0x120] sm:$0xff]
        %v6631 = vld [vmem:[#allocation20 + $0x128] sm:$0xff]
        %v6632 = vld [vmem:[#allocation20 + $0x130] sm:$0xff]
        %v6633 = vld [vmem:[#allocation20 + $0x138] sm:$0xff]
        %v6634 = vld [vmem:[#allocation20 + $0x140] sm:$0xff]
        %v6635 = vld [vmem:[#allocation20 + $0x148] sm:$0xff]
        %v6636 = vld [vmem:[#allocation20 + $0x150] sm:$0xff]
        %v6637 = vld [vmem:[#allocation20 + $0x158] sm:$0xff]
        %v6638 = vld [vmem:[#allocation20 + $0x160] sm:$0xff]
        %v6639 = vld [vmem:[#allocation20 + $0x168] sm:$0xff]
        %v6640 = vld [vmem:[#allocation20 + $0x170] sm:$0xff]
        %v6641 = vld [vmem:[#allocation20 + $0x178] sm:$0xff]
        %v6642 = vld [vmem:[#allocation20 + $0x180] sm:$0xff]
        %v6643 = vld [vmem:[#allocation20 + $0x188] sm:$0xff]
        %v6644 = vld [vmem:[#allocation20 + $0x190] sm:$0xff]
        %v6645 = vld [vmem:[#allocation20 + $0x198] sm:$0xff]
        %v6646 = vld [vmem:[#allocation20 + $0x1a0] sm:$0xff]
        %v6647 = vld [vmem:[#allocation20 + $0x1a8] sm:$0xff]
        %v6648 = vld [vmem:[#allocation20 + $0x1b0] sm:$0xff]
        %v6649 = vld [vmem:[#allocation20 + $0x1b8] sm:$0xff]
        %v6650 = vld [vmem:[#allocation20 + $0x1c0] sm:$0xff]
        %v6651 = vld [vmem:[#allocation20 + $0x1c8] sm:$0xff]
        %v6652 = vld [vmem:[#allocation20 + $0x1d0] sm:$0xff]
        %v6653 = vld [vmem:[#allocation20 + $0x1d8] sm:$0xff]
        %v6654 = vld [vmem:[#allocation20 + $0x1e0] sm:$0xff]
        %v6655 = vld [vmem:[#allocation20 + $0x1e8] sm:$0xff]
        %v6656 = vld [vmem:[#allocation20 + $0x1f0] sm:$0xff]
        %v6657 = vld [vmem:[#allocation20 + $0x1f8] sm:$0xff]
        %v6658 = vld [vmem:[#allocation22] sm:$0x1]
        %v6660 = vlaneseq
        %v6661 = vshrl.u32 %v6660, 7
        %v6662 = vsub.s32 0, %v6661
        %v6663 = vrot.slane %v6658, %v6662
        %6665 = vmatprep.subr.mxu0 0.0
        %6666 = vmatpush1.msra.mxu0 %v6594
        %6667 = vmatprep.subr.mxu0 0.0
        %6668 = vmatpush1.msra.mxu0 %v6595
        %6669 = vmatprep.subr.mxu0 0.0
        %6670 = vmatpush1.msra.mxu0 %v6596
        %6671 = vmatprep.subr.mxu0 0.0
        %6672 = vmatpush1.msra.mxu0 %v6597
        %6673 = vmatprep.subr.mxu0 0.0
        %6674 = vmatpush1.msra.mxu0 %v6598
        %6675 = vmatprep.subr.mxu0 0.0
        %6676 = vmatpush1.msra.mxu0 %v6599
        %6677 = vmatprep.subr.mxu0 0.0
        %6678 = vmatpush1.msra.mxu0 %v6600
        %6679 = vmatprep.subr.mxu0 0.0
        %6680 = vmatpush1.msra.mxu0 %v6601
        %6681 = vmatprep.subr.mxu0 0.0
        %6682 = vmatpush1.msra.mxu0 %v6602
        %6683 = vmatprep.subr.mxu0 0.0
        %6684 = vmatpush1.msra.mxu0 %v6603
        %6685 = vmatprep.subr.mxu0 0.0
        %6686 = vmatpush1.msra.mxu0 %v6604
        %6687 = vmatprep.subr.mxu0 0.0
        %6688 = vmatpush1.msra.mxu0 %v6605
        %6689 = vmatprep.subr.mxu0 0.0
        %6690 = vmatpush1.msra.mxu0 %v6606
        %6691 = vmatprep.subr.mxu0 0.0
        %6692 = vmatpush1.msra.mxu0 %v6607
        %6693 = vmatprep.subr.mxu0 0.0
        %6694 = vmatpush1.msra.mxu0 %v6608
        %6695 = vmatprep.subr.mxu0 0.0
        %6696 = vmatpush1.msra.mxu0 %v6609
        %6697 = vmatprep.subr.mxu0 0.0
        %6698 = vmatpush1.msra.mxu0 %v6610
        %6699 = vmatprep.subr.mxu0 0.0
        %6700 = vmatpush1.msra.mxu0 %v6611
        %6701 = vmatprep.subr.mxu0 0.0
        %6702 = vmatpush1.msra.mxu0 %v6612
        %6703 = vmatprep.subr.mxu0 0.0
        %6704 = vmatpush1.msra.mxu0 %v6613
        %6705 = vmatprep.subr.mxu0 0.0
        %6706 = vmatpush1.msra.mxu0 %v6614
        %6707 = vmatprep.subr.mxu0 0.0
        %6708 = vmatpush1.msra.mxu0 %v6615
        %6709 = vmatprep.subr.mxu0 0.0
        %6710 = vmatpush1.msra.mxu0 %v6616
        %6711 = vmatprep.subr.mxu0 0.0
        %6712 = vmatpush1.msra.mxu0 %v6617
        %6713 = vmatprep.subr.mxu0 0.0
        %6714 = vmatpush1.msra.mxu0 %v6618
        %6715 = vmatprep.subr.mxu0 0.0
        %6716 = vmatpush1.msra.mxu0 %v6619
        %6717 = vmatprep.subr.mxu0 0.0
        %6718 = vmatpush1.msra.mxu0 %v6620
        %6719 = vmatprep.subr.mxu0 0.0
        %6720 = vmatpush1.msra.mxu0 %v6621
        %6721 = vmatprep.subr.mxu0 0.0
        %6722 = vmatpush1.msra.mxu0 %v6622
        %6723 = vmatprep.subr.mxu0 0.0
        %6724 = vmatpush1.msra.mxu0 %v6623
        %6725 = vmatprep.subr.mxu0 0.0
        %6726 = vmatpush1.msra.mxu0 %v6624
        %6727 = vmatprep.subr.mxu0 0.0
        %6728 = vmatpush1.msra.mxu0 %v6625
        %6729 = vmatprep.mubr.f32.mxu0 %v6467
        %6730 = vmatmul.mubr.f32.gmra.mrb[0].mxu0 %v6466
        %v6731 = vpop.f32.mrb[0].mxu0
        %v6732 = vadd.f32 %v6663, %v6731
        %v6733 = vpop.f32.mrb[0].mxu0
        %6734 = vmatprep.mubr.f32.mxu0 %v6471
        %6735 = vmatmul.mubr.f32.gmra.mrb[0].mxu0 %v6470
        %v6736 = vpop.f32.mrb[0].mxu0
        %v6737 = vadd.f32 %v6663, %v6736
        %v6738 = vpop.f32.mrb[0].mxu0
        %6739 = vmatprep.mubr.f32.mxu0 %v6475
        %6740 = vmatmul.mubr.f32.gmra.mrb[0].mxu0 %v6474
        %v6741 = vpop.f32.mrb[0].mxu0
        %v6742 = vadd.f32 %v6663, %v6741
        %v6743 = vpop.f32.mrb[0].mxu0
        %6744 = vmatprep.mubr.f32.mxu0 %v6479
        %6745 = vmatmul.mubr.f32.gmra.mrb[0].mxu0 %v6478
        %v6746 = vpop.f32.mrb[0].mxu0
        %v6747 = vadd.f32 %v6663, %v6746
        %v6748 = vpop.f32.mrb[0].mxu0
        %6749 = vmatprep.mubr.f32.mxu0 %v6483
        %6750 = vmatmul.mubr.f32.gmra.mrb[0].mxu0 %v6482
        %v6751 = vpop.f32.mrb[0].mxu0
        %v6752 = vadd.f32 %v6663, %v6751
        %v6753 = vpop.f32.mrb[0].mxu0
        %6754 = vmatprep.mubr.f32.mxu0 %v6487
        %6755 = vmatmul.mubr.f32.gmra.mrb[0].mxu0 %v6486
        %v6756 = vpop.f32.mrb[0].mxu0
        %v6757 = vadd.f32 %v6663, %v6756
        %v6758 = vpop.f32.mrb[0].mxu0
        %6759 = vmatprep.mubr.f32.mxu0 %v6491
        %6760 = vmatmul.mubr.f32.gmra.mrb[0].mxu0 %v6490
        %v6761 = vpop.f32.mrb[0].mxu0
        %v6762 = vadd.f32 %v6663, %v6761
        %v6763 = vpop.f32.mrb[0].mxu0
        %6764 = vmatprep.mubr.f32.mxu0 %v6495
        %6765 = vmatmul.mubr.f32.gmra.mrb[0].mxu0 %v6494
        %v6766 = vpop.f32.mrb[0].mxu0
        %v6767 = vadd.f32 %v6663, %v6766
        %v6768 = vpop.f32.mrb[0].mxu0
        %6769 = vmatprep.mubr.f32.mxu0 %v6499
        %6770 = vmatmul.mubr.f32.gmra.mrb[0].mxu0 %v6498
        %v6771 = vpop.f32.mrb[0].mxu0
        %v6772 = vadd.f32 %v6663, %v6771
        %v6773 = vpop.f32.mrb[0].mxu0
        %6774 = vmatprep.mubr.f32.mxu0 %v6503
        %6775 = vmatmul.mubr.f32.gmra.mrb[0].mxu0 %v6502
        %v6776 = vpop.f32.mrb[0].mxu0
        %v6777 = vadd.f32 %v6663, %v6776
        %v6778 = vpop.f32.mrb[0].mxu0
        %6779 = vmatprep.mubr.f32.mxu0 %v6507
        %6780 = vmatmul.mubr.f32.gmra.mrb[0].mxu0 %v6506
        %v6781 = vpop.f32.mrb[0].mxu0
        %v6782 = vadd.f32 %v6663, %v6781
        %v6783 = vpop.f32.mrb[0].mxu0
        %6784 = vmatprep.mubr.f32.mxu0 %v6511
        %6785 = vmatmul.mubr.f32.gmra.mrb[0].mxu0 %v6510
        %v6786 = vpop.f32.mrb[0].mxu0
        %v6787 = vadd.f32 %v6663, %v6786
        %v6788 = vpop.f32.mrb[0].mxu0
        %6789 = vmatprep.mubr.f32.mxu0 %v6515
        %6790 = vmatmul.mubr.f32.gmra.mrb[0].mxu0 %v6514
        %v6791 = vpop.f32.mrb[0].mxu0
        %v6792 = vadd.f32 %v6663, %v6791
        %v6793 = vpop.f32.mrb[0].mxu0
        %6794 = vmatprep.mubr.f32.mxu0 %v6519
        %6795 = vmatmul.mubr.f32.gmra.mrb[0].mxu0 %v6518
        %v6796 = vpop.f32.mrb[0].mxu0
        %v6797 = vadd.f32 %v6663, %v6796
        %v6798 = vpop.f32.mrb[0].mxu0
        %6799 = vmatprep.mubr.f32.mxu0 %v6523
        %6800 = vmatmul.mubr.f32.gmra.mrb[0].mxu0 %v6522
        %v6801 = vpop.f32.mrb[0].mxu0
        %v6802 = vadd.f32 %v6663, %v6801
        %v6803 = vpop.f32.mrb[0].mxu0
        %6804 = vmatprep.mubr.f32.mxu0 %v6527
        %6805 = vmatmul.mubr.f32.gmra.mrb[0].mxu0 %v6526
        %v6806 = vpop.f32.mrb[0].mxu0
        %v6807 = vadd.f32 %v6663, %v6806
        %v6808 = vpop.f32.mrb[0].mxu0
        %6809 = vmatprep.mubr.f32.mxu0 %v6531
        %6810 = vmatmul.mubr.f32.gmra.mrb[0].mxu0 %v6530
        %v6811 = vpop.f32.mrb[0].mxu0
        %v6812 = vadd.f32 %v6663, %v6811
        %v6813 = vpop.f32.mrb[0].mxu0
        %6814 = vmatprep.mubr.f32.mxu0 %v6535
        %6815 = vmatmul.mubr.f32.gmra.mrb[0].mxu0 %v6534
        %v6816 = vpop.f32.mrb[0].mxu0
        %v6817 = vadd.f32 %v6663, %v6816
        %v6818 = vpop.f32.mrb[0].mxu0
        %6819 = vmatprep.mubr.f32.mxu0 %v6539
        %6820 = vmatmul.mubr.f32.gmra.mrb[0].mxu0 %v6538
        %v6821 = vpop.f32.mrb[0].mxu0
        %v6822 = vadd.f32 %v6663, %v6821
        %v6823 = vpop.f32.mrb[0].mxu0
        %6824 = vmatprep.mubr.f32.mxu0 %v6543
        %6825 = vmatmul.mubr.f32.gmra.mrb[0].mxu0 %v6542
        %v6826 = vpop.f32.mrb[0].mxu0
        %v6827 = vadd.f32 %v6663, %v6826
        %v6828 = vpop.f32.mrb[0].mxu0
        %6829 = vmatprep.mubr.f32.mxu0 %v6547
        %6830 = vmatmul.mubr.f32.gmra.mrb[0].mxu0 %v6546
        %v6831 = vpop.f32.mrb[0].mxu0
        %v6832 = vadd.f32 %v6663, %v6831
        %v6833 = vpop.f32.mrb[0].mxu0
        %6834 = vmatprep.mubr.f32.mxu0 %v6551
        %6835 = vmatmul.mubr.f32.gmra.mrb[0].mxu0 %v6550
        %v6836 = vpop.f32.mrb[0].mxu0
        %v6837 = vadd.f32 %v6663, %v6836
        %v6838 = vpop.f32.mrb[0].mxu0
        %6839 = vmatprep.mubr.f32.mxu0 %v6555
        %6840 = vmatmul.mubr.f32.gmra.mrb[0].mxu0 %v6554
        %v6841 = vpop.f32.mrb[0].mxu0
        %v6842 = vadd.f32 %v6663, %v6841
        %v6843 = vpop.f32.mrb[0].mxu0
        %6844 = vmatprep.mubr.f32.mxu0 %v6559
        %6845 = vmatmul.mubr.f32.gmra.mrb[0].mxu0 %v6558
        %v6846 = vpop.f32.mrb[0].mxu0
        %v6847 = vadd.f32 %v6663, %v6846
        %v6848 = vpop.f32.mrb[0].mxu0
        %6849 = vmatprep.mubr.f32.mxu0 %v6563
        %6850 = vmatmul.mubr.f32.gmra.mrb[0].mxu0 %v6562
        %v6851 = vpop.f32.mrb[0].mxu0
        %v6852 = vadd.f32 %v6663, %v6851
        %v6853 = vpop.f32.mrb[0].mxu0
        %6854 = vmatprep.mubr.f32.mxu0 %v6567
        %6855 = vmatmul.mubr.f32.gmra.mrb[0].mxu0 %v6566
        %v6856 = vpop.f32.mrb[0].mxu0
        %v6857 = vadd.f32 %v6663, %v6856
        %v6858 = vpop.f32.mrb[0].mxu0
        %6859 = vmatprep.mubr.f32.mxu0 %v6571
        %6860 = vmatmul.mubr.f32.gmra.mrb[0].mxu0 %v6570
        %v6861 = vpop.f32.mrb[0].mxu0
        %v6862 = vadd.f32 %v6663, %v6861
        %v6863 = vpop.f32.mrb[0].mxu0
        %6864 = vmatprep.mubr.f32.mxu0 %v6575
        %6865 = vmatmul.mubr.f32.gmra.mrb[0].mxu0 %v6574
        %v6866 = vpop.f32.mrb[0].mxu0
        %v6867 = vadd.f32 %v6663, %v6866
        %v6868 = vpop.f32.mrb[0].mxu0
        %6869 = vmatprep.mubr.f32.mxu0 %v6579
        %6870 = vmatmul.mubr.f32.gmra.mrb[0].mxu0 %v6578
        %v6871 = vpop.f32.mrb[0].mxu0
        %v6872 = vadd.f32 %v6663, %v6871
        %v6873 = vpop.f32.mrb[0].mxu0
        %6874 = vmatprep.mubr.f32.mxu0 %v6583
        %6875 = vmatmul.mubr.f32.gmra.mrb[0].mxu0 %v6582
        %v6876 = vpop.f32.mrb[0].mxu0
        %v6877 = vadd.f32 %v6663, %v6876
        %v6878 = vpop.f32.mrb[0].mxu0
        %6879 = vmatprep.mubr.f32.mxu0 %v6587
        %6880 = vmatmul.mubr.f32.gmra.mrb[0].mxu0 %v6586
        %v6881 = vpop.f32.mrb[0].mxu0
        %v6882 = vadd.f32 %v6663, %v6881
        %v6883 = vpop.f32.mrb[0].mxu0
        %6884 = vmatprep.mubr.f32.mxu0 %v6591
        %6885 = vmatmul.mubr.f32.gmra.mrb[0].mxu0 %v6590
        %v6886 = vpop.f32.mrb[0].mxu0
        %v6887 = vadd.f32 %v6663, %v6886
        %v6888 = vpop.f32.mrb[0].mxu0
        %6889 = vdwg.mxu0
        %6890 = vmatprep.subr.mxu0 0.0
        %6891 = vmatpush1.msra.mxu0 %v6626
        %6892 = vmatprep.subr.mxu0 0.0
        %6893 = vmatpush1.msra.mxu0 %v6627
        %6894 = vmatprep.subr.mxu0 0.0
        %6895 = vmatpush1.msra.mxu0 %v6628
        %6896 = vmatprep.subr.mxu0 0.0
        %6897 = vmatpush1.msra.mxu0 %v6629
        %6898 = vmatprep.subr.mxu0 0.0
        %6899 = vmatpush1.msra.mxu0 %v6630
        %6900 = vmatprep.subr.mxu0 0.0
        %6901 = vmatpush1.msra.mxu0 %v6631
        %6902 = vmatprep.subr.mxu0 0.0
        %6903 = vmatpush1.msra.mxu0 %v6632
        %6904 = vmatprep.subr.mxu0 0.0
        %6905 = vmatpush1.msra.mxu0 %v6633
        %6906 = vmatprep.subr.mxu0 0.0
        %6907 = vmatpush1.msra.mxu0 %v6634
        %6908 = vmatprep.subr.mxu0 0.0
        %6909 = vmatpush1.msra.mxu0 %v6635
        %6910 = vmatprep.subr.mxu0 0.0
        %6911 = vmatpush1.msra.mxu0 %v6636
        %6912 = vmatprep.subr.mxu0 0.0
        %6913 = vmatpush1.msra.mxu0 %v6637
        %6914 = vmatprep.subr.mxu0 0.0
        %6915 = vmatpush1.msra.mxu0 %v6638
        %6916 = vmatprep.subr.mxu0 0.0
        %6917 = vmatpush1.msra.mxu0 %v6639
        %6918 = vmatprep.subr.mxu0 0.0
        %6919 = vmatpush1.msra.mxu0 %v6640
        %6920 = vmatprep.subr.mxu0 0.0
        %6921 = vmatpush1.msra.mxu0 %v6641
        %6922 = vmatprep.subr.mxu0 0.0
        %6923 = vmatpush1.msra.mxu0 %v6642
        %6924 = vmatprep.subr.mxu0 0.0
        %6925 = vmatpush1.msra.mxu0 %v6643
        %6926 = vmatprep.subr.mxu0 0.0
        %6927 = vmatpush1.msra.mxu0 %v6644
        %6928 = vmatprep.subr.mxu0 0.0
        %6929 = vmatpush1.msra.mxu0 %v6645
        %6930 = vmatprep.subr.mxu0 0.0
        %6931 = vmatpush1.msra.mxu0 %v6646
        %6932 = vmatprep.subr.mxu0 0.0
        %6933 = vmatpush1.msra.mxu0 %v6647
        %6934 = vmatprep.subr.mxu0 0.0
        %6935 = vmatpush1.msra.mxu0 %v6648
        %6936 = vmatprep.subr.mxu0 0.0
        %6937 = vmatpush1.msra.mxu0 %v6649
        %6938 = vmatprep.subr.mxu0 0.0
        %6939 = vmatpush1.msra.mxu0 %v6650
        %6940 = vmatprep.subr.mxu0 0.0
        %6941 = vmatpush1.msra.mxu0 %v6651
        %6942 = vmatprep.subr.mxu0 0.0
        %6943 = vmatpush1.msra.mxu0 %v6652
        %6944 = vmatprep.subr.mxu0 0.0
        %6945 = vmatpush1.msra.mxu0 %v6653
        %6946 = vmatprep.subr.mxu0 0.0
        %6947 = vmatpush1.msra.mxu0 %v6654
        %6948 = vmatprep.subr.mxu0 0.0
        %6949 = vmatpush1.msra.mxu0 %v6655
        %6950 = vmatprep.subr.mxu0 0.0
        %6951 = vmatpush1.msra.mxu0 %v6656
        %6952 = vmatprep.subr.mxu0 0.0
        %6953 = vmatpush1.msra.mxu0 %v6657
        %6954 = vmatprep.mubr.f32.mxu0 %v6469
        %6955 = vmatmul.mubr.f32.gmra.mrb[0].mxu0 %v6468
        %v6956 = vpop.f32.mrb[0].mxu0
        %v6957 = vadd.f32 %v6732, %v6956
        %v6958 = vpop.f32.mrb[0].mxu0
        %6959 = vmatprep.mubr.f32.mxu0 %v6473
        %6960 = vmatmul.mubr.f32.gmra.mrb[0].mxu0 %v6472
        %v6961 = vpop.f32.mrb[0].mxu0
        %v6962 = vadd.f32 %v6737, %v6961
        %v6963 = vpop.f32.mrb[0].mxu0
        %6964 = vmatprep.mubr.f32.mxu0 %v6477
        %6965 = vmatmul.mubr.f32.gmra.mrb[0].mxu0 %v6476
        %v6966 = vpop.f32.mrb[0].mxu0
        %v6967 = vadd.f32 %v6742, %v6966
        %v6968 = vpop.f32.mrb[0].mxu0
        %6969 = vmatprep.mubr.f32.mxu0 %v6481
        %6970 = vmatmul.mubr.f32.gmra.mrb[0].mxu0 %v6480
        %v6971 = vpop.f32.mrb[0].mxu0
        %v6972 = vadd.f32 %v6747, %v6971
        %v6973 = vpop.f32.mrb[0].mxu0
        %6974 = vmatprep.mubr.f32.mxu0 %v6485
        %6975 = vmatmul.mubr.f32.gmra.mrb[0].mxu0 %v6484
        %v6976 = vpop.f32.mrb[0].mxu0
        %v6977 = vadd.f32 %v6752, %v6976
        %v6978 = vpop.f32.mrb[0].mxu0
        %6979 = vmatprep.mubr.f32.mxu0 %v6489
        %6980 = vmatmul.mubr.f32.gmra.mrb[0].mxu0 %v6488
        %v6981 = vpop.f32.mrb[0].mxu0
        %v6982 = vadd.f32 %v6757, %v6981
        %v6983 = vpop.f32.mrb[0].mxu0
        %6984 = vmatprep.mubr.f32.mxu0 %v6493
        %6985 = vmatmul.mubr.f32.gmra.mrb[0].mxu0 %v6492
        %v6986 = vpop.f32.mrb[0].mxu0
        %v6987 = vadd.f32 %v6762, %v6986
        %v6988 = vpop.f32.mrb[0].mxu0
        %6989 = vmatprep.mubr.f32.mxu0 %v6497
        %6990 = vmatmul.mubr.f32.gmra.mrb[0].mxu0 %v6496
        %v6991 = vpop.f32.mrb[0].mxu0
        %v6992 = vadd.f32 %v6767, %v6991
        %v6993 = vpop.f32.mrb[0].mxu0
        %6994 = vmatprep.mubr.f32.mxu0 %v6501
        %6995 = vmatmul.mubr.f32.gmra.mrb[0].mxu0 %v6500
        %v6996 = vpop.f32.mrb[0].mxu0
        %v6997 = vadd.f32 %v6772, %v6996
        %v6998 = vpop.f32.mrb[0].mxu0
        %6999 = vmatprep.mubr.f32.mxu0 %v6505
        %7000 = vmatmul.mubr.f32.gmra.mrb[0].mxu0 %v6504
        %v7001 = vpop.f32.mrb[0].mxu0
        %v7002 = vadd.f32 %v6777, %v7001
        %v7003 = vpop.f32.mrb[0].mxu0
        %7004 = vmatprep.mubr.f32.mxu0 %v6509
        %7005 = vmatmul.mubr.f32.gmra.mrb[0].mxu0 %v6508
        %v7006 = vpop.f32.mrb[0].mxu0
        %v7007 = vadd.f32 %v6782, %v7006
        %v7008 = vpop.f32.mrb[0].mxu0
        %7009 = vmatprep.mubr.f32.mxu0 %v6513
        %7010 = vmatmul.mubr.f32.gmra.mrb[0].mxu0 %v6512
        %v7011 = vpop.f32.mrb[0].mxu0
        %v7012 = vadd.f32 %v6787, %v7011
        %v7013 = vpop.f32.mrb[0].mxu0
        %7014 = vmatprep.mubr.f32.mxu0 %v6517
        %7015 = vmatmul.mubr.f32.gmra.mrb[0].mxu0 %v6516
        %v7016 = vpop.f32.mrb[0].mxu0
        %v7017 = vadd.f32 %v6792, %v7016
        %v7018 = vpop.f32.mrb[0].mxu0
        %7019 = vmatprep.mubr.f32.mxu0 %v6521
        %7020 = vmatmul.mubr.f32.gmra.mrb[0].mxu0 %v6520
        %v7021 = vpop.f32.mrb[0].mxu0
        %v7022 = vadd.f32 %v6797, %v7021
        %v7023 = vpop.f32.mrb[0].mxu0
        %7024 = vmatprep.mubr.f32.mxu0 %v6525
        %7025 = vmatmul.mubr.f32.gmra.mrb[0].mxu0 %v6524
        %v7026 = vpop.f32.mrb[0].mxu0
        %v7027 = vadd.f32 %v6802, %v7026
        %v7028 = vpop.f32.mrb[0].mxu0
        %7029 = vmatprep.mubr.f32.mxu0 %v6529
        %7030 = vmatmul.mubr.f32.gmra.mrb[0].mxu0 %v6528
        %v7031 = vpop.f32.mrb[0].mxu0
        %v7032 = vadd.f32 %v6807, %v7031
        %v7033 = vpop.f32.mrb[0].mxu0
        %7034 = vmatprep.mubr.f32.mxu0 %v6533
        %7035 = vmatmul.mubr.f32.gmra.mrb[0].mxu0 %v6532
        %v7036 = vpop.f32.mrb[0].mxu0
        %v7037 = vadd.f32 %v6812, %v7036
        %v7038 = vpop.f32.mrb[0].mxu0
        %7039 = vmatprep.mubr.f32.mxu0 %v6537
        %7040 = vmatmul.mubr.f32.gmra.mrb[0].mxu0 %v6536
        %v7041 = vpop.f32.mrb[0].mxu0
        %v7042 = vadd.f32 %v6817, %v7041
        %v7043 = vpop.f32.mrb[0].mxu0
        %7044 = vmatprep.mubr.f32.mxu0 %v6541
        %7045 = vmatmul.mubr.f32.gmra.mrb[0].mxu0 %v6540
        %v7046 = vpop.f32.mrb[0].mxu0
        %v7047 = vadd.f32 %v6822, %v7046
        %v7048 = vpop.f32.mrb[0].mxu0
        %7049 = vmatprep.mubr.f32.mxu0 %v6545
        %7050 = vmatmul.mubr.f32.gmra.mrb[0].mxu0 %v6544
        %v7051 = vpop.f32.mrb[0].mxu0
        %v7052 = vadd.f32 %v6827, %v7051
        %v7053 = vpop.f32.mrb[0].mxu0
        %7054 = vmatprep.mubr.f32.mxu0 %v6549
        %7055 = vmatmul.mubr.f32.gmra.mrb[0].mxu0 %v6548
        %v7056 = vpop.f32.mrb[0].mxu0
        %v7057 = vadd.f32 %v6832, %v7056
        %v7058 = vpop.f32.mrb[0].mxu0
        %7059 = vmatprep.mubr.f32.mxu0 %v6553
        %7060 = vmatmul.mubr.f32.gmra.mrb[0].mxu0 %v6552
        %v7061 = vpop.f32.mrb[0].mxu0
        %v7062 = vadd.f32 %v6837, %v7061
        %v7063 = vpop.f32.mrb[0].mxu0
        %7064 = vmatprep.mubr.f32.mxu0 %v6557
        %7065 = vmatmul.mubr.f32.gmra.mrb[0].mxu0 %v6556
        %v7066 = vpop.f32.mrb[0].mxu0
        %v7067 = vadd.f32 %v6842, %v7066
        %v7068 = vpop.f32.mrb[0].mxu0
        %7069 = vmatprep.mubr.f32.mxu0 %v6561
        %7070 = vmatmul.mubr.f32.gmra.mrb[0].mxu0 %v6560
        %v7071 = vpop.f32.mrb[0].mxu0
        %v7072 = vadd.f32 %v6847, %v7071
        %v7073 = vpop.f32.mrb[0].mxu0
        %7074 = vmatprep.mubr.f32.mxu0 %v6565
        %7075 = vmatmul.mubr.f32.gmra.mrb[0].mxu0 %v6564
        %v7076 = vpop.f32.mrb[0].mxu0
        %v7077 = vadd.f32 %v6852, %v7076
        %v7078 = vpop.f32.mrb[0].mxu0
        %7079 = vmatprep.mubr.f32.mxu0 %v6569
        %7080 = vmatmul.mubr.f32.gmra.mrb[0].mxu0 %v6568
        %v7081 = vpop.f32.mrb[0].mxu0
        %v7082 = vadd.f32 %v6857, %v7081
        %v7083 = vpop.f32.mrb[0].mxu0
        %7084 = vmatprep.mubr.f32.mxu0 %v6573
        %7085 = vmatmul.mubr.f32.gmra.mrb[0].mxu0 %v6572
        %v7086 = vpop.f32.mrb[0].mxu0
        %v7087 = vadd.f32 %v6862, %v7086
        %v7088 = vpop.f32.mrb[0].mxu0
        %7089 = vmatprep.mubr.f32.mxu0 %v6577
        %7090 = vmatmul.mubr.f32.gmra.mrb[0].mxu0 %v6576
        %v7091 = vpop.f32.mrb[0].mxu0
        %v7092 = vadd.f32 %v6867, %v7091
        %v7093 = vpop.f32.mrb[0].mxu0
        %7094 = vmatprep.mubr.f32.mxu0 %v6581
        %7095 = vmatmul.mubr.f32.gmra.mrb[0].mxu0 %v6580
        %v7096 = vpop.f32.mrb[0].mxu0
        %v7097 = vadd.f32 %v6872, %v7096
        %v7098 = vpop.f32.mrb[0].mxu0
        %7099 = vmatprep.mubr.f32.mxu0 %v6585
        %7100 = vmatmul.mubr.f32.gmra.mrb[0].mxu0 %v6584
        %v7101 = vpop.f32.mrb[0].mxu0
        %v7102 = vadd.f32 %v6877, %v7101
        %v7103 = vpop.f32.mrb[0].mxu0
        %7104 = vmatprep.mubr.f32.mxu0 %v6589
        %7105 = vmatmul.mubr.f32.gmra.mrb[0].mxu0 %v6588
        %v7106 = vpop.f32.mrb[0].mxu0
        %v7107 = vadd.f32 %v6882, %v7106
        %v7108 = vpop.f32.mrb[0].mxu0
        %7109 = vmatprep.mubr.f32.mxu0 %v6593
        %7110 = vmatmul.mubr.f32.gmra.mrb[0].mxu0 %v6592
        %v7111 = vpop.f32.mrb[0].mxu0
        %v7112 = vadd.f32 %v6887, %v7111
        %v7113 = vpop.f32.mrb[0].mxu0
        %7114 = vdwg.mxu0
        %v7115 = vadd.f32 %v5404, %v6957
        %v7116 = vadd.f32 %v5405, %v6962
        %v7117 = vadd.f32 %v5406, %v6967
        %v7118 = vadd.f32 %v5407, %v6972
        %v7119 = vadd.f32 %v5408, %v6977
        %v7120 = vadd.f32 %v5409, %v6982
        %v7121 = vadd.f32 %v5410, %v6987
        %v7122 = vadd.f32 %v5411, %v6992
        %v7123 = vadd.f32 %v5412, %v6997
        %v7124 = vadd.f32 %v5413, %v7002
        %v7125 = vadd.f32 %v5414, %v7007
        %v7126 = vadd.f32 %v5415, %v7012
        %v7127 = vadd.f32 %v5416, %v7017
        %v7128 = vadd.f32 %v5417, %v7022
        %v7129 = vadd.f32 %v5418, %v7027
        %v7130 = vadd.f32 %v5419, %v7032
        %v7131 = vadd.f32 %v5420, %v7037
        %v7132 = vadd.f32 %v5421, %v7042
        %v7133 = vadd.f32 %v5422, %v7047
        %v7134 = vadd.f32 %v5423, %v7052
        %v7135 = vadd.f32 %v5424, %v7057
        %v7136 = vadd.f32 %v5425, %v7062
        %v7137 = vadd.f32 %v5426, %v7067
        %v7138 = vadd.f32 %v5427, %v7072
        %v7139 = vadd.f32 %v5428, %v7077
        %v7140 = vadd.f32 %v5429, %v7082
        %v7141 = vadd.f32 %v5430, %v7087
        %v7142 = vadd.f32 %v5431, %v7092
        %v7143 = vadd.f32 %v5432, %v7097
        %v7144 = vadd.f32 %v5433, %v7102
        %v7145 = vadd.f32 %v5434, %v7107
        %v7146 = vadd.f32 %v5435, %v7112
        %7147 = vst [vmem:[%s618] sm:$0xff] %v7115
        %7148 = vst [vmem:[%s618 + $0x8] sm:$0xff] %v7116
        %7149 = vst [vmem:[%s618 + $0x10] sm:$0xff] %v7117
        %7150 = vst [vmem:[%s618 + $0x18] sm:$0xff] %v7118
        %7151 = vst [vmem:[%s618 + $0x20] sm:$0xff] %v7119
        %7152 = vst [vmem:[%s618 + $0x28] sm:$0xff] %v7120
        %7153 = vst [vmem:[%s618 + $0x30] sm:$0xff] %v7121
        %7154 = vst [vmem:[%s618 + $0x38] sm:$0xff] %v7122
        %7155 = vst [vmem:[%s618 + $0x40] sm:$0xff] %v7123
        %7156 = vst [vmem:[%s618 + $0x48] sm:$0xff] %v7124
        %7157 = vst [vmem:[%s618 + $0x50] sm:$0xff] %v7125
        %7158 = vst [vmem:[%s618 + $0x58] sm:$0xff] %v7126
        %7159 = vst [vmem:[%s618 + $0x60] sm:$0xff] %v7127
        %7160 = vst [vmem:[%s618 + $0x68] sm:$0xff] %v7128
        %7161 = vst [vmem:[%s618 + $0x70] sm:$0xff] %v7129
        %7162 = vst [vmem:[%s618 + $0x78] sm:$0xff] %v7130
        %7163 = vst [vmem:[%s618 + $0x80] sm:$0xff] %v7131
        %7164 = vst [vmem:[%s618 + $0x88] sm:$0xff] %v7132
        %7165 = vst [vmem:[%s618 + $0x90] sm:$0xff] %v7133
        %7166 = vst [vmem:[%s618 + $0x98] sm:$0xff] %v7134
        %7167 = vst [vmem:[%s618 + $0xa0] sm:$0xff] %v7135
        %7168 = vst [vmem:[%s618 + $0xa8] sm:$0xff] %v7136
        %7169 = vst [vmem:[%s618 + $0xb0] sm:$0xff] %v7137
        %7170 = vst [vmem:[%s618 + $0xb8] sm:$0xff] %v7138
        %7171 = vst [vmem:[%s618 + $0xc0] sm:$0xff] %v7139
        %7172 = vst [vmem:[%s618 + $0xc8] sm:$0xff] %v7140
        %7173 = vst [vmem:[%s618 + $0xd0] sm:$0xff] %v7141
        %7174 = vst [vmem:[%s618 + $0xd8] sm:$0xff] %v7142
        %7175 = vst [vmem:[%s618 + $0xe0] sm:$0xff] %v7143
        %7176 = vst [vmem:[%s618 + $0xe8] sm:$0xff] %v7144
        %7177 = vst [vmem:[%s618 + $0xf0] sm:$0xff] %v7145
        %7178 = vst [vmem:[%s618 + $0xf8] sm:$0xff] %v7146
        %s7179 = sand.u32 %s322, 1
        %s7180 = scalar_lea.sflag [#allocation4], %s7179
        %s7181 = sand.u32 %s322, 1
        %s7182 = smul.addr %s7181, 256
        %s7183 = scalar_lea.vmem [#allocation23], %s7182
        // Predicated region
        $region125: #{tpu_custom_call.1} parent=71 // pred_check
          %p7184 = pneg %p332
        $region126: #{tpu_custom_call.1} parent=71 // pred_check_branch
          %7186 = sbr.rel (%p7184) target = $region128
        $region127: #{tpu_custom_call.1} parent=71 // pred_region
          %s7187 = smul.u32 32, %s36
          %s7189 = ssub.s32 4096, 4096
          %7190 = vsyncadd %s7180, %s7189
          %s7191 = smul.addr %s7187, 128
          %s7192 = scalar_lea.hbm %s13, %s7191
          %s7193 = sshll.u32 %s7183, 4
          %s7194 = int_to_ptr.vmem [resolvable:$true] %s7193
          %7199 = dma.vmem_to_hbm [thread:$0]  %s7194, 4096, %s7192, %s7180, 128, 128, 8
        $region128: #{tpu_custom_call.1} parent=71 // pred_fallthru
          _
      $region72: #{tpu_custom_call.1} parent=5 // pred_fallthru
        _
      %p7200 = scmp.le.s32.totalorder 2, %s31
      // Predicated region
      $region129: #{tpu_custom_call.1} parent=5 // pred_check
        %p7201 = pneg %p7200
      $region130: #{tpu_custom_call.1} parent=5 // pred_check_branch
        %7203 = sbr.rel (%p7201) target = $region132
      $region131: #{tpu_custom_call.1} parent=5 // pred_region
        %s7204 = ssub.s32 %s31, 2
        // Predicated region
        $region133: #{tpu_custom_call.1} parent=131 // pred_check
          %p7205 = pneg %p338
        $region134: #{tpu_custom_call.1} parent=131 // pred_check_branch
          %7207 = sbr.rel (%p7205) target = $region136
        $region135: #{tpu_custom_call.1} parent=131 // pred_region
          %s7208 = sand.u32 %s323, 1
          %s7209 = scalar_lea.sflag [#allocation4], %s7208
          %s7210 = sand.u32 %s323, 1
          %s7211 = smul.addr %s7210, 256
          %s7212 = scalar_lea.vmem [#allocation23], %s7211
          %7213 = dma.done %s7209, 4096
        $region136: #{tpu_custom_call.1} parent=131 // pred_fallthru
          _
      $region132: #{tpu_custom_call.1} parent=5 // pred_fallthru
        _
    $region6: #{tpu_custom_call.1} parent=1 // loop_footer
      %s35 = sadd.s32 1, %s31
    $region7: #{tpu_custom_call.1} parent=1 // loop_footer_branch
      %30 = sbr.rel target = $region3
    $region8: #{tpu_custom_call.1} parent=1 // loop_exit
      _
    %7214 = vsyncpa [#allocation3], 1
    %s7215 = scalar_lea.sflag [#allocation3], 1
    %7216 = vsyncpa %s7215, 1
    %7217 = vsyncpa [#allocation6], 1
    %7218 = vsyncpa [#allocation9], 1
    %7219 = vsyncpa [#allocation12], 1
    %7220 = vsyncpa [#allocation15], 1
    %7221 = vsyncpa [#allocation18], 1
    %7222 = vsyncpa [#allocation21], 1
    %7223 = vsyncpa [#allocation4], 1
    %s7224 = scalar_lea.sflag [#allocation4], 1
    %7225 = vsyncpa %s7224, 1

</llo_original>
